<compile_context>
chip_gen: v7x
topology: tpu7x:2x2x1
jax: 0.10.0
libtpu: 0.0.40
codegen_flags: <defaults>
</compile_context>

<pallas_src>
import numpy as np
import jax
import jax.numpy as jnp
from jax.experimental import pallas as pl
from jax.experimental.pallas import tpu as pltpu

_BF16 = jnp.bfloat16


# ---------------------------------------------------------------------------
# In-kernel helpers
# ---------------------------------------------------------------------------
def _fill_padded(xp_ref, x):
    """Write x (H, W, C) into the center of a zeroed (H+2, W+2, C) scratch."""
    H, W, _ = x.shape
    xp_ref[...] = jnp.zeros(xp_ref.shape, xp_ref.dtype)
    xp_ref[1:H + 1, 1:W + 1, :] = x


def _conv3x3_taps(xp_ref, w_ref, H, W):
    """Accumulate the 9 shifted-patch matmuls of a 3x3 'same' conv (f32 acc)."""
    Cin = xp_ref.shape[-1]
    Cout = w_ref.shape[-1]
    acc = jnp.zeros((H * W, Cout), jnp.float32)
    for t in range(9):
        dy, dx = t // 3, t % 3
        patch = xp_ref[dy:dy + H, dx:dx + W, :].reshape(H * W, Cin)
        acc = acc + jnp.dot(patch, w_ref[t], preferred_element_type=jnp.float32)
    return acc


def _pool2x2(y3):
    """2x2 / stride-2 max pool of (H, W, C) (no strided ref indexing)."""
    H, W, C = y3.shape
    zw = jnp.max(y3.reshape(H, W // 2, 2, C), axis=2)
    return jnp.max(zw.reshape(H // 2, 2, W // 2, C), axis=1)


# ---------------------------------------------------------------------------
# Kernels
# ---------------------------------------------------------------------------
def _conv_relu_pool_kernel(x_ref, w_ref, b_ref, o_full_ref, o_pool_ref, xp_ref):
    # x_ref: (1, H, W, Cin) bf16 ; w_ref: (9, Cin, Cout) bf16 ; b_ref: (1, Cout) f32
    H, W, Cout = o_full_ref.shape[1], o_full_ref.shape[2], o_full_ref.shape[3]
    _fill_padded(xp_ref, x_ref[0])
    y = _conv3x3_taps(xp_ref, w_ref, H, W) + b_ref[...]
    y3 = jnp.maximum(y, 0.0).reshape(H, W, Cout)
    o_full_ref[0] = y3.astype(o_full_ref.dtype)
    o_pool_ref[0] = _pool2x2(y3).astype(o_pool_ref.dtype)   # fused maxpool epilogue


def _conv_relu_kernel(x_ref, w_ref, b_ref, o_ref, xp_ref):
    H, W, Cout = o_ref.shape[1], o_ref.shape[2], o_ref.shape[3]
    _fill_padded(xp_ref, x_ref[0])
    y = _conv3x3_taps(xp_ref, w_ref, H, W) + b_ref[...]
    o_ref[0] = jnp.maximum(y, 0.0).reshape(H, W, Cout).astype(o_ref.dtype)


def _conv2in_relu_kernel(a_ref, b_ref, wa_ref, wb_ref, bias_ref, o_ref,
                         ap_ref, bp_ref):
    # conv3x3(concat([a, b], channel)) realized as conv(a, Wa) + conv(b, Wb).
    H, W, Cout = o_ref.shape[1], o_ref.shape[2], o_ref.shape[3]
    _fill_padded(ap_ref, a_ref[0])
    _fill_padded(bp_ref, b_ref[0])
    y = (_conv3x3_taps(ap_ref, wa_ref, H, W)
         + _conv3x3_taps(bp_ref, wb_ref, H, W) + bias_ref[...])
    o_ref[0] = jnp.maximum(y, 0.0).reshape(H, W, Cout).astype(o_ref.dtype)


def _conv2in_relu_outc_kernel(a_ref, b_ref, wa_ref, wb_ref, bias_ref,
                              wout_ref, bout_ref, o_ref, ap_ref, bp_ref):
    # conv2 (+bias+ReLU) fused with the 1x1 outc conv; output is NCHW logits.
    n_classes, H, W = o_ref.shape[1], o_ref.shape[2], o_ref.shape[3]
    Cout = wa_ref.shape[-1]
    _fill_padded(ap_ref, a_ref[0])
    _fill_padded(bp_ref, b_ref[0])
    y = (_conv3x3_taps(ap_ref, wa_ref, H, W)
         + _conv3x3_taps(bp_ref, wb_ref, H, W) + bias_ref[...])
    y3 = jnp.maximum(y, 0.0).reshape(H, W, Cout)          # conv2 activation, f32
    for k in range(n_classes):                            # fused 1x1 outc
        w_k = wout_ref[k:k + 1, :]                        # (1, Cout)
        o_ref[0, k] = jnp.sum(y3 * w_k, axis=-1) + bout_ref[k]


def _convT_kernel(x_ref, w_ref, b_ref, o_ref):
    # Merged-tap ConvTranspose2d(2,2): one (h*w, Cin) x (Cin, 4*Cout) matmul.
    # Output block (1, h, 2, w, 2*Cout): taps interleaved so the wrapper
    # reshape to (2h, 2w, Cout) is contiguous.
    h, w, Cin = x_ref.shape[1], x_ref.shape[2], x_ref.shape[3]
    two_cout = o_ref.shape[4]
    x2d = x_ref[0].reshape(h * w, Cin)
    r = jnp.dot(x2d, w_ref[...], preferred_element_type=jnp.float32) + b_ref[...]
    for di in range(2):
        o_ref[0, :, di] = (r[:, di * two_cout:(di + 1) * two_cout]
                           .reshape(h, w, two_cout).astype(o_ref.dtype))


# ---------------------------------------------------------------------------
# Wrappers (pallas_call plumbing)
# ---------------------------------------------------------------------------
def conv3x3_relu_pool(x, w, b):
    """3x3 same conv + bias + ReLU; returns (full, 2x2-maxpooled) activations."""
    N, H, W, Cin = x.shape
    Cout = w.shape[-1]
    wf = w.reshape(9, Cin, Cout).astype(_BF16)
    bf = b.reshape(1, Cout).astype(jnp.float32)
    return pl.pallas_call(
        _conv_relu_pool_kernel,
        out_shape=(jax.ShapeDtypeStruct((N, H, W, Cout), _BF16),
                   jax.ShapeDtypeStruct((N, H // 2, W // 2, Cout), _BF16)),
        grid=(N,),
        in_specs=[pl.BlockSpec((1, H, W, Cin), lambda n: (n, 0, 0, 0)),
                  pl.BlockSpec((9, Cin, Cout), lambda n: (0, 0, 0)),
                  pl.BlockSpec((1, Cout), lambda n: (0, 0))],
        out_specs=(pl.BlockSpec((1, H, W, Cout), lambda n: (n, 0, 0, 0)),
                   pl.BlockSpec((1, H // 2, W // 2, Cout),
                                lambda n: (n, 0, 0, 0))),
        scratch_shapes=[pltpu.VMEM((H + 2, W + 2, Cin), _BF16)],
        compiler_params=pltpu.CompilerParams(dimension_semantics=("parallel",)),
    )(x.astype(_BF16), wf, bf)


def conv3x3_relu(x, w, b):
    N, H, W, Cin = x.shape
    Cout = w.shape[-1]
    wf = w.reshape(9, Cin, Cout).astype(_BF16)
    bf = b.reshape(1, Cout).astype(jnp.float32)
    return pl.pallas_call(
        _conv_relu_kernel,
        out_shape=jax.ShapeDtypeStruct((N, H, W, Cout), _BF16),
        grid=(N,),
        in_specs=[pl.BlockSpec((1, H, W, Cin), lambda n: (n, 0, 0, 0)),
                  pl.BlockSpec((9, Cin, Cout), lambda n: (0, 0, 0)),
                  pl.BlockSpec((1, Cout), lambda n: (0, 0))],
        out_specs=pl.BlockSpec((1, H, W, Cout), lambda n: (n, 0, 0, 0)),
        scratch_shapes=[pltpu.VMEM((H + 2, W + 2, Cin), _BF16)],
        compiler_params=pltpu.CompilerParams(dimension_semantics=("parallel",)),
    )(x.astype(_BF16), wf, bf)


def conv3x3_relu_2in(a, skip, w, b):
    """3x3 conv over the (virtual) channel-concat [a, skip] + bias + ReLU."""
    N, H, W, Ca = a.shape
    Cb = skip.shape[-1]
    Cout = w.shape[-1]
    wa = w[:, :, :Ca, :].reshape(9, Ca, Cout).astype(_BF16)
    wb = w[:, :, Ca:, :].reshape(9, Cb, Cout).astype(_BF16)
    bf = b.reshape(1, Cout).astype(jnp.float32)
    return pl.pallas_call(
        _conv2in_relu_kernel,
        out_shape=jax.ShapeDtypeStruct((N, H, W, Cout), _BF16),
        grid=(N,),
        in_specs=[pl.BlockSpec((1, H, W, Ca), lambda n: (n, 0, 0, 0)),
                  pl.BlockSpec((1, H, W, Cb), lambda n: (n, 0, 0, 0)),
                  pl.BlockSpec((9, Ca, Cout), lambda n: (0, 0, 0)),
                  pl.BlockSpec((9, Cb, Cout), lambda n: (0, 0, 0)),
                  pl.BlockSpec((1, Cout), lambda n: (0, 0))],
        out_specs=pl.BlockSpec((1, H, W, Cout), lambda n: (n, 0, 0, 0)),
        scratch_shapes=[pltpu.VMEM((H + 2, W + 2, Ca), _BF16),
                        pltpu.VMEM((H + 2, W + 2, Cb), _BF16)],
        compiler_params=pltpu.CompilerParams(dimension_semantics=("parallel",)),
    )(a.astype(_BF16), skip.astype(_BF16), wa, wb, bf)


def conv3x3_relu_2in_outc(a, skip, w, b, w_out, b_out):
    """conv2 over [a, skip] (+bias+ReLU) fused with 1x1 outc; NCHW f32 logits."""
    N, H, W, Ca = a.shape
    Cb = skip.shape[-1]
    Cout = w.shape[-1]
    n_classes = w_out.shape[-1]
    wa = w[:, :, :Ca, :].reshape(9, Ca, Cout).astype(_BF16)
    wb = w[:, :, Ca:, :].reshape(9, Cb, Cout).astype(_BF16)
    bf = b.reshape(1, Cout).astype(jnp.float32)
    wo = jnp.transpose(w_out.reshape(Cout, n_classes), (1, 0)).astype(jnp.float32)
    bo = b_out.reshape(n_classes, 1, 1).astype(jnp.float32)
    return pl.pallas_call(
        _conv2in_relu_outc_kernel,
        out_shape=jax.ShapeDtypeStruct((N, n_classes, H, W), jnp.float32),
        grid=(N,),
        in_specs=[pl.BlockSpec((1, H, W, Ca), lambda n: (n, 0, 0, 0)),
                  pl.BlockSpec((1, H, W, Cb), lambda n: (n, 0, 0, 0)),
                  pl.BlockSpec((9, Ca, Cout), lambda n: (0, 0, 0)),
                  pl.BlockSpec((9, Cb, Cout), lambda n: (0, 0, 0)),
                  pl.BlockSpec((1, Cout), lambda n: (0, 0)),
                  pl.BlockSpec((n_classes, Cout), lambda n: (0, 0)),
                  pl.BlockSpec((n_classes, 1, 1), lambda n: (0, 0, 0))],
        out_specs=pl.BlockSpec((1, n_classes, H, W), lambda n: (n, 0, 0, 0)),
        scratch_shapes=[pltpu.VMEM((H + 2, W + 2, Ca), _BF16),
                        pltpu.VMEM((H + 2, W + 2, Cb), _BF16)],
        compiler_params=pltpu.CompilerParams(dimension_semantics=("parallel",)),
    )(a.astype(_BF16), skip.astype(_BF16), wa, wb, bf, wo, bo)


def conv_transpose2x2(x, w, b):
    """ConvTranspose2d(k=2, s=2): single merged-tap matmul + in-kernel shuffle."""
    N, h, wd, Cin = x.shape
    Cout = w.shape[-1]
    # Columns ordered (di, dj, co) so row-major slicing matches the shuffle.
    wcat = jnp.transpose(w, (2, 0, 1, 3)).reshape(Cin, 4 * Cout).astype(_BF16)
    bcat = jnp.tile(b, 4).reshape(1, 4 * Cout).astype(jnp.float32)
    taps = pl.pallas_call(
        _convT_kernel,
        out_shape=jax.ShapeDtypeStruct((N, h, 2, wd, 2 * Cout), _BF16),
        grid=(N,),
        in_specs=[pl.BlockSpec((1, h, wd, Cin), lambda n: (n, 0, 0, 0)),
                  pl.BlockSpec((Cin, 4 * Cout), lambda n: (0, 0)),
                  pl.BlockSpec((1, 4 * Cout), lambda n: (0, 0))],
        out_specs=pl.BlockSpec((1, h, 2, wd, 2 * Cout),
                               lambda n: (n, 0, 0, 0, 0)),
        compiler_params=pltpu.CompilerParams(dimension_semantics=("parallel",)),
    )(x.astype(_BF16), wcat, bcat)
    # (N, h, 2, w, 2*Cout) -> (N, 2h, 2w, Cout) is a contiguous (free) reshape.
    return taps.reshape(N, 2 * h, 2 * wd, Cout)


# ---------------------------------------------------------------------------
# Full forward (matches AffordanceModel.forward; NCHW in / NCHW out)
# ---------------------------------------------------------------------------
def affordance_forward_nchw(x_nchw, p):
    x = jnp.transpose(x_nchw, (0, 2, 3, 1))                         # NCHW -> NHWC
    x_inc, x_inc_pool = conv3x3_relu_pool(x, *p["inc"])             # inc  (+fused pool)
    x_d1, x_d1_pool = conv3x3_relu_pool(x_inc_pool, *p["d1"])       # down1(+fused pool)
    x_d2 = conv3x3_relu(x_d1_pool, *p["d2"])                        # down2
    x_up1 = conv_transpose2x2(x_d2, *p["up1"])                      # upconv1
    x_u1 = conv3x3_relu_2in(x_up1, x_d1, *p["c1"])                  # cat + conv1
    x_up2 = conv_transpose2x2(x_u1, *p["up2"])                      # upconv2
    return conv3x3_relu_2in_outc(x_up2, x_inc, *p["c2"], *p["out"])  # cat+conv2+outc


# ---------------------------------------------------------------------------
# Pure-JAX reference (independent path, same bf16-in / f32-accumulate policy)
# ---------------------------------------------------------------------------
def reference_forward_nchw(x_nchw, p):
    bf16 = jnp.bfloat16

    def conv(x, w, b, pad=1, relu=True):
        y = jax.lax.conv_general_dilated(
            x.astype(bf16), w.astype(bf16), (1, 1), [(pad, pad), (pad, pad)],
            dimension_numbers=("NHWC", "HWIO", "NHWC"),
            preferred_element_type=jnp.float32) + b.astype(jnp.float32)
        return jnp.maximum(y, 0.0) if relu else y

    def pool(x):
        return jax.lax.reduce_window(x, -jnp.inf, jax.lax.max,
                                     (1, 2, 2, 1), (1, 2, 2, 1), "VALID")

    def convT(x, w, b):
        N, h, wd, _ = x.shape
        Cout = w.shape[-1]
        y = jnp.einsum("nijc,abcd->niajbd", x.astype(bf16), w.astype(bf16),
                       preferred_element_type=jnp.float32)
        return y.reshape(N, 2 * h, 2 * wd, Cout) + b.astype(jnp.float32)

    x = jnp.transpose(x_nchw, (0, 2, 3, 1))
    x_inc = conv(x, *p["inc"])
    x_d1 = conv(pool(x_inc), *p["d1"])
    x_d2 = conv(pool(x_d1), *p["d2"])
    x_u1 = conv(jnp.concatenate([convT(x_d2, *p["up1"]), x_d1], -1), *p["c1"])
    x_u2 = conv(jnp.concatenate([convT(x_u1, *p["up2"]), x_inc], -1), *p["c2"])
    w_out, b_out = p["out"]
    cout, ncls = w_out.shape[2], w_out.shape[3]
    logits = jnp.einsum("nhwc,ck->nhwk", x_u2,
                        w_out.reshape(cout, ncls).astype(jnp.float32)) + b_out
    return jnp.transpose(logits, (0, 3, 1, 2))


# ---------------------------------------------------------------------------
# Deterministic parameter init (PyTorch-style uniform bounds), HWIO layout
# ---------------------------------------------------------------------------
def init_conv(key, kh, kw, cin, cout):
    kwk, kbk = jax.random.split(key)
    bound = 1.0 / np.sqrt(cin * kh * kw)
    w = jax.random.uniform(kwk, (kh, kw, cin, cout), jnp.float32, -bound, bound)
    b = jax.random.uniform(kbk, (cout,), jnp.float32, -bound, bound)
    return w, b


if __name__ == "__main__":
    key = jax.random.PRNGKey(0)
    keys = jax.random.split(key, 9)
    N, C, H, W = 2, 3, 16, 16     # n_channels=3, n_classes=1

    params = {
        "inc": init_conv(keys[0], 3, 3, C, 64),
        "d1":  init_conv(keys[1], 3, 3, 64, 128),
        "d2":  init_conv(keys[2], 3, 3, 128, 256),
        "up1": init_conv(keys[3], 2, 2, 256, 128),
        "c1":  init_conv(keys[4], 3, 3, 256, 128),
        "up2": init_conv(keys[5], 2, 2, 128, 64),
        "c2":  init_conv(keys[6], 3, 3, 128, 64),
        "out": init_conv(keys[7], 1, 1, 64, 1),
    }

    x = jax.random.uniform(keys[8], (N, C, H, W), jnp.float32)

    out = jax.block_until_ready(affordance_forward_nchw(x, params))
    assert out.shape == (N, 1, H, W), out.shape

    ref = jax.block_until_ready(reference_forward_nchw(x, params))
    np.testing.assert_allclose(np.asarray(out, dtype=np.float32),
                               np.asarray(ref, dtype=np.float32),
                               rtol=2e-2, atol=2e-2)

    print("KERNEL_OK")
</pallas_src>

<mosaic_0001>
module attributes {stable_mosaic.version = 11 : i64} {
  func.func @_conv_relu_pool_kernel(%arg0: i32, %arg1: memref<1x16x16x3xbf16, #tpu.memory_space<vmem>>, %arg2: memref<9x3x64xbf16, #tpu.memory_space<vmem>>, %arg3: memref<1x64xf32, #tpu.memory_space<vmem>>, %arg4: memref<1x16x16x64xbf16, #tpu.memory_space<vmem>>, %arg5: memref<1x8x8x64xbf16, #tpu.memory_space<vmem>>, %arg6: memref<18x18x3xbf16, #tpu.memory_space<vmem>>) attributes {dimension_semantics = [#tpu.dimension_semantics<parallel>], iteration_bounds = array<i64: 2>, scalar_prefetch = 0 : i64, scratch_operands = 1 : i64, tpu.core_type = #tpu.core_type<tc>, window_params = [{transform_indices = @transform_0, window_bounds = array<i64: 1, 16, 16, 3>}, {pipeline_mode = #tpu.pipeline_mode<synchronous>, transform_indices = @transform_1, window_bounds = array<i64: 9, 3, 64>}, {pipeline_mode = #tpu.pipeline_mode<synchronous>, transform_indices = @transform_2, window_bounds = array<i64: 1, 64>}, {transform_indices = @transform_3, window_bounds = array<i64: 1, 16, 16, 64>}, {transform_indices = @transform_4, window_bounds = array<i64: 1, 8, 8, 64>}]} {
    %c0 = arith.constant 0 : index
    %c0_0 = arith.constant 0 : index
    %c0_1 = arith.constant 0 : index
    %c0_2 = arith.constant 0 : index
    %0 = vector.load %arg1[%c0, %c0_0, %c0_1, %c0_2] : memref<1x16x16x3xbf16, #tpu.memory_space<vmem>>, vector<1x16x16x3xbf16>
    %1 = vector.shape_cast %0 : vector<1x16x16x3xbf16> to vector<16x16x3xbf16>
    %cst = arith.constant 0.000000e+00 : bf16
    %2 = vector.broadcast %cst : bf16 to vector<18x18x3xbf16>
    %c0_3 = arith.constant 0 : index
    %c0_4 = arith.constant 0 : index
    %c0_5 = arith.constant 0 : index
    %3 = vector.load %arg6[%c0_3, %c0_4, %c0_5] : memref<18x18x3xbf16, #tpu.memory_space<vmem>>, vector<18x18x3xbf16>
    tpu.vector_store %arg6[%c0_3, %c0_4, %c0_5], %2 {strides = array<i32>} : memref<18x18x3xbf16, #tpu.memory_space<vmem>>, vector<18x18x3xbf16>,
    %c1 = arith.constant 1 : index
    %c1_6 = arith.constant 1 : index
    %c0_7 = arith.constant 0 : index
    %4 = vector.load %arg6[%c1, %c1_6, %c0_7] : memref<18x18x3xbf16, #tpu.memory_space<vmem>>, vector<16x16x3xbf16>
    tpu.vector_store %arg6[%c1, %c1_6, %c0_7], %1 {strides = array<i32>} : memref<18x18x3xbf16, #tpu.memory_space<vmem>>, vector<16x16x3xbf16>,
    %cst_8 = arith.constant 0.000000e+00 : f32
    %5 = vector.broadcast %cst_8 : f32 to vector<256x64xf32>
    %c0_9 = arith.constant 0 : index
    %c0_10 = arith.constant 0 : index
    %c0_11 = arith.constant 0 : index
    %6 = vector.load %arg6[%c0_9, %c0_10, %c0_11] : memref<18x18x3xbf16, #tpu.memory_space<vmem>>, vector<16x16x3xbf16>
    %7 = vector.shape_cast %6 : vector<16x16x3xbf16> to vector<256x3xbf16>
    %c0_12 = arith.constant 0 : index
    %c0_13 = arith.constant 0 : index
    %c0_14 = arith.constant 0 : index
    %8 = vector.load %arg2[%c0_12, %c0_13, %c0_14] : memref<9x3x64xbf16, #tpu.memory_space<vmem>>, vector<1x3x64xbf16>
    %9 = vector.shape_cast %8 : vector<1x3x64xbf16> to vector<3x64xbf16>
    %cst_15 = arith.constant dense<0.000000e+00> : vector<256x64xf32>
    %10 = tpu.matmul %7, %9, %cst_15 {dimension_numbers = #tpu.dot_dimension_numbers<[1], [0], [0], [1], [0, 0, 1, 1], [], []>} : vector<256x3xbf16>, vector<3x64xbf16>, vector<256x64xf32> -> vector<256x64xf32>
    %11 = arith.addf %5, %10 : vector<256x64xf32>
    %c0_16 = arith.constant 0 : index
    %c1_17 = arith.constant 1 : index
    %c0_18 = arith.constant 0 : index
    %12 = vector.load %arg6[%c0_16, %c1_17, %c0_18] : memref<18x18x3xbf16, #tpu.memory_space<vmem>>, vector<16x16x3xbf16>
    %13 = vector.shape_cast %12 : vector<16x16x3xbf16> to vector<256x3xbf16>
    %c1_19 = arith.constant 1 : index
    %c0_20 = arith.constant 0 : index
    %c0_21 = arith.constant 0 : index
    %14 = vector.load %arg2[%c1_19, %c0_20, %c0_21] : memref<9x3x64xbf16, #tpu.memory_space<vmem>>, vector<1x3x64xbf16>
    %15 = vector.shape_cast %14 : vector<1x3x64xbf16> to vector<3x64xbf16>
    %cst_22 = arith.constant dense<0.000000e+00> : vector<256x64xf32>
    %16 = tpu.matmul %13, %15, %cst_22 {dimension_numbers = #tpu.dot_dimension_numbers<[1], [0], [0], [1], [0, 0, 1, 1], [], []>} : vector<256x3xbf16>, vector<3x64xbf16>, vector<256x64xf32> -> vector<256x64xf32>
    %17 = arith.addf %11, %16 : vector<256x64xf32>
    %c0_23 = arith.constant 0 : index
    %c2 = arith.constant 2 : index
    %c0_24 = arith.constant 0 : index
    %18 = vector.load %arg6[%c0_23, %c2, %c0_24] : memref<18x18x3xbf16, #tpu.memory_space<vmem>>, vector<16x16x3xbf16>
    %19 = vector.shape_cast %18 : vector<16x16x3xbf16> to vector<256x3xbf16>
    %c2_25 = arith.constant 2 : index
    %c0_26 = arith.constant 0 : index
    %c0_27 = arith.constant 0 : index
    %20 = vector.load %arg2[%c2_25, %c0_26, %c0_27] : memref<9x3x64xbf16, #tpu.memory_space<vmem>>, vector<1x3x64xbf16>
    %21 = vector.shape_cast %20 : vector<1x3x64xbf16> to vector<3x64xbf16>
    %cst_28 = arith.constant dense<0.000000e+00> : vector<256x64xf32>
    %22 = tpu.matmul %19, %21, %cst_28 {dimension_numbers = #tpu.dot_dimension_numbers<[1], [0], [0], [1], [0, 0, 1, 1], [], []>} : vector<256x3xbf16>, vector<3x64xbf16>, vector<256x64xf32> -> vector<256x64xf32>
    %23 = arith.addf %17, %22 : vector<256x64xf32>
    %c1_29 = arith.constant 1 : index
    %c0_30 = arith.constant 0 : index
    %c0_31 = arith.constant 0 : index
    %24 = vector.load %arg6[%c1_29, %c0_30, %c0_31] : memref<18x18x3xbf16, #tpu.memory_space<vmem>>, vector<16x16x3xbf16>
    %25 = vector.shape_cast %24 : vector<16x16x3xbf16> to vector<256x3xbf16>
    %c3 = arith.constant 3 : index
    %c0_32 = arith.constant 0 : index
    %c0_33 = arith.constant 0 : index
    %26 = vector.load %arg2[%c3, %c0_32, %c0_33] : memref<9x3x64xbf16, #tpu.memory_space<vmem>>, vector<1x3x64xbf16>
    %27 = vector.shape_cast %26 : vector<1x3x64xbf16> to vector<3x64xbf16>
    %cst_34 = arith.constant dense<0.000000e+00> : vector<256x64xf32>
    %28 = tpu.matmul %25, %27, %cst_34 {dimension_numbers = #tpu.dot_dimension_numbers<[1], [0], [0], [1], [0, 0, 1, 1], [], []>} : vector<256x3xbf16>, vector<3x64xbf16>, vector<256x64xf32> -> vector<256x64xf32>
    %29 = arith.addf %23, %28 : vector<256x64xf32>
    %c1_35 = arith.constant 1 : index
    %c1_36 = arith.constant 1 : index
    %c0_37 = arith.constant 0 : index
    %30 = vector.load %arg6[%c1_35, %c1_36, %c0_37] : memref<18x18x3xbf16, #tpu.memory_space<vmem>>, vector<16x16x3xbf16>
    %31 = vector.shape_cast %30 : vector<16x16x3xbf16> to vector<256x3xbf16>
    %c4 = arith.constant 4 : index
    %c0_38 = arith.constant 0 : index
    %c0_39 = arith.constant 0 : index
    %32 = vector.load %arg2[%c4, %c0_38, %c0_39] : memref<9x3x64xbf16, #tpu.memory_space<vmem>>, vector<1x3x64xbf16>
    %33 = vector.shape_cast %32 : vector<1x3x64xbf16> to vector<3x64xbf16>
    %cst_40 = arith.constant dense<0.000000e+00> : vector<256x64xf32>
    %34 = tpu.matmul %31, %33, %cst_40 {dimension_numbers = #tpu.dot_dimension_numbers<[1], [0], [0], [1], [0, 0, 1, 1], [], []>} : vector<256x3xbf16>, vector<3x64xbf16>, vector<256x64xf32> -> vector<256x64xf32>
    %35 = arith.addf %29, %34 : vector<256x64xf32>
    %c1_41 = arith.constant 1 : index
    %c2_42 = arith.constant 2 : index
    %c0_43 = arith.constant 0 : index
    %36 = vector.load %arg6[%c1_41, %c2_42, %c0_43] : memref<18x18x3xbf16, #tpu.memory_space<vmem>>, vector<16x16x3xbf16>
    %37 = vector.shape_cast %36 : vector<16x16x3xbf16> to vector<256x3xbf16>
    %c5 = arith.constant 5 : index
    %c0_44 = arith.constant 0 : index
    %c0_45 = arith.constant 0 : index
    %38 = vector.load %arg2[%c5, %c0_44, %c0_45] : memref<9x3x64xbf16, #tpu.memory_space<vmem>>, vector<1x3x64xbf16>
    %39 = vector.shape_cast %38 : vector<1x3x64xbf16> to vector<3x64xbf16>
    %cst_46 = arith.constant dense<0.000000e+00> : vector<256x64xf32>
    %40 = tpu.matmul %37, %39, %cst_46 {dimension_numbers = #tpu.dot_dimension_numbers<[1], [0], [0], [1], [0, 0, 1, 1], [], []>} : vector<256x3xbf16>, vector<3x64xbf16>, vector<256x64xf32> -> vector<256x64xf32>
    %41 = arith.addf %35, %40 : vector<256x64xf32>
    %c2_47 = arith.constant 2 : index
    %c0_48 = arith.constant 0 : index
    %c0_49 = arith.constant 0 : index
    %42 = vector.load %arg6[%c2_47, %c0_48, %c0_49] : memref<18x18x3xbf16, #tpu.memory_space<vmem>>, vector<16x16x3xbf16>
    %43 = vector.shape_cast %42 : vector<16x16x3xbf16> to vector<256x3xbf16>
    %c6 = arith.constant 6 : index
    %c0_50 = arith.constant 0 : index
    %c0_51 = arith.constant 0 : index
    %44 = vector.load %arg2[%c6, %c0_50, %c0_51] : memref<9x3x64xbf16, #tpu.memory_space<vmem>>, vector<1x3x64xbf16>
    %45 = vector.shape_cast %44 : vector<1x3x64xbf16> to vector<3x64xbf16>
    %cst_52 = arith.constant dense<0.000000e+00> : vector<256x64xf32>
    %46 = tpu.matmul %43, %45, %cst_52 {dimension_numbers = #tpu.dot_dimension_numbers<[1], [0], [0], [1], [0, 0, 1, 1], [], []>} : vector<256x3xbf16>, vector<3x64xbf16>, vector<256x64xf32> -> vector<256x64xf32>
    %47 = arith.addf %41, %46 : vector<256x64xf32>
    %c2_53 = arith.constant 2 : index
    %c1_54 = arith.constant 1 : index
    %c0_55 = arith.constant 0 : index
    %48 = vector.load %arg6[%c2_53, %c1_54, %c0_55] : memref<18x18x3xbf16, #tpu.memory_space<vmem>>, vector<16x16x3xbf16>
    %49 = vector.shape_cast %48 : vector<16x16x3xbf16> to vector<256x3xbf16>
    %c7 = arith.constant 7 : index
    %c0_56 = arith.constant 0 : index
    %c0_57 = arith.constant 0 : index
    %50 = vector.load %arg2[%c7, %c0_56, %c0_57] : memref<9x3x64xbf16, #tpu.memory_space<vmem>>, vector<1x3x64xbf16>
    %51 = vector.shape_cast %50 : vector<1x3x64xbf16> to vector<3x64xbf16>
    %cst_58 = arith.constant dense<0.000000e+00> : vector<256x64xf32>
    %52 = tpu.matmul %49, %51, %cst_58 {dimension_numbers = #tpu.dot_dimension_numbers<[1], [0], [0], [1], [0, 0, 1, 1], [], []>} : vector<256x3xbf16>, vector<3x64xbf16>, vector<256x64xf32> -> vector<256x64xf32>
    %53 = arith.addf %47, %52 : vector<256x64xf32>
    %c2_59 = arith.constant 2 : index
    %c2_60 = arith.constant 2 : index
    %c0_61 = arith.constant 0 : index
    %54 = vector.load %arg6[%c2_59, %c2_60, %c0_61] : memref<18x18x3xbf16, #tpu.memory_space<vmem>>, vector<16x16x3xbf16>
    %55 = vector.shape_cast %54 : vector<16x16x3xbf16> to vector<256x3xbf16>
    %c8 = arith.constant 8 : index
    %c0_62 = arith.constant 0 : index
    %c0_63 = arith.constant 0 : index
    %56 = vector.load %arg2[%c8, %c0_62, %c0_63] : memref<9x3x64xbf16, #tpu.memory_space<vmem>>, vector<1x3x64xbf16>
    %57 = vector.shape_cast %56 : vector<1x3x64xbf16> to vector<3x64xbf16>
    %cst_64 = arith.constant dense<0.000000e+00> : vector<256x64xf32>
    %58 = tpu.matmul %55, %57, %cst_64 {dimension_numbers = #tpu.dot_dimension_numbers<[1], [0], [0], [1], [0, 0, 1, 1], [], []>} : vector<256x3xbf16>, vector<3x64xbf16>, vector<256x64xf32> -> vector<256x64xf32>
    %59 = arith.addf %53, %58 : vector<256x64xf32>
    %c0_65 = arith.constant 0 : index
    %c0_66 = arith.constant 0 : index
    %60 = vector.load %arg3[%c0_65, %c0_66] : memref<1x64xf32, #tpu.memory_space<vmem>>, vector<1x64xf32>
    %61 = vector.broadcast %60 : vector<1x64xf32> to vector<256x64xf32>
    %62 = arith.addf %59, %61 : vector<256x64xf32>
    %cst_67 = arith.constant 0.000000e+00 : f32
    %63 = vector.broadcast %cst_67 : f32 to vector<256x64xf32>
    %64 = arith.maximumf %62, %63 : vector<256x64xf32>
    %65 = vector.shape_cast %64 : vector<256x64xf32> to vector<16x16x64xf32>
    %66 = arith.truncf %65 : vector<16x16x64xf32> to vector<16x16x64xbf16>
    %c0_68 = arith.constant 0 : index
    %c0_69 = arith.constant 0 : index
    %c0_70 = arith.constant 0 : index
    %c0_71 = arith.constant 0 : index
    %67 = vector.load %arg4[%c0_68, %c0_69, %c0_70, %c0_71] : memref<1x16x16x64xbf16, #tpu.memory_space<vmem>>, vector<1x16x16x64xbf16>
    %68 = vector.shape_cast %67 : vector<1x16x16x64xbf16> to vector<16x16x64xbf16>
    %69 = vector.shape_cast %66 : vector<16x16x64xbf16> to vector<1x16x16x64xbf16>
    tpu.vector_store %arg4[%c0_68, %c0_69, %c0_70, %c0_71], %69 {strides = array<i32>} : memref<1x16x16x64xbf16, #tpu.memory_space<vmem>>, vector<1x16x16x64xbf16>,
    %70 = vector.shape_cast %65 : vector<16x16x64xf32> to vector<16x8x2x64xf32>
    %cst_72 = arith.constant dense<0xFF800000> : vector<16x8x64xf32>
    %71 = vector.multi_reduction <maximumf>, %70, %cst_72 [2] : vector<16x8x2x64xf32> to vector<16x8x64xf32>
    %72 = vector.shape_cast %71 : vector<16x8x64xf32> to vector<8x2x8x64xf32>
    %cst_73 = arith.constant dense<0xFF800000> : vector<8x8x64xf32>
    %73 = vector.multi_reduction <maximumf>, %72, %cst_73 [1] : vector<8x2x8x64xf32> to vector<8x8x64xf32>
    %74 = arith.truncf %73 : vector<8x8x64xf32> to vector<8x8x64xbf16>
    %c0_74 = arith.constant 0 : index
    %c0_75 = arith.constant 0 : index
    %c0_76 = arith.constant 0 : index
    %c0_77 = arith.constant 0 : index
    %75 = vector.load %arg5[%c0_74, %c0_75, %c0_76, %c0_77] : memref<1x8x8x64xbf16, #tpu.memory_space<vmem>>, vector<1x8x8x64xbf16>
    %76 = vector.shape_cast %75 : vector<1x8x8x64xbf16> to vector<8x8x64xbf16>
    %77 = vector.shape_cast %74 : vector<8x8x64xbf16> to vector<1x8x8x64xbf16>
    tpu.vector_store %arg5[%c0_74, %c0_75, %c0_76, %c0_77], %77 {strides = array<i32>} : memref<1x8x8x64xbf16, #tpu.memory_space<vmem>>, vector<1x8x8x64xbf16>,
    return
  }
  func.func @transform_0(%arg0: i32) -> (i32, i32, i32, i32) {
    %c0_i32 = arith.constant 0 : i32
    %c0_i32_0 = arith.constant 0 : i32
    %c0_i32_1 = arith.constant 0 : i32
    %c0_i32_2 = arith.constant 0 : i32
    return %arg0, %c0_i32, %c0_i32_0, %c0_i32_1 : i32, i32, i32, i32
  }
  func.func @transform_1(%arg0: i32) -> (i32, i32, i32) {
    %c0_i32 = arith.constant 0 : i32
    %c0_i32_0 = arith.constant 0 : i32
    %c0_i32_1 = arith.constant 0 : i32
    %c0_i32_2 = arith.constant 0 : i32
    return %c0_i32, %c0_i32_0, %c0_i32_1 : i32, i32, i32
  }
  func.func @transform_2(%arg0: i32) -> (i32, i32) {
    %c0_i32 = arith.constant 0 : i32
    %c0_i32_0 = arith.constant 0 : i32
    %c0_i32_1 = arith.constant 0 : i32
    return %c0_i32, %c0_i32_0 : i32, i32
  }
  func.func @transform_3(%arg0: i32) -> (i32, i32, i32, i32) {
    %c0_i32 = arith.constant 0 : i32
    %c0_i32_0 = arith.constant 0 : i32
    %c0_i32_1 = arith.constant 0 : i32
    %c0_i32_2 = arith.constant 0 : i32
    return %arg0, %c0_i32, %c0_i32_0, %c0_i32_1 : i32, i32, i32, i32
  }
  func.func @transform_4(%arg0: i32) -> (i32, i32, i32, i32) {
    %c0_i32 = arith.constant 0 : i32
    %c0_i32_0 = arith.constant 0 : i32
    %c0_i32_1 = arith.constant 0 : i32
    %c0_i32_2 = arith.constant 0 : i32
    return %arg0, %c0_i32, %c0_i32_0, %c0_i32_1 : i32, i32, i32, i32
  }
}

</mosaic_0001>

<llo_original>
// kernel: tpu_custom_call.1
$region0: #{tpu_custom_call.1}
  #allocation0 [shape = 'u32[]', space=smem, size = 0x4, offset = 0x4, fixed_abs, tag = 'smem constant byte address 0x4 - core index']
  #allocation1 [shape = 'u32[144,128]{1,0:T(1,128)}', space=vmem, size = 0x12000, scoped, tag = 'internal scratch']
  #allocation2 [shape = 'bf16[18,18,3]{2,1,0:T(8,128)(2,1)}', space=vmem, size = 0x1b000, scoped, tag = 'scratch operand']
  %s0 = inlined_call_operand.vmem [shape: bf16[2,16,16,3], index: 0, kind: input, shape index: {}]
  %s1 = inlined_call_operand.vmem [shape: bf16[9,3,64], index: 1, kind: input, shape index: {}]
  %s2 = inlined_call_operand.vmem [shape: f32[1,64], index: 2, kind: input, shape index: {}]
  %s3 = inlined_call_operand.hbm [shape: bf16[2,16,16,64], index: 3, kind: output, shape index: {0}]
  %s4 = inlined_call_operand.hbm [shape: bf16[2,8,8,64], index: 4, kind: output, shape index: {1}]
  %5 = xla_tuple %s3, %s4
  %s6 = sld [smem:[#allocation0]]
  $region53: #{tpu_custom_call.1} parent=0
    _
  %s8 = ssub.s32 1, %s6
  %s9 = scalar_select 0, %s8, %s6
  $region1: #{tpu_custom_call.1} parent=0
    #allocation3 [shape = 'u8[131072]{0}', space=vmem, size = 0x20000, scoped, tag = 'output window, operand 0']
    #allocation4 [shape = 's32[2]{0}', space=sflag, size = 0x8, scoped, tag = 'scoped memory for tpu_custom_call.1']
    #allocation5 [shape = 'u8[32768]{0}', space=vmem, size = 0x8000, scoped, tag = 'output window, operand 1']
    #allocation6 [shape = 's32[2]{0}', space=sflag, size = 0x8, scoped, tag = 'scoped memory for tpu_custom_call.1']
    %10 = vsyncpa [#allocation4], 0
    %s11 = scalar_lea.sflag [#allocation4], 1
    %12 = vsyncpa %s11, 0
    %13 = vsyncpa [#allocation6], 0
    %s14 = scalar_lea.sflag [#allocation6], 1
    %15 = vsyncpa %s14, 0
    loop: start=0, step=1, limit=4
    $region2: #{tpu_custom_call.1} parent=1 // loop_pre_header
      _
    $region3: #{tpu_custom_call.1} parent=1 // loop_header
      %s17 = sphi 0, %s21
      %p18 = scmp.ge.s32.totalorder %s17, 4
      %s27 = sphi 0, %s29
      %s30 = sphi 0, %s27
      %s31 = sphi 0, %s30
      %s47 = sphi 0, %s31
      %s51 = sphi 0, %s51
      %s53 = sphi 0, %s51
      %s54 = sphi 0, %s53
      %s68 = sphi 0, %s54
      %s72 = sphi 0, %s72
      %s74 = sphi 0, %s72
      %s75 = sphi 0, %s74
      %s89 = sphi 0, %s75
      %s95 = sphi 0, %s97
      %s98 = sphi 0, %s95
      %s99 = sphi 0, %s98
      %s115 = sphi 0, %s99
      %s121 = sphi 0, %s123
      %s124 = sphi 0, %s121
      %s125 = sphi 0, %s124
      %s141 = sphi 0, %s125
    $region4: #{tpu_custom_call.1} parent=1 // loop_header_branch
      %20 = sbr.rel (%p18) target = $region8
    $region5: #{tpu_custom_call.1} parent=1 // loop_body
      %s22 = ssub.s32 %s17, 1
      %s23 = ssub.s32 %s17, 2
      %s24 = sadd.s32 %s17, 1
      %s25 = ssub.s32 %s17, %s24
      %p26 = scmp.eq.s32.totalorder %s25, 0
      %s28 = sadd.s32 %s27, 1
      %s29 = scalar_select %p26, %s27, %s28
      %p32 = pneg %p26
      %p33 = scmp.eq.s32.totalorder %s17, 1
      %p34 = por %p32, %p33
      %p35 = scmp.ne.s32.totalorder %s27, %s30
      %p36 = scmp.eq.s32.totalorder %s17, 0
      %p37 = por %p35, %p36
      %p38 = scmp.ne.s32.totalorder %s27, %s30
      %p39 = scmp.eq.s32.totalorder %s22, 1
      %p40 = por %p38, %p39
      %p41 = scmp.ne.s32.totalorder %s30, %s31
      %p42 = scmp.eq.s32.totalorder %s22, 0
      %p43 = por %p41, %p42
      %p44 = scmp.ne.s32.totalorder %s30, %s31
      %p45 = scmp.eq.s32.totalorder %s23, 1
      %p46 = por %p44, %p45
      %p48 = scmp.ne.s32.totalorder %s31, %s47
      %p49 = scmp.eq.s32.totalorder %s23, 0
      %p50 = por %p48, %p49
      %s52 = sadd.s32 %s51, 1
      %p55 = scmp.eq.s32.totalorder %s17, 1
      %p56 = scmp.ne.s32.totalorder %s51, %s53
      %p57 = scmp.eq.s32.totalorder %s17, 0
      %p58 = por %p56, %p57
      %p59 = scmp.ne.s32.totalorder %s51, %s53
      %p60 = scmp.eq.s32.totalorder %s22, 1
      %p61 = por %p59, %p60
      %p62 = scmp.ne.s32.totalorder %s53, %s54
      %p63 = scmp.eq.s32.totalorder %s22, 0
      %p64 = por %p62, %p63
      %p65 = scmp.ne.s32.totalorder %s53, %s54
      %p66 = scmp.eq.s32.totalorder %s23, 1
      %p67 = por %p65, %p66
      %p69 = scmp.ne.s32.totalorder %s54, %s68
      %p70 = scmp.eq.s32.totalorder %s23, 0
      %p71 = por %p69, %p70
      %s73 = sadd.s32 %s72, 1
      %p76 = scmp.eq.s32.totalorder %s17, 1
      %p77 = scmp.ne.s32.totalorder %s72, %s74
      %p78 = scmp.eq.s32.totalorder %s17, 0
      %p79 = por %p77, %p78
      %p80 = scmp.ne.s32.totalorder %s72, %s74
      %p81 = scmp.eq.s32.totalorder %s22, 1
      %p82 = por %p80, %p81
      %p83 = scmp.ne.s32.totalorder %s74, %s75
      %p84 = scmp.eq.s32.totalorder %s22, 0
      %p85 = por %p83, %p84
      %p86 = scmp.ne.s32.totalorder %s74, %s75
      %p87 = scmp.eq.s32.totalorder %s23, 1
      %p88 = por %p86, %p87
      %p90 = scmp.ne.s32.totalorder %s75, %s89
      %p91 = scmp.eq.s32.totalorder %s23, 0
      %p92 = por %p90, %p91
      %s93 = ssub.s32 %s17, %s24
      %p94 = scmp.eq.s32.totalorder %s93, 0
      %s96 = sadd.s32 %s95, 1
      %s97 = scalar_select %p94, %s95, %s96
      %p100 = pneg %p94
      %p101 = scmp.eq.s32.totalorder %s17, 1
      %p102 = por %p100, %p101
      %p103 = scmp.ne.s32.totalorder %s95, %s98
      %p104 = scmp.eq.s32.totalorder %s17, 0
      %p105 = por %p103, %p104
      %p106 = scmp.ne.s32.totalorder %s95, %s98
      %p107 = scmp.eq.s32.totalorder %s22, 1
      %p108 = por %p106, %p107
      %p109 = scmp.ne.s32.totalorder %s98, %s99
      %p110 = scmp.eq.s32.totalorder %s22, 0
      %p111 = por %p109, %p110
      %p112 = scmp.ne.s32.totalorder %s98, %s99
      %p113 = scmp.eq.s32.totalorder %s23, 1
      %p114 = por %p112, %p113
      %p116 = scmp.ne.s32.totalorder %s99, %s115
      %p117 = scmp.eq.s32.totalorder %s23, 0
      %p118 = por %p116, %p117
      %s119 = ssub.s32 %s17, %s24
      %p120 = scmp.eq.s32.totalorder %s119, 0
      %s122 = sadd.s32 %s121, 1
      %s123 = scalar_select %p120, %s121, %s122
      %p126 = pneg %p120
      %p127 = scmp.eq.s32.totalorder %s17, 1
      %p128 = por %p126, %p127
      %p129 = scmp.ne.s32.totalorder %s121, %s124
      %p130 = scmp.eq.s32.totalorder %s17, 0
      %p131 = por %p129, %p130
      %p132 = scmp.ne.s32.totalorder %s121, %s124
      %p133 = scmp.eq.s32.totalorder %s22, 1
      %p134 = por %p132, %p133
      %p135 = scmp.ne.s32.totalorder %s124, %s125
      %p136 = scmp.eq.s32.totalorder %s22, 0
      %p137 = por %p135, %p136
      %p138 = scmp.ne.s32.totalorder %s124, %s125
      %p139 = scmp.eq.s32.totalorder %s23, 1
      %p140 = por %p138, %p139
      %p142 = scmp.ne.s32.totalorder %s125, %s141
      %p143 = scmp.eq.s32.totalorder %s23, 0
      %p144 = por %p142, %p143
      %p145 = scmp.le.s32.totalorder 1, %s17
      %p146 = scmp.lt.s32.totalorder %s17, 3
      %p147 = pnand %p145, %p146
      %p148 = pneg %p147
      // Predicated region
      $region9: #{tpu_custom_call.1} parent=5 // pred_check
        _
      $region10: #{tpu_custom_call.1} parent=5 // pred_check_branch
        %150 = sbr.rel (%p147) target = $region12
      $region11: #{tpu_custom_call.1} parent=5 // pred_region
        %s151 = ssub.s32 %s17, 1
        // Predicated region
        $region13: #{tpu_custom_call.1} parent=11 // pred_check
          %p152 = pneg %p64
        $region14: #{tpu_custom_call.1} parent=11 // pred_check_branch
          %154 = sbr.rel (%p152) target = $region16
        $region15: #{tpu_custom_call.1} parent=11 // pred_region
          _
        $region16: #{tpu_custom_call.1} parent=11 // pred_fallthru
          _
        // Predicated region
        $region17: #{tpu_custom_call.1} parent=11 // pred_check
          %p155 = pneg %p85
        $region18: #{tpu_custom_call.1} parent=11 // pred_check_branch
          %157 = sbr.rel (%p155) target = $region20
        $region19: #{tpu_custom_call.1} parent=11 // pred_region
          _
        $region20: #{tpu_custom_call.1} parent=11 // pred_fallthru
          _
      $region12: #{tpu_custom_call.1} parent=5 // pred_fallthru
        _
      %p158 = scmp.lt.s32.totalorder %s17, 2
      // Predicated region
      $region21: #{tpu_custom_call.1} parent=5 // pred_check
        %p159 = pneg %p158
      $region22: #{tpu_custom_call.1} parent=5 // pred_check_branch
        %161 = sbr.rel (%p159) target = $region24
      $region23: #{tpu_custom_call.1} parent=5 // pred_region
        // Predicated region
        $region25: #{tpu_custom_call.1} parent=23 // pred_check
          %p162 = pneg %p37
        $region26: #{tpu_custom_call.1} parent=23 // pred_check_branch
          %164 = sbr.rel (%p162) target = $region28
        $region27: #{tpu_custom_call.1} parent=23 // pred_region
          %p165 = scmp.lt.s32.totalorder %s17, 1
          %s166 = scalar_select %p165, %s17, 1
          %s167 = smul.addr %s166, 32
          %s168 = smul.addr %s167, 4
          %s169 = scalar_lea.vmem %s0, %s168
        $region28: #{tpu_custom_call.1} parent=23 // pred_fallthru
          _
      $region24: #{tpu_custom_call.1} parent=5 // pred_fallthru
        _
      %p170 = scmp.le.s32.totalorder 1, %s17
      %p171 = scmp.lt.s32.totalorder %s17, 3
      %p172 = pnand %p170, %p171
      %p173 = pneg %p172
      // Predicated region
      $region29: #{tpu_custom_call.1} parent=5 // pred_check
        _
      $region30: #{tpu_custom_call.1} parent=5 // pred_check_branch
        %175 = sbr.rel (%p172) target = $region32
      $region31: #{tpu_custom_call.1} parent=5 // pred_region
        %s176 = ssub.s32 %s17, 1
        %p177 = scmp.lt.s32.totalorder %s22, 1
        %s178 = scalar_select %p177, %s22, 1
        %s179 = smul.addr %s178, 32
        %s180 = smul.addr %s179, 4
        %s181 = scalar_lea.vmem %s0, %s180
        %p182 = pneg %p43
        %p183 = pneg %p40
        %p184 = pneg %p64
        %p185 = pneg %p61
        %p186 = pneg %p85
        %p187 = pneg %p82
        %p188 = pneg %p111
        %p189 = pneg %p108
        %s190 = sand.u32 %s98, 1
        %s191 = scalar_lea.sflag [#allocation4], %s190
        %s192 = sand.u32 %s98, 1
        %s193 = smul.addr %s192, 128
        %s194 = scalar_lea.vmem [#allocation3], %s193
        %p195 = pneg %p137
        %p196 = pneg %p134
        %s197 = sand.u32 %s124, 1
        %s198 = scalar_lea.sflag [#allocation6], %s197
        %s199 = sand.u32 %s124, 1
        %s200 = smul.addr %s199, 32
        %s201 = scalar_lea.vmem [#allocation5], %s200
        %p202 = scmp.lt.s32.totalorder %s22, 1
        %s203 = scalar_select %p202, %s22, 1
        %s204 = smul.addr %s203, 32
        %s205 = smul.addr %s204, 4
        %s206 = scalar_lea.vmem %s0, %s205
        %v208 = vld [vmem:[%s206] sm:$0xf]
        %v209 = vld [vmem:[%s206 + $0x4] sm:$0xf]
        %v210 = vld [vmem:[%s206 + $0x8] sm:$0xf]
        %v211 = vld [vmem:[%s206 + $0xc] sm:$0xf]
        %v212 = vld [vmem:[%s206 + $0x10] sm:$0xf]
        %v213 = vld [vmem:[%s206 + $0x14] sm:$0xf]
        %v214 = vld [vmem:[%s206 + $0x18] sm:$0xf]
        %v215 = vld [vmem:[%s206 + $0x1c] sm:$0xf]
        %v216 = vld [vmem:[%s206 + $0x20] sm:$0xf]
        %v217 = vld [vmem:[%s206 + $0x24] sm:$0xf]
        %v218 = vld [vmem:[%s206 + $0x28] sm:$0xf]
        %v219 = vld [vmem:[%s206 + $0x2c] sm:$0xf]
        %v220 = vld [vmem:[%s206 + $0x30] sm:$0xf]
        %v221 = vld [vmem:[%s206 + $0x34] sm:$0xf]
        %v222 = vld [vmem:[%s206 + $0x38] sm:$0xf]
        %v223 = vld [vmem:[%s206 + $0x3c] sm:$0xf]
        %v224 = vld [vmem:[%s206 + $0x40] sm:$0xf]
        %v225 = vld [vmem:[%s206 + $0x44] sm:$0xf]
        %v226 = vld [vmem:[%s206 + $0x48] sm:$0xf]
        %v227 = vld [vmem:[%s206 + $0x4c] sm:$0xf]
        %v228 = vld [vmem:[%s206 + $0x50] sm:$0xf]
        %v229 = vld [vmem:[%s206 + $0x54] sm:$0xf]
        %v230 = vld [vmem:[%s206 + $0x58] sm:$0xf]
        %v231 = vld [vmem:[%s206 + $0x5c] sm:$0xf]
        %v232 = vld [vmem:[%s206 + $0x60] sm:$0xf]
        %v233 = vld [vmem:[%s206 + $0x64] sm:$0xf]
        %v234 = vld [vmem:[%s206 + $0x68] sm:$0xf]
        %v235 = vld [vmem:[%s206 + $0x6c] sm:$0xf]
        %v236 = vld [vmem:[%s206 + $0x70] sm:$0xf]
        %v237 = vld [vmem:[%s206 + $0x74] sm:$0xf]
        %v238 = vld [vmem:[%s206 + $0x78] sm:$0xf]
        %v239 = vld [vmem:[%s206 + $0x7c] sm:$0xf]
        %vm240 = vcmask 19456
        %241 = vst.msk [vmem:[#allocation2] sm:$0xf] %vm240, 0
        %242 = vst.msk [vmem:[#allocation2 + $0x4] sm:$0xf] %vm240, 0
        %vm243 = vcmask 16384
        %244 = vst.msk [vmem:[#allocation2 + $0x8] sm:$0x1] %vm243, 0
        %245 = vst.msk [vmem:[#allocation2 + $0xc] sm:$0xf] %vm240, 0
        %246 = vst.msk [vmem:[#allocation2 + $0x10] sm:$0xf] %vm240, 0
        %247 = vst.msk [vmem:[#allocation2 + $0x14] sm:$0x1] %vm243, 0
        %248 = vst.msk [vmem:[#allocation2 + $0x18] sm:$0xf] %vm240, 0
        %249 = vst.msk [vmem:[#allocation2 + $0x1c] sm:$0xf] %vm240, 0
        %250 = vst.msk [vmem:[#allocation2 + $0x20] sm:$0x1] %vm243, 0
        %251 = vst.msk [vmem:[#allocation2 + $0x24] sm:$0xf] %vm240, 0
        %252 = vst.msk [vmem:[#allocation2 + $0x28] sm:$0xf] %vm240, 0
        %253 = vst.msk [vmem:[#allocation2 + $0x2c] sm:$0x1] %vm243, 0
        %254 = vst.msk [vmem:[#allocation2 + $0x30] sm:$0xf] %vm240, 0
        %255 = vst.msk [vmem:[#allocation2 + $0x34] sm:$0xf] %vm240, 0
        %256 = vst.msk [vmem:[#allocation2 + $0x38] sm:$0x1] %vm243, 0
        %257 = vst.msk [vmem:[#allocation2 + $0x3c] sm:$0xf] %vm240, 0
        %258 = vst.msk [vmem:[#allocation2 + $0x40] sm:$0xf] %vm240, 0
        %259 = vst.msk [vmem:[#allocation2 + $0x44] sm:$0x1] %vm243, 0
        %260 = vst.msk [vmem:[#allocation2 + $0x48] sm:$0xf] %vm240, 0
        %261 = vst.msk [vmem:[#allocation2 + $0x4c] sm:$0xf] %vm240, 0
        %262 = vst.msk [vmem:[#allocation2 + $0x50] sm:$0x1] %vm243, 0
        %263 = vst.msk [vmem:[#allocation2 + $0x54] sm:$0xf] %vm240, 0
        %264 = vst.msk [vmem:[#allocation2 + $0x58] sm:$0xf] %vm240, 0
        %265 = vst.msk [vmem:[#allocation2 + $0x5c] sm:$0x1] %vm243, 0
        %266 = vst.msk [vmem:[#allocation2 + $0x60] sm:$0xf] %vm240, 0
        %267 = vst.msk [vmem:[#allocation2 + $0x64] sm:$0xf] %vm240, 0
        %268 = vst.msk [vmem:[#allocation2 + $0x68] sm:$0x1] %vm243, 0
        %269 = vst.msk [vmem:[#allocation2 + $0x6c] sm:$0xf] %vm240, 0
        %270 = vst.msk [vmem:[#allocation2 + $0x70] sm:$0xf] %vm240, 0
        %271 = vst.msk [vmem:[#allocation2 + $0x74] sm:$0x1] %vm243, 0
        %272 = vst.msk [vmem:[#allocation2 + $0x78] sm:$0xf] %vm240, 0
        %273 = vst.msk [vmem:[#allocation2 + $0x7c] sm:$0xf] %vm240, 0
        %274 = vst.msk [vmem:[#allocation2 + $0x80] sm:$0x1] %vm243, 0
        %275 = vst.msk [vmem:[#allocation2 + $0x84] sm:$0xf] %vm240, 0
        %276 = vst.msk [vmem:[#allocation2 + $0x88] sm:$0xf] %vm240, 0
        %277 = vst.msk [vmem:[#allocation2 + $0x8c] sm:$0x1] %vm243, 0
        %278 = vst.msk [vmem:[#allocation2 + $0x90] sm:$0xf] %vm240, 0
        %279 = vst.msk [vmem:[#allocation2 + $0x94] sm:$0xf] %vm240, 0
        %280 = vst.msk [vmem:[#allocation2 + $0x98] sm:$0x1] %vm243, 0
        %281 = vst.msk [vmem:[#allocation2 + $0x9c] sm:$0xf] %vm240, 0
        %282 = vst.msk [vmem:[#allocation2 + $0xa0] sm:$0xf] %vm240, 0
        %283 = vst.msk [vmem:[#allocation2 + $0xa4] sm:$0x1] %vm243, 0
        %284 = vst.msk [vmem:[#allocation2 + $0xa8] sm:$0xf] %vm240, 0
        %285 = vst.msk [vmem:[#allocation2 + $0xac] sm:$0xf] %vm240, 0
        %286 = vst.msk [vmem:[#allocation2 + $0xb0] sm:$0x1] %vm243, 0
        %287 = vst.msk [vmem:[#allocation2 + $0xb4] sm:$0xf] %vm240, 0
        %288 = vst.msk [vmem:[#allocation2 + $0xb8] sm:$0xf] %vm240, 0
        %289 = vst.msk [vmem:[#allocation2 + $0xbc] sm:$0x1] %vm243, 0
        %290 = vst.msk [vmem:[#allocation2 + $0xc0] sm:$0xf] %vm240, 0
        %291 = vst.msk [vmem:[#allocation2 + $0xc4] sm:$0xf] %vm240, 0
        %292 = vst.msk [vmem:[#allocation2 + $0xc8] sm:$0x1] %vm243, 0
        %293 = vst.msk [vmem:[#allocation2 + $0xcc] sm:$0xf] %vm240, 0
        %294 = vst.msk [vmem:[#allocation2 + $0xd0] sm:$0xf] %vm240, 0
        %295 = vst.msk [vmem:[#allocation2 + $0xd4] sm:$0x1] %vm243, 0
        %vm296 = vsmask.f32 256
        %vm297 = vsmask.f32 4368
        %vm298 = vmor %vm296, %vm297
        %v300 = vshrl.u32 %v208, 16
        %v302 = vrot.slane %v300, 7
        %v303 = vshll.u32 %v208, 16
        %v305 = vor.u32 %v302, %v303
        %v306 = vrot.slane %v302, 4
        %v308 = vshrl.u32 %v209, 16
        %v310 = vrot.slane %v308, 7
        %v311 = vshll.u32 %v209, 16
        %v313 = vor.u32 %v310, %v311
        %v314 = vsel %vm298, %v306, %v313
        %v315 = vrot.slane %v310, 4
        %v317 = vshrl.u32 %v210, 16
        %v319 = vrot.slane %v317, 7
        %v320 = vshll.u32 %v210, 16
        %v322 = vor.u32 %v319, %v320
        %v323 = vrot.slane %v319, 4
        %v325 = vshrl.u32 %v211, 16
        %v327 = vrot.slane %v325, 7
        %v328 = vshll.u32 %v211, 16
        %v330 = vor.u32 %v327, %v328
        %v331 = vsel %vm298, %v323, %v330
        %v332 = vrot.slane %v327, 4
        %v334 = vshrl.u32 %v212, 16
        %v336 = vrot.slane %v334, 7
        %v337 = vshll.u32 %v212, 16
        %v339 = vor.u32 %v336, %v337
        %v340 = vrot.slane %v336, 4
        %v342 = vshrl.u32 %v213, 16
        %v344 = vrot.slane %v342, 7
        %v345 = vshll.u32 %v213, 16
        %v347 = vor.u32 %v344, %v345
        %v348 = vsel %vm298, %v340, %v347
        %v349 = vrot.slane %v344, 4
        %v351 = vshrl.u32 %v214, 16
        %v353 = vrot.slane %v351, 7
        %v354 = vshll.u32 %v214, 16
        %v356 = vor.u32 %v353, %v354
        %v357 = vrot.slane %v353, 4
        %v359 = vshrl.u32 %v215, 16
        %v361 = vrot.slane %v359, 7
        %v362 = vshll.u32 %v215, 16
        %v364 = vor.u32 %v361, %v362
        %v365 = vsel %vm298, %v357, %v364
        %v366 = vrot.slane %v361, 4
        %v368 = vshrl.u32 %v216, 16
        %v370 = vrot.slane %v368, 7
        %v371 = vshll.u32 %v216, 16
        %v373 = vor.u32 %v370, %v371
        %v374 = vrot.slane %v370, 4
        %v376 = vshrl.u32 %v217, 16
        %v378 = vrot.slane %v376, 7
        %v379 = vshll.u32 %v217, 16
        %v381 = vor.u32 %v378, %v379
        %v382 = vsel %vm298, %v374, %v381
        %v383 = vrot.slane %v378, 4
        %v385 = vshrl.u32 %v218, 16
        %v387 = vrot.slane %v385, 7
        %v388 = vshll.u32 %v218, 16
        %v390 = vor.u32 %v387, %v388
        %v391 = vrot.slane %v387, 4
        %v393 = vshrl.u32 %v219, 16
        %v395 = vrot.slane %v393, 7
        %v396 = vshll.u32 %v219, 16
        %v398 = vor.u32 %v395, %v396
        %v399 = vsel %vm298, %v391, %v398
        %v400 = vrot.slane %v395, 4
        %v402 = vshrl.u32 %v220, 16
        %v404 = vrot.slane %v402, 7
        %v405 = vshll.u32 %v220, 16
        %v407 = vor.u32 %v404, %v405
        %v408 = vrot.slane %v404, 4
        %v410 = vshrl.u32 %v221, 16
        %v412 = vrot.slane %v410, 7
        %v413 = vshll.u32 %v221, 16
        %v415 = vor.u32 %v412, %v413
        %v416 = vsel %vm298, %v408, %v415
        %v417 = vrot.slane %v412, 4
        %v419 = vshrl.u32 %v222, 16
        %v421 = vrot.slane %v419, 7
        %v422 = vshll.u32 %v222, 16
        %v424 = vor.u32 %v421, %v422
        %v425 = vrot.slane %v421, 4
        %v427 = vshrl.u32 %v223, 16
        %v429 = vrot.slane %v427, 7
        %v430 = vshll.u32 %v223, 16
        %v432 = vor.u32 %v429, %v430
        %v433 = vsel %vm298, %v425, %v432
        %v434 = vrot.slane %v429, 4
        %v436 = vshrl.u32 %v224, 16
        %v438 = vrot.slane %v436, 7
        %v439 = vshll.u32 %v224, 16
        %v441 = vor.u32 %v438, %v439
        %v442 = vrot.slane %v438, 4
        %v444 = vshrl.u32 %v225, 16
        %v446 = vrot.slane %v444, 7
        %v447 = vshll.u32 %v225, 16
        %v449 = vor.u32 %v446, %v447
        %v450 = vsel %vm298, %v442, %v449
        %v451 = vrot.slane %v446, 4
        %v453 = vshrl.u32 %v226, 16
        %v455 = vrot.slane %v453, 7
        %v456 = vshll.u32 %v226, 16
        %v458 = vor.u32 %v455, %v456
        %v459 = vrot.slane %v455, 4
        %v461 = vshrl.u32 %v227, 16
        %v463 = vrot.slane %v461, 7
        %v464 = vshll.u32 %v227, 16
        %v466 = vor.u32 %v463, %v464
        %v467 = vsel %vm298, %v459, %v466
        %v468 = vrot.slane %v463, 4
        %v470 = vshrl.u32 %v228, 16
        %v472 = vrot.slane %v470, 7
        %v473 = vshll.u32 %v228, 16
        %v475 = vor.u32 %v472, %v473
        %v476 = vrot.slane %v472, 4
        %v478 = vshrl.u32 %v229, 16
        %v480 = vrot.slane %v478, 7
        %v481 = vshll.u32 %v229, 16
        %v483 = vor.u32 %v480, %v481
        %v484 = vsel %vm298, %v476, %v483
        %v485 = vrot.slane %v480, 4
        %v487 = vshrl.u32 %v230, 16
        %v489 = vrot.slane %v487, 7
        %v490 = vshll.u32 %v230, 16
        %v492 = vor.u32 %v489, %v490
        %v493 = vrot.slane %v489, 4
        %v495 = vshrl.u32 %v231, 16
        %v497 = vrot.slane %v495, 7
        %v498 = vshll.u32 %v231, 16
        %v500 = vor.u32 %v497, %v498
        %v501 = vsel %vm298, %v493, %v500
        %v502 = vrot.slane %v497, 4
        %v504 = vshrl.u32 %v232, 16
        %v506 = vrot.slane %v504, 7
        %v507 = vshll.u32 %v232, 16
        %v509 = vor.u32 %v506, %v507
        %v510 = vrot.slane %v506, 4
        %v512 = vshrl.u32 %v233, 16
        %v514 = vrot.slane %v512, 7
        %v515 = vshll.u32 %v233, 16
        %v517 = vor.u32 %v514, %v515
        %v518 = vsel %vm298, %v510, %v517
        %v519 = vrot.slane %v514, 4
        %v521 = vshrl.u32 %v234, 16
        %v523 = vrot.slane %v521, 7
        %v524 = vshll.u32 %v234, 16
        %v526 = vor.u32 %v523, %v524
        %v527 = vrot.slane %v523, 4
        %v529 = vshrl.u32 %v235, 16
        %v531 = vrot.slane %v529, 7
        %v532 = vshll.u32 %v235, 16
        %v534 = vor.u32 %v531, %v532
        %v535 = vsel %vm298, %v527, %v534
        %v536 = vrot.slane %v531, 4
        %v538 = vshrl.u32 %v236, 16
        %v540 = vrot.slane %v538, 7
        %v541 = vshll.u32 %v236, 16
        %v543 = vor.u32 %v540, %v541
        %v544 = vrot.slane %v540, 4
        %v546 = vshrl.u32 %v237, 16
        %v548 = vrot.slane %v546, 7
        %v549 = vshll.u32 %v237, 16
        %v551 = vor.u32 %v548, %v549
        %v552 = vsel %vm298, %v544, %v551
        %v553 = vrot.slane %v548, 4
        %v555 = vshrl.u32 %v238, 16
        %v557 = vrot.slane %v555, 7
        %v558 = vshll.u32 %v238, 16
        %v560 = vor.u32 %v557, %v558
        %v561 = vrot.slane %v557, 4
        %v563 = vshrl.u32 %v239, 16
        %v565 = vrot.slane %v563, 7
        %v566 = vshll.u32 %v239, 16
        %v568 = vor.u32 %v565, %v566
        %v569 = vsel %vm298, %v561, %v568
        %v570 = vrot.slane %v565, 4
        %s619 = scalar_lea.vmem [#allocation2], 12
        %vm620 = vcmask 19456
        %vm621 = vsmask.f32 7938
        %vm622 = vmand %vm620, %vm621
        %v623 = vld [vmem:[%s619] sm:$0xf]
        %v624 = vsel %vm622, %v305, %v623
        %625 = vst [vmem:[%s619] sm:$0xf] %v624
        %626 = vst.msk [vmem:[%s619 + $0x4] sm:$0xf] %vm240, %v314
        %vm627 = vcmask 16384
        %vm628 = vmand %vm627, %vm296
        %v629 = vld [vmem:[%s619 + $0x8] sm:$0x1]
        %v630 = vsel %vm628, %v315, %v629
        %631 = vst [vmem:[%s619 + $0x8] sm:$0x1] %v630
        %v632 = vld [vmem:[%s619 + $0xc] sm:$0xf]
        %v633 = vsel %vm622, %v322, %v632
        %634 = vst [vmem:[%s619 + $0xc] sm:$0xf] %v633
        %635 = vst.msk [vmem:[%s619 + $0x10] sm:$0xf] %vm240, %v331
        %v636 = vld [vmem:[%s619 + $0x14] sm:$0x1]
        %v637 = vsel %vm628, %v332, %v636
        %638 = vst [vmem:[%s619 + $0x14] sm:$0x1] %v637
        %v639 = vld [vmem:[%s619 + $0x18] sm:$0xf]
        %v640 = vsel %vm622, %v339, %v639
        %641 = vst [vmem:[%s619 + $0x18] sm:$0xf] %v640
        %642 = vst.msk [vmem:[%s619 + $0x1c] sm:$0xf] %vm240, %v348
        %v643 = vld [vmem:[%s619 + $0x20] sm:$0x1]
        %v644 = vsel %vm628, %v349, %v643
        %645 = vst [vmem:[%s619 + $0x20] sm:$0x1] %v644
        %v646 = vld [vmem:[%s619 + $0x24] sm:$0xf]
        %v647 = vsel %vm622, %v356, %v646
        %648 = vst [vmem:[%s619 + $0x24] sm:$0xf] %v647
        %649 = vst.msk [vmem:[%s619 + $0x28] sm:$0xf] %vm240, %v365
        %v650 = vld [vmem:[%s619 + $0x2c] sm:$0x1]
        %v651 = vsel %vm628, %v366, %v650
        %652 = vst [vmem:[%s619 + $0x2c] sm:$0x1] %v651
        %v653 = vld [vmem:[%s619 + $0x30] sm:$0xf]
        %v654 = vsel %vm622, %v373, %v653
        %655 = vst [vmem:[%s619 + $0x30] sm:$0xf] %v654
        %656 = vst.msk [vmem:[%s619 + $0x34] sm:$0xf] %vm240, %v382
        %v657 = vld [vmem:[%s619 + $0x38] sm:$0x1]
        %v658 = vsel %vm628, %v383, %v657
        %659 = vst [vmem:[%s619 + $0x38] sm:$0x1] %v658
        %v660 = vld [vmem:[%s619 + $0x3c] sm:$0xf]
        %v661 = vsel %vm622, %v390, %v660
        %662 = vst [vmem:[%s619 + $0x3c] sm:$0xf] %v661
        %663 = vst.msk [vmem:[%s619 + $0x40] sm:$0xf] %vm240, %v399
        %v664 = vld [vmem:[%s619 + $0x44] sm:$0x1]
        %v665 = vsel %vm628, %v400, %v664
        %666 = vst [vmem:[%s619 + $0x44] sm:$0x1] %v665
        %v667 = vld [vmem:[%s619 + $0x48] sm:$0xf]
        %v668 = vsel %vm622, %v407, %v667
        %669 = vst [vmem:[%s619 + $0x48] sm:$0xf] %v668
        %670 = vst.msk [vmem:[%s619 + $0x4c] sm:$0xf] %vm240, %v416
        %v671 = vld [vmem:[%s619 + $0x50] sm:$0x1]
        %v672 = vsel %vm628, %v417, %v671
        %673 = vst [vmem:[%s619 + $0x50] sm:$0x1] %v672
        %v674 = vld [vmem:[%s619 + $0x54] sm:$0xf]
        %v675 = vsel %vm622, %v424, %v674
        %676 = vst [vmem:[%s619 + $0x54] sm:$0xf] %v675
        %677 = vst.msk [vmem:[%s619 + $0x58] sm:$0xf] %vm240, %v433
        %v678 = vld [vmem:[%s619 + $0x5c] sm:$0x1]
        %v679 = vsel %vm628, %v434, %v678
        %680 = vst [vmem:[%s619 + $0x5c] sm:$0x1] %v679
        %v681 = vld [vmem:[%s619 + $0x60] sm:$0xf]
        %v682 = vsel %vm622, %v441, %v681
        %683 = vst [vmem:[%s619 + $0x60] sm:$0xf] %v682
        %684 = vst.msk [vmem:[%s619 + $0x64] sm:$0xf] %vm240, %v450
        %v685 = vld [vmem:[%s619 + $0x68] sm:$0x1]
        %v686 = vsel %vm628, %v451, %v685
        %687 = vst [vmem:[%s619 + $0x68] sm:$0x1] %v686
        %v688 = vld [vmem:[%s619 + $0x6c] sm:$0xf]
        %v689 = vsel %vm622, %v458, %v688
        %690 = vst [vmem:[%s619 + $0x6c] sm:$0xf] %v689
        %691 = vst.msk [vmem:[%s619 + $0x70] sm:$0xf] %vm240, %v467
        %v692 = vld [vmem:[%s619 + $0x74] sm:$0x1]
        %v693 = vsel %vm628, %v468, %v692
        %694 = vst [vmem:[%s619 + $0x74] sm:$0x1] %v693
        %v695 = vld [vmem:[%s619 + $0x78] sm:$0xf]
        %v696 = vsel %vm622, %v475, %v695
        %697 = vst [vmem:[%s619 + $0x78] sm:$0xf] %v696
        %698 = vst.msk [vmem:[%s619 + $0x7c] sm:$0xf] %vm240, %v484
        %v699 = vld [vmem:[%s619 + $0x80] sm:$0x1]
        %v700 = vsel %vm628, %v485, %v699
        %701 = vst [vmem:[%s619 + $0x80] sm:$0x1] %v700
        %v702 = vld [vmem:[%s619 + $0x84] sm:$0xf]
        %v703 = vsel %vm622, %v492, %v702
        %704 = vst [vmem:[%s619 + $0x84] sm:$0xf] %v703
        %705 = vst.msk [vmem:[%s619 + $0x88] sm:$0xf] %vm240, %v501
        %v706 = vld [vmem:[%s619 + $0x8c] sm:$0x1]
        %v707 = vsel %vm628, %v502, %v706
        %708 = vst [vmem:[%s619 + $0x8c] sm:$0x1] %v707
        %v709 = vld [vmem:[%s619 + $0x90] sm:$0xf]
        %v710 = vsel %vm622, %v509, %v709
        %711 = vst [vmem:[%s619 + $0x90] sm:$0xf] %v710
        %712 = vst.msk [vmem:[%s619 + $0x94] sm:$0xf] %vm240, %v518
        %v713 = vld [vmem:[%s619 + $0x98] sm:$0x1]
        %v714 = vsel %vm628, %v519, %v713
        %715 = vst [vmem:[%s619 + $0x98] sm:$0x1] %v714
        %v716 = vld [vmem:[%s619 + $0x9c] sm:$0xf]
        %v717 = vsel %vm622, %v526, %v716
        %718 = vst [vmem:[%s619 + $0x9c] sm:$0xf] %v717
        %719 = vst.msk [vmem:[%s619 + $0xa0] sm:$0xf] %vm240, %v535
        %v720 = vld [vmem:[%s619 + $0xa4] sm:$0x1]
        %v721 = vsel %vm628, %v536, %v720
        %722 = vst [vmem:[%s619 + $0xa4] sm:$0x1] %v721
        %v723 = vld [vmem:[%s619 + $0xa8] sm:$0xf]
        %v724 = vsel %vm622, %v543, %v723
        %725 = vst [vmem:[%s619 + $0xa8] sm:$0xf] %v724
        %726 = vst.msk [vmem:[%s619 + $0xac] sm:$0xf] %vm240, %v552
        %v727 = vld [vmem:[%s619 + $0xb0] sm:$0x1]
        %v728 = vsel %vm628, %v553, %v727
        %729 = vst [vmem:[%s619 + $0xb0] sm:$0x1] %v728
        %v730 = vld [vmem:[%s619 + $0xb4] sm:$0xf]
        %v731 = vsel %vm622, %v560, %v730
        %732 = vst [vmem:[%s619 + $0xb4] sm:$0xf] %v731
        %733 = vst.msk [vmem:[%s619 + $0xb8] sm:$0xf] %vm240, %v569
        %v734 = vld [vmem:[%s619 + $0xbc] sm:$0x1]
        %v735 = vsel %vm628, %v570, %v734
        %736 = vst [vmem:[%s619 + $0xbc] sm:$0x1] %v735
        %v737 = vld [vmem:[#allocation2] sm:$0xf]
        %v738 = vld [vmem:[#allocation2 + $0x4] sm:$0xf]
        %v739 = vld [vmem:[#allocation2 + $0xc] sm:$0xf]
        %v740 = vld [vmem:[#allocation2 + $0x10] sm:$0xf]
        %v741 = vld [vmem:[#allocation2 + $0x18] sm:$0xf]
        %v742 = vld [vmem:[#allocation2 + $0x1c] sm:$0xf]
        %v743 = vld [vmem:[#allocation2 + $0x24] sm:$0xf]
        %v744 = vld [vmem:[#allocation2 + $0x28] sm:$0xf]
        %v745 = vld [vmem:[#allocation2 + $0x30] sm:$0xf]
        %v746 = vld [vmem:[#allocation2 + $0x34] sm:$0xf]
        %v747 = vld [vmem:[#allocation2 + $0x3c] sm:$0xf]
        %v748 = vld [vmem:[#allocation2 + $0x40] sm:$0xf]
        %v749 = vld [vmem:[#allocation2 + $0x48] sm:$0xf]
        %v750 = vld [vmem:[#allocation2 + $0x4c] sm:$0xf]
        %v751 = vld [vmem:[#allocation2 + $0x54] sm:$0xf]
        %v752 = vld [vmem:[#allocation2 + $0x58] sm:$0xf]
        %v753 = vld [vmem:[#allocation2 + $0x60] sm:$0xf]
        %v754 = vld [vmem:[#allocation2 + $0x64] sm:$0xf]
        %v755 = vld [vmem:[#allocation2 + $0x6c] sm:$0xf]
        %v756 = vld [vmem:[#allocation2 + $0x70] sm:$0xf]
        %v757 = vld [vmem:[#allocation2 + $0x78] sm:$0xf]
        %v758 = vld [vmem:[#allocation2 + $0x7c] sm:$0xf]
        %v759 = vld [vmem:[#allocation2 + $0x84] sm:$0xf]
        %v760 = vld [vmem:[#allocation2 + $0x88] sm:$0xf]
        %v761 = vld [vmem:[#allocation2 + $0x90] sm:$0xf]
        %v762 = vld [vmem:[#allocation2 + $0x94] sm:$0xf]
        %v763 = vld [vmem:[#allocation2 + $0x9c] sm:$0xf]
        %v764 = vld [vmem:[#allocation2 + $0xa0] sm:$0xf]
        %v765 = vld [vmem:[#allocation2 + $0xa8] sm:$0xf]
        %v766 = vld [vmem:[#allocation2 + $0xac] sm:$0xf]
        %v767 = vld [vmem:[#allocation2 + $0xb4] sm:$0xf]
        %v768 = vld [vmem:[#allocation2 + $0xb8] sm:$0xf]
        %v769 = vld [vmem:[%s1] sm:$0x3]
        %v770 = vld [vmem:[#allocation2 + $0x8] sm:$0x1]
        %v771 = vld [vmem:[#allocation2 + $0x14] sm:$0x1]
        %v772 = vld [vmem:[#allocation2 + $0x20] sm:$0x1]
        %v773 = vld [vmem:[#allocation2 + $0x2c] sm:$0x1]
        %v774 = vld [vmem:[#allocation2 + $0x38] sm:$0x1]
        %v775 = vld [vmem:[#allocation2 + $0x44] sm:$0x1]
        %v776 = vld [vmem:[#allocation2 + $0x50] sm:$0x1]
        %v777 = vld [vmem:[#allocation2 + $0x5c] sm:$0x1]
        %v778 = vld [vmem:[#allocation2 + $0x68] sm:$0x1]
        %v779 = vld [vmem:[#allocation2 + $0x74] sm:$0x1]
        %v780 = vld [vmem:[#allocation2 + $0x80] sm:$0x1]
        %v781 = vld [vmem:[#allocation2 + $0x8c] sm:$0x1]
        %v782 = vld [vmem:[#allocation2 + $0x98] sm:$0x1]
        %v783 = vld [vmem:[#allocation2 + $0xa4] sm:$0x1]
        %v784 = vld [vmem:[#allocation2 + $0xb0] sm:$0x1]
        %v785 = vld [vmem:[#allocation2 + $0xbc] sm:$0x1]
        %vm786 = vsmask.f32 3328
        %vm787 = vsmask.f32 7440
        %vm788 = vmor %vm786, %vm787
        %v790 = vshrl.u32 %v737, 16
        %v792 = vrot.slane %v790, 4
        %v793 = vshll.u32 %v737, 16
        %v795 = vrot.slane %v793, 5
        %v796 = vor.u32 %v792, %v795
        %v797 = vrot.slane %v796, 4
        %v799 = vshll.u32 %v738, 16
        %v801 = vrot.slane %v799, 5
        %v802 = vsel %vm788, %v797, %v801
        %v803 = vshrl.u32 %v738, 16
        %v805 = vrot.slane %v803, 4
        %v806 = vor.u32 %v805, %v801
        %v807 = vrot.slane %v806, 4
        %v809 = vshll.u32 %v770, 16
        %v811 = vrot.slane %v809, 5
        %v812 = vsel %vm788, %v807, %v811
        %v814 = vshrl.u32 %v739, 16
        %v816 = vrot.slane %v814, 4
        %v817 = vshll.u32 %v739, 16
        %v819 = vrot.slane %v817, 5
        %v820 = vor.u32 %v816, %v819
        %v821 = vrot.slane %v820, 4
        %v823 = vshll.u32 %v740, 16
        %v825 = vrot.slane %v823, 5
        %v826 = vsel %vm788, %v821, %v825
        %v827 = vshrl.u32 %v740, 16
        %v829 = vrot.slane %v827, 4
        %v830 = vor.u32 %v829, %v825
        %v831 = vrot.slane %v830, 4
        %v833 = vshll.u32 %v771, 16
        %v835 = vrot.slane %v833, 5
        %v836 = vsel %vm788, %v831, %v835
        %v838 = vshrl.u32 %v741, 16
        %v840 = vrot.slane %v838, 4
        %v841 = vshll.u32 %v741, 16
        %v843 = vrot.slane %v841, 5
        %v844 = vor.u32 %v840, %v843
        %v845 = vrot.slane %v844, 4
        %v847 = vshll.u32 %v742, 16
        %v849 = vrot.slane %v847, 5
        %v850 = vsel %vm788, %v845, %v849
        %v851 = vshrl.u32 %v742, 16
        %v853 = vrot.slane %v851, 4
        %v854 = vor.u32 %v853, %v849
        %v855 = vrot.slane %v854, 4
        %v857 = vshll.u32 %v772, 16
        %v859 = vrot.slane %v857, 5
        %v860 = vsel %vm788, %v855, %v859
        %v862 = vshrl.u32 %v743, 16
        %v864 = vrot.slane %v862, 4
        %v865 = vshll.u32 %v743, 16
        %v867 = vrot.slane %v865, 5
        %v868 = vor.u32 %v864, %v867
        %v869 = vrot.slane %v868, 4
        %v871 = vshll.u32 %v744, 16
        %v873 = vrot.slane %v871, 5
        %v874 = vsel %vm788, %v869, %v873
        %v875 = vshrl.u32 %v744, 16
        %v877 = vrot.slane %v875, 4
        %v878 = vor.u32 %v877, %v873
        %v879 = vrot.slane %v878, 4
        %v881 = vshll.u32 %v773, 16
        %v883 = vrot.slane %v881, 5
        %v884 = vsel %vm788, %v879, %v883
        %v886 = vshrl.u32 %v745, 16
        %v888 = vrot.slane %v886, 4
        %v889 = vshll.u32 %v745, 16
        %v891 = vrot.slane %v889, 5
        %v892 = vor.u32 %v888, %v891
        %v893 = vrot.slane %v892, 4
        %v895 = vshll.u32 %v746, 16
        %v897 = vrot.slane %v895, 5
        %v898 = vsel %vm788, %v893, %v897
        %v899 = vshrl.u32 %v746, 16
        %v901 = vrot.slane %v899, 4
        %v902 = vor.u32 %v901, %v897
        %v903 = vrot.slane %v902, 4
        %v905 = vshll.u32 %v774, 16
        %v907 = vrot.slane %v905, 5
        %v908 = vsel %vm788, %v903, %v907
        %v910 = vshrl.u32 %v747, 16
        %v912 = vrot.slane %v910, 4
        %v913 = vshll.u32 %v747, 16
        %v915 = vrot.slane %v913, 5
        %v916 = vor.u32 %v912, %v915
        %v917 = vrot.slane %v916, 4
        %v919 = vshll.u32 %v748, 16
        %v921 = vrot.slane %v919, 5
        %v922 = vsel %vm788, %v917, %v921
        %v923 = vshrl.u32 %v748, 16
        %v925 = vrot.slane %v923, 4
        %v926 = vor.u32 %v925, %v921
        %v927 = vrot.slane %v926, 4
        %v929 = vshll.u32 %v775, 16
        %v931 = vrot.slane %v929, 5
        %v932 = vsel %vm788, %v927, %v931
        %v934 = vshrl.u32 %v749, 16
        %v936 = vrot.slane %v934, 4
        %v937 = vshll.u32 %v749, 16
        %v939 = vrot.slane %v937, 5
        %v940 = vor.u32 %v936, %v939
        %v941 = vrot.slane %v940, 4
        %v943 = vshll.u32 %v750, 16
        %v945 = vrot.slane %v943, 5
        %v946 = vsel %vm788, %v941, %v945
        %v947 = vshrl.u32 %v750, 16
        %v949 = vrot.slane %v947, 4
        %v950 = vor.u32 %v949, %v945
        %v951 = vrot.slane %v950, 4
        %v953 = vshll.u32 %v776, 16
        %v955 = vrot.slane %v953, 5
        %v956 = vsel %vm788, %v951, %v955
        %v958 = vshrl.u32 %v751, 16
        %v960 = vrot.slane %v958, 4
        %v961 = vshll.u32 %v751, 16
        %v963 = vrot.slane %v961, 5
        %v964 = vor.u32 %v960, %v963
        %v965 = vrot.slane %v964, 4
        %v967 = vshll.u32 %v752, 16
        %v969 = vrot.slane %v967, 5
        %v970 = vsel %vm788, %v965, %v969
        %v971 = vshrl.u32 %v752, 16
        %v973 = vrot.slane %v971, 4
        %v974 = vor.u32 %v973, %v969
        %v975 = vrot.slane %v974, 4
        %v977 = vshll.u32 %v777, 16
        %v979 = vrot.slane %v977, 5
        %v980 = vsel %vm788, %v975, %v979
        %v982 = vshrl.u32 %v753, 16
        %v984 = vrot.slane %v982, 4
        %v985 = vshll.u32 %v753, 16
        %v987 = vrot.slane %v985, 5
        %v988 = vor.u32 %v984, %v987
        %v989 = vrot.slane %v988, 4
        %v991 = vshll.u32 %v754, 16
        %v993 = vrot.slane %v991, 5
        %v994 = vsel %vm788, %v989, %v993
        %v995 = vshrl.u32 %v754, 16
        %v997 = vrot.slane %v995, 4
        %v998 = vor.u32 %v997, %v993
        %v999 = vrot.slane %v998, 4
        %v1001 = vshll.u32 %v778, 16
        %v1003 = vrot.slane %v1001, 5
        %v1004 = vsel %vm788, %v999, %v1003
        %v1006 = vshrl.u32 %v755, 16
        %v1008 = vrot.slane %v1006, 4
        %v1009 = vshll.u32 %v755, 16
        %v1011 = vrot.slane %v1009, 5
        %v1012 = vor.u32 %v1008, %v1011
        %v1013 = vrot.slane %v1012, 4
        %v1015 = vshll.u32 %v756, 16
        %v1017 = vrot.slane %v1015, 5
        %v1018 = vsel %vm788, %v1013, %v1017
        %v1019 = vshrl.u32 %v756, 16
        %v1021 = vrot.slane %v1019, 4
        %v1022 = vor.u32 %v1021, %v1017
        %v1023 = vrot.slane %v1022, 4
        %v1025 = vshll.u32 %v779, 16
        %v1027 = vrot.slane %v1025, 5
        %v1028 = vsel %vm788, %v1023, %v1027
        %v1030 = vshrl.u32 %v757, 16
        %v1032 = vrot.slane %v1030, 4
        %v1033 = vshll.u32 %v757, 16
        %v1035 = vrot.slane %v1033, 5
        %v1036 = vor.u32 %v1032, %v1035
        %v1037 = vrot.slane %v1036, 4
        %v1039 = vshll.u32 %v758, 16
        %v1041 = vrot.slane %v1039, 5
        %v1042 = vsel %vm788, %v1037, %v1041
        %v1043 = vshrl.u32 %v758, 16
        %v1045 = vrot.slane %v1043, 4
        %v1046 = vor.u32 %v1045, %v1041
        %v1047 = vrot.slane %v1046, 4
        %v1049 = vshll.u32 %v780, 16
        %v1051 = vrot.slane %v1049, 5
        %v1052 = vsel %vm788, %v1047, %v1051
        %v1054 = vshrl.u32 %v759, 16
        %v1056 = vrot.slane %v1054, 4
        %v1057 = vshll.u32 %v759, 16
        %v1059 = vrot.slane %v1057, 5
        %v1060 = vor.u32 %v1056, %v1059
        %v1061 = vrot.slane %v1060, 4
        %v1063 = vshll.u32 %v760, 16
        %v1065 = vrot.slane %v1063, 5
        %v1066 = vsel %vm788, %v1061, %v1065
        %v1067 = vshrl.u32 %v760, 16
        %v1069 = vrot.slane %v1067, 4
        %v1070 = vor.u32 %v1069, %v1065
        %v1071 = vrot.slane %v1070, 4
        %v1073 = vshll.u32 %v781, 16
        %v1075 = vrot.slane %v1073, 5
        %v1076 = vsel %vm788, %v1071, %v1075
        %v1078 = vshrl.u32 %v761, 16
        %v1080 = vrot.slane %v1078, 4
        %v1081 = vshll.u32 %v761, 16
        %v1083 = vrot.slane %v1081, 5
        %v1084 = vor.u32 %v1080, %v1083
        %v1085 = vrot.slane %v1084, 4
        %v1087 = vshll.u32 %v762, 16
        %v1089 = vrot.slane %v1087, 5
        %v1090 = vsel %vm788, %v1085, %v1089
        %v1091 = vshrl.u32 %v762, 16
        %v1093 = vrot.slane %v1091, 4
        %v1094 = vor.u32 %v1093, %v1089
        %v1095 = vrot.slane %v1094, 4
        %v1097 = vshll.u32 %v782, 16
        %v1099 = vrot.slane %v1097, 5
        %v1100 = vsel %vm788, %v1095, %v1099
        %v1102 = vshrl.u32 %v763, 16
        %v1104 = vrot.slane %v1102, 4
        %v1105 = vshll.u32 %v763, 16
        %v1107 = vrot.slane %v1105, 5
        %v1108 = vor.u32 %v1104, %v1107
        %v1109 = vrot.slane %v1108, 4
        %v1111 = vshll.u32 %v764, 16
        %v1113 = vrot.slane %v1111, 5
        %v1114 = vsel %vm788, %v1109, %v1113
        %v1115 = vshrl.u32 %v764, 16
        %v1117 = vrot.slane %v1115, 4
        %v1118 = vor.u32 %v1117, %v1113
        %v1119 = vrot.slane %v1118, 4
        %v1121 = vshll.u32 %v783, 16
        %v1123 = vrot.slane %v1121, 5
        %v1124 = vsel %vm788, %v1119, %v1123
        %v1126 = vshrl.u32 %v765, 16
        %v1128 = vrot.slane %v1126, 4
        %v1129 = vshll.u32 %v765, 16
        %v1131 = vrot.slane %v1129, 5
        %v1132 = vor.u32 %v1128, %v1131
        %v1133 = vrot.slane %v1132, 4
        %v1135 = vshll.u32 %v766, 16
        %v1137 = vrot.slane %v1135, 5
        %v1138 = vsel %vm788, %v1133, %v1137
        %v1139 = vshrl.u32 %v766, 16
        %v1141 = vrot.slane %v1139, 4
        %v1142 = vor.u32 %v1141, %v1137
        %v1143 = vrot.slane %v1142, 4
        %v1145 = vshll.u32 %v784, 16
        %v1147 = vrot.slane %v1145, 5
        %v1148 = vsel %vm788, %v1143, %v1147
        %v1150 = vshrl.u32 %v767, 16
        %v1152 = vrot.slane %v1150, 4
        %v1153 = vshll.u32 %v767, 16
        %v1155 = vrot.slane %v1153, 5
        %v1156 = vor.u32 %v1152, %v1155
        %v1157 = vrot.slane %v1156, 4
        %v1159 = vshll.u32 %v768, 16
        %v1161 = vrot.slane %v1159, 5
        %v1162 = vsel %vm788, %v1157, %v1161
        %v1163 = vshrl.u32 %v768, 16
        %v1165 = vrot.slane %v1163, 4
        %v1166 = vor.u32 %v1165, %v1161
        %v1167 = vrot.slane %v1166, 4
        %v1169 = vshll.u32 %v785, 16
        %v1171 = vrot.slane %v1169, 5
        %v1172 = vsel %vm788, %v1167, %v1171
        %s1173 = scalar_lea.vmem %s1, 2
        %v1174 = vld [vmem:[%s1173] sm:$0x3]
        %v1175 = vunpack.c.l.b16 %v802
        %v1176 = vunpack.c.l.b16 %v812
        %v1177 = vunpack.c.l.b16 %v826
        %v1178 = vunpack.c.l.b16 %v836
        %v1179 = vunpack.c.l.b16 %v850
        %v1180 = vunpack.c.l.b16 %v860
        %v1181 = vunpack.c.l.b16 %v874
        %v1182 = vunpack.c.l.b16 %v884
        %v1183 = vunpack.c.l.b16 %v898
        %v1184 = vunpack.c.l.b16 %v908
        %v1185 = vunpack.c.l.b16 %v922
        %v1186 = vunpack.c.l.b16 %v932
        %v1187 = vunpack.c.l.b16 %v946
        %v1188 = vunpack.c.l.b16 %v956
        %v1189 = vunpack.c.l.b16 %v970
        %v1190 = vunpack.c.l.b16 %v980
        %v1191 = vunpack.c.l.b16 %v994
        %v1192 = vunpack.c.l.b16 %v1004
        %v1193 = vunpack.c.l.b16 %v1018
        %v1194 = vunpack.c.l.b16 %v1028
        %v1195 = vunpack.c.l.b16 %v1042
        %v1196 = vunpack.c.l.b16 %v1052
        %v1197 = vunpack.c.l.b16 %v1066
        %v1198 = vunpack.c.l.b16 %v1076
        %v1199 = vunpack.c.l.b16 %v1090
        %v1200 = vunpack.c.l.b16 %v1100
        %v1201 = vunpack.c.l.b16 %v1114
        %v1202 = vunpack.c.l.b16 %v1124
        %v1203 = vunpack.c.l.b16 %v1138
        %v1204 = vunpack.c.l.b16 %v1148
        %v1205 = vunpack.c.l.b16 %v1162
        %v1206 = vunpack.c.l.b16 %v1172
        %v1207 = vpack.c.b16 %v1176, %v1175
        %v1208 = vpack.c.b16 %v1178, %v1177
        %v1209 = vpack.c.b16 %v1180, %v1179
        %v1210 = vpack.c.b16 %v1182, %v1181
        %v1211 = vpack.c.b16 %v1184, %v1183
        %v1212 = vpack.c.b16 %v1186, %v1185
        %v1213 = vpack.c.b16 %v1188, %v1187
        %v1214 = vpack.c.b16 %v1190, %v1189
        %v1215 = vpack.c.b16 %v1192, %v1191
        %v1216 = vpack.c.b16 %v1194, %v1193
        %v1217 = vpack.c.b16 %v1196, %v1195
        %v1218 = vpack.c.b16 %v1198, %v1197
        %v1219 = vpack.c.b16 %v1200, %v1199
        %v1220 = vpack.c.b16 %v1202, %v1201
        %v1221 = vpack.c.b16 %v1204, %v1203
        %v1222 = vpack.c.b16 %v1206, %v1205
        %vm1223 = vcmask 23552
        %v1225 = vsel %vm1223, %v1207, 0
        %v1228 = vsel %vm1223, %v1208, 0
        %v1231 = vsel %vm1223, %v1209, 0
        %v1234 = vsel %vm1223, %v1210, 0
        %v1237 = vsel %vm1223, %v1211, 0
        %v1240 = vsel %vm1223, %v1212, 0
        %v1243 = vsel %vm1223, %v1213, 0
        %v1246 = vsel %vm1223, %v1214, 0
        %v1249 = vsel %vm1223, %v1215, 0
        %v1252 = vsel %vm1223, %v1216, 0
        %v1255 = vsel %vm1223, %v1217, 0
        %v1258 = vsel %vm1223, %v1218, 0
        %v1261 = vsel %vm1223, %v1219, 0
        %v1264 = vsel %vm1223, %v1220, 0
        %v1267 = vsel %vm1223, %v1221, 0
        %v1270 = vsel %vm1223, %v1222, 0
        %vm1272 = vcmask 1040384
        %vm1273 = vcmask 1041408
        %v1274 = vsel %vm1272, 4294967295, 65535
        %v1275 = vsel %vm1273, %v1274, 0
        %v1277 = vand.u32 %v1174, %v1275
        %1279 = vmatprep.subr.bf16.mxu0 0
        %1280 = vmatpush1.bf16.msra.mxu0 %v1277
        %1281 = vmatprep.subr.bf16.mxu0 0
        %1282 = vmatpush1.bf16.msra.mxu0 0
        %1283 = vmatprep.subr.bf16.mxu0 0
        %1284 = vmatpush1.bf16.msra.mxu0 0
        %1285 = vmatprep.subr.bf16.mxu0 0
        %1286 = vmatpush1.bf16.msra.mxu0 0
        %1287 = vmatprep.subr.bf16.mxu0 0
        %1288 = vmatpush1.bf16.msra.mxu0 0
        %1289 = vmatprep.subr.bf16.mxu0 0
        %1290 = vmatpush1.bf16.msra.mxu0 0
        %1291 = vmatprep.subr.bf16.mxu0 0
        %1292 = vmatpush1.bf16.msra.mxu0 0
        %1293 = vmatprep.subr.bf16.mxu0 0
        %1294 = vmatpush1.bf16.msra.mxu0 0
        %1295 = vmatprep.subr.bf16.mxu0 0
        %1296 = vmatpush1.bf16.msra.mxu0 0
        %1297 = vmatprep.subr.bf16.mxu0 0
        %1298 = vmatpush1.bf16.msra.mxu0 0
        %1299 = vmatprep.subr.bf16.mxu0 0
        %1300 = vmatpush1.bf16.msra.mxu0 0
        %1301 = vmatprep.subr.bf16.mxu0 0
        %1302 = vmatpush1.bf16.msra.mxu0 0
        %1303 = vmatprep.subr.bf16.mxu0 0
        %1304 = vmatpush1.bf16.msra.mxu0 0
        %1305 = vmatprep.subr.bf16.mxu0 0
        %1306 = vmatpush1.bf16.msra.mxu0 0
        %1307 = vmatprep.subr.bf16.mxu0 0
        %1308 = vmatpush1.bf16.msra.mxu0 0
        %1309 = vmatprep.subr.bf16.mxu0 0
        %1310 = vmatpush1.bf16.msra.mxu0 0
        %1311 = vmatprep.mubr.bf16.mxu0 0
        %1312 = vmatmul.mubr.bf16.gmra.mrb[0].mxu0 %v1225
        %v1313 = vpop.f32.mrb[0].mxu0
        %v1314 = vadd.f32 0.0, %v1313
        %v1315 = vpop.f32.mrb[0].mxu0
        %v1316 = vpop.f32.mrb[0].mxu0
        %v1317 = vadd.f32 0.0, %v1316
        %v1318 = vpop.f32.mrb[0].mxu0
        %1319 = vmatprep.mubr.bf16.mxu0 0
        %1320 = vmatmul.mubr.bf16.gmra.mrb[0].mxu0 %v1228
        %v1321 = vpop.f32.mrb[0].mxu0
        %v1322 = vadd.f32 0.0, %v1321
        %v1323 = vpop.f32.mrb[0].mxu0
        %v1324 = vpop.f32.mrb[0].mxu0
        %v1325 = vadd.f32 0.0, %v1324
        %v1326 = vpop.f32.mrb[0].mxu0
        %1327 = vmatprep.mubr.bf16.mxu0 0
        %1328 = vmatmul.mubr.bf16.gmra.mrb[0].mxu0 %v1231
        %v1329 = vpop.f32.mrb[0].mxu0
        %v1330 = vadd.f32 0.0, %v1329
        %v1331 = vpop.f32.mrb[0].mxu0
        %v1332 = vpop.f32.mrb[0].mxu0
        %v1333 = vadd.f32 0.0, %v1332
        %v1334 = vpop.f32.mrb[0].mxu0
        %1335 = vmatprep.mubr.bf16.mxu0 0
        %1336 = vmatmul.mubr.bf16.gmra.mrb[0].mxu0 %v1234
        %v1337 = vpop.f32.mrb[0].mxu0
        %v1338 = vadd.f32 0.0, %v1337
        %v1339 = vpop.f32.mrb[0].mxu0
        %v1340 = vpop.f32.mrb[0].mxu0
        %v1341 = vadd.f32 0.0, %v1340
        %v1342 = vpop.f32.mrb[0].mxu0
        %1343 = vmatprep.mubr.bf16.mxu0 0
        %1344 = vmatmul.mubr.bf16.gmra.mrb[0].mxu0 %v1237
        %v1345 = vpop.f32.mrb[0].mxu0
        %v1346 = vadd.f32 0.0, %v1345
        %v1347 = vpop.f32.mrb[0].mxu0
        %v1348 = vpop.f32.mrb[0].mxu0
        %v1349 = vadd.f32 0.0, %v1348
        %v1350 = vpop.f32.mrb[0].mxu0
        %1351 = vmatprep.mubr.bf16.mxu0 0
        %1352 = vmatmul.mubr.bf16.gmra.mrb[0].mxu0 %v1240
        %v1353 = vpop.f32.mrb[0].mxu0
        %v1354 = vadd.f32 0.0, %v1353
        %v1355 = vpop.f32.mrb[0].mxu0
        %v1356 = vpop.f32.mrb[0].mxu0
        %v1357 = vadd.f32 0.0, %v1356
        %v1358 = vpop.f32.mrb[0].mxu0
        %1359 = vmatprep.mubr.bf16.mxu0 0
        %1360 = vmatmul.mubr.bf16.gmra.mrb[0].mxu0 %v1243
        %v1361 = vpop.f32.mrb[0].mxu0
        %v1362 = vadd.f32 0.0, %v1361
        %v1363 = vpop.f32.mrb[0].mxu0
        %v1364 = vpop.f32.mrb[0].mxu0
        %v1365 = vadd.f32 0.0, %v1364
        %v1366 = vpop.f32.mrb[0].mxu0
        %1367 = vmatprep.mubr.bf16.mxu0 0
        %1368 = vmatmul.mubr.bf16.gmra.mrb[0].mxu0 %v1246
        %v1369 = vpop.f32.mrb[0].mxu0
        %v1370 = vadd.f32 0.0, %v1369
        %v1371 = vpop.f32.mrb[0].mxu0
        %v1372 = vpop.f32.mrb[0].mxu0
        %v1373 = vadd.f32 0.0, %v1372
        %v1374 = vpop.f32.mrb[0].mxu0
        %1375 = vmatprep.mubr.bf16.mxu0 0
        %1376 = vmatmul.mubr.bf16.gmra.mrb[0].mxu0 %v1249
        %v1377 = vpop.f32.mrb[0].mxu0
        %v1378 = vadd.f32 0.0, %v1377
        %v1379 = vpop.f32.mrb[0].mxu0
        %v1380 = vpop.f32.mrb[0].mxu0
        %v1381 = vadd.f32 0.0, %v1380
        %v1382 = vpop.f32.mrb[0].mxu0
        %1383 = vmatprep.mubr.bf16.mxu0 0
        %1384 = vmatmul.mubr.bf16.gmra.mrb[0].mxu0 %v1252
        %v1385 = vpop.f32.mrb[0].mxu0
        %v1386 = vadd.f32 0.0, %v1385
        %v1387 = vpop.f32.mrb[0].mxu0
        %v1388 = vpop.f32.mrb[0].mxu0
        %v1389 = vadd.f32 0.0, %v1388
        %v1390 = vpop.f32.mrb[0].mxu0
        %1391 = vmatprep.mubr.bf16.mxu0 0
        %1392 = vmatmul.mubr.bf16.gmra.mrb[0].mxu0 %v1255
        %v1393 = vpop.f32.mrb[0].mxu0
        %v1394 = vadd.f32 0.0, %v1393
        %v1395 = vpop.f32.mrb[0].mxu0
        %v1396 = vpop.f32.mrb[0].mxu0
        %v1397 = vadd.f32 0.0, %v1396
        %v1398 = vpop.f32.mrb[0].mxu0
        %1399 = vmatprep.mubr.bf16.mxu0 0
        %1400 = vmatmul.mubr.bf16.gmra.mrb[0].mxu0 %v1258
        %v1401 = vpop.f32.mrb[0].mxu0
        %v1402 = vadd.f32 0.0, %v1401
        %v1403 = vpop.f32.mrb[0].mxu0
        %v1404 = vpop.f32.mrb[0].mxu0
        %v1405 = vadd.f32 0.0, %v1404
        %v1406 = vpop.f32.mrb[0].mxu0
        %1407 = vmatprep.mubr.bf16.mxu0 0
        %1408 = vmatmul.mubr.bf16.gmra.mrb[0].mxu0 %v1261
        %v1409 = vpop.f32.mrb[0].mxu0
        %v1410 = vadd.f32 0.0, %v1409
        %v1411 = vpop.f32.mrb[0].mxu0
        %v1412 = vpop.f32.mrb[0].mxu0
        %v1413 = vadd.f32 0.0, %v1412
        %v1414 = vpop.f32.mrb[0].mxu0
        %1415 = vmatprep.mubr.bf16.mxu0 0
        %1416 = vmatmul.mubr.bf16.gmra.mrb[0].mxu0 %v1264
        %v1417 = vpop.f32.mrb[0].mxu0
        %v1418 = vadd.f32 0.0, %v1417
        %v1419 = vpop.f32.mrb[0].mxu0
        %v1420 = vpop.f32.mrb[0].mxu0
        %v1421 = vadd.f32 0.0, %v1420
        %v1422 = vpop.f32.mrb[0].mxu0
        %1423 = vmatprep.mubr.bf16.mxu0 0
        %1424 = vmatmul.mubr.bf16.gmra.mrb[0].mxu0 %v1267
        %v1425 = vpop.f32.mrb[0].mxu0
        %v1426 = vadd.f32 0.0, %v1425
        %v1427 = vpop.f32.mrb[0].mxu0
        %v1428 = vpop.f32.mrb[0].mxu0
        %v1429 = vadd.f32 0.0, %v1428
        %v1430 = vpop.f32.mrb[0].mxu0
        %1431 = vmatprep.mubr.bf16.mxu0 0
        %1432 = vmatmul.mubr.bf16.gmra.mrb[0].mxu0 %v1270
        %v1433 = vpop.f32.mrb[0].mxu0
        %v1434 = vadd.f32 0.0, %v1433
        %v1435 = vpop.f32.mrb[0].mxu0
        %v1436 = vpop.f32.mrb[0].mxu0
        %v1437 = vadd.f32 0.0, %v1436
        %v1438 = vpop.f32.mrb[0].mxu0
        %1439 = vdwg.mxu0
        %v1472 = vunpack.c.l.b16 %v737
        %v1473 = vunpack.c.l.b16 %v738
        %v1474 = vunpack.c.l.b16 %v739
        %v1475 = vunpack.c.l.b16 %v740
        %v1476 = vunpack.c.l.b16 %v741
        %v1477 = vunpack.c.l.b16 %v742
        %v1478 = vunpack.c.l.b16 %v743
        %v1479 = vunpack.c.l.b16 %v744
        %v1480 = vunpack.c.l.b16 %v745
        %v1481 = vunpack.c.l.b16 %v746
        %v1482 = vunpack.c.l.b16 %v747
        %v1483 = vunpack.c.l.b16 %v748
        %v1484 = vunpack.c.l.b16 %v749
        %v1485 = vunpack.c.l.b16 %v750
        %v1486 = vunpack.c.l.b16 %v751
        %v1487 = vunpack.c.l.b16 %v752
        %v1488 = vunpack.c.l.b16 %v753
        %v1489 = vunpack.c.l.b16 %v754
        %v1490 = vunpack.c.l.b16 %v755
        %v1491 = vunpack.c.l.b16 %v756
        %v1492 = vunpack.c.l.b16 %v757
        %v1493 = vunpack.c.l.b16 %v758
        %v1494 = vunpack.c.l.b16 %v759
        %v1495 = vunpack.c.l.b16 %v760
        %v1496 = vunpack.c.l.b16 %v761
        %v1497 = vunpack.c.l.b16 %v762
        %v1498 = vunpack.c.l.b16 %v763
        %v1499 = vunpack.c.l.b16 %v764
        %v1500 = vunpack.c.l.b16 %v765
        %v1501 = vunpack.c.l.b16 %v766
        %v1502 = vunpack.c.l.b16 %v767
        %v1503 = vunpack.c.l.b16 %v768
        %v1504 = vpack.c.b16 %v1473, %v1472
        %v1505 = vpack.c.b16 %v1475, %v1474
        %v1506 = vpack.c.b16 %v1477, %v1476
        %v1507 = vpack.c.b16 %v1479, %v1478
        %v1508 = vpack.c.b16 %v1481, %v1480
        %v1509 = vpack.c.b16 %v1483, %v1482
        %v1510 = vpack.c.b16 %v1485, %v1484
        %v1511 = vpack.c.b16 %v1487, %v1486
        %v1512 = vpack.c.b16 %v1489, %v1488
        %v1513 = vpack.c.b16 %v1491, %v1490
        %v1514 = vpack.c.b16 %v1493, %v1492
        %v1515 = vpack.c.b16 %v1495, %v1494
        %v1516 = vpack.c.b16 %v1497, %v1496
        %v1517 = vpack.c.b16 %v1499, %v1498
        %v1518 = vpack.c.b16 %v1501, %v1500
        %v1519 = vpack.c.b16 %v1503, %v1502
        %v1521 = vsel %vm1223, %v1504, 0
        %v1524 = vsel %vm1223, %v1505, 0
        %v1527 = vsel %vm1223, %v1506, 0
        %v1530 = vsel %vm1223, %v1507, 0
        %v1533 = vsel %vm1223, %v1508, 0
        %v1536 = vsel %vm1223, %v1509, 0
        %v1539 = vsel %vm1223, %v1510, 0
        %v1542 = vsel %vm1223, %v1511, 0
        %v1545 = vsel %vm1223, %v1512, 0
        %v1548 = vsel %vm1223, %v1513, 0
        %v1551 = vsel %vm1223, %v1514, 0
        %v1554 = vsel %vm1223, %v1515, 0
        %v1557 = vsel %vm1223, %v1516, 0
        %v1560 = vsel %vm1223, %v1517, 0
        %v1563 = vsel %vm1223, %v1518, 0
        %v1566 = vsel %vm1223, %v1519, 0
        %v1569 = vand.u32 %v769, %v1275
        %1571 = vmatprep.subr.bf16.mxu0 0
        %1572 = vmatpush1.bf16.msra.mxu0 %v1569
        %1573 = vmatprep.subr.bf16.mxu0 0
        %1574 = vmatpush1.bf16.msra.mxu0 0
        %1575 = vmatprep.subr.bf16.mxu0 0
        %1576 = vmatpush1.bf16.msra.mxu0 0
        %1577 = vmatprep.subr.bf16.mxu0 0
        %1578 = vmatpush1.bf16.msra.mxu0 0
        %1579 = vmatprep.subr.bf16.mxu0 0
        %1580 = vmatpush1.bf16.msra.mxu0 0
        %1581 = vmatprep.subr.bf16.mxu0 0
        %1582 = vmatpush1.bf16.msra.mxu0 0
        %1583 = vmatprep.subr.bf16.mxu0 0
        %1584 = vmatpush1.bf16.msra.mxu0 0
        %1585 = vmatprep.subr.bf16.mxu0 0
        %1586 = vmatpush1.bf16.msra.mxu0 0
        %1587 = vmatprep.subr.bf16.mxu0 0
        %1588 = vmatpush1.bf16.msra.mxu0 0
        %1589 = vmatprep.subr.bf16.mxu0 0
        %1590 = vmatpush1.bf16.msra.mxu0 0
        %1591 = vmatprep.subr.bf16.mxu0 0
        %1592 = vmatpush1.bf16.msra.mxu0 0
        %1593 = vmatprep.subr.bf16.mxu0 0
        %1594 = vmatpush1.bf16.msra.mxu0 0
        %1595 = vmatprep.subr.bf16.mxu0 0
        %1596 = vmatpush1.bf16.msra.mxu0 0
        %1597 = vmatprep.subr.bf16.mxu0 0
        %1598 = vmatpush1.bf16.msra.mxu0 0
        %1599 = vmatprep.subr.bf16.mxu0 0
        %1600 = vmatpush1.bf16.msra.mxu0 0
        %1601 = vmatprep.subr.bf16.mxu0 0
        %1602 = vmatpush1.bf16.msra.mxu0 0
        %1603 = vmatprep.mubr.bf16.mxu0 0
        %1604 = vmatmul.mubr.bf16.gmra.mrb[0].mxu0 %v1521
        %v1605 = vpop.f32.mrb[0].mxu0
        %v1606 = vadd.f32 %v1314, %v1605
        %v1607 = vpop.f32.mrb[0].mxu0
        %v1608 = vpop.f32.mrb[0].mxu0
        %v1609 = vadd.f32 %v1317, %v1608
        %v1610 = vpop.f32.mrb[0].mxu0
        %1611 = vmatprep.mubr.bf16.mxu0 0
        %1612 = vmatmul.mubr.bf16.gmra.mrb[0].mxu0 %v1524
        %v1613 = vpop.f32.mrb[0].mxu0
        %v1614 = vadd.f32 %v1322, %v1613
        %v1615 = vpop.f32.mrb[0].mxu0
        %v1616 = vpop.f32.mrb[0].mxu0
        %v1617 = vadd.f32 %v1325, %v1616
        %v1618 = vpop.f32.mrb[0].mxu0
        %1619 = vmatprep.mubr.bf16.mxu0 0
        %1620 = vmatmul.mubr.bf16.gmra.mrb[0].mxu0 %v1527
        %v1621 = vpop.f32.mrb[0].mxu0
        %v1622 = vadd.f32 %v1330, %v1621
        %v1623 = vpop.f32.mrb[0].mxu0
        %v1624 = vpop.f32.mrb[0].mxu0
        %v1625 = vadd.f32 %v1333, %v1624
        %v1626 = vpop.f32.mrb[0].mxu0
        %1627 = vmatprep.mubr.bf16.mxu0 0
        %1628 = vmatmul.mubr.bf16.gmra.mrb[0].mxu0 %v1530
        %v1629 = vpop.f32.mrb[0].mxu0
        %v1630 = vadd.f32 %v1338, %v1629
        %v1631 = vpop.f32.mrb[0].mxu0
        %v1632 = vpop.f32.mrb[0].mxu0
        %v1633 = vadd.f32 %v1341, %v1632
        %v1634 = vpop.f32.mrb[0].mxu0
        %1635 = vmatprep.mubr.bf16.mxu0 0
        %1636 = vmatmul.mubr.bf16.gmra.mrb[0].mxu0 %v1533
        %v1637 = vpop.f32.mrb[0].mxu0
        %v1638 = vadd.f32 %v1346, %v1637
        %v1639 = vpop.f32.mrb[0].mxu0
        %v1640 = vpop.f32.mrb[0].mxu0
        %v1641 = vadd.f32 %v1349, %v1640
        %v1642 = vpop.f32.mrb[0].mxu0
        %1643 = vmatprep.mubr.bf16.mxu0 0
        %1644 = vmatmul.mubr.bf16.gmra.mrb[0].mxu0 %v1536
        %v1645 = vpop.f32.mrb[0].mxu0
        %v1646 = vadd.f32 %v1354, %v1645
        %v1647 = vpop.f32.mrb[0].mxu0
        %v1648 = vpop.f32.mrb[0].mxu0
        %v1649 = vadd.f32 %v1357, %v1648
        %v1650 = vpop.f32.mrb[0].mxu0
        %1651 = vmatprep.mubr.bf16.mxu0 0
        %1652 = vmatmul.mubr.bf16.gmra.mrb[0].mxu0 %v1539
        %v1653 = vpop.f32.mrb[0].mxu0
        %v1654 = vadd.f32 %v1362, %v1653
        %v1655 = vpop.f32.mrb[0].mxu0
        %v1656 = vpop.f32.mrb[0].mxu0
        %v1657 = vadd.f32 %v1365, %v1656
        %v1658 = vpop.f32.mrb[0].mxu0
        %1659 = vmatprep.mubr.bf16.mxu0 0
        %1660 = vmatmul.mubr.bf16.gmra.mrb[0].mxu0 %v1542
        %v1661 = vpop.f32.mrb[0].mxu0
        %v1662 = vadd.f32 %v1370, %v1661
        %v1663 = vpop.f32.mrb[0].mxu0
        %v1664 = vpop.f32.mrb[0].mxu0
        %v1665 = vadd.f32 %v1373, %v1664
        %v1666 = vpop.f32.mrb[0].mxu0
        %1667 = vmatprep.mubr.bf16.mxu0 0
        %1668 = vmatmul.mubr.bf16.gmra.mrb[0].mxu0 %v1545
        %v1669 = vpop.f32.mrb[0].mxu0
        %v1670 = vadd.f32 %v1378, %v1669
        %v1671 = vpop.f32.mrb[0].mxu0
        %v1672 = vpop.f32.mrb[0].mxu0
        %v1673 = vadd.f32 %v1381, %v1672
        %v1674 = vpop.f32.mrb[0].mxu0
        %1675 = vmatprep.mubr.bf16.mxu0 0
        %1676 = vmatmul.mubr.bf16.gmra.mrb[0].mxu0 %v1548
        %v1677 = vpop.f32.mrb[0].mxu0
        %v1678 = vadd.f32 %v1386, %v1677
        %v1679 = vpop.f32.mrb[0].mxu0
        %v1680 = vpop.f32.mrb[0].mxu0
        %v1681 = vadd.f32 %v1389, %v1680
        %v1682 = vpop.f32.mrb[0].mxu0
        %1683 = vmatprep.mubr.bf16.mxu0 0
        %1684 = vmatmul.mubr.bf16.gmra.mrb[0].mxu0 %v1551
        %v1685 = vpop.f32.mrb[0].mxu0
        %v1686 = vadd.f32 %v1394, %v1685
        %v1687 = vpop.f32.mrb[0].mxu0
        %v1688 = vpop.f32.mrb[0].mxu0
        %v1689 = vadd.f32 %v1397, %v1688
        %v1690 = vpop.f32.mrb[0].mxu0
        %1691 = vmatprep.mubr.bf16.mxu0 0
        %1692 = vmatmul.mubr.bf16.gmra.mrb[0].mxu0 %v1554
        %v1693 = vpop.f32.mrb[0].mxu0
        %v1694 = vadd.f32 %v1402, %v1693
        %v1695 = vpop.f32.mrb[0].mxu0
        %v1696 = vpop.f32.mrb[0].mxu0
        %v1697 = vadd.f32 %v1405, %v1696
        %v1698 = vpop.f32.mrb[0].mxu0
        %1699 = vmatprep.mubr.bf16.mxu0 0
        %1700 = vmatmul.mubr.bf16.gmra.mrb[0].mxu0 %v1557
        %v1701 = vpop.f32.mrb[0].mxu0
        %v1702 = vadd.f32 %v1410, %v1701
        %v1703 = vpop.f32.mrb[0].mxu0
        %v1704 = vpop.f32.mrb[0].mxu0
        %v1705 = vadd.f32 %v1413, %v1704
        %v1706 = vpop.f32.mrb[0].mxu0
        %1707 = vmatprep.mubr.bf16.mxu0 0
        %1708 = vmatmul.mubr.bf16.gmra.mrb[0].mxu0 %v1560
        %v1709 = vpop.f32.mrb[0].mxu0
        %v1710 = vadd.f32 %v1418, %v1709
        %v1711 = vpop.f32.mrb[0].mxu0
        %v1712 = vpop.f32.mrb[0].mxu0
        %v1713 = vadd.f32 %v1421, %v1712
        %v1714 = vpop.f32.mrb[0].mxu0
        %1715 = vmatprep.mubr.bf16.mxu0 0
        %1716 = vmatmul.mubr.bf16.gmra.mrb[0].mxu0 %v1563
        %v1717 = vpop.f32.mrb[0].mxu0
        %v1718 = vadd.f32 %v1426, %v1717
        %v1719 = vpop.f32.mrb[0].mxu0
        %v1720 = vpop.f32.mrb[0].mxu0
        %v1721 = vadd.f32 %v1429, %v1720
        %v1722 = vpop.f32.mrb[0].mxu0
        %1723 = vmatprep.mubr.bf16.mxu0 0
        %1724 = vmatmul.mubr.bf16.gmra.mrb[0].mxu0 %v1566
        %v1725 = vpop.f32.mrb[0].mxu0
        %v1726 = vadd.f32 %v1434, %v1725
        %v1727 = vpop.f32.mrb[0].mxu0
        %v1728 = vpop.f32.mrb[0].mxu0
        %v1729 = vadd.f32 %v1437, %v1728
        %v1730 = vpop.f32.mrb[0].mxu0
        %1731 = vdwg.mxu0
        %v1732 = vld [vmem:[#allocation2] sm:$0xe]
        %v1733 = vld [vmem:[#allocation2 + $0xc] sm:$0xe]
        %v1734 = vld [vmem:[#allocation2 + $0x18] sm:$0xe]
        %v1735 = vld [vmem:[#allocation2 + $0x24] sm:$0xe]
        %v1736 = vld [vmem:[#allocation2 + $0x30] sm:$0xe]
        %v1737 = vld [vmem:[#allocation2 + $0x3c] sm:$0xe]
        %v1738 = vld [vmem:[#allocation2 + $0x48] sm:$0xe]
        %v1739 = vld [vmem:[#allocation2 + $0x54] sm:$0xe]
        %v1740 = vld [vmem:[#allocation2 + $0x60] sm:$0xe]
        %v1741 = vld [vmem:[#allocation2 + $0x6c] sm:$0xe]
        %v1742 = vld [vmem:[#allocation2 + $0x78] sm:$0xe]
        %v1743 = vld [vmem:[#allocation2 + $0x84] sm:$0xe]
        %v1744 = vld [vmem:[#allocation2 + $0x90] sm:$0xe]
        %v1745 = vld [vmem:[#allocation2 + $0x9c] sm:$0xe]
        %v1746 = vld [vmem:[#allocation2 + $0xa8] sm:$0xe]
        %v1747 = vld [vmem:[#allocation2 + $0xb4] sm:$0xe]
        %vm1780 = vcmask 1042432
        %vm1781 = vcmask 1046532
        %vm1782 = vmor %vm1780, %vm1781
        %v1783 = vrot.slane %v1732, 5
        %v1784 = vrot.slane %v1783, 4
        %v1785 = vrot.slane %v738, 5
        %v1786 = vsel %vm1782, %v1784, %v1785
        %v1787 = vrot.slane %v1785, 4
        %v1788 = vrot.slane %v770, 5
        %v1789 = vsel %vm1782, %v1787, %v1788
        %v1790 = vrot.slane %v1733, 5
        %v1791 = vrot.slane %v1790, 4
        %v1792 = vrot.slane %v740, 5
        %v1793 = vsel %vm1782, %v1791, %v1792
        %v1794 = vrot.slane %v1792, 4
        %v1795 = vrot.slane %v771, 5
        %v1796 = vsel %vm1782, %v1794, %v1795
        %v1797 = vrot.slane %v1734, 5
        %v1798 = vrot.slane %v1797, 4
        %v1799 = vrot.slane %v742, 5
        %v1800 = vsel %vm1782, %v1798, %v1799
        %v1801 = vrot.slane %v1799, 4
        %v1802 = vrot.slane %v772, 5
        %v1803 = vsel %vm1782, %v1801, %v1802
        %v1804 = vrot.slane %v1735, 5
        %v1805 = vrot.slane %v1804, 4
        %v1806 = vrot.slane %v744, 5
        %v1807 = vsel %vm1782, %v1805, %v1806
        %v1808 = vrot.slane %v1806, 4
        %v1809 = vrot.slane %v773, 5
        %v1810 = vsel %vm1782, %v1808, %v1809
        %v1811 = vrot.slane %v1736, 5
        %v1812 = vrot.slane %v1811, 4
        %v1813 = vrot.slane %v746, 5
        %v1814 = vsel %vm1782, %v1812, %v1813
        %v1815 = vrot.slane %v1813, 4
        %v1816 = vrot.slane %v774, 5
        %v1817 = vsel %vm1782, %v1815, %v1816
        %v1818 = vrot.slane %v1737, 5
        %v1819 = vrot.slane %v1818, 4
        %v1820 = vrot.slane %v748, 5
        %v1821 = vsel %vm1782, %v1819, %v1820
        %v1822 = vrot.slane %v1820, 4
        %v1823 = vrot.slane %v775, 5
        %v1824 = vsel %vm1782, %v1822, %v1823
        %v1825 = vrot.slane %v1738, 5
        %v1826 = vrot.slane %v1825, 4
        %v1827 = vrot.slane %v750, 5
        %v1828 = vsel %vm1782, %v1826, %v1827
        %v1829 = vrot.slane %v1827, 4
        %v1830 = vrot.slane %v776, 5
        %v1831 = vsel %vm1782, %v1829, %v1830
        %v1832 = vrot.slane %v1739, 5
        %v1833 = vrot.slane %v1832, 4
        %v1834 = vrot.slane %v752, 5
        %v1835 = vsel %vm1782, %v1833, %v1834
        %v1836 = vrot.slane %v1834, 4
        %v1837 = vrot.slane %v777, 5
        %v1838 = vsel %vm1782, %v1836, %v1837
        %v1839 = vrot.slane %v1740, 5
        %v1840 = vrot.slane %v1839, 4
        %v1841 = vrot.slane %v754, 5
        %v1842 = vsel %vm1782, %v1840, %v1841
        %v1843 = vrot.slane %v1841, 4
        %v1844 = vrot.slane %v778, 5
        %v1845 = vsel %vm1782, %v1843, %v1844
        %v1846 = vrot.slane %v1741, 5
        %v1847 = vrot.slane %v1846, 4
        %v1848 = vrot.slane %v756, 5
        %v1849 = vsel %vm1782, %v1847, %v1848
        %v1850 = vrot.slane %v1848, 4
        %v1851 = vrot.slane %v779, 5
        %v1852 = vsel %vm1782, %v1850, %v1851
        %v1853 = vrot.slane %v1742, 5
        %v1854 = vrot.slane %v1853, 4
        %v1855 = vrot.slane %v758, 5
        %v1856 = vsel %vm1782, %v1854, %v1855
        %v1857 = vrot.slane %v1855, 4
        %v1858 = vrot.slane %v780, 5
        %v1859 = vsel %vm1782, %v1857, %v1858
        %v1860 = vrot.slane %v1743, 5
        %v1861 = vrot.slane %v1860, 4
        %v1862 = vrot.slane %v760, 5
        %v1863 = vsel %vm1782, %v1861, %v1862
        %v1864 = vrot.slane %v1862, 4
        %v1865 = vrot.slane %v781, 5
        %v1866 = vsel %vm1782, %v1864, %v1865
        %v1867 = vrot.slane %v1744, 5
        %v1868 = vrot.slane %v1867, 4
        %v1869 = vrot.slane %v762, 5
        %v1870 = vsel %vm1782, %v1868, %v1869
        %v1871 = vrot.slane %v1869, 4
        %v1872 = vrot.slane %v782, 5
        %v1873 = vsel %vm1782, %v1871, %v1872
        %v1874 = vrot.slane %v1745, 5
        %v1875 = vrot.slane %v1874, 4
        %v1876 = vrot.slane %v764, 5
        %v1877 = vsel %vm1782, %v1875, %v1876
        %v1878 = vrot.slane %v1876, 4
        %v1879 = vrot.slane %v783, 5
        %v1880 = vsel %vm1782, %v1878, %v1879
        %v1881 = vrot.slane %v1746, 5
        %v1882 = vrot.slane %v1881, 4
        %v1883 = vrot.slane %v766, 5
        %v1884 = vsel %vm1782, %v1882, %v1883
        %v1885 = vrot.slane %v1883, 4
        %v1886 = vrot.slane %v784, 5
        %v1887 = vsel %vm1782, %v1885, %v1886
        %v1888 = vrot.slane %v1747, 5
        %v1889 = vrot.slane %v1888, 4
        %v1890 = vrot.slane %v768, 5
        %v1891 = vsel %vm1782, %v1889, %v1890
        %v1892 = vrot.slane %v1890, 4
        %v1893 = vrot.slane %v785, 5
        %v1894 = vsel %vm1782, %v1892, %v1893
        %s1895 = scalar_lea.vmem %s1, 4
        %v1896 = vld [vmem:[%s1895] sm:$0x3]
        %v1897 = vunpack.c.l.b16 %v1786
        %v1898 = vunpack.c.l.b16 %v1789
        %v1899 = vunpack.c.l.b16 %v1793
        %v1900 = vunpack.c.l.b16 %v1796
        %v1901 = vunpack.c.l.b16 %v1800
        %v1902 = vunpack.c.l.b16 %v1803
        %v1903 = vunpack.c.l.b16 %v1807
        %v1904 = vunpack.c.l.b16 %v1810
        %v1905 = vunpack.c.l.b16 %v1814
        %v1906 = vunpack.c.l.b16 %v1817
        %v1907 = vunpack.c.l.b16 %v1821
        %v1908 = vunpack.c.l.b16 %v1824
        %v1909 = vunpack.c.l.b16 %v1828
        %v1910 = vunpack.c.l.b16 %v1831
        %v1911 = vunpack.c.l.b16 %v1835
        %v1912 = vunpack.c.l.b16 %v1838
        %v1913 = vunpack.c.l.b16 %v1842
        %v1914 = vunpack.c.l.b16 %v1845
        %v1915 = vunpack.c.l.b16 %v1849
        %v1916 = vunpack.c.l.b16 %v1852
        %v1917 = vunpack.c.l.b16 %v1856
        %v1918 = vunpack.c.l.b16 %v1859
        %v1919 = vunpack.c.l.b16 %v1863
        %v1920 = vunpack.c.l.b16 %v1866
        %v1921 = vunpack.c.l.b16 %v1870
        %v1922 = vunpack.c.l.b16 %v1873
        %v1923 = vunpack.c.l.b16 %v1877
        %v1924 = vunpack.c.l.b16 %v1880
        %v1925 = vunpack.c.l.b16 %v1884
        %v1926 = vunpack.c.l.b16 %v1887
        %v1927 = vunpack.c.l.b16 %v1891
        %v1928 = vunpack.c.l.b16 %v1894
        %v1929 = vpack.c.b16 %v1898, %v1897
        %v1930 = vpack.c.b16 %v1900, %v1899
        %v1931 = vpack.c.b16 %v1902, %v1901
        %v1932 = vpack.c.b16 %v1904, %v1903
        %v1933 = vpack.c.b16 %v1906, %v1905
        %v1934 = vpack.c.b16 %v1908, %v1907
        %v1935 = vpack.c.b16 %v1910, %v1909
        %v1936 = vpack.c.b16 %v1912, %v1911
        %v1937 = vpack.c.b16 %v1914, %v1913
        %v1938 = vpack.c.b16 %v1916, %v1915
        %v1939 = vpack.c.b16 %v1918, %v1917
        %v1940 = vpack.c.b16 %v1920, %v1919
        %v1941 = vpack.c.b16 %v1922, %v1921
        %v1942 = vpack.c.b16 %v1924, %v1923
        %v1943 = vpack.c.b16 %v1926, %v1925
        %v1944 = vpack.c.b16 %v1928, %v1927
        %v1946 = vsel %vm1223, %v1929, 0
        %v1949 = vsel %vm1223, %v1930, 0
        %v1952 = vsel %vm1223, %v1931, 0
        %v1955 = vsel %vm1223, %v1932, 0
        %v1958 = vsel %vm1223, %v1933, 0
        %v1961 = vsel %vm1223, %v1934, 0
        %v1964 = vsel %vm1223, %v1935, 0
        %v1967 = vsel %vm1223, %v1936, 0
        %v1970 = vsel %vm1223, %v1937, 0
        %v1973 = vsel %vm1223, %v1938, 0
        %v1976 = vsel %vm1223, %v1939, 0
        %v1979 = vsel %vm1223, %v1940, 0
        %v1982 = vsel %vm1223, %v1941, 0
        %v1985 = vsel %vm1223, %v1942, 0
        %v1988 = vsel %vm1223, %v1943, 0
        %v1991 = vsel %vm1223, %v1944, 0
        %v1994 = vand.u32 %v1896, %v1275
        %1996 = vmatprep.subr.bf16.mxu0 0
        %1997 = vmatpush1.bf16.msra.mxu0 %v1994
        %1998 = vmatprep.subr.bf16.mxu0 0
        %1999 = vmatpush1.bf16.msra.mxu0 0
        %2000 = vmatprep.subr.bf16.mxu0 0
        %2001 = vmatpush1.bf16.msra.mxu0 0
        %2002 = vmatprep.subr.bf16.mxu0 0
        %2003 = vmatpush1.bf16.msra.mxu0 0
        %2004 = vmatprep.subr.bf16.mxu0 0
        %2005 = vmatpush1.bf16.msra.mxu0 0
        %2006 = vmatprep.subr.bf16.mxu0 0
        %2007 = vmatpush1.bf16.msra.mxu0 0
        %2008 = vmatprep.subr.bf16.mxu0 0
        %2009 = vmatpush1.bf16.msra.mxu0 0
        %2010 = vmatprep.subr.bf16.mxu0 0
        %2011 = vmatpush1.bf16.msra.mxu0 0
        %2012 = vmatprep.subr.bf16.mxu0 0
        %2013 = vmatpush1.bf16.msra.mxu0 0
        %2014 = vmatprep.subr.bf16.mxu0 0
        %2015 = vmatpush1.bf16.msra.mxu0 0
        %2016 = vmatprep.subr.bf16.mxu0 0
        %2017 = vmatpush1.bf16.msra.mxu0 0
        %2018 = vmatprep.subr.bf16.mxu0 0
        %2019 = vmatpush1.bf16.msra.mxu0 0
        %2020 = vmatprep.subr.bf16.mxu0 0
        %2021 = vmatpush1.bf16.msra.mxu0 0
        %2022 = vmatprep.subr.bf16.mxu0 0
        %2023 = vmatpush1.bf16.msra.mxu0 0
        %2024 = vmatprep.subr.bf16.mxu0 0
        %2025 = vmatpush1.bf16.msra.mxu0 0
        %2026 = vmatprep.subr.bf16.mxu0 0
        %2027 = vmatpush1.bf16.msra.mxu0 0
        %2028 = vmatprep.mubr.bf16.mxu0 0
        %2029 = vmatmul.mubr.bf16.gmra.mrb[0].mxu0 %v1946
        %v2030 = vpop.f32.mrb[0].mxu0
        %v2031 = vadd.f32 0.0, %v2030
        %v2032 = vpop.f32.mrb[0].mxu0
        %v2033 = vpop.f32.mrb[0].mxu0
        %v2034 = vadd.f32 0.0, %v2033
        %v2035 = vpop.f32.mrb[0].mxu0
        %2036 = vmatprep.mubr.bf16.mxu0 0
        %2037 = vmatmul.mubr.bf16.gmra.mrb[0].mxu0 %v1949
        %v2038 = vpop.f32.mrb[0].mxu0
        %v2039 = vadd.f32 0.0, %v2038
        %v2040 = vpop.f32.mrb[0].mxu0
        %v2041 = vpop.f32.mrb[0].mxu0
        %v2042 = vadd.f32 0.0, %v2041
        %v2043 = vpop.f32.mrb[0].mxu0
        %2044 = vmatprep.mubr.bf16.mxu0 0
        %2045 = vmatmul.mubr.bf16.gmra.mrb[0].mxu0 %v1952
        %v2046 = vpop.f32.mrb[0].mxu0
        %v2047 = vadd.f32 0.0, %v2046
        %v2048 = vpop.f32.mrb[0].mxu0
        %v2049 = vpop.f32.mrb[0].mxu0
        %v2050 = vadd.f32 0.0, %v2049
        %v2051 = vpop.f32.mrb[0].mxu0
        %2052 = vmatprep.mubr.bf16.mxu0 0
        %2053 = vmatmul.mubr.bf16.gmra.mrb[0].mxu0 %v1955
        %v2054 = vpop.f32.mrb[0].mxu0
        %v2055 = vadd.f32 0.0, %v2054
        %v2056 = vpop.f32.mrb[0].mxu0
        %v2057 = vpop.f32.mrb[0].mxu0
        %v2058 = vadd.f32 0.0, %v2057
        %v2059 = vpop.f32.mrb[0].mxu0
        %2060 = vmatprep.mubr.bf16.mxu0 0
        %2061 = vmatmul.mubr.bf16.gmra.mrb[0].mxu0 %v1958
        %v2062 = vpop.f32.mrb[0].mxu0
        %v2063 = vadd.f32 0.0, %v2062
        %v2064 = vpop.f32.mrb[0].mxu0
        %v2065 = vpop.f32.mrb[0].mxu0
        %v2066 = vadd.f32 0.0, %v2065
        %v2067 = vpop.f32.mrb[0].mxu0
        %2068 = vmatprep.mubr.bf16.mxu0 0
        %2069 = vmatmul.mubr.bf16.gmra.mrb[0].mxu0 %v1961
        %v2070 = vpop.f32.mrb[0].mxu0
        %v2071 = vadd.f32 0.0, %v2070
        %v2072 = vpop.f32.mrb[0].mxu0
        %v2073 = vpop.f32.mrb[0].mxu0
        %v2074 = vadd.f32 0.0, %v2073
        %v2075 = vpop.f32.mrb[0].mxu0
        %2076 = vmatprep.mubr.bf16.mxu0 0
        %2077 = vmatmul.mubr.bf16.gmra.mrb[0].mxu0 %v1964
        %v2078 = vpop.f32.mrb[0].mxu0
        %v2079 = vadd.f32 0.0, %v2078
        %v2080 = vpop.f32.mrb[0].mxu0
        %v2081 = vpop.f32.mrb[0].mxu0
        %v2082 = vadd.f32 0.0, %v2081
        %v2083 = vpop.f32.mrb[0].mxu0
        %2084 = vmatprep.mubr.bf16.mxu0 0
        %2085 = vmatmul.mubr.bf16.gmra.mrb[0].mxu0 %v1967
        %v2086 = vpop.f32.mrb[0].mxu0
        %v2087 = vadd.f32 0.0, %v2086
        %v2088 = vpop.f32.mrb[0].mxu0
        %v2089 = vpop.f32.mrb[0].mxu0
        %v2090 = vadd.f32 0.0, %v2089
        %v2091 = vpop.f32.mrb[0].mxu0
        %2092 = vmatprep.mubr.bf16.mxu0 0
        %2093 = vmatmul.mubr.bf16.gmra.mrb[0].mxu0 %v1970
        %v2094 = vpop.f32.mrb[0].mxu0
        %v2095 = vadd.f32 0.0, %v2094
        %v2096 = vpop.f32.mrb[0].mxu0
        %v2097 = vpop.f32.mrb[0].mxu0
        %v2098 = vadd.f32 0.0, %v2097
        %v2099 = vpop.f32.mrb[0].mxu0
        %2100 = vmatprep.mubr.bf16.mxu0 0
        %2101 = vmatmul.mubr.bf16.gmra.mrb[0].mxu0 %v1973
        %v2102 = vpop.f32.mrb[0].mxu0
        %v2103 = vadd.f32 0.0, %v2102
        %v2104 = vpop.f32.mrb[0].mxu0
        %v2105 = vpop.f32.mrb[0].mxu0
        %v2106 = vadd.f32 0.0, %v2105
        %v2107 = vpop.f32.mrb[0].mxu0
        %2108 = vmatprep.mubr.bf16.mxu0 0
        %2109 = vmatmul.mubr.bf16.gmra.mrb[0].mxu0 %v1976
        %v2110 = vpop.f32.mrb[0].mxu0
        %v2111 = vadd.f32 0.0, %v2110
        %v2112 = vpop.f32.mrb[0].mxu0
        %v2113 = vpop.f32.mrb[0].mxu0
        %v2114 = vadd.f32 0.0, %v2113
        %v2115 = vpop.f32.mrb[0].mxu0
        %2116 = vmatprep.mubr.bf16.mxu0 0
        %2117 = vmatmul.mubr.bf16.gmra.mrb[0].mxu0 %v1979
        %v2118 = vpop.f32.mrb[0].mxu0
        %v2119 = vadd.f32 0.0, %v2118
        %v2120 = vpop.f32.mrb[0].mxu0
        %v2121 = vpop.f32.mrb[0].mxu0
        %v2122 = vadd.f32 0.0, %v2121
        %v2123 = vpop.f32.mrb[0].mxu0
        %2124 = vmatprep.mubr.bf16.mxu0 0
        %2125 = vmatmul.mubr.bf16.gmra.mrb[0].mxu0 %v1982
        %v2126 = vpop.f32.mrb[0].mxu0
        %v2127 = vadd.f32 0.0, %v2126
        %v2128 = vpop.f32.mrb[0].mxu0
        %v2129 = vpop.f32.mrb[0].mxu0
        %v2130 = vadd.f32 0.0, %v2129
        %v2131 = vpop.f32.mrb[0].mxu0
        %2132 = vmatprep.mubr.bf16.mxu0 0
        %2133 = vmatmul.mubr.bf16.gmra.mrb[0].mxu0 %v1985
        %v2134 = vpop.f32.mrb[0].mxu0
        %v2135 = vadd.f32 0.0, %v2134
        %v2136 = vpop.f32.mrb[0].mxu0
        %v2137 = vpop.f32.mrb[0].mxu0
        %v2138 = vadd.f32 0.0, %v2137
        %v2139 = vpop.f32.mrb[0].mxu0
        %2140 = vmatprep.mubr.bf16.mxu0 0
        %2141 = vmatmul.mubr.bf16.gmra.mrb[0].mxu0 %v1988
        %v2142 = vpop.f32.mrb[0].mxu0
        %v2143 = vadd.f32 0.0, %v2142
        %v2144 = vpop.f32.mrb[0].mxu0
        %v2145 = vpop.f32.mrb[0].mxu0
        %v2146 = vadd.f32 0.0, %v2145
        %v2147 = vpop.f32.mrb[0].mxu0
        %2148 = vmatprep.mubr.bf16.mxu0 0
        %2149 = vmatmul.mubr.bf16.gmra.mrb[0].mxu0 %v1991
        %v2150 = vpop.f32.mrb[0].mxu0
        %v2151 = vadd.f32 0.0, %v2150
        %v2152 = vpop.f32.mrb[0].mxu0
        %v2153 = vpop.f32.mrb[0].mxu0
        %v2154 = vadd.f32 0.0, %v2153
        %v2155 = vpop.f32.mrb[0].mxu0
        %2156 = vdwg.mxu0
        %v2157 = vadd.f32 %v1606, %v2031
        %v2158 = vadd.f32 %v1609, %v2034
        %v2159 = vadd.f32 %v1614, %v2039
        %v2160 = vadd.f32 %v1617, %v2042
        %v2161 = vadd.f32 %v1622, %v2047
        %v2162 = vadd.f32 %v1625, %v2050
        %v2163 = vadd.f32 %v1630, %v2055
        %v2164 = vadd.f32 %v1633, %v2058
        %v2165 = vadd.f32 %v1638, %v2063
        %v2166 = vadd.f32 %v1641, %v2066
        %v2167 = vadd.f32 %v1646, %v2071
        %v2168 = vadd.f32 %v1649, %v2074
        %v2169 = vadd.f32 %v1654, %v2079
        %v2170 = vadd.f32 %v1657, %v2082
        %v2171 = vadd.f32 %v1662, %v2087
        %v2172 = vadd.f32 %v1665, %v2090
        %v2173 = vadd.f32 %v1670, %v2095
        %v2174 = vadd.f32 %v1673, %v2098
        %v2175 = vadd.f32 %v1678, %v2103
        %v2176 = vadd.f32 %v1681, %v2106
        %v2177 = vadd.f32 %v1686, %v2111
        %v2178 = vadd.f32 %v1689, %v2114
        %v2179 = vadd.f32 %v1694, %v2119
        %v2180 = vadd.f32 %v1697, %v2122
        %v2181 = vadd.f32 %v1702, %v2127
        %v2182 = vadd.f32 %v1705, %v2130
        %v2183 = vadd.f32 %v1710, %v2135
        %v2184 = vadd.f32 %v1713, %v2138
        %v2185 = vadd.f32 %v1718, %v2143
        %v2186 = vadd.f32 %v1721, %v2146
        %v2187 = vadd.f32 %v1726, %v2151
        %v2188 = vadd.f32 %v1729, %v2154
        %v2189 = vld [vmem:[%s619] sm:$0xf]
        %v2190 = vld [vmem:[%s619 + $0x4] sm:$0xf]
        %v2191 = vld [vmem:[%s619 + $0xc] sm:$0xf]
        %v2192 = vld [vmem:[%s619 + $0x10] sm:$0xf]
        %v2193 = vld [vmem:[%s619 + $0x18] sm:$0xf]
        %v2194 = vld [vmem:[%s619 + $0x1c] sm:$0xf]
        %v2195 = vld [vmem:[%s619 + $0x24] sm:$0xf]
        %v2196 = vld [vmem:[%s619 + $0x28] sm:$0xf]
        %v2197 = vld [vmem:[%s619 + $0x30] sm:$0xf]
        %v2198 = vld [vmem:[%s619 + $0x34] sm:$0xf]
        %v2199 = vld [vmem:[%s619 + $0x3c] sm:$0xf]
        %v2200 = vld [vmem:[%s619 + $0x40] sm:$0xf]
        %v2201 = vld [vmem:[%s619 + $0x48] sm:$0xf]
        %v2202 = vld [vmem:[%s619 + $0x4c] sm:$0xf]
        %v2203 = vld [vmem:[%s619 + $0x54] sm:$0xf]
        %v2204 = vld [vmem:[%s619 + $0x58] sm:$0xf]
        %v2205 = vld [vmem:[%s619 + $0x60] sm:$0xf]
        %v2206 = vld [vmem:[%s619 + $0x64] sm:$0xf]
        %v2207 = vld [vmem:[%s619 + $0x6c] sm:$0xf]
        %v2208 = vld [vmem:[%s619 + $0x70] sm:$0xf]
        %v2209 = vld [vmem:[%s619 + $0x78] sm:$0xf]
        %v2210 = vld [vmem:[%s619 + $0x7c] sm:$0xf]
        %v2211 = vld [vmem:[%s619 + $0x84] sm:$0xf]
        %v2212 = vld [vmem:[%s619 + $0x88] sm:$0xf]
        %v2213 = vld [vmem:[%s619 + $0x90] sm:$0xf]
        %v2214 = vld [vmem:[%s619 + $0x94] sm:$0xf]
        %v2215 = vld [vmem:[%s619 + $0x9c] sm:$0xf]
        %v2216 = vld [vmem:[%s619 + $0xa0] sm:$0xf]
        %v2217 = vld [vmem:[%s619 + $0xa8] sm:$0xf]
        %v2218 = vld [vmem:[%s619 + $0xac] sm:$0xf]
        %v2219 = vld [vmem:[%s619 + $0xb4] sm:$0xf]
        %v2220 = vld [vmem:[%s619 + $0xb8] sm:$0xf]
        %s2221 = scalar_lea.vmem %s1, 6
        %v2222 = vld [vmem:[%s2221] sm:$0x3]
        %v2255 = vunpack.c.l.b16 %v2189
        %v2256 = vunpack.c.l.b16 %v2190
        %v2257 = vunpack.c.l.b16 %v2191
        %v2258 = vunpack.c.l.b16 %v2192
        %v2259 = vunpack.c.l.b16 %v2193
        %v2260 = vunpack.c.l.b16 %v2194
        %v2261 = vunpack.c.l.b16 %v2195
        %v2262 = vunpack.c.l.b16 %v2196
        %v2263 = vunpack.c.l.b16 %v2197
        %v2264 = vunpack.c.l.b16 %v2198
        %v2265 = vunpack.c.l.b16 %v2199
        %v2266 = vunpack.c.l.b16 %v2200
        %v2267 = vunpack.c.l.b16 %v2201
        %v2268 = vunpack.c.l.b16 %v2202
        %v2269 = vunpack.c.l.b16 %v2203
        %v2270 = vunpack.c.l.b16 %v2204
        %v2271 = vunpack.c.l.b16 %v2205
        %v2272 = vunpack.c.l.b16 %v2206
        %v2273 = vunpack.c.l.b16 %v2207
        %v2274 = vunpack.c.l.b16 %v2208
        %v2275 = vunpack.c.l.b16 %v2209
        %v2276 = vunpack.c.l.b16 %v2210
        %v2277 = vunpack.c.l.b16 %v2211
        %v2278 = vunpack.c.l.b16 %v2212
        %v2279 = vunpack.c.l.b16 %v2213
        %v2280 = vunpack.c.l.b16 %v2214
        %v2281 = vunpack.c.l.b16 %v2215
        %v2282 = vunpack.c.l.b16 %v2216
        %v2283 = vunpack.c.l.b16 %v2217
        %v2284 = vunpack.c.l.b16 %v2218
        %v2285 = vunpack.c.l.b16 %v2219
        %v2286 = vunpack.c.l.b16 %v2220
        %v2287 = vpack.c.b16 %v2256, %v2255
        %v2288 = vpack.c.b16 %v2258, %v2257
        %v2289 = vpack.c.b16 %v2260, %v2259
        %v2290 = vpack.c.b16 %v2262, %v2261
        %v2291 = vpack.c.b16 %v2264, %v2263
        %v2292 = vpack.c.b16 %v2266, %v2265
        %v2293 = vpack.c.b16 %v2268, %v2267
        %v2294 = vpack.c.b16 %v2270, %v2269
        %v2295 = vpack.c.b16 %v2272, %v2271
        %v2296 = vpack.c.b16 %v2274, %v2273
        %v2297 = vpack.c.b16 %v2276, %v2275
        %v2298 = vpack.c.b16 %v2278, %v2277
        %v2299 = vpack.c.b16 %v2280, %v2279
        %v2300 = vpack.c.b16 %v2282, %v2281
        %v2301 = vpack.c.b16 %v2284, %v2283
        %v2302 = vpack.c.b16 %v2286, %v2285
        %v2304 = vsel %vm1223, %v2287, 0
        %v2307 = vsel %vm1223, %v2288, 0
        %v2310 = vsel %vm1223, %v2289, 0
        %v2313 = vsel %vm1223, %v2290, 0
        %v2316 = vsel %vm1223, %v2291, 0
        %v2319 = vsel %vm1223, %v2292, 0
        %v2322 = vsel %vm1223, %v2293, 0
        %v2325 = vsel %vm1223, %v2294, 0
        %v2328 = vsel %vm1223, %v2295, 0
        %v2331 = vsel %vm1223, %v2296, 0
        %v2334 = vsel %vm1223, %v2297, 0
        %v2337 = vsel %vm1223, %v2298, 0
        %v2340 = vsel %vm1223, %v2299, 0
        %v2343 = vsel %vm1223, %v2300, 0
        %v2346 = vsel %vm1223, %v2301, 0
        %v2349 = vsel %vm1223, %v2302, 0
        %v2352 = vand.u32 %v2222, %v1275
        %2354 = vmatprep.subr.bf16.mxu0 0
        %2355 = vmatpush1.bf16.msra.mxu0 %v2352
        %2356 = vmatprep.subr.bf16.mxu0 0
        %2357 = vmatpush1.bf16.msra.mxu0 0
        %2358 = vmatprep.subr.bf16.mxu0 0
        %2359 = vmatpush1.bf16.msra.mxu0 0
        %2360 = vmatprep.subr.bf16.mxu0 0
        %2361 = vmatpush1.bf16.msra.mxu0 0
        %2362 = vmatprep.subr.bf16.mxu0 0
        %2363 = vmatpush1.bf16.msra.mxu0 0
        %2364 = vmatprep.subr.bf16.mxu0 0
        %2365 = vmatpush1.bf16.msra.mxu0 0
        %2366 = vmatprep.subr.bf16.mxu0 0
        %2367 = vmatpush1.bf16.msra.mxu0 0
        %2368 = vmatprep.subr.bf16.mxu0 0
        %2369 = vmatpush1.bf16.msra.mxu0 0
        %2370 = vmatprep.subr.bf16.mxu0 0
        %2371 = vmatpush1.bf16.msra.mxu0 0
        %2372 = vmatprep.subr.bf16.mxu0 0
        %2373 = vmatpush1.bf16.msra.mxu0 0
        %2374 = vmatprep.subr.bf16.mxu0 0
        %2375 = vmatpush1.bf16.msra.mxu0 0
        %2376 = vmatprep.subr.bf16.mxu0 0
        %2377 = vmatpush1.bf16.msra.mxu0 0
        %2378 = vmatprep.subr.bf16.mxu0 0
        %2379 = vmatpush1.bf16.msra.mxu0 0
        %2380 = vmatprep.subr.bf16.mxu0 0
        %2381 = vmatpush1.bf16.msra.mxu0 0
        %2382 = vmatprep.subr.bf16.mxu0 0
        %2383 = vmatpush1.bf16.msra.mxu0 0
        %2384 = vmatprep.subr.bf16.mxu0 0
        %2385 = vmatpush1.bf16.msra.mxu0 0
        %2386 = vmatprep.mubr.bf16.mxu0 0
        %2387 = vmatmul.mubr.bf16.gmra.mrb[0].mxu0 %v2304
        %v2388 = vpop.f32.mrb[0].mxu0
        %v2389 = vadd.f32 0.0, %v2388
        %v2390 = vpop.f32.mrb[0].mxu0
        %v2391 = vpop.f32.mrb[0].mxu0
        %v2392 = vadd.f32 0.0, %v2391
        %v2393 = vpop.f32.mrb[0].mxu0
        %2394 = vmatprep.mubr.bf16.mxu0 0
        %2395 = vmatmul.mubr.bf16.gmra.mrb[0].mxu0 %v2307
        %v2396 = vpop.f32.mrb[0].mxu0
        %v2397 = vadd.f32 0.0, %v2396
        %v2398 = vpop.f32.mrb[0].mxu0
        %v2399 = vpop.f32.mrb[0].mxu0
        %v2400 = vadd.f32 0.0, %v2399
        %v2401 = vpop.f32.mrb[0].mxu0
        %2402 = vmatprep.mubr.bf16.mxu0 0
        %2403 = vmatmul.mubr.bf16.gmra.mrb[0].mxu0 %v2310
        %v2404 = vpop.f32.mrb[0].mxu0
        %v2405 = vadd.f32 0.0, %v2404
        %v2406 = vpop.f32.mrb[0].mxu0
        %v2407 = vpop.f32.mrb[0].mxu0
        %v2408 = vadd.f32 0.0, %v2407
        %v2409 = vpop.f32.mrb[0].mxu0
        %2410 = vmatprep.mubr.bf16.mxu0 0
        %2411 = vmatmul.mubr.bf16.gmra.mrb[0].mxu0 %v2313
        %v2412 = vpop.f32.mrb[0].mxu0
        %v2413 = vadd.f32 0.0, %v2412
        %v2414 = vpop.f32.mrb[0].mxu0
        %v2415 = vpop.f32.mrb[0].mxu0
        %v2416 = vadd.f32 0.0, %v2415
        %v2417 = vpop.f32.mrb[0].mxu0
        %2418 = vmatprep.mubr.bf16.mxu0 0
        %2419 = vmatmul.mubr.bf16.gmra.mrb[0].mxu0 %v2316
        %v2420 = vpop.f32.mrb[0].mxu0
        %v2421 = vadd.f32 0.0, %v2420
        %v2422 = vpop.f32.mrb[0].mxu0
        %v2423 = vpop.f32.mrb[0].mxu0
        %v2424 = vadd.f32 0.0, %v2423
        %v2425 = vpop.f32.mrb[0].mxu0
        %2426 = vmatprep.mubr.bf16.mxu0 0
        %2427 = vmatmul.mubr.bf16.gmra.mrb[0].mxu0 %v2319
        %v2428 = vpop.f32.mrb[0].mxu0
        %v2429 = vadd.f32 0.0, %v2428
        %v2430 = vpop.f32.mrb[0].mxu0
        %v2431 = vpop.f32.mrb[0].mxu0
        %v2432 = vadd.f32 0.0, %v2431
        %v2433 = vpop.f32.mrb[0].mxu0
        %2434 = vmatprep.mubr.bf16.mxu0 0
        %2435 = vmatmul.mubr.bf16.gmra.mrb[0].mxu0 %v2322
        %v2436 = vpop.f32.mrb[0].mxu0
        %v2437 = vadd.f32 0.0, %v2436
        %v2438 = vpop.f32.mrb[0].mxu0
        %v2439 = vpop.f32.mrb[0].mxu0
        %v2440 = vadd.f32 0.0, %v2439
        %v2441 = vpop.f32.mrb[0].mxu0
        %2442 = vmatprep.mubr.bf16.mxu0 0
        %2443 = vmatmul.mubr.bf16.gmra.mrb[0].mxu0 %v2325
        %v2444 = vpop.f32.mrb[0].mxu0
        %v2445 = vadd.f32 0.0, %v2444
        %v2446 = vpop.f32.mrb[0].mxu0
        %v2447 = vpop.f32.mrb[0].mxu0
        %v2448 = vadd.f32 0.0, %v2447
        %v2449 = vpop.f32.mrb[0].mxu0
        %2450 = vmatprep.mubr.bf16.mxu0 0
        %2451 = vmatmul.mubr.bf16.gmra.mrb[0].mxu0 %v2328
        %v2452 = vpop.f32.mrb[0].mxu0
        %v2453 = vadd.f32 0.0, %v2452
        %v2454 = vpop.f32.mrb[0].mxu0
        %v2455 = vpop.f32.mrb[0].mxu0
        %v2456 = vadd.f32 0.0, %v2455
        %v2457 = vpop.f32.mrb[0].mxu0
        %2458 = vmatprep.mubr.bf16.mxu0 0
        %2459 = vmatmul.mubr.bf16.gmra.mrb[0].mxu0 %v2331
        %v2460 = vpop.f32.mrb[0].mxu0
        %v2461 = vadd.f32 0.0, %v2460
        %v2462 = vpop.f32.mrb[0].mxu0
        %v2463 = vpop.f32.mrb[0].mxu0
        %v2464 = vadd.f32 0.0, %v2463
        %v2465 = vpop.f32.mrb[0].mxu0
        %2466 = vmatprep.mubr.bf16.mxu0 0
        %2467 = vmatmul.mubr.bf16.gmra.mrb[0].mxu0 %v2334
        %v2468 = vpop.f32.mrb[0].mxu0
        %v2469 = vadd.f32 0.0, %v2468
        %v2470 = vpop.f32.mrb[0].mxu0
        %v2471 = vpop.f32.mrb[0].mxu0
        %v2472 = vadd.f32 0.0, %v2471
        %v2473 = vpop.f32.mrb[0].mxu0
        %2474 = vmatprep.mubr.bf16.mxu0 0
        %2475 = vmatmul.mubr.bf16.gmra.mrb[0].mxu0 %v2337
        %v2476 = vpop.f32.mrb[0].mxu0
        %v2477 = vadd.f32 0.0, %v2476
        %v2478 = vpop.f32.mrb[0].mxu0
        %v2479 = vpop.f32.mrb[0].mxu0
        %v2480 = vadd.f32 0.0, %v2479
        %v2481 = vpop.f32.mrb[0].mxu0
        %2482 = vmatprep.mubr.bf16.mxu0 0
        %2483 = vmatmul.mubr.bf16.gmra.mrb[0].mxu0 %v2340
        %v2484 = vpop.f32.mrb[0].mxu0
        %v2485 = vadd.f32 0.0, %v2484
        %v2486 = vpop.f32.mrb[0].mxu0
        %v2487 = vpop.f32.mrb[0].mxu0
        %v2488 = vadd.f32 0.0, %v2487
        %v2489 = vpop.f32.mrb[0].mxu0
        %2490 = vmatprep.mubr.bf16.mxu0 0
        %2491 = vmatmul.mubr.bf16.gmra.mrb[0].mxu0 %v2343
        %v2492 = vpop.f32.mrb[0].mxu0
        %v2493 = vadd.f32 0.0, %v2492
        %v2494 = vpop.f32.mrb[0].mxu0
        %v2495 = vpop.f32.mrb[0].mxu0
        %v2496 = vadd.f32 0.0, %v2495
        %v2497 = vpop.f32.mrb[0].mxu0
        %2498 = vmatprep.mubr.bf16.mxu0 0
        %2499 = vmatmul.mubr.bf16.gmra.mrb[0].mxu0 %v2346
        %v2500 = vpop.f32.mrb[0].mxu0
        %v2501 = vadd.f32 0.0, %v2500
        %v2502 = vpop.f32.mrb[0].mxu0
        %v2503 = vpop.f32.mrb[0].mxu0
        %v2504 = vadd.f32 0.0, %v2503
        %v2505 = vpop.f32.mrb[0].mxu0
        %2506 = vmatprep.mubr.bf16.mxu0 0
        %2507 = vmatmul.mubr.bf16.gmra.mrb[0].mxu0 %v2349
        %v2508 = vpop.f32.mrb[0].mxu0
        %v2509 = vadd.f32 0.0, %v2508
        %v2510 = vpop.f32.mrb[0].mxu0
        %v2511 = vpop.f32.mrb[0].mxu0
        %v2512 = vadd.f32 0.0, %v2511
        %v2513 = vpop.f32.mrb[0].mxu0
        %2514 = vdwg.mxu0
        %v2515 = vadd.f32 %v2157, %v2389
        %v2516 = vadd.f32 %v2158, %v2392
        %v2517 = vadd.f32 %v2159, %v2397
        %v2518 = vadd.f32 %v2160, %v2400
        %v2519 = vadd.f32 %v2161, %v2405
        %v2520 = vadd.f32 %v2162, %v2408
        %v2521 = vadd.f32 %v2163, %v2413
        %v2522 = vadd.f32 %v2164, %v2416
        %v2523 = vadd.f32 %v2165, %v2421
        %v2524 = vadd.f32 %v2166, %v2424
        %v2525 = vadd.f32 %v2167, %v2429
        %v2526 = vadd.f32 %v2168, %v2432
        %v2527 = vadd.f32 %v2169, %v2437
        %v2528 = vadd.f32 %v2170, %v2440
        %v2529 = vadd.f32 %v2171, %v2445
        %v2530 = vadd.f32 %v2172, %v2448
        %v2531 = vadd.f32 %v2173, %v2453
        %v2532 = vadd.f32 %v2174, %v2456
        %v2533 = vadd.f32 %v2175, %v2461
        %v2534 = vadd.f32 %v2176, %v2464
        %v2535 = vadd.f32 %v2177, %v2469
        %v2536 = vadd.f32 %v2178, %v2472
        %v2537 = vadd.f32 %v2179, %v2477
        %v2538 = vadd.f32 %v2180, %v2480
        %v2539 = vadd.f32 %v2181, %v2485
        %v2540 = vadd.f32 %v2182, %v2488
        %v2541 = vadd.f32 %v2183, %v2493
        %v2542 = vadd.f32 %v2184, %v2496
        %v2543 = vadd.f32 %v2185, %v2501
        %v2544 = vadd.f32 %v2186, %v2504
        %v2545 = vadd.f32 %v2187, %v2509
        %v2546 = vadd.f32 %v2188, %v2512
        %v2547 = vld [vmem:[%s619] sm:$0xf]
        %v2548 = vld [vmem:[%s619 + $0x4] sm:$0xf]
        %v2549 = vld [vmem:[%s619 + $0x8] sm:$0x1]
        %v2550 = vld [vmem:[%s619 + $0xc] sm:$0xf]
        %v2551 = vld [vmem:[%s619 + $0x10] sm:$0xf]
        %v2552 = vld [vmem:[%s619 + $0x14] sm:$0x1]
        %v2553 = vld [vmem:[%s619 + $0x18] sm:$0xf]
        %v2554 = vld [vmem:[%s619 + $0x1c] sm:$0xf]
        %v2555 = vld [vmem:[%s619 + $0x20] sm:$0x1]
        %v2556 = vld [vmem:[%s619 + $0x24] sm:$0xf]
        %v2557 = vld [vmem:[%s619 + $0x28] sm:$0xf]
        %v2558 = vld [vmem:[%s619 + $0x2c] sm:$0x1]
        %v2559 = vld [vmem:[%s619 + $0x30] sm:$0xf]
        %v2560 = vld [vmem:[%s619 + $0x34] sm:$0xf]
        %v2561 = vld [vmem:[%s619 + $0x38] sm:$0x1]
        %v2562 = vld [vmem:[%s619 + $0x3c] sm:$0xf]
        %v2563 = vld [vmem:[%s619 + $0x40] sm:$0xf]
        %v2564 = vld [vmem:[%s619 + $0x44] sm:$0x1]
        %v2565 = vld [vmem:[%s619 + $0x48] sm:$0xf]
        %v2566 = vld [vmem:[%s619 + $0x4c] sm:$0xf]
        %v2567 = vld [vmem:[%s619 + $0x50] sm:$0x1]
        %v2568 = vld [vmem:[%s619 + $0x54] sm:$0xf]
        %v2569 = vld [vmem:[%s619 + $0x58] sm:$0xf]
        %v2570 = vld [vmem:[%s619 + $0x5c] sm:$0x1]
        %v2571 = vld [vmem:[%s619 + $0x60] sm:$0xf]
        %v2572 = vld [vmem:[%s619 + $0x64] sm:$0xf]
        %v2573 = vld [vmem:[%s619 + $0x68] sm:$0x1]
        %v2574 = vld [vmem:[%s619 + $0x6c] sm:$0xf]
        %v2575 = vld [vmem:[%s619 + $0x70] sm:$0xf]
        %v2576 = vld [vmem:[%s619 + $0x74] sm:$0x1]
        %v2577 = vld [vmem:[%s619 + $0x78] sm:$0xf]
        %v2578 = vld [vmem:[%s619 + $0x7c] sm:$0xf]
        %v2579 = vld [vmem:[%s619 + $0x80] sm:$0x1]
        %v2580 = vld [vmem:[%s619 + $0x84] sm:$0xf]
        %v2581 = vld [vmem:[%s619 + $0x88] sm:$0xf]
        %v2582 = vld [vmem:[%s619 + $0x8c] sm:$0x1]
        %v2583 = vld [vmem:[%s619 + $0x90] sm:$0xf]
        %v2584 = vld [vmem:[%s619 + $0x94] sm:$0xf]
        %v2585 = vld [vmem:[%s619 + $0x98] sm:$0x1]
        %v2586 = vld [vmem:[%s619 + $0x9c] sm:$0xf]
        %v2587 = vld [vmem:[%s619 + $0xa0] sm:$0xf]
        %v2588 = vld [vmem:[%s619 + $0xa4] sm:$0x1]
        %v2589 = vld [vmem:[%s619 + $0xa8] sm:$0xf]
        %v2590 = vld [vmem:[%s619 + $0xac] sm:$0xf]
        %v2591 = vld [vmem:[%s619 + $0xb0] sm:$0x1]
        %v2592 = vld [vmem:[%s619 + $0xb4] sm:$0xf]
        %v2593 = vld [vmem:[%s619 + $0xb8] sm:$0xf]
        %v2594 = vld [vmem:[%s619 + $0xbc] sm:$0x1]
        %v2596 = vshrl.u32 %v2547, 16
        %v2598 = vrot.slane %v2596, 4
        %v2599 = vshll.u32 %v2547, 16
        %v2601 = vrot.slane %v2599, 5
        %v2602 = vor.u32 %v2598, %v2601
        %v2603 = vrot.slane %v2602, 4
        %v2605 = vshll.u32 %v2548, 16
        %v2607 = vrot.slane %v2605, 5
        %v2608 = vsel %vm788, %v2603, %v2607
        %v2609 = vshrl.u32 %v2548, 16
        %v2611 = vrot.slane %v2609, 4
        %v2612 = vor.u32 %v2611, %v2607
        %v2613 = vrot.slane %v2612, 4
        %v2615 = vshll.u32 %v2549, 16
        %v2617 = vrot.slane %v2615, 5
        %v2618 = vsel %vm788, %v2613, %v2617
        %v2620 = vshrl.u32 %v2550, 16
        %v2622 = vrot.slane %v2620, 4
        %v2623 = vshll.u32 %v2550, 16
        %v2625 = vrot.slane %v2623, 5
        %v2626 = vor.u32 %v2622, %v2625
        %v2627 = vrot.slane %v2626, 4
        %v2629 = vshll.u32 %v2551, 16
        %v2631 = vrot.slane %v2629, 5
        %v2632 = vsel %vm788, %v2627, %v2631
        %v2633 = vshrl.u32 %v2551, 16
        %v2635 = vrot.slane %v2633, 4
        %v2636 = vor.u32 %v2635, %v2631
        %v2637 = vrot.slane %v2636, 4
        %v2639 = vshll.u32 %v2552, 16
        %v2641 = vrot.slane %v2639, 5
        %v2642 = vsel %vm788, %v2637, %v2641
        %v2644 = vshrl.u32 %v2553, 16
        %v2646 = vrot.slane %v2644, 4
        %v2647 = vshll.u32 %v2553, 16
        %v2649 = vrot.slane %v2647, 5
        %v2650 = vor.u32 %v2646, %v2649
        %v2651 = vrot.slane %v2650, 4
        %v2653 = vshll.u32 %v2554, 16
        %v2655 = vrot.slane %v2653, 5
        %v2656 = vsel %vm788, %v2651, %v2655
        %v2657 = vshrl.u32 %v2554, 16
        %v2659 = vrot.slane %v2657, 4
        %v2660 = vor.u32 %v2659, %v2655
        %v2661 = vrot.slane %v2660, 4
        %v2663 = vshll.u32 %v2555, 16
        %v2665 = vrot.slane %v2663, 5
        %v2666 = vsel %vm788, %v2661, %v2665
        %v2668 = vshrl.u32 %v2556, 16
        %v2670 = vrot.slane %v2668, 4
        %v2671 = vshll.u32 %v2556, 16
        %v2673 = vrot.slane %v2671, 5
        %v2674 = vor.u32 %v2670, %v2673
        %v2675 = vrot.slane %v2674, 4
        %v2677 = vshll.u32 %v2557, 16
        %v2679 = vrot.slane %v2677, 5
        %v2680 = vsel %vm788, %v2675, %v2679
        %v2681 = vshrl.u32 %v2557, 16
        %v2683 = vrot.slane %v2681, 4
        %v2684 = vor.u32 %v2683, %v2679
        %v2685 = vrot.slane %v2684, 4
        %v2687 = vshll.u32 %v2558, 16
        %v2689 = vrot.slane %v2687, 5
        %v2690 = vsel %vm788, %v2685, %v2689
        %v2692 = vshrl.u32 %v2559, 16
        %v2694 = vrot.slane %v2692, 4
        %v2695 = vshll.u32 %v2559, 16
        %v2697 = vrot.slane %v2695, 5
        %v2698 = vor.u32 %v2694, %v2697
        %v2699 = vrot.slane %v2698, 4
        %v2701 = vshll.u32 %v2560, 16
        %v2703 = vrot.slane %v2701, 5
        %v2704 = vsel %vm788, %v2699, %v2703
        %v2705 = vshrl.u32 %v2560, 16
        %v2707 = vrot.slane %v2705, 4
        %v2708 = vor.u32 %v2707, %v2703
        %v2709 = vrot.slane %v2708, 4
        %v2711 = vshll.u32 %v2561, 16
        %v2713 = vrot.slane %v2711, 5
        %v2714 = vsel %vm788, %v2709, %v2713
        %v2716 = vshrl.u32 %v2562, 16
        %v2718 = vrot.slane %v2716, 4
        %v2719 = vshll.u32 %v2562, 16
        %v2721 = vrot.slane %v2719, 5
        %v2722 = vor.u32 %v2718, %v2721
        %v2723 = vrot.slane %v2722, 4
        %v2725 = vshll.u32 %v2563, 16
        %v2727 = vrot.slane %v2725, 5
        %v2728 = vsel %vm788, %v2723, %v2727
        %v2729 = vshrl.u32 %v2563, 16
        %v2731 = vrot.slane %v2729, 4
        %v2732 = vor.u32 %v2731, %v2727
        %v2733 = vrot.slane %v2732, 4
        %v2735 = vshll.u32 %v2564, 16
        %v2737 = vrot.slane %v2735, 5
        %v2738 = vsel %vm788, %v2733, %v2737
        %v2740 = vshrl.u32 %v2565, 16
        %v2742 = vrot.slane %v2740, 4
        %v2743 = vshll.u32 %v2565, 16
        %v2745 = vrot.slane %v2743, 5
        %v2746 = vor.u32 %v2742, %v2745
        %v2747 = vrot.slane %v2746, 4
        %v2749 = vshll.u32 %v2566, 16
        %v2751 = vrot.slane %v2749, 5
        %v2752 = vsel %vm788, %v2747, %v2751
        %v2753 = vshrl.u32 %v2566, 16
        %v2755 = vrot.slane %v2753, 4
        %v2756 = vor.u32 %v2755, %v2751
        %v2757 = vrot.slane %v2756, 4
        %v2759 = vshll.u32 %v2567, 16
        %v2761 = vrot.slane %v2759, 5
        %v2762 = vsel %vm788, %v2757, %v2761
        %v2764 = vshrl.u32 %v2568, 16
        %v2766 = vrot.slane %v2764, 4
        %v2767 = vshll.u32 %v2568, 16
        %v2769 = vrot.slane %v2767, 5
        %v2770 = vor.u32 %v2766, %v2769
        %v2771 = vrot.slane %v2770, 4
        %v2773 = vshll.u32 %v2569, 16
        %v2775 = vrot.slane %v2773, 5
        %v2776 = vsel %vm788, %v2771, %v2775
        %v2777 = vshrl.u32 %v2569, 16
        %v2779 = vrot.slane %v2777, 4
        %v2780 = vor.u32 %v2779, %v2775
        %v2781 = vrot.slane %v2780, 4
        %v2783 = vshll.u32 %v2570, 16
        %v2785 = vrot.slane %v2783, 5
        %v2786 = vsel %vm788, %v2781, %v2785
        %v2788 = vshrl.u32 %v2571, 16
        %v2790 = vrot.slane %v2788, 4
        %v2791 = vshll.u32 %v2571, 16
        %v2793 = vrot.slane %v2791, 5
        %v2794 = vor.u32 %v2790, %v2793
        %v2795 = vrot.slane %v2794, 4
        %v2797 = vshll.u32 %v2572, 16
        %v2799 = vrot.slane %v2797, 5
        %v2800 = vsel %vm788, %v2795, %v2799
        %v2801 = vshrl.u32 %v2572, 16
        %v2803 = vrot.slane %v2801, 4
        %v2804 = vor.u32 %v2803, %v2799
        %v2805 = vrot.slane %v2804, 4
        %v2807 = vshll.u32 %v2573, 16
        %v2809 = vrot.slane %v2807, 5
        %v2810 = vsel %vm788, %v2805, %v2809
        %v2812 = vshrl.u32 %v2574, 16
        %v2814 = vrot.slane %v2812, 4
        %v2815 = vshll.u32 %v2574, 16
        %v2817 = vrot.slane %v2815, 5
        %v2818 = vor.u32 %v2814, %v2817
        %v2819 = vrot.slane %v2818, 4
        %v2821 = vshll.u32 %v2575, 16
        %v2823 = vrot.slane %v2821, 5
        %v2824 = vsel %vm788, %v2819, %v2823
        %v2825 = vshrl.u32 %v2575, 16
        %v2827 = vrot.slane %v2825, 4
        %v2828 = vor.u32 %v2827, %v2823
        %v2829 = vrot.slane %v2828, 4
        %v2831 = vshll.u32 %v2576, 16
        %v2833 = vrot.slane %v2831, 5
        %v2834 = vsel %vm788, %v2829, %v2833
        %v2836 = vshrl.u32 %v2577, 16
        %v2838 = vrot.slane %v2836, 4
        %v2839 = vshll.u32 %v2577, 16
        %v2841 = vrot.slane %v2839, 5
        %v2842 = vor.u32 %v2838, %v2841
        %v2843 = vrot.slane %v2842, 4
        %v2845 = vshll.u32 %v2578, 16
        %v2847 = vrot.slane %v2845, 5
        %v2848 = vsel %vm788, %v2843, %v2847
        %v2849 = vshrl.u32 %v2578, 16
        %v2851 = vrot.slane %v2849, 4
        %v2852 = vor.u32 %v2851, %v2847
        %v2853 = vrot.slane %v2852, 4
        %v2855 = vshll.u32 %v2579, 16
        %v2857 = vrot.slane %v2855, 5
        %v2858 = vsel %vm788, %v2853, %v2857
        %v2860 = vshrl.u32 %v2580, 16
        %v2862 = vrot.slane %v2860, 4
        %v2863 = vshll.u32 %v2580, 16
        %v2865 = vrot.slane %v2863, 5
        %v2866 = vor.u32 %v2862, %v2865
        %v2867 = vrot.slane %v2866, 4
        %v2869 = vshll.u32 %v2581, 16
        %v2871 = vrot.slane %v2869, 5
        %v2872 = vsel %vm788, %v2867, %v2871
        %v2873 = vshrl.u32 %v2581, 16
        %v2875 = vrot.slane %v2873, 4
        %v2876 = vor.u32 %v2875, %v2871
        %v2877 = vrot.slane %v2876, 4
        %v2879 = vshll.u32 %v2582, 16
        %v2881 = vrot.slane %v2879, 5
        %v2882 = vsel %vm788, %v2877, %v2881
        %v2884 = vshrl.u32 %v2583, 16
        %v2886 = vrot.slane %v2884, 4
        %v2887 = vshll.u32 %v2583, 16
        %v2889 = vrot.slane %v2887, 5
        %v2890 = vor.u32 %v2886, %v2889
        %v2891 = vrot.slane %v2890, 4
        %v2893 = vshll.u32 %v2584, 16
        %v2895 = vrot.slane %v2893, 5
        %v2896 = vsel %vm788, %v2891, %v2895
        %v2897 = vshrl.u32 %v2584, 16
        %v2899 = vrot.slane %v2897, 4
        %v2900 = vor.u32 %v2899, %v2895
        %v2901 = vrot.slane %v2900, 4
        %v2903 = vshll.u32 %v2585, 16
        %v2905 = vrot.slane %v2903, 5
        %v2906 = vsel %vm788, %v2901, %v2905
        %v2908 = vshrl.u32 %v2586, 16
        %v2910 = vrot.slane %v2908, 4
        %v2911 = vshll.u32 %v2586, 16
        %v2913 = vrot.slane %v2911, 5
        %v2914 = vor.u32 %v2910, %v2913
        %v2915 = vrot.slane %v2914, 4
        %v2917 = vshll.u32 %v2587, 16
        %v2919 = vrot.slane %v2917, 5
        %v2920 = vsel %vm788, %v2915, %v2919
        %v2921 = vshrl.u32 %v2587, 16
        %v2923 = vrot.slane %v2921, 4
        %v2924 = vor.u32 %v2923, %v2919
        %v2925 = vrot.slane %v2924, 4
        %v2927 = vshll.u32 %v2588, 16
        %v2929 = vrot.slane %v2927, 5
        %v2930 = vsel %vm788, %v2925, %v2929
        %v2932 = vshrl.u32 %v2589, 16
        %v2934 = vrot.slane %v2932, 4
        %v2935 = vshll.u32 %v2589, 16
        %v2937 = vrot.slane %v2935, 5
        %v2938 = vor.u32 %v2934, %v2937
        %v2939 = vrot.slane %v2938, 4
        %v2941 = vshll.u32 %v2590, 16
        %v2943 = vrot.slane %v2941, 5
        %v2944 = vsel %vm788, %v2939, %v2943
        %v2945 = vshrl.u32 %v2590, 16
        %v2947 = vrot.slane %v2945, 4
        %v2948 = vor.u32 %v2947, %v2943
        %v2949 = vrot.slane %v2948, 4
        %v2951 = vshll.u32 %v2591, 16
        %v2953 = vrot.slane %v2951, 5
        %v2954 = vsel %vm788, %v2949, %v2953
        %v2956 = vshrl.u32 %v2592, 16
        %v2958 = vrot.slane %v2956, 4
        %v2959 = vshll.u32 %v2592, 16
        %v2961 = vrot.slane %v2959, 5
        %v2962 = vor.u32 %v2958, %v2961
        %v2963 = vrot.slane %v2962, 4
        %v2965 = vshll.u32 %v2593, 16
        %v2967 = vrot.slane %v2965, 5
        %v2968 = vsel %vm788, %v2963, %v2967
        %v2969 = vshrl.u32 %v2593, 16
        %v2971 = vrot.slane %v2969, 4
        %v2972 = vor.u32 %v2971, %v2967
        %v2973 = vrot.slane %v2972, 4
        %v2975 = vshll.u32 %v2594, 16
        %v2977 = vrot.slane %v2975, 5
        %v2978 = vsel %vm788, %v2973, %v2977
        %s2979 = scalar_lea.vmem %s1, 8
        %v2980 = vld [vmem:[%s2979] sm:$0x3]
        %v2981 = vunpack.c.l.b16 %v2608
        %v2982 = vunpack.c.l.b16 %v2618
        %v2983 = vunpack.c.l.b16 %v2632
        %v2984 = vunpack.c.l.b16 %v2642
        %v2985 = vunpack.c.l.b16 %v2656
        %v2986 = vunpack.c.l.b16 %v2666
        %v2987 = vunpack.c.l.b16 %v2680
        %v2988 = vunpack.c.l.b16 %v2690
        %v2989 = vunpack.c.l.b16 %v2704
        %v2990 = vunpack.c.l.b16 %v2714
        %v2991 = vunpack.c.l.b16 %v2728
        %v2992 = vunpack.c.l.b16 %v2738
        %v2993 = vunpack.c.l.b16 %v2752
        %v2994 = vunpack.c.l.b16 %v2762
        %v2995 = vunpack.c.l.b16 %v2776
        %v2996 = vunpack.c.l.b16 %v2786
        %v2997 = vunpack.c.l.b16 %v2800
        %v2998 = vunpack.c.l.b16 %v2810
        %v2999 = vunpack.c.l.b16 %v2824
        %v3000 = vunpack.c.l.b16 %v2834
        %v3001 = vunpack.c.l.b16 %v2848
        %v3002 = vunpack.c.l.b16 %v2858
        %v3003 = vunpack.c.l.b16 %v2872
        %v3004 = vunpack.c.l.b16 %v2882
        %v3005 = vunpack.c.l.b16 %v2896
        %v3006 = vunpack.c.l.b16 %v2906
        %v3007 = vunpack.c.l.b16 %v2920
        %v3008 = vunpack.c.l.b16 %v2930
        %v3009 = vunpack.c.l.b16 %v2944
        %v3010 = vunpack.c.l.b16 %v2954
        %v3011 = vunpack.c.l.b16 %v2968
        %v3012 = vunpack.c.l.b16 %v2978
        %v3013 = vpack.c.b16 %v2982, %v2981
        %v3014 = vpack.c.b16 %v2984, %v2983
        %v3015 = vpack.c.b16 %v2986, %v2985
        %v3016 = vpack.c.b16 %v2988, %v2987
        %v3017 = vpack.c.b16 %v2990, %v2989
        %v3018 = vpack.c.b16 %v2992, %v2991
        %v3019 = vpack.c.b16 %v2994, %v2993
        %v3020 = vpack.c.b16 %v2996, %v2995
        %v3021 = vpack.c.b16 %v2998, %v2997
        %v3022 = vpack.c.b16 %v3000, %v2999
        %v3023 = vpack.c.b16 %v3002, %v3001
        %v3024 = vpack.c.b16 %v3004, %v3003
        %v3025 = vpack.c.b16 %v3006, %v3005
        %v3026 = vpack.c.b16 %v3008, %v3007
        %v3027 = vpack.c.b16 %v3010, %v3009
        %v3028 = vpack.c.b16 %v3012, %v3011
        %v3030 = vsel %vm1223, %v3013, 0
        %v3033 = vsel %vm1223, %v3014, 0
        %v3036 = vsel %vm1223, %v3015, 0
        %v3039 = vsel %vm1223, %v3016, 0
        %v3042 = vsel %vm1223, %v3017, 0
        %v3045 = vsel %vm1223, %v3018, 0
        %v3048 = vsel %vm1223, %v3019, 0
        %v3051 = vsel %vm1223, %v3020, 0
        %v3054 = vsel %vm1223, %v3021, 0
        %v3057 = vsel %vm1223, %v3022, 0
        %v3060 = vsel %vm1223, %v3023, 0
        %v3063 = vsel %vm1223, %v3024, 0
        %v3066 = vsel %vm1223, %v3025, 0
        %v3069 = vsel %vm1223, %v3026, 0
        %v3072 = vsel %vm1223, %v3027, 0
        %v3075 = vsel %vm1223, %v3028, 0
        %v3078 = vand.u32 %v2980, %v1275
        %3080 = vmatprep.subr.bf16.mxu0 0
        %3081 = vmatpush1.bf16.msra.mxu0 %v3078
        %3082 = vmatprep.subr.bf16.mxu0 0
        %3083 = vmatpush1.bf16.msra.mxu0 0
        %3084 = vmatprep.subr.bf16.mxu0 0
        %3085 = vmatpush1.bf16.msra.mxu0 0
        %3086 = vmatprep.subr.bf16.mxu0 0
        %3087 = vmatpush1.bf16.msra.mxu0 0
        %3088 = vmatprep.subr.bf16.mxu0 0
        %3089 = vmatpush1.bf16.msra.mxu0 0
        %3090 = vmatprep.subr.bf16.mxu0 0
        %3091 = vmatpush1.bf16.msra.mxu0 0
        %3092 = vmatprep.subr.bf16.mxu0 0
        %3093 = vmatpush1.bf16.msra.mxu0 0
        %3094 = vmatprep.subr.bf16.mxu0 0
        %3095 = vmatpush1.bf16.msra.mxu0 0
        %3096 = vmatprep.subr.bf16.mxu0 0
        %3097 = vmatpush1.bf16.msra.mxu0 0
        %3098 = vmatprep.subr.bf16.mxu0 0
        %3099 = vmatpush1.bf16.msra.mxu0 0
        %3100 = vmatprep.subr.bf16.mxu0 0
        %3101 = vmatpush1.bf16.msra.mxu0 0
        %3102 = vmatprep.subr.bf16.mxu0 0
        %3103 = vmatpush1.bf16.msra.mxu0 0
        %3104 = vmatprep.subr.bf16.mxu0 0
        %3105 = vmatpush1.bf16.msra.mxu0 0
        %3106 = vmatprep.subr.bf16.mxu0 0
        %3107 = vmatpush1.bf16.msra.mxu0 0
        %3108 = vmatprep.subr.bf16.mxu0 0
        %3109 = vmatpush1.bf16.msra.mxu0 0
        %3110 = vmatprep.subr.bf16.mxu0 0
        %3111 = vmatpush1.bf16.msra.mxu0 0
        %3112 = vmatprep.mubr.bf16.mxu0 0
        %3113 = vmatmul.mubr.bf16.gmra.mrb[0].mxu0 %v3030
        %v3114 = vpop.f32.mrb[0].mxu0
        %v3115 = vadd.f32 0.0, %v3114
        %v3116 = vpop.f32.mrb[0].mxu0
        %v3117 = vpop.f32.mrb[0].mxu0
        %v3118 = vadd.f32 0.0, %v3117
        %v3119 = vpop.f32.mrb[0].mxu0
        %3120 = vmatprep.mubr.bf16.mxu0 0
        %3121 = vmatmul.mubr.bf16.gmra.mrb[0].mxu0 %v3033
        %v3122 = vpop.f32.mrb[0].mxu0
        %v3123 = vadd.f32 0.0, %v3122
        %v3124 = vpop.f32.mrb[0].mxu0
        %v3125 = vpop.f32.mrb[0].mxu0
        %v3126 = vadd.f32 0.0, %v3125
        %v3127 = vpop.f32.mrb[0].mxu0
        %3128 = vmatprep.mubr.bf16.mxu0 0
        %3129 = vmatmul.mubr.bf16.gmra.mrb[0].mxu0 %v3036
        %v3130 = vpop.f32.mrb[0].mxu0
        %v3131 = vadd.f32 0.0, %v3130
        %v3132 = vpop.f32.mrb[0].mxu0
        %v3133 = vpop.f32.mrb[0].mxu0
        %v3134 = vadd.f32 0.0, %v3133
        %v3135 = vpop.f32.mrb[0].mxu0
        %3136 = vmatprep.mubr.bf16.mxu0 0
        %3137 = vmatmul.mubr.bf16.gmra.mrb[0].mxu0 %v3039
        %v3138 = vpop.f32.mrb[0].mxu0
        %v3139 = vadd.f32 0.0, %v3138
        %v3140 = vpop.f32.mrb[0].mxu0
        %v3141 = vpop.f32.mrb[0].mxu0
        %v3142 = vadd.f32 0.0, %v3141
        %v3143 = vpop.f32.mrb[0].mxu0
        %3144 = vmatprep.mubr.bf16.mxu0 0
        %3145 = vmatmul.mubr.bf16.gmra.mrb[0].mxu0 %v3042
        %v3146 = vpop.f32.mrb[0].mxu0
        %v3147 = vadd.f32 0.0, %v3146
        %v3148 = vpop.f32.mrb[0].mxu0
        %v3149 = vpop.f32.mrb[0].mxu0
        %v3150 = vadd.f32 0.0, %v3149
        %v3151 = vpop.f32.mrb[0].mxu0
        %3152 = vmatprep.mubr.bf16.mxu0 0
        %3153 = vmatmul.mubr.bf16.gmra.mrb[0].mxu0 %v3045
        %v3154 = vpop.f32.mrb[0].mxu0
        %v3155 = vadd.f32 0.0, %v3154
        %v3156 = vpop.f32.mrb[0].mxu0
        %v3157 = vpop.f32.mrb[0].mxu0
        %v3158 = vadd.f32 0.0, %v3157
        %v3159 = vpop.f32.mrb[0].mxu0
        %3160 = vmatprep.mubr.bf16.mxu0 0
        %3161 = vmatmul.mubr.bf16.gmra.mrb[0].mxu0 %v3048
        %v3162 = vpop.f32.mrb[0].mxu0
        %v3163 = vadd.f32 0.0, %v3162
        %v3164 = vpop.f32.mrb[0].mxu0
        %v3165 = vpop.f32.mrb[0].mxu0
        %v3166 = vadd.f32 0.0, %v3165
        %v3167 = vpop.f32.mrb[0].mxu0
        %3168 = vmatprep.mubr.bf16.mxu0 0
        %3169 = vmatmul.mubr.bf16.gmra.mrb[0].mxu0 %v3051
        %v3170 = vpop.f32.mrb[0].mxu0
        %v3171 = vadd.f32 0.0, %v3170
        %v3172 = vpop.f32.mrb[0].mxu0
        %v3173 = vpop.f32.mrb[0].mxu0
        %v3174 = vadd.f32 0.0, %v3173
        %v3175 = vpop.f32.mrb[0].mxu0
        %3176 = vmatprep.mubr.bf16.mxu0 0
        %3177 = vmatmul.mubr.bf16.gmra.mrb[0].mxu0 %v3054
        %v3178 = vpop.f32.mrb[0].mxu0
        %v3179 = vadd.f32 0.0, %v3178
        %v3180 = vpop.f32.mrb[0].mxu0
        %v3181 = vpop.f32.mrb[0].mxu0
        %v3182 = vadd.f32 0.0, %v3181
        %v3183 = vpop.f32.mrb[0].mxu0
        %3184 = vmatprep.mubr.bf16.mxu0 0
        %3185 = vmatmul.mubr.bf16.gmra.mrb[0].mxu0 %v3057
        %v3186 = vpop.f32.mrb[0].mxu0
        %v3187 = vadd.f32 0.0, %v3186
        %v3188 = vpop.f32.mrb[0].mxu0
        %v3189 = vpop.f32.mrb[0].mxu0
        %v3190 = vadd.f32 0.0, %v3189
        %v3191 = vpop.f32.mrb[0].mxu0
        %3192 = vmatprep.mubr.bf16.mxu0 0
        %3193 = vmatmul.mubr.bf16.gmra.mrb[0].mxu0 %v3060
        %v3194 = vpop.f32.mrb[0].mxu0
        %v3195 = vadd.f32 0.0, %v3194
        %v3196 = vpop.f32.mrb[0].mxu0
        %v3197 = vpop.f32.mrb[0].mxu0
        %v3198 = vadd.f32 0.0, %v3197
        %v3199 = vpop.f32.mrb[0].mxu0
        %3200 = vmatprep.mubr.bf16.mxu0 0
        %3201 = vmatmul.mubr.bf16.gmra.mrb[0].mxu0 %v3063
        %v3202 = vpop.f32.mrb[0].mxu0
        %v3203 = vadd.f32 0.0, %v3202
        %v3204 = vpop.f32.mrb[0].mxu0
        %v3205 = vpop.f32.mrb[0].mxu0
        %v3206 = vadd.f32 0.0, %v3205
        %v3207 = vpop.f32.mrb[0].mxu0
        %3208 = vmatprep.mubr.bf16.mxu0 0
        %3209 = vmatmul.mubr.bf16.gmra.mrb[0].mxu0 %v3066
        %v3210 = vpop.f32.mrb[0].mxu0
        %v3211 = vadd.f32 0.0, %v3210
        %v3212 = vpop.f32.mrb[0].mxu0
        %v3213 = vpop.f32.mrb[0].mxu0
        %v3214 = vadd.f32 0.0, %v3213
        %v3215 = vpop.f32.mrb[0].mxu0
        %3216 = vmatprep.mubr.bf16.mxu0 0
        %3217 = vmatmul.mubr.bf16.gmra.mrb[0].mxu0 %v3069
        %v3218 = vpop.f32.mrb[0].mxu0
        %v3219 = vadd.f32 0.0, %v3218
        %v3220 = vpop.f32.mrb[0].mxu0
        %v3221 = vpop.f32.mrb[0].mxu0
        %v3222 = vadd.f32 0.0, %v3221
        %v3223 = vpop.f32.mrb[0].mxu0
        %3224 = vmatprep.mubr.bf16.mxu0 0
        %3225 = vmatmul.mubr.bf16.gmra.mrb[0].mxu0 %v3072
        %v3226 = vpop.f32.mrb[0].mxu0
        %v3227 = vadd.f32 0.0, %v3226
        %v3228 = vpop.f32.mrb[0].mxu0
        %v3229 = vpop.f32.mrb[0].mxu0
        %v3230 = vadd.f32 0.0, %v3229
        %v3231 = vpop.f32.mrb[0].mxu0
        %3232 = vmatprep.mubr.bf16.mxu0 0
        %3233 = vmatmul.mubr.bf16.gmra.mrb[0].mxu0 %v3075
        %v3234 = vpop.f32.mrb[0].mxu0
        %v3235 = vadd.f32 0.0, %v3234
        %v3236 = vpop.f32.mrb[0].mxu0
        %v3237 = vpop.f32.mrb[0].mxu0
        %v3238 = vadd.f32 0.0, %v3237
        %v3239 = vpop.f32.mrb[0].mxu0
        %3240 = vdwg.mxu0
        %v3241 = vadd.f32 %v2515, %v3115
        %v3242 = vadd.f32 %v2516, %v3118
        %v3243 = vadd.f32 %v2517, %v3123
        %v3244 = vadd.f32 %v2518, %v3126
        %v3245 = vadd.f32 %v2519, %v3131
        %v3246 = vadd.f32 %v2520, %v3134
        %v3247 = vadd.f32 %v2521, %v3139
        %v3248 = vadd.f32 %v2522, %v3142
        %v3249 = vadd.f32 %v2523, %v3147
        %v3250 = vadd.f32 %v2524, %v3150
        %v3251 = vadd.f32 %v2525, %v3155
        %v3252 = vadd.f32 %v2526, %v3158
        %v3253 = vadd.f32 %v2527, %v3163
        %v3254 = vadd.f32 %v2528, %v3166
        %v3255 = vadd.f32 %v2529, %v3171
        %v3256 = vadd.f32 %v2530, %v3174
        %v3257 = vadd.f32 %v2531, %v3179
        %v3258 = vadd.f32 %v2532, %v3182
        %v3259 = vadd.f32 %v2533, %v3187
        %v3260 = vadd.f32 %v2534, %v3190
        %v3261 = vadd.f32 %v2535, %v3195
        %v3262 = vadd.f32 %v2536, %v3198
        %v3263 = vadd.f32 %v2537, %v3203
        %v3264 = vadd.f32 %v2538, %v3206
        %v3265 = vadd.f32 %v2539, %v3211
        %v3266 = vadd.f32 %v2540, %v3214
        %v3267 = vadd.f32 %v2541, %v3219
        %v3268 = vadd.f32 %v2542, %v3222
        %v3269 = vadd.f32 %v2543, %v3227
        %v3270 = vadd.f32 %v2544, %v3230
        %v3271 = vadd.f32 %v2545, %v3235
        %v3272 = vadd.f32 %v2546, %v3238
        %v3273 = vld [vmem:[%s619] sm:$0xe]
        %v3274 = vld [vmem:[%s619 + $0xc] sm:$0xe]
        %v3275 = vld [vmem:[%s619 + $0x18] sm:$0xe]
        %v3276 = vld [vmem:[%s619 + $0x24] sm:$0xe]
        %v3277 = vld [vmem:[%s619 + $0x30] sm:$0xe]
        %v3278 = vld [vmem:[%s619 + $0x3c] sm:$0xe]
        %v3279 = vld [vmem:[%s619 + $0x48] sm:$0xe]
        %v3280 = vld [vmem:[%s619 + $0x54] sm:$0xe]
        %v3281 = vld [vmem:[%s619 + $0x60] sm:$0xe]
        %v3282 = vld [vmem:[%s619 + $0x6c] sm:$0xe]
        %v3283 = vld [vmem:[%s619 + $0x78] sm:$0xe]
        %v3284 = vld [vmem:[%s619 + $0x84] sm:$0xe]
        %v3285 = vld [vmem:[%s619 + $0x90] sm:$0xe]
        %v3286 = vld [vmem:[%s619 + $0x9c] sm:$0xe]
        %v3287 = vld [vmem:[%s619 + $0xa8] sm:$0xe]
        %v3288 = vld [vmem:[%s619 + $0xb4] sm:$0xe]
        %v3337 = vrot.slane %v3273, 5
        %v3338 = vrot.slane %v3337, 4
        %v3339 = vrot.slane %v2548, 5
        %v3340 = vsel %vm1782, %v3338, %v3339
        %v3341 = vrot.slane %v3339, 4
        %v3342 = vrot.slane %v2549, 5
        %v3343 = vsel %vm1782, %v3341, %v3342
        %v3344 = vrot.slane %v3274, 5
        %v3345 = vrot.slane %v3344, 4
        %v3346 = vrot.slane %v2551, 5
        %v3347 = vsel %vm1782, %v3345, %v3346
        %v3348 = vrot.slane %v3346, 4
        %v3349 = vrot.slane %v2552, 5
        %v3350 = vsel %vm1782, %v3348, %v3349
        %v3351 = vrot.slane %v3275, 5
        %v3352 = vrot.slane %v3351, 4
        %v3353 = vrot.slane %v2554, 5
        %v3354 = vsel %vm1782, %v3352, %v3353
        %v3355 = vrot.slane %v3353, 4
        %v3356 = vrot.slane %v2555, 5
        %v3357 = vsel %vm1782, %v3355, %v3356
        %v3358 = vrot.slane %v3276, 5
        %v3359 = vrot.slane %v3358, 4
        %v3360 = vrot.slane %v2557, 5
        %v3361 = vsel %vm1782, %v3359, %v3360
        %v3362 = vrot.slane %v3360, 4
        %v3363 = vrot.slane %v2558, 5
        %v3364 = vsel %vm1782, %v3362, %v3363
        %v3365 = vrot.slane %v3277, 5
        %v3366 = vrot.slane %v3365, 4
        %v3367 = vrot.slane %v2560, 5
        %v3368 = vsel %vm1782, %v3366, %v3367
        %v3369 = vrot.slane %v3367, 4
        %v3370 = vrot.slane %v2561, 5
        %v3371 = vsel %vm1782, %v3369, %v3370
        %v3372 = vrot.slane %v3278, 5
        %v3373 = vrot.slane %v3372, 4
        %v3374 = vrot.slane %v2563, 5
        %v3375 = vsel %vm1782, %v3373, %v3374
        %v3376 = vrot.slane %v3374, 4
        %v3377 = vrot.slane %v2564, 5
        %v3378 = vsel %vm1782, %v3376, %v3377
        %v3379 = vrot.slane %v3279, 5
        %v3380 = vrot.slane %v3379, 4
        %v3381 = vrot.slane %v2566, 5
        %v3382 = vsel %vm1782, %v3380, %v3381
        %v3383 = vrot.slane %v3381, 4
        %v3384 = vrot.slane %v2567, 5
        %v3385 = vsel %vm1782, %v3383, %v3384
        %v3386 = vrot.slane %v3280, 5
        %v3387 = vrot.slane %v3386, 4
        %v3388 = vrot.slane %v2569, 5
        %v3389 = vsel %vm1782, %v3387, %v3388
        %v3390 = vrot.slane %v3388, 4
        %v3391 = vrot.slane %v2570, 5
        %v3392 = vsel %vm1782, %v3390, %v3391
        %v3393 = vrot.slane %v3281, 5
        %v3394 = vrot.slane %v3393, 4
        %v3395 = vrot.slane %v2572, 5
        %v3396 = vsel %vm1782, %v3394, %v3395
        %v3397 = vrot.slane %v3395, 4
        %v3398 = vrot.slane %v2573, 5
        %v3399 = vsel %vm1782, %v3397, %v3398
        %v3400 = vrot.slane %v3282, 5
        %v3401 = vrot.slane %v3400, 4
        %v3402 = vrot.slane %v2575, 5
        %v3403 = vsel %vm1782, %v3401, %v3402
        %v3404 = vrot.slane %v3402, 4
        %v3405 = vrot.slane %v2576, 5
        %v3406 = vsel %vm1782, %v3404, %v3405
        %v3407 = vrot.slane %v3283, 5
        %v3408 = vrot.slane %v3407, 4
        %v3409 = vrot.slane %v2578, 5
        %v3410 = vsel %vm1782, %v3408, %v3409
        %v3411 = vrot.slane %v3409, 4
        %v3412 = vrot.slane %v2579, 5
        %v3413 = vsel %vm1782, %v3411, %v3412
        %v3414 = vrot.slane %v3284, 5
        %v3415 = vrot.slane %v3414, 4
        %v3416 = vrot.slane %v2581, 5
        %v3417 = vsel %vm1782, %v3415, %v3416
        %v3418 = vrot.slane %v3416, 4
        %v3419 = vrot.slane %v2582, 5
        %v3420 = vsel %vm1782, %v3418, %v3419
        %v3421 = vrot.slane %v3285, 5
        %v3422 = vrot.slane %v3421, 4
        %v3423 = vrot.slane %v2584, 5
        %v3424 = vsel %vm1782, %v3422, %v3423
        %v3425 = vrot.slane %v3423, 4
        %v3426 = vrot.slane %v2585, 5
        %v3427 = vsel %vm1782, %v3425, %v3426
        %v3428 = vrot.slane %v3286, 5
        %v3429 = vrot.slane %v3428, 4
        %v3430 = vrot.slane %v2587, 5
        %v3431 = vsel %vm1782, %v3429, %v3430
        %v3432 = vrot.slane %v3430, 4
        %v3433 = vrot.slane %v2588, 5
        %v3434 = vsel %vm1782, %v3432, %v3433
        %v3435 = vrot.slane %v3287, 5
        %v3436 = vrot.slane %v3435, 4
        %v3437 = vrot.slane %v2590, 5
        %v3438 = vsel %vm1782, %v3436, %v3437
        %v3439 = vrot.slane %v3437, 4
        %v3440 = vrot.slane %v2591, 5
        %v3441 = vsel %vm1782, %v3439, %v3440
        %v3442 = vrot.slane %v3288, 5
        %v3443 = vrot.slane %v3442, 4
        %v3444 = vrot.slane %v2593, 5
        %v3445 = vsel %vm1782, %v3443, %v3444
        %v3446 = vrot.slane %v3444, 4
        %v3447 = vrot.slane %v2594, 5
        %v3448 = vsel %vm1782, %v3446, %v3447
        %s3449 = scalar_lea.vmem %s1, 10
        %v3450 = vld [vmem:[%s3449] sm:$0x3]
        %v3451 = vunpack.c.l.b16 %v3340
        %v3452 = vunpack.c.l.b16 %v3343
        %v3453 = vunpack.c.l.b16 %v3347
        %v3454 = vunpack.c.l.b16 %v3350
        %v3455 = vunpack.c.l.b16 %v3354
        %v3456 = vunpack.c.l.b16 %v3357
        %v3457 = vunpack.c.l.b16 %v3361
        %v3458 = vunpack.c.l.b16 %v3364
        %v3459 = vunpack.c.l.b16 %v3368
        %v3460 = vunpack.c.l.b16 %v3371
        %v3461 = vunpack.c.l.b16 %v3375
        %v3462 = vunpack.c.l.b16 %v3378
        %v3463 = vunpack.c.l.b16 %v3382
        %v3464 = vunpack.c.l.b16 %v3385
        %v3465 = vunpack.c.l.b16 %v3389
        %v3466 = vunpack.c.l.b16 %v3392
        %v3467 = vunpack.c.l.b16 %v3396
        %v3468 = vunpack.c.l.b16 %v3399
        %v3469 = vunpack.c.l.b16 %v3403
        %v3470 = vunpack.c.l.b16 %v3406
        %v3471 = vunpack.c.l.b16 %v3410
        %v3472 = vunpack.c.l.b16 %v3413
        %v3473 = vunpack.c.l.b16 %v3417
        %v3474 = vunpack.c.l.b16 %v3420
        %v3475 = vunpack.c.l.b16 %v3424
        %v3476 = vunpack.c.l.b16 %v3427
        %v3477 = vunpack.c.l.b16 %v3431
        %v3478 = vunpack.c.l.b16 %v3434
        %v3479 = vunpack.c.l.b16 %v3438
        %v3480 = vunpack.c.l.b16 %v3441
        %v3481 = vunpack.c.l.b16 %v3445
        %v3482 = vunpack.c.l.b16 %v3448
        %v3483 = vpack.c.b16 %v3452, %v3451
        %v3484 = vpack.c.b16 %v3454, %v3453
        %v3485 = vpack.c.b16 %v3456, %v3455
        %v3486 = vpack.c.b16 %v3458, %v3457
        %v3487 = vpack.c.b16 %v3460, %v3459
        %v3488 = vpack.c.b16 %v3462, %v3461
        %v3489 = vpack.c.b16 %v3464, %v3463
        %v3490 = vpack.c.b16 %v3466, %v3465
        %v3491 = vpack.c.b16 %v3468, %v3467
        %v3492 = vpack.c.b16 %v3470, %v3469
        %v3493 = vpack.c.b16 %v3472, %v3471
        %v3494 = vpack.c.b16 %v3474, %v3473
        %v3495 = vpack.c.b16 %v3476, %v3475
        %v3496 = vpack.c.b16 %v3478, %v3477
        %v3497 = vpack.c.b16 %v3480, %v3479
        %v3498 = vpack.c.b16 %v3482, %v3481
        %v3500 = vsel %vm1223, %v3483, 0
        %v3503 = vsel %vm1223, %v3484, 0
        %v3506 = vsel %vm1223, %v3485, 0
        %v3509 = vsel %vm1223, %v3486, 0
        %v3512 = vsel %vm1223, %v3487, 0
        %v3515 = vsel %vm1223, %v3488, 0
        %v3518 = vsel %vm1223, %v3489, 0
        %v3521 = vsel %vm1223, %v3490, 0
        %v3524 = vsel %vm1223, %v3491, 0
        %v3527 = vsel %vm1223, %v3492, 0
        %v3530 = vsel %vm1223, %v3493, 0
        %v3533 = vsel %vm1223, %v3494, 0
        %v3536 = vsel %vm1223, %v3495, 0
        %v3539 = vsel %vm1223, %v3496, 0
        %v3542 = vsel %vm1223, %v3497, 0
        %v3545 = vsel %vm1223, %v3498, 0
        %v3548 = vand.u32 %v3450, %v1275
        %3550 = vmatprep.subr.bf16.mxu0 0
        %3551 = vmatpush1.bf16.msra.mxu0 %v3548
        %3552 = vmatprep.subr.bf16.mxu0 0
        %3553 = vmatpush1.bf16.msra.mxu0 0
        %3554 = vmatprep.subr.bf16.mxu0 0
        %3555 = vmatpush1.bf16.msra.mxu0 0
        %3556 = vmatprep.subr.bf16.mxu0 0
        %3557 = vmatpush1.bf16.msra.mxu0 0
        %3558 = vmatprep.subr.bf16.mxu0 0
        %3559 = vmatpush1.bf16.msra.mxu0 0
        %3560 = vmatprep.subr.bf16.mxu0 0
        %3561 = vmatpush1.bf16.msra.mxu0 0
        %3562 = vmatprep.subr.bf16.mxu0 0
        %3563 = vmatpush1.bf16.msra.mxu0 0
        %3564 = vmatprep.subr.bf16.mxu0 0
        %3565 = vmatpush1.bf16.msra.mxu0 0
        %3566 = vmatprep.subr.bf16.mxu0 0
        %3567 = vmatpush1.bf16.msra.mxu0 0
        %3568 = vmatprep.subr.bf16.mxu0 0
        %3569 = vmatpush1.bf16.msra.mxu0 0
        %3570 = vmatprep.subr.bf16.mxu0 0
        %3571 = vmatpush1.bf16.msra.mxu0 0
        %3572 = vmatprep.subr.bf16.mxu0 0
        %3573 = vmatpush1.bf16.msra.mxu0 0
        %3574 = vmatprep.subr.bf16.mxu0 0
        %3575 = vmatpush1.bf16.msra.mxu0 0
        %3576 = vmatprep.subr.bf16.mxu0 0
        %3577 = vmatpush1.bf16.msra.mxu0 0
        %3578 = vmatprep.subr.bf16.mxu0 0
        %3579 = vmatpush1.bf16.msra.mxu0 0
        %3580 = vmatprep.subr.bf16.mxu0 0
        %3581 = vmatpush1.bf16.msra.mxu0 0
        %3582 = vmatprep.mubr.bf16.mxu0 0
        %3583 = vmatmul.mubr.bf16.gmra.mrb[0].mxu0 %v3500
        %v3584 = vpop.f32.mrb[0].mxu0
        %v3585 = vadd.f32 0.0, %v3584
        %v3586 = vpop.f32.mrb[0].mxu0
        %v3587 = vpop.f32.mrb[0].mxu0
        %v3588 = vadd.f32 0.0, %v3587
        %v3589 = vpop.f32.mrb[0].mxu0
        %3590 = vmatprep.mubr.bf16.mxu0 0
        %3591 = vmatmul.mubr.bf16.gmra.mrb[0].mxu0 %v3503
        %v3592 = vpop.f32.mrb[0].mxu0
        %v3593 = vadd.f32 0.0, %v3592
        %v3594 = vpop.f32.mrb[0].mxu0
        %v3595 = vpop.f32.mrb[0].mxu0
        %v3596 = vadd.f32 0.0, %v3595
        %v3597 = vpop.f32.mrb[0].mxu0
        %3598 = vmatprep.mubr.bf16.mxu0 0
        %3599 = vmatmul.mubr.bf16.gmra.mrb[0].mxu0 %v3506
        %v3600 = vpop.f32.mrb[0].mxu0
        %v3601 = vadd.f32 0.0, %v3600
        %v3602 = vpop.f32.mrb[0].mxu0
        %v3603 = vpop.f32.mrb[0].mxu0
        %v3604 = vadd.f32 0.0, %v3603
        %v3605 = vpop.f32.mrb[0].mxu0
        %3606 = vmatprep.mubr.bf16.mxu0 0
        %3607 = vmatmul.mubr.bf16.gmra.mrb[0].mxu0 %v3509
        %v3608 = vpop.f32.mrb[0].mxu0
        %v3609 = vadd.f32 0.0, %v3608
        %v3610 = vpop.f32.mrb[0].mxu0
        %v3611 = vpop.f32.mrb[0].mxu0
        %v3612 = vadd.f32 0.0, %v3611
        %v3613 = vpop.f32.mrb[0].mxu0
        %3614 = vmatprep.mubr.bf16.mxu0 0
        %3615 = vmatmul.mubr.bf16.gmra.mrb[0].mxu0 %v3512
        %v3616 = vpop.f32.mrb[0].mxu0
        %v3617 = vadd.f32 0.0, %v3616
        %v3618 = vpop.f32.mrb[0].mxu0
        %v3619 = vpop.f32.mrb[0].mxu0
        %v3620 = vadd.f32 0.0, %v3619
        %v3621 = vpop.f32.mrb[0].mxu0
        %3622 = vmatprep.mubr.bf16.mxu0 0
        %3623 = vmatmul.mubr.bf16.gmra.mrb[0].mxu0 %v3515
        %v3624 = vpop.f32.mrb[0].mxu0
        %v3625 = vadd.f32 0.0, %v3624
        %v3626 = vpop.f32.mrb[0].mxu0
        %v3627 = vpop.f32.mrb[0].mxu0
        %v3628 = vadd.f32 0.0, %v3627
        %v3629 = vpop.f32.mrb[0].mxu0
        %3630 = vmatprep.mubr.bf16.mxu0 0
        %3631 = vmatmul.mubr.bf16.gmra.mrb[0].mxu0 %v3518
        %v3632 = vpop.f32.mrb[0].mxu0
        %v3633 = vadd.f32 0.0, %v3632
        %v3634 = vpop.f32.mrb[0].mxu0
        %v3635 = vpop.f32.mrb[0].mxu0
        %v3636 = vadd.f32 0.0, %v3635
        %v3637 = vpop.f32.mrb[0].mxu0
        %3638 = vmatprep.mubr.bf16.mxu0 0
        %3639 = vmatmul.mubr.bf16.gmra.mrb[0].mxu0 %v3521
        %v3640 = vpop.f32.mrb[0].mxu0
        %v3641 = vadd.f32 0.0, %v3640
        %v3642 = vpop.f32.mrb[0].mxu0
        %v3643 = vpop.f32.mrb[0].mxu0
        %v3644 = vadd.f32 0.0, %v3643
        %v3645 = vpop.f32.mrb[0].mxu0
        %3646 = vmatprep.mubr.bf16.mxu0 0
        %3647 = vmatmul.mubr.bf16.gmra.mrb[0].mxu0 %v3524
        %v3648 = vpop.f32.mrb[0].mxu0
        %v3649 = vadd.f32 0.0, %v3648
        %v3650 = vpop.f32.mrb[0].mxu0
        %v3651 = vpop.f32.mrb[0].mxu0
        %v3652 = vadd.f32 0.0, %v3651
        %v3653 = vpop.f32.mrb[0].mxu0
        %3654 = vmatprep.mubr.bf16.mxu0 0
        %3655 = vmatmul.mubr.bf16.gmra.mrb[0].mxu0 %v3527
        %v3656 = vpop.f32.mrb[0].mxu0
        %v3657 = vadd.f32 0.0, %v3656
        %v3658 = vpop.f32.mrb[0].mxu0
        %v3659 = vpop.f32.mrb[0].mxu0
        %v3660 = vadd.f32 0.0, %v3659
        %v3661 = vpop.f32.mrb[0].mxu0
        %3662 = vmatprep.mubr.bf16.mxu0 0
        %3663 = vmatmul.mubr.bf16.gmra.mrb[0].mxu0 %v3530
        %v3664 = vpop.f32.mrb[0].mxu0
        %v3665 = vadd.f32 0.0, %v3664
        %v3666 = vpop.f32.mrb[0].mxu0
        %v3667 = vpop.f32.mrb[0].mxu0
        %v3668 = vadd.f32 0.0, %v3667
        %v3669 = vpop.f32.mrb[0].mxu0
        %3670 = vmatprep.mubr.bf16.mxu0 0
        %3671 = vmatmul.mubr.bf16.gmra.mrb[0].mxu0 %v3533
        %v3672 = vpop.f32.mrb[0].mxu0
        %v3673 = vadd.f32 0.0, %v3672
        %v3674 = vpop.f32.mrb[0].mxu0
        %v3675 = vpop.f32.mrb[0].mxu0
        %v3676 = vadd.f32 0.0, %v3675
        %v3677 = vpop.f32.mrb[0].mxu0
        %3678 = vmatprep.mubr.bf16.mxu0 0
        %3679 = vmatmul.mubr.bf16.gmra.mrb[0].mxu0 %v3536
        %v3680 = vpop.f32.mrb[0].mxu0
        %v3681 = vadd.f32 0.0, %v3680
        %v3682 = vpop.f32.mrb[0].mxu0
        %v3683 = vpop.f32.mrb[0].mxu0
        %v3684 = vadd.f32 0.0, %v3683
        %v3685 = vpop.f32.mrb[0].mxu0
        %3686 = vmatprep.mubr.bf16.mxu0 0
        %3687 = vmatmul.mubr.bf16.gmra.mrb[0].mxu0 %v3539
        %v3688 = vpop.f32.mrb[0].mxu0
        %v3689 = vadd.f32 0.0, %v3688
        %v3690 = vpop.f32.mrb[0].mxu0
        %v3691 = vpop.f32.mrb[0].mxu0
        %v3692 = vadd.f32 0.0, %v3691
        %v3693 = vpop.f32.mrb[0].mxu0
        %3694 = vmatprep.mubr.bf16.mxu0 0
        %3695 = vmatmul.mubr.bf16.gmra.mrb[0].mxu0 %v3542
        %v3696 = vpop.f32.mrb[0].mxu0
        %v3697 = vadd.f32 0.0, %v3696
        %v3698 = vpop.f32.mrb[0].mxu0
        %v3699 = vpop.f32.mrb[0].mxu0
        %v3700 = vadd.f32 0.0, %v3699
        %v3701 = vpop.f32.mrb[0].mxu0
        %3702 = vmatprep.mubr.bf16.mxu0 0
        %3703 = vmatmul.mubr.bf16.gmra.mrb[0].mxu0 %v3545
        %v3704 = vpop.f32.mrb[0].mxu0
        %v3705 = vadd.f32 0.0, %v3704
        %v3706 = vpop.f32.mrb[0].mxu0
        %v3707 = vpop.f32.mrb[0].mxu0
        %v3708 = vadd.f32 0.0, %v3707
        %v3709 = vpop.f32.mrb[0].mxu0
        %3710 = vdwg.mxu0
        %v3711 = vadd.f32 %v3241, %v3585
        %v3712 = vadd.f32 %v3242, %v3588
        %v3713 = vadd.f32 %v3243, %v3593
        %v3714 = vadd.f32 %v3244, %v3596
        %v3715 = vadd.f32 %v3245, %v3601
        %v3716 = vadd.f32 %v3246, %v3604
        %v3717 = vadd.f32 %v3247, %v3609
        %v3718 = vadd.f32 %v3248, %v3612
        %v3719 = vadd.f32 %v3249, %v3617
        %v3720 = vadd.f32 %v3250, %v3620
        %v3721 = vadd.f32 %v3251, %v3625
        %v3722 = vadd.f32 %v3252, %v3628
        %v3723 = vadd.f32 %v3253, %v3633
        %v3724 = vadd.f32 %v3254, %v3636
        %v3725 = vadd.f32 %v3255, %v3641
        %v3726 = vadd.f32 %v3256, %v3644
        %v3727 = vadd.f32 %v3257, %v3649
        %v3728 = vadd.f32 %v3258, %v3652
        %v3729 = vadd.f32 %v3259, %v3657
        %v3730 = vadd.f32 %v3260, %v3660
        %v3731 = vadd.f32 %v3261, %v3665
        %v3732 = vadd.f32 %v3262, %v3668
        %v3733 = vadd.f32 %v3263, %v3673
        %v3734 = vadd.f32 %v3264, %v3676
        %v3735 = vadd.f32 %v3265, %v3681
        %v3736 = vadd.f32 %v3266, %v3684
        %v3737 = vadd.f32 %v3267, %v3689
        %v3738 = vadd.f32 %v3268, %v3692
        %v3739 = vadd.f32 %v3269, %v3697
        %v3740 = vadd.f32 %v3270, %v3700
        %v3741 = vadd.f32 %v3271, %v3705
        %v3742 = vadd.f32 %v3272, %v3708
        %s3743 = scalar_lea.vmem [#allocation2], 24
        %v3744 = vld [vmem:[%s3743] sm:$0xf]
        %v3745 = vld [vmem:[%s3743 + $0x4] sm:$0xf]
        %v3746 = vld [vmem:[%s3743 + $0xc] sm:$0xf]
        %v3747 = vld [vmem:[%s3743 + $0x10] sm:$0xf]
        %v3748 = vld [vmem:[%s3743 + $0x18] sm:$0xf]
        %v3749 = vld [vmem:[%s3743 + $0x1c] sm:$0xf]
        %v3750 = vld [vmem:[%s3743 + $0x24] sm:$0xf]
        %v3751 = vld [vmem:[%s3743 + $0x28] sm:$0xf]
        %v3752 = vld [vmem:[%s3743 + $0x30] sm:$0xf]
        %v3753 = vld [vmem:[%s3743 + $0x34] sm:$0xf]
        %v3754 = vld [vmem:[%s3743 + $0x3c] sm:$0xf]
        %v3755 = vld [vmem:[%s3743 + $0x40] sm:$0xf]
        %v3756 = vld [vmem:[%s3743 + $0x48] sm:$0xf]
        %v3757 = vld [vmem:[%s3743 + $0x4c] sm:$0xf]
        %v3758 = vld [vmem:[%s3743 + $0x54] sm:$0xf]
        %v3759 = vld [vmem:[%s3743 + $0x58] sm:$0xf]
        %v3760 = vld [vmem:[%s3743 + $0x60] sm:$0xf]
        %v3761 = vld [vmem:[%s3743 + $0x64] sm:$0xf]
        %v3762 = vld [vmem:[%s3743 + $0x6c] sm:$0xf]
        %v3763 = vld [vmem:[%s3743 + $0x70] sm:$0xf]
        %v3764 = vld [vmem:[%s3743 + $0x78] sm:$0xf]
        %v3765 = vld [vmem:[%s3743 + $0x7c] sm:$0xf]
        %v3766 = vld [vmem:[%s3743 + $0x84] sm:$0xf]
        %v3767 = vld [vmem:[%s3743 + $0x88] sm:$0xf]
        %v3768 = vld [vmem:[%s3743 + $0x90] sm:$0xf]
        %v3769 = vld [vmem:[%s3743 + $0x94] sm:$0xf]
        %v3770 = vld [vmem:[%s3743 + $0x9c] sm:$0xf]
        %v3771 = vld [vmem:[%s3743 + $0xa0] sm:$0xf]
        %v3772 = vld [vmem:[%s3743 + $0xa8] sm:$0xf]
        %v3773 = vld [vmem:[%s3743 + $0xac] sm:$0xf]
        %v3774 = vld [vmem:[%s3743 + $0xb4] sm:$0xf]
        %v3775 = vld [vmem:[%s3743 + $0xb8] sm:$0xf]
        %s3776 = scalar_lea.vmem %s1, 12
        %v3777 = vld [vmem:[%s3776] sm:$0x3]
        %v3810 = vunpack.c.l.b16 %v3744
        %v3811 = vunpack.c.l.b16 %v3745
        %v3812 = vunpack.c.l.b16 %v3746
        %v3813 = vunpack.c.l.b16 %v3747
        %v3814 = vunpack.c.l.b16 %v3748
        %v3815 = vunpack.c.l.b16 %v3749
        %v3816 = vunpack.c.l.b16 %v3750
        %v3817 = vunpack.c.l.b16 %v3751
        %v3818 = vunpack.c.l.b16 %v3752
        %v3819 = vunpack.c.l.b16 %v3753
        %v3820 = vunpack.c.l.b16 %v3754
        %v3821 = vunpack.c.l.b16 %v3755
        %v3822 = vunpack.c.l.b16 %v3756
        %v3823 = vunpack.c.l.b16 %v3757
        %v3824 = vunpack.c.l.b16 %v3758
        %v3825 = vunpack.c.l.b16 %v3759
        %v3826 = vunpack.c.l.b16 %v3760
        %v3827 = vunpack.c.l.b16 %v3761
        %v3828 = vunpack.c.l.b16 %v3762
        %v3829 = vunpack.c.l.b16 %v3763
        %v3830 = vunpack.c.l.b16 %v3764
        %v3831 = vunpack.c.l.b16 %v3765
        %v3832 = vunpack.c.l.b16 %v3766
        %v3833 = vunpack.c.l.b16 %v3767
        %v3834 = vunpack.c.l.b16 %v3768
        %v3835 = vunpack.c.l.b16 %v3769
        %v3836 = vunpack.c.l.b16 %v3770
        %v3837 = vunpack.c.l.b16 %v3771
        %v3838 = vunpack.c.l.b16 %v3772
        %v3839 = vunpack.c.l.b16 %v3773
        %v3840 = vunpack.c.l.b16 %v3774
        %v3841 = vunpack.c.l.b16 %v3775
        %v3842 = vpack.c.b16 %v3811, %v3810
        %v3843 = vpack.c.b16 %v3813, %v3812
        %v3844 = vpack.c.b16 %v3815, %v3814
        %v3845 = vpack.c.b16 %v3817, %v3816
        %v3846 = vpack.c.b16 %v3819, %v3818
        %v3847 = vpack.c.b16 %v3821, %v3820
        %v3848 = vpack.c.b16 %v3823, %v3822
        %v3849 = vpack.c.b16 %v3825, %v3824
        %v3850 = vpack.c.b16 %v3827, %v3826
        %v3851 = vpack.c.b16 %v3829, %v3828
        %v3852 = vpack.c.b16 %v3831, %v3830
        %v3853 = vpack.c.b16 %v3833, %v3832
        %v3854 = vpack.c.b16 %v3835, %v3834
        %v3855 = vpack.c.b16 %v3837, %v3836
        %v3856 = vpack.c.b16 %v3839, %v3838
        %v3857 = vpack.c.b16 %v3841, %v3840
        %v3859 = vsel %vm1223, %v3842, 0
        %v3862 = vsel %vm1223, %v3843, 0
        %v3865 = vsel %vm1223, %v3844, 0
        %v3868 = vsel %vm1223, %v3845, 0
        %v3871 = vsel %vm1223, %v3846, 0
        %v3874 = vsel %vm1223, %v3847, 0
        %v3877 = vsel %vm1223, %v3848, 0
        %v3880 = vsel %vm1223, %v3849, 0
        %v3883 = vsel %vm1223, %v3850, 0
        %v3886 = vsel %vm1223, %v3851, 0
        %v3889 = vsel %vm1223, %v3852, 0
        %v3892 = vsel %vm1223, %v3853, 0
        %v3895 = vsel %vm1223, %v3854, 0
        %v3898 = vsel %vm1223, %v3855, 0
        %v3901 = vsel %vm1223, %v3856, 0
        %v3904 = vsel %vm1223, %v3857, 0
        %v3907 = vand.u32 %v3777, %v1275
        %3909 = vmatprep.subr.bf16.mxu0 0
        %3910 = vmatpush1.bf16.msra.mxu0 %v3907
        %3911 = vmatprep.subr.bf16.mxu0 0
        %3912 = vmatpush1.bf16.msra.mxu0 0
        %3913 = vmatprep.subr.bf16.mxu0 0
        %3914 = vmatpush1.bf16.msra.mxu0 0
        %3915 = vmatprep.subr.bf16.mxu0 0
        %3916 = vmatpush1.bf16.msra.mxu0 0
        %3917 = vmatprep.subr.bf16.mxu0 0
        %3918 = vmatpush1.bf16.msra.mxu0 0
        %3919 = vmatprep.subr.bf16.mxu0 0
        %3920 = vmatpush1.bf16.msra.mxu0 0
        %3921 = vmatprep.subr.bf16.mxu0 0
        %3922 = vmatpush1.bf16.msra.mxu0 0
        %3923 = vmatprep.subr.bf16.mxu0 0
        %3924 = vmatpush1.bf16.msra.mxu0 0
        %3925 = vmatprep.subr.bf16.mxu0 0
        %3926 = vmatpush1.bf16.msra.mxu0 0
        %3927 = vmatprep.subr.bf16.mxu0 0
        %3928 = vmatpush1.bf16.msra.mxu0 0
        %3929 = vmatprep.subr.bf16.mxu0 0
        %3930 = vmatpush1.bf16.msra.mxu0 0
        %3931 = vmatprep.subr.bf16.mxu0 0
        %3932 = vmatpush1.bf16.msra.mxu0 0
        %3933 = vmatprep.subr.bf16.mxu0 0
        %3934 = vmatpush1.bf16.msra.mxu0 0
        %3935 = vmatprep.subr.bf16.mxu0 0
        %3936 = vmatpush1.bf16.msra.mxu0 0
        %3937 = vmatprep.subr.bf16.mxu0 0
        %3938 = vmatpush1.bf16.msra.mxu0 0
        %3939 = vmatprep.subr.bf16.mxu0 0
        %3940 = vmatpush1.bf16.msra.mxu0 0
        %3941 = vmatprep.mubr.bf16.mxu0 0
        %3942 = vmatmul.mubr.bf16.gmra.mrb[0].mxu0 %v3859
        %v3943 = vpop.f32.mrb[0].mxu0
        %v3944 = vadd.f32 0.0, %v3943
        %v3945 = vpop.f32.mrb[0].mxu0
        %v3946 = vpop.f32.mrb[0].mxu0
        %v3947 = vadd.f32 0.0, %v3946
        %v3948 = vpop.f32.mrb[0].mxu0
        %3949 = vmatprep.mubr.bf16.mxu0 0
        %3950 = vmatmul.mubr.bf16.gmra.mrb[0].mxu0 %v3862
        %v3951 = vpop.f32.mrb[0].mxu0
        %v3952 = vadd.f32 0.0, %v3951
        %v3953 = vpop.f32.mrb[0].mxu0
        %v3954 = vpop.f32.mrb[0].mxu0
        %v3955 = vadd.f32 0.0, %v3954
        %v3956 = vpop.f32.mrb[0].mxu0
        %3957 = vmatprep.mubr.bf16.mxu0 0
        %3958 = vmatmul.mubr.bf16.gmra.mrb[0].mxu0 %v3865
        %v3959 = vpop.f32.mrb[0].mxu0
        %v3960 = vadd.f32 0.0, %v3959
        %v3961 = vpop.f32.mrb[0].mxu0
        %v3962 = vpop.f32.mrb[0].mxu0
        %v3963 = vadd.f32 0.0, %v3962
        %v3964 = vpop.f32.mrb[0].mxu0
        %3965 = vmatprep.mubr.bf16.mxu0 0
        %3966 = vmatmul.mubr.bf16.gmra.mrb[0].mxu0 %v3868
        %v3967 = vpop.f32.mrb[0].mxu0
        %v3968 = vadd.f32 0.0, %v3967
        %v3969 = vpop.f32.mrb[0].mxu0
        %v3970 = vpop.f32.mrb[0].mxu0
        %v3971 = vadd.f32 0.0, %v3970
        %v3972 = vpop.f32.mrb[0].mxu0
        %3973 = vmatprep.mubr.bf16.mxu0 0
        %3974 = vmatmul.mubr.bf16.gmra.mrb[0].mxu0 %v3871
        %v3975 = vpop.f32.mrb[0].mxu0
        %v3976 = vadd.f32 0.0, %v3975
        %v3977 = vpop.f32.mrb[0].mxu0
        %v3978 = vpop.f32.mrb[0].mxu0
        %v3979 = vadd.f32 0.0, %v3978
        %v3980 = vpop.f32.mrb[0].mxu0
        %3981 = vmatprep.mubr.bf16.mxu0 0
        %3982 = vmatmul.mubr.bf16.gmra.mrb[0].mxu0 %v3874
        %v3983 = vpop.f32.mrb[0].mxu0
        %v3984 = vadd.f32 0.0, %v3983
        %v3985 = vpop.f32.mrb[0].mxu0
        %v3986 = vpop.f32.mrb[0].mxu0
        %v3987 = vadd.f32 0.0, %v3986
        %v3988 = vpop.f32.mrb[0].mxu0
        %3989 = vmatprep.mubr.bf16.mxu0 0
        %3990 = vmatmul.mubr.bf16.gmra.mrb[0].mxu0 %v3877
        %v3991 = vpop.f32.mrb[0].mxu0
        %v3992 = vadd.f32 0.0, %v3991
        %v3993 = vpop.f32.mrb[0].mxu0
        %v3994 = vpop.f32.mrb[0].mxu0
        %v3995 = vadd.f32 0.0, %v3994
        %v3996 = vpop.f32.mrb[0].mxu0
        %3997 = vmatprep.mubr.bf16.mxu0 0
        %3998 = vmatmul.mubr.bf16.gmra.mrb[0].mxu0 %v3880
        %v3999 = vpop.f32.mrb[0].mxu0
        %v4000 = vadd.f32 0.0, %v3999
        %v4001 = vpop.f32.mrb[0].mxu0
        %v4002 = vpop.f32.mrb[0].mxu0
        %v4003 = vadd.f32 0.0, %v4002
        %v4004 = vpop.f32.mrb[0].mxu0
        %4005 = vmatprep.mubr.bf16.mxu0 0
        %4006 = vmatmul.mubr.bf16.gmra.mrb[0].mxu0 %v3883
        %v4007 = vpop.f32.mrb[0].mxu0
        %v4008 = vadd.f32 0.0, %v4007
        %v4009 = vpop.f32.mrb[0].mxu0
        %v4010 = vpop.f32.mrb[0].mxu0
        %v4011 = vadd.f32 0.0, %v4010
        %v4012 = vpop.f32.mrb[0].mxu0
        %4013 = vmatprep.mubr.bf16.mxu0 0
        %4014 = vmatmul.mubr.bf16.gmra.mrb[0].mxu0 %v3886
        %v4015 = vpop.f32.mrb[0].mxu0
        %v4016 = vadd.f32 0.0, %v4015
        %v4017 = vpop.f32.mrb[0].mxu0
        %v4018 = vpop.f32.mrb[0].mxu0
        %v4019 = vadd.f32 0.0, %v4018
        %v4020 = vpop.f32.mrb[0].mxu0
        %4021 = vmatprep.mubr.bf16.mxu0 0
        %4022 = vmatmul.mubr.bf16.gmra.mrb[0].mxu0 %v3889
        %v4023 = vpop.f32.mrb[0].mxu0
        %v4024 = vadd.f32 0.0, %v4023
        %v4025 = vpop.f32.mrb[0].mxu0
        %v4026 = vpop.f32.mrb[0].mxu0
        %v4027 = vadd.f32 0.0, %v4026
        %v4028 = vpop.f32.mrb[0].mxu0
        %4029 = vmatprep.mubr.bf16.mxu0 0
        %4030 = vmatmul.mubr.bf16.gmra.mrb[0].mxu0 %v3892
        %v4031 = vpop.f32.mrb[0].mxu0
        %v4032 = vadd.f32 0.0, %v4031
        %v4033 = vpop.f32.mrb[0].mxu0
        %v4034 = vpop.f32.mrb[0].mxu0
        %v4035 = vadd.f32 0.0, %v4034
        %v4036 = vpop.f32.mrb[0].mxu0
        %4037 = vmatprep.mubr.bf16.mxu0 0
        %4038 = vmatmul.mubr.bf16.gmra.mrb[0].mxu0 %v3895
        %v4039 = vpop.f32.mrb[0].mxu0
        %v4040 = vadd.f32 0.0, %v4039
        %v4041 = vpop.f32.mrb[0].mxu0
        %v4042 = vpop.f32.mrb[0].mxu0
        %v4043 = vadd.f32 0.0, %v4042
        %v4044 = vpop.f32.mrb[0].mxu0
        %4045 = vmatprep.mubr.bf16.mxu0 0
        %4046 = vmatmul.mubr.bf16.gmra.mrb[0].mxu0 %v3898
        %v4047 = vpop.f32.mrb[0].mxu0
        %v4048 = vadd.f32 0.0, %v4047
        %v4049 = vpop.f32.mrb[0].mxu0
        %v4050 = vpop.f32.mrb[0].mxu0
        %v4051 = vadd.f32 0.0, %v4050
        %v4052 = vpop.f32.mrb[0].mxu0
        %4053 = vmatprep.mubr.bf16.mxu0 0
        %4054 = vmatmul.mubr.bf16.gmra.mrb[0].mxu0 %v3901
        %v4055 = vpop.f32.mrb[0].mxu0
        %v4056 = vadd.f32 0.0, %v4055
        %v4057 = vpop.f32.mrb[0].mxu0
        %v4058 = vpop.f32.mrb[0].mxu0
        %v4059 = vadd.f32 0.0, %v4058
        %v4060 = vpop.f32.mrb[0].mxu0
        %4061 = vmatprep.mubr.bf16.mxu0 0
        %4062 = vmatmul.mubr.bf16.gmra.mrb[0].mxu0 %v3904
        %v4063 = vpop.f32.mrb[0].mxu0
        %v4064 = vadd.f32 0.0, %v4063
        %v4065 = vpop.f32.mrb[0].mxu0
        %v4066 = vpop.f32.mrb[0].mxu0
        %v4067 = vadd.f32 0.0, %v4066
        %v4068 = vpop.f32.mrb[0].mxu0
        %4069 = vdwg.mxu0
        %v4070 = vadd.f32 %v3711, %v3944
        %v4071 = vadd.f32 %v3712, %v3947
        %v4072 = vadd.f32 %v3713, %v3952
        %v4073 = vadd.f32 %v3714, %v3955
        %v4074 = vadd.f32 %v3715, %v3960
        %v4075 = vadd.f32 %v3716, %v3963
        %v4076 = vadd.f32 %v3717, %v3968
        %v4077 = vadd.f32 %v3718, %v3971
        %v4078 = vadd.f32 %v3719, %v3976
        %v4079 = vadd.f32 %v3720, %v3979
        %v4080 = vadd.f32 %v3721, %v3984
        %v4081 = vadd.f32 %v3722, %v3987
        %v4082 = vadd.f32 %v3723, %v3992
        %v4083 = vadd.f32 %v3724, %v3995
        %v4084 = vadd.f32 %v3725, %v4000
        %v4085 = vadd.f32 %v3726, %v4003
        %v4086 = vadd.f32 %v3727, %v4008
        %v4087 = vadd.f32 %v3728, %v4011
        %v4088 = vadd.f32 %v3729, %v4016
        %v4089 = vadd.f32 %v3730, %v4019
        %v4090 = vadd.f32 %v3731, %v4024
        %v4091 = vadd.f32 %v3732, %v4027
        %v4092 = vadd.f32 %v3733, %v4032
        %v4093 = vadd.f32 %v3734, %v4035
        %v4094 = vadd.f32 %v3735, %v4040
        %v4095 = vadd.f32 %v3736, %v4043
        %v4096 = vadd.f32 %v3737, %v4048
        %v4097 = vadd.f32 %v3738, %v4051
        %v4098 = vadd.f32 %v3739, %v4056
        %v4099 = vadd.f32 %v3740, %v4059
        %v4100 = vadd.f32 %v3741, %v4064
        %v4101 = vadd.f32 %v3742, %v4067
        %v4102 = vld [vmem:[%s3743] sm:$0xf]
        %v4103 = vld [vmem:[%s3743 + $0x4] sm:$0xf]
        %v4104 = vld [vmem:[%s3743 + $0x8] sm:$0x1]
        %v4105 = vld [vmem:[%s3743 + $0xc] sm:$0xf]
        %v4106 = vld [vmem:[%s3743 + $0x10] sm:$0xf]
        %v4107 = vld [vmem:[%s3743 + $0x14] sm:$0x1]
        %v4108 = vld [vmem:[%s3743 + $0x18] sm:$0xf]
        %v4109 = vld [vmem:[%s3743 + $0x1c] sm:$0xf]
        %v4110 = vld [vmem:[%s3743 + $0x20] sm:$0x1]
        %v4111 = vld [vmem:[%s3743 + $0x24] sm:$0xf]
        %v4112 = vld [vmem:[%s3743 + $0x28] sm:$0xf]
        %v4113 = vld [vmem:[%s3743 + $0x2c] sm:$0x1]
        %v4114 = vld [vmem:[%s3743 + $0x30] sm:$0xf]
        %v4115 = vld [vmem:[%s3743 + $0x34] sm:$0xf]
        %v4116 = vld [vmem:[%s3743 + $0x38] sm:$0x1]
        %v4117 = vld [vmem:[%s3743 + $0x3c] sm:$0xf]
        %v4118 = vld [vmem:[%s3743 + $0x40] sm:$0xf]
        %v4119 = vld [vmem:[%s3743 + $0x44] sm:$0x1]
        %v4120 = vld [vmem:[%s3743 + $0x48] sm:$0xf]
        %v4121 = vld [vmem:[%s3743 + $0x4c] sm:$0xf]
        %v4122 = vld [vmem:[%s3743 + $0x50] sm:$0x1]
        %v4123 = vld [vmem:[%s3743 + $0x54] sm:$0xf]
        %v4124 = vld [vmem:[%s3743 + $0x58] sm:$0xf]
        %v4125 = vld [vmem:[%s3743 + $0x5c] sm:$0x1]
        %v4126 = vld [vmem:[%s3743 + $0x60] sm:$0xf]
        %v4127 = vld [vmem:[%s3743 + $0x64] sm:$0xf]
        %v4128 = vld [vmem:[%s3743 + $0x68] sm:$0x1]
        %v4129 = vld [vmem:[%s3743 + $0x6c] sm:$0xf]
        %v4130 = vld [vmem:[%s3743 + $0x70] sm:$0xf]
        %v4131 = vld [vmem:[%s3743 + $0x74] sm:$0x1]
        %v4132 = vld [vmem:[%s3743 + $0x78] sm:$0xf]
        %v4133 = vld [vmem:[%s3743 + $0x7c] sm:$0xf]
        %v4134 = vld [vmem:[%s3743 + $0x80] sm:$0x1]
        %v4135 = vld [vmem:[%s3743 + $0x84] sm:$0xf]
        %v4136 = vld [vmem:[%s3743 + $0x88] sm:$0xf]
        %v4137 = vld [vmem:[%s3743 + $0x8c] sm:$0x1]
        %v4138 = vld [vmem:[%s3743 + $0x90] sm:$0xf]
        %v4139 = vld [vmem:[%s3743 + $0x94] sm:$0xf]
        %v4140 = vld [vmem:[%s3743 + $0x98] sm:$0x1]
        %v4141 = vld [vmem:[%s3743 + $0x9c] sm:$0xf]
        %v4142 = vld [vmem:[%s3743 + $0xa0] sm:$0xf]
        %v4143 = vld [vmem:[%s3743 + $0xa4] sm:$0x1]
        %v4144 = vld [vmem:[%s3743 + $0xa8] sm:$0xf]
        %v4145 = vld [vmem:[%s3743 + $0xac] sm:$0xf]
        %v4146 = vld [vmem:[%s3743 + $0xb0] sm:$0x1]
        %v4147 = vld [vmem:[%s3743 + $0xb4] sm:$0xf]
        %v4148 = vld [vmem:[%s3743 + $0xb8] sm:$0xf]
        %v4149 = vld [vmem:[%s3743 + $0xbc] sm:$0x1]
        %v4151 = vshrl.u32 %v4102, 16
        %v4153 = vrot.slane %v4151, 4
        %v4154 = vshll.u32 %v4102, 16
        %v4156 = vrot.slane %v4154, 5
        %v4157 = vor.u32 %v4153, %v4156
        %v4158 = vrot.slane %v4157, 4
        %v4160 = vshll.u32 %v4103, 16
        %v4162 = vrot.slane %v4160, 5
        %v4163 = vsel %vm788, %v4158, %v4162
        %v4164 = vshrl.u32 %v4103, 16
        %v4166 = vrot.slane %v4164, 4
        %v4167 = vor.u32 %v4166, %v4162
        %v4168 = vrot.slane %v4167, 4
        %v4170 = vshll.u32 %v4104, 16
        %v4172 = vrot.slane %v4170, 5
        %v4173 = vsel %vm788, %v4168, %v4172
        %v4175 = vshrl.u32 %v4105, 16
        %v4177 = vrot.slane %v4175, 4
        %v4178 = vshll.u32 %v4105, 16
        %v4180 = vrot.slane %v4178, 5
        %v4181 = vor.u32 %v4177, %v4180
        %v4182 = vrot.slane %v4181, 4
        %v4184 = vshll.u32 %v4106, 16
        %v4186 = vrot.slane %v4184, 5
        %v4187 = vsel %vm788, %v4182, %v4186
        %v4188 = vshrl.u32 %v4106, 16
        %v4190 = vrot.slane %v4188, 4
        %v4191 = vor.u32 %v4190, %v4186
        %v4192 = vrot.slane %v4191, 4
        %v4194 = vshll.u32 %v4107, 16
        %v4196 = vrot.slane %v4194, 5
        %v4197 = vsel %vm788, %v4192, %v4196
        %v4199 = vshrl.u32 %v4108, 16
        %v4201 = vrot.slane %v4199, 4
        %v4202 = vshll.u32 %v4108, 16
        %v4204 = vrot.slane %v4202, 5
        %v4205 = vor.u32 %v4201, %v4204
        %v4206 = vrot.slane %v4205, 4
        %v4208 = vshll.u32 %v4109, 16
        %v4210 = vrot.slane %v4208, 5
        %v4211 = vsel %vm788, %v4206, %v4210
        %v4212 = vshrl.u32 %v4109, 16
        %v4214 = vrot.slane %v4212, 4
        %v4215 = vor.u32 %v4214, %v4210
        %v4216 = vrot.slane %v4215, 4
        %v4218 = vshll.u32 %v4110, 16
        %v4220 = vrot.slane %v4218, 5
        %v4221 = vsel %vm788, %v4216, %v4220
        %v4223 = vshrl.u32 %v4111, 16
        %v4225 = vrot.slane %v4223, 4
        %v4226 = vshll.u32 %v4111, 16
        %v4228 = vrot.slane %v4226, 5
        %v4229 = vor.u32 %v4225, %v4228
        %v4230 = vrot.slane %v4229, 4
        %v4232 = vshll.u32 %v4112, 16
        %v4234 = vrot.slane %v4232, 5
        %v4235 = vsel %vm788, %v4230, %v4234
        %v4236 = vshrl.u32 %v4112, 16
        %v4238 = vrot.slane %v4236, 4
        %v4239 = vor.u32 %v4238, %v4234
        %v4240 = vrot.slane %v4239, 4
        %v4242 = vshll.u32 %v4113, 16
        %v4244 = vrot.slane %v4242, 5
        %v4245 = vsel %vm788, %v4240, %v4244
        %v4247 = vshrl.u32 %v4114, 16
        %v4249 = vrot.slane %v4247, 4
        %v4250 = vshll.u32 %v4114, 16
        %v4252 = vrot.slane %v4250, 5
        %v4253 = vor.u32 %v4249, %v4252
        %v4254 = vrot.slane %v4253, 4
        %v4256 = vshll.u32 %v4115, 16
        %v4258 = vrot.slane %v4256, 5
        %v4259 = vsel %vm788, %v4254, %v4258
        %v4260 = vshrl.u32 %v4115, 16
        %v4262 = vrot.slane %v4260, 4
        %v4263 = vor.u32 %v4262, %v4258
        %v4264 = vrot.slane %v4263, 4
        %v4266 = vshll.u32 %v4116, 16
        %v4268 = vrot.slane %v4266, 5
        %v4269 = vsel %vm788, %v4264, %v4268
        %v4271 = vshrl.u32 %v4117, 16
        %v4273 = vrot.slane %v4271, 4
        %v4274 = vshll.u32 %v4117, 16
        %v4276 = vrot.slane %v4274, 5
        %v4277 = vor.u32 %v4273, %v4276
        %v4278 = vrot.slane %v4277, 4
        %v4280 = vshll.u32 %v4118, 16
        %v4282 = vrot.slane %v4280, 5
        %v4283 = vsel %vm788, %v4278, %v4282
        %v4284 = vshrl.u32 %v4118, 16
        %v4286 = vrot.slane %v4284, 4
        %v4287 = vor.u32 %v4286, %v4282
        %v4288 = vrot.slane %v4287, 4
        %v4290 = vshll.u32 %v4119, 16
        %v4292 = vrot.slane %v4290, 5
        %v4293 = vsel %vm788, %v4288, %v4292
        %v4295 = vshrl.u32 %v4120, 16
        %v4297 = vrot.slane %v4295, 4
        %v4298 = vshll.u32 %v4120, 16
        %v4300 = vrot.slane %v4298, 5
        %v4301 = vor.u32 %v4297, %v4300
        %v4302 = vrot.slane %v4301, 4
        %v4304 = vshll.u32 %v4121, 16
        %v4306 = vrot.slane %v4304, 5
        %v4307 = vsel %vm788, %v4302, %v4306
        %v4308 = vshrl.u32 %v4121, 16
        %v4310 = vrot.slane %v4308, 4
        %v4311 = vor.u32 %v4310, %v4306
        %v4312 = vrot.slane %v4311, 4
        %v4314 = vshll.u32 %v4122, 16
        %v4316 = vrot.slane %v4314, 5
        %v4317 = vsel %vm788, %v4312, %v4316
        %v4319 = vshrl.u32 %v4123, 16
        %v4321 = vrot.slane %v4319, 4
        %v4322 = vshll.u32 %v4123, 16
        %v4324 = vrot.slane %v4322, 5
        %v4325 = vor.u32 %v4321, %v4324
        %v4326 = vrot.slane %v4325, 4
        %v4328 = vshll.u32 %v4124, 16
        %v4330 = vrot.slane %v4328, 5
        %v4331 = vsel %vm788, %v4326, %v4330
        %v4332 = vshrl.u32 %v4124, 16
        %v4334 = vrot.slane %v4332, 4
        %v4335 = vor.u32 %v4334, %v4330
        %v4336 = vrot.slane %v4335, 4
        %v4338 = vshll.u32 %v4125, 16
        %v4340 = vrot.slane %v4338, 5
        %v4341 = vsel %vm788, %v4336, %v4340
        %v4343 = vshrl.u32 %v4126, 16
        %v4345 = vrot.slane %v4343, 4
        %v4346 = vshll.u32 %v4126, 16
        %v4348 = vrot.slane %v4346, 5
        %v4349 = vor.u32 %v4345, %v4348
        %v4350 = vrot.slane %v4349, 4
        %v4352 = vshll.u32 %v4127, 16
        %v4354 = vrot.slane %v4352, 5
        %v4355 = vsel %vm788, %v4350, %v4354
        %v4356 = vshrl.u32 %v4127, 16
        %v4358 = vrot.slane %v4356, 4
        %v4359 = vor.u32 %v4358, %v4354
        %v4360 = vrot.slane %v4359, 4
        %v4362 = vshll.u32 %v4128, 16
        %v4364 = vrot.slane %v4362, 5
        %v4365 = vsel %vm788, %v4360, %v4364
        %v4367 = vshrl.u32 %v4129, 16
        %v4369 = vrot.slane %v4367, 4
        %v4370 = vshll.u32 %v4129, 16
        %v4372 = vrot.slane %v4370, 5
        %v4373 = vor.u32 %v4369, %v4372
        %v4374 = vrot.slane %v4373, 4
        %v4376 = vshll.u32 %v4130, 16
        %v4378 = vrot.slane %v4376, 5
        %v4379 = vsel %vm788, %v4374, %v4378
        %v4380 = vshrl.u32 %v4130, 16
        %v4382 = vrot.slane %v4380, 4
        %v4383 = vor.u32 %v4382, %v4378
        %v4384 = vrot.slane %v4383, 4
        %v4386 = vshll.u32 %v4131, 16
        %v4388 = vrot.slane %v4386, 5
        %v4389 = vsel %vm788, %v4384, %v4388
        %v4391 = vshrl.u32 %v4132, 16
        %v4393 = vrot.slane %v4391, 4
        %v4394 = vshll.u32 %v4132, 16
        %v4396 = vrot.slane %v4394, 5
        %v4397 = vor.u32 %v4393, %v4396
        %v4398 = vrot.slane %v4397, 4
        %v4400 = vshll.u32 %v4133, 16
        %v4402 = vrot.slane %v4400, 5
        %v4403 = vsel %vm788, %v4398, %v4402
        %v4404 = vshrl.u32 %v4133, 16
        %v4406 = vrot.slane %v4404, 4
        %v4407 = vor.u32 %v4406, %v4402
        %v4408 = vrot.slane %v4407, 4
        %v4410 = vshll.u32 %v4134, 16
        %v4412 = vrot.slane %v4410, 5
        %v4413 = vsel %vm788, %v4408, %v4412
        %v4415 = vshrl.u32 %v4135, 16
        %v4417 = vrot.slane %v4415, 4
        %v4418 = vshll.u32 %v4135, 16
        %v4420 = vrot.slane %v4418, 5
        %v4421 = vor.u32 %v4417, %v4420
        %v4422 = vrot.slane %v4421, 4
        %v4424 = vshll.u32 %v4136, 16
        %v4426 = vrot.slane %v4424, 5
        %v4427 = vsel %vm788, %v4422, %v4426
        %v4428 = vshrl.u32 %v4136, 16
        %v4430 = vrot.slane %v4428, 4
        %v4431 = vor.u32 %v4430, %v4426
        %v4432 = vrot.slane %v4431, 4
        %v4434 = vshll.u32 %v4137, 16
        %v4436 = vrot.slane %v4434, 5
        %v4437 = vsel %vm788, %v4432, %v4436
        %v4439 = vshrl.u32 %v4138, 16
        %v4441 = vrot.slane %v4439, 4
        %v4442 = vshll.u32 %v4138, 16
        %v4444 = vrot.slane %v4442, 5
        %v4445 = vor.u32 %v4441, %v4444
        %v4446 = vrot.slane %v4445, 4
        %v4448 = vshll.u32 %v4139, 16
        %v4450 = vrot.slane %v4448, 5
        %v4451 = vsel %vm788, %v4446, %v4450
        %v4452 = vshrl.u32 %v4139, 16
        %v4454 = vrot.slane %v4452, 4
        %v4455 = vor.u32 %v4454, %v4450
        %v4456 = vrot.slane %v4455, 4
        %v4458 = vshll.u32 %v4140, 16
        %v4460 = vrot.slane %v4458, 5
        %v4461 = vsel %vm788, %v4456, %v4460
        %v4463 = vshrl.u32 %v4141, 16
        %v4465 = vrot.slane %v4463, 4
        %v4466 = vshll.u32 %v4141, 16
        %v4468 = vrot.slane %v4466, 5
        %v4469 = vor.u32 %v4465, %v4468
        %v4470 = vrot.slane %v4469, 4
        %v4472 = vshll.u32 %v4142, 16
        %v4474 = vrot.slane %v4472, 5
        %v4475 = vsel %vm788, %v4470, %v4474
        %v4476 = vshrl.u32 %v4142, 16
        %v4478 = vrot.slane %v4476, 4
        %v4479 = vor.u32 %v4478, %v4474
        %v4480 = vrot.slane %v4479, 4
        %v4482 = vshll.u32 %v4143, 16
        %v4484 = vrot.slane %v4482, 5
        %v4485 = vsel %vm788, %v4480, %v4484
        %v4487 = vshrl.u32 %v4144, 16
        %v4489 = vrot.slane %v4487, 4
        %v4490 = vshll.u32 %v4144, 16
        %v4492 = vrot.slane %v4490, 5
        %v4493 = vor.u32 %v4489, %v4492
        %v4494 = vrot.slane %v4493, 4
        %v4496 = vshll.u32 %v4145, 16
        %v4498 = vrot.slane %v4496, 5
        %v4499 = vsel %vm788, %v4494, %v4498
        %v4500 = vshrl.u32 %v4145, 16
        %v4502 = vrot.slane %v4500, 4
        %v4503 = vor.u32 %v4502, %v4498
        %v4504 = vrot.slane %v4503, 4
        %v4506 = vshll.u32 %v4146, 16
        %v4508 = vrot.slane %v4506, 5
        %v4509 = vsel %vm788, %v4504, %v4508
        %v4511 = vshrl.u32 %v4147, 16
        %v4513 = vrot.slane %v4511, 4
        %v4514 = vshll.u32 %v4147, 16
        %v4516 = vrot.slane %v4514, 5
        %v4517 = vor.u32 %v4513, %v4516
        %v4518 = vrot.slane %v4517, 4
        %v4520 = vshll.u32 %v4148, 16
        %v4522 = vrot.slane %v4520, 5
        %v4523 = vsel %vm788, %v4518, %v4522
        %v4524 = vshrl.u32 %v4148, 16
        %v4526 = vrot.slane %v4524, 4
        %v4527 = vor.u32 %v4526, %v4522
        %v4528 = vrot.slane %v4527, 4
        %v4530 = vshll.u32 %v4149, 16
        %v4532 = vrot.slane %v4530, 5
        %v4533 = vsel %vm788, %v4528, %v4532
        %s4534 = scalar_lea.vmem %s1, 14
        %v4535 = vld [vmem:[%s4534] sm:$0x3]
        %v4536 = vunpack.c.l.b16 %v4163
        %v4537 = vunpack.c.l.b16 %v4173
        %v4538 = vunpack.c.l.b16 %v4187
        %v4539 = vunpack.c.l.b16 %v4197
        %v4540 = vunpack.c.l.b16 %v4211
        %v4541 = vunpack.c.l.b16 %v4221
        %v4542 = vunpack.c.l.b16 %v4235
        %v4543 = vunpack.c.l.b16 %v4245
        %v4544 = vunpack.c.l.b16 %v4259
        %v4545 = vunpack.c.l.b16 %v4269
        %v4546 = vunpack.c.l.b16 %v4283
        %v4547 = vunpack.c.l.b16 %v4293
        %v4548 = vunpack.c.l.b16 %v4307
        %v4549 = vunpack.c.l.b16 %v4317
        %v4550 = vunpack.c.l.b16 %v4331
        %v4551 = vunpack.c.l.b16 %v4341
        %v4552 = vunpack.c.l.b16 %v4355
        %v4553 = vunpack.c.l.b16 %v4365
        %v4554 = vunpack.c.l.b16 %v4379
        %v4555 = vunpack.c.l.b16 %v4389
        %v4556 = vunpack.c.l.b16 %v4403
        %v4557 = vunpack.c.l.b16 %v4413
        %v4558 = vunpack.c.l.b16 %v4427
        %v4559 = vunpack.c.l.b16 %v4437
        %v4560 = vunpack.c.l.b16 %v4451
        %v4561 = vunpack.c.l.b16 %v4461
        %v4562 = vunpack.c.l.b16 %v4475
        %v4563 = vunpack.c.l.b16 %v4485
        %v4564 = vunpack.c.l.b16 %v4499
        %v4565 = vunpack.c.l.b16 %v4509
        %v4566 = vunpack.c.l.b16 %v4523
        %v4567 = vunpack.c.l.b16 %v4533
        %v4568 = vpack.c.b16 %v4537, %v4536
        %v4569 = vpack.c.b16 %v4539, %v4538
        %v4570 = vpack.c.b16 %v4541, %v4540
        %v4571 = vpack.c.b16 %v4543, %v4542
        %v4572 = vpack.c.b16 %v4545, %v4544
        %v4573 = vpack.c.b16 %v4547, %v4546
        %v4574 = vpack.c.b16 %v4549, %v4548
        %v4575 = vpack.c.b16 %v4551, %v4550
        %v4576 = vpack.c.b16 %v4553, %v4552
        %v4577 = vpack.c.b16 %v4555, %v4554
        %v4578 = vpack.c.b16 %v4557, %v4556
        %v4579 = vpack.c.b16 %v4559, %v4558
        %v4580 = vpack.c.b16 %v4561, %v4560
        %v4581 = vpack.c.b16 %v4563, %v4562
        %v4582 = vpack.c.b16 %v4565, %v4564
        %v4583 = vpack.c.b16 %v4567, %v4566
        %v4585 = vsel %vm1223, %v4568, 0
        %v4588 = vsel %vm1223, %v4569, 0
        %v4591 = vsel %vm1223, %v4570, 0
        %v4594 = vsel %vm1223, %v4571, 0
        %v4597 = vsel %vm1223, %v4572, 0
        %v4600 = vsel %vm1223, %v4573, 0
        %v4603 = vsel %vm1223, %v4574, 0
        %v4606 = vsel %vm1223, %v4575, 0
        %v4609 = vsel %vm1223, %v4576, 0
        %v4612 = vsel %vm1223, %v4577, 0
        %v4615 = vsel %vm1223, %v4578, 0
        %v4618 = vsel %vm1223, %v4579, 0
        %v4621 = vsel %vm1223, %v4580, 0
        %v4624 = vsel %vm1223, %v4581, 0
        %v4627 = vsel %vm1223, %v4582, 0
        %v4630 = vsel %vm1223, %v4583, 0
        %v4633 = vand.u32 %v4535, %v1275
        %4635 = vmatprep.subr.bf16.mxu0 0
        %4636 = vmatpush1.bf16.msra.mxu0 %v4633
        %4637 = vmatprep.subr.bf16.mxu0 0
        %4638 = vmatpush1.bf16.msra.mxu0 0
        %4639 = vmatprep.subr.bf16.mxu0 0
        %4640 = vmatpush1.bf16.msra.mxu0 0
        %4641 = vmatprep.subr.bf16.mxu0 0
        %4642 = vmatpush1.bf16.msra.mxu0 0
        %4643 = vmatprep.subr.bf16.mxu0 0
        %4644 = vmatpush1.bf16.msra.mxu0 0
        %4645 = vmatprep.subr.bf16.mxu0 0
        %4646 = vmatpush1.bf16.msra.mxu0 0
        %4647 = vmatprep.subr.bf16.mxu0 0
        %4648 = vmatpush1.bf16.msra.mxu0 0
        %4649 = vmatprep.subr.bf16.mxu0 0
        %4650 = vmatpush1.bf16.msra.mxu0 0
        %4651 = vmatprep.subr.bf16.mxu0 0
        %4652 = vmatpush1.bf16.msra.mxu0 0
        %4653 = vmatprep.subr.bf16.mxu0 0
        %4654 = vmatpush1.bf16.msra.mxu0 0
        %4655 = vmatprep.subr.bf16.mxu0 0
        %4656 = vmatpush1.bf16.msra.mxu0 0
        %4657 = vmatprep.subr.bf16.mxu0 0
        %4658 = vmatpush1.bf16.msra.mxu0 0
        %4659 = vmatprep.subr.bf16.mxu0 0
        %4660 = vmatpush1.bf16.msra.mxu0 0
        %4661 = vmatprep.subr.bf16.mxu0 0
        %4662 = vmatpush1.bf16.msra.mxu0 0
        %4663 = vmatprep.subr.bf16.mxu0 0
        %4664 = vmatpush1.bf16.msra.mxu0 0
        %4665 = vmatprep.subr.bf16.mxu0 0
        %4666 = vmatpush1.bf16.msra.mxu0 0
        %4667 = vmatprep.mubr.bf16.mxu0 0
        %4668 = vmatmul.mubr.bf16.gmra.mrb[0].mxu0 %v4585
        %v4669 = vpop.f32.mrb[0].mxu0
        %v4670 = vadd.f32 0.0, %v4669
        %v4671 = vpop.f32.mrb[0].mxu0
        %v4672 = vpop.f32.mrb[0].mxu0
        %v4673 = vadd.f32 0.0, %v4672
        %v4674 = vpop.f32.mrb[0].mxu0
        %4675 = vmatprep.mubr.bf16.mxu0 0
        %4676 = vmatmul.mubr.bf16.gmra.mrb[0].mxu0 %v4588
        %v4677 = vpop.f32.mrb[0].mxu0
        %v4678 = vadd.f32 0.0, %v4677
        %v4679 = vpop.f32.mrb[0].mxu0
        %v4680 = vpop.f32.mrb[0].mxu0
        %v4681 = vadd.f32 0.0, %v4680
        %v4682 = vpop.f32.mrb[0].mxu0
        %4683 = vmatprep.mubr.bf16.mxu0 0
        %4684 = vmatmul.mubr.bf16.gmra.mrb[0].mxu0 %v4591
        %v4685 = vpop.f32.mrb[0].mxu0
        %v4686 = vadd.f32 0.0, %v4685
        %v4687 = vpop.f32.mrb[0].mxu0
        %v4688 = vpop.f32.mrb[0].mxu0
        %v4689 = vadd.f32 0.0, %v4688
        %v4690 = vpop.f32.mrb[0].mxu0
        %4691 = vmatprep.mubr.bf16.mxu0 0
        %4692 = vmatmul.mubr.bf16.gmra.mrb[0].mxu0 %v4594
        %v4693 = vpop.f32.mrb[0].mxu0
        %v4694 = vadd.f32 0.0, %v4693
        %v4695 = vpop.f32.mrb[0].mxu0
        %v4696 = vpop.f32.mrb[0].mxu0
        %v4697 = vadd.f32 0.0, %v4696
        %v4698 = vpop.f32.mrb[0].mxu0
        %4699 = vmatprep.mubr.bf16.mxu0 0
        %4700 = vmatmul.mubr.bf16.gmra.mrb[0].mxu0 %v4597
        %v4701 = vpop.f32.mrb[0].mxu0
        %v4702 = vadd.f32 0.0, %v4701
        %v4703 = vpop.f32.mrb[0].mxu0
        %v4704 = vpop.f32.mrb[0].mxu0
        %v4705 = vadd.f32 0.0, %v4704
        %v4706 = vpop.f32.mrb[0].mxu0
        %4707 = vmatprep.mubr.bf16.mxu0 0
        %4708 = vmatmul.mubr.bf16.gmra.mrb[0].mxu0 %v4600
        %v4709 = vpop.f32.mrb[0].mxu0
        %v4710 = vadd.f32 0.0, %v4709
        %v4711 = vpop.f32.mrb[0].mxu0
        %v4712 = vpop.f32.mrb[0].mxu0
        %v4713 = vadd.f32 0.0, %v4712
        %v4714 = vpop.f32.mrb[0].mxu0
        %4715 = vmatprep.mubr.bf16.mxu0 0
        %4716 = vmatmul.mubr.bf16.gmra.mrb[0].mxu0 %v4603
        %v4717 = vpop.f32.mrb[0].mxu0
        %v4718 = vadd.f32 0.0, %v4717
        %v4719 = vpop.f32.mrb[0].mxu0
        %v4720 = vpop.f32.mrb[0].mxu0
        %v4721 = vadd.f32 0.0, %v4720
        %v4722 = vpop.f32.mrb[0].mxu0
        %4723 = vmatprep.mubr.bf16.mxu0 0
        %4724 = vmatmul.mubr.bf16.gmra.mrb[0].mxu0 %v4606
        %v4725 = vpop.f32.mrb[0].mxu0
        %v4726 = vadd.f32 0.0, %v4725
        %v4727 = vpop.f32.mrb[0].mxu0
        %v4728 = vpop.f32.mrb[0].mxu0
        %v4729 = vadd.f32 0.0, %v4728
        %v4730 = vpop.f32.mrb[0].mxu0
        %4731 = vmatprep.mubr.bf16.mxu0 0
        %4732 = vmatmul.mubr.bf16.gmra.mrb[0].mxu0 %v4609
        %v4733 = vpop.f32.mrb[0].mxu0
        %v4734 = vadd.f32 0.0, %v4733
        %v4735 = vpop.f32.mrb[0].mxu0
        %v4736 = vpop.f32.mrb[0].mxu0
        %v4737 = vadd.f32 0.0, %v4736
        %v4738 = vpop.f32.mrb[0].mxu0
        %4739 = vmatprep.mubr.bf16.mxu0 0
        %4740 = vmatmul.mubr.bf16.gmra.mrb[0].mxu0 %v4612
        %v4741 = vpop.f32.mrb[0].mxu0
        %v4742 = vadd.f32 0.0, %v4741
        %v4743 = vpop.f32.mrb[0].mxu0
        %v4744 = vpop.f32.mrb[0].mxu0
        %v4745 = vadd.f32 0.0, %v4744
        %v4746 = vpop.f32.mrb[0].mxu0
        %4747 = vmatprep.mubr.bf16.mxu0 0
        %4748 = vmatmul.mubr.bf16.gmra.mrb[0].mxu0 %v4615
        %v4749 = vpop.f32.mrb[0].mxu0
        %v4750 = vadd.f32 0.0, %v4749
        %v4751 = vpop.f32.mrb[0].mxu0
        %v4752 = vpop.f32.mrb[0].mxu0
        %v4753 = vadd.f32 0.0, %v4752
        %v4754 = vpop.f32.mrb[0].mxu0
        %4755 = vmatprep.mubr.bf16.mxu0 0
        %4756 = vmatmul.mubr.bf16.gmra.mrb[0].mxu0 %v4618
        %v4757 = vpop.f32.mrb[0].mxu0
        %v4758 = vadd.f32 0.0, %v4757
        %v4759 = vpop.f32.mrb[0].mxu0
        %v4760 = vpop.f32.mrb[0].mxu0
        %v4761 = vadd.f32 0.0, %v4760
        %v4762 = vpop.f32.mrb[0].mxu0
        %4763 = vmatprep.mubr.bf16.mxu0 0
        %4764 = vmatmul.mubr.bf16.gmra.mrb[0].mxu0 %v4621
        %v4765 = vpop.f32.mrb[0].mxu0
        %v4766 = vadd.f32 0.0, %v4765
        %v4767 = vpop.f32.mrb[0].mxu0
        %v4768 = vpop.f32.mrb[0].mxu0
        %v4769 = vadd.f32 0.0, %v4768
        %v4770 = vpop.f32.mrb[0].mxu0
        %4771 = vmatprep.mubr.bf16.mxu0 0
        %4772 = vmatmul.mubr.bf16.gmra.mrb[0].mxu0 %v4624
        %v4773 = vpop.f32.mrb[0].mxu0
        %v4774 = vadd.f32 0.0, %v4773
        %v4775 = vpop.f32.mrb[0].mxu0
        %v4776 = vpop.f32.mrb[0].mxu0
        %v4777 = vadd.f32 0.0, %v4776
        %v4778 = vpop.f32.mrb[0].mxu0
        %4779 = vmatprep.mubr.bf16.mxu0 0
        %4780 = vmatmul.mubr.bf16.gmra.mrb[0].mxu0 %v4627
        %v4781 = vpop.f32.mrb[0].mxu0
        %v4782 = vadd.f32 0.0, %v4781
        %v4783 = vpop.f32.mrb[0].mxu0
        %v4784 = vpop.f32.mrb[0].mxu0
        %v4785 = vadd.f32 0.0, %v4784
        %v4786 = vpop.f32.mrb[0].mxu0
        %4787 = vmatprep.mubr.bf16.mxu0 0
        %4788 = vmatmul.mubr.bf16.gmra.mrb[0].mxu0 %v4630
        %v4789 = vpop.f32.mrb[0].mxu0
        %v4790 = vadd.f32 0.0, %v4789
        %v4791 = vpop.f32.mrb[0].mxu0
        %v4792 = vpop.f32.mrb[0].mxu0
        %v4793 = vadd.f32 0.0, %v4792
        %v4794 = vpop.f32.mrb[0].mxu0
        %4795 = vdwg.mxu0
        %v4796 = vadd.f32 %v4070, %v4670
        %v4797 = vadd.f32 %v4071, %v4673
        %v4798 = vadd.f32 %v4072, %v4678
        %v4799 = vadd.f32 %v4073, %v4681
        %v4800 = vadd.f32 %v4074, %v4686
        %v4801 = vadd.f32 %v4075, %v4689
        %v4802 = vadd.f32 %v4076, %v4694
        %v4803 = vadd.f32 %v4077, %v4697
        %v4804 = vadd.f32 %v4078, %v4702
        %v4805 = vadd.f32 %v4079, %v4705
        %v4806 = vadd.f32 %v4080, %v4710
        %v4807 = vadd.f32 %v4081, %v4713
        %v4808 = vadd.f32 %v4082, %v4718
        %v4809 = vadd.f32 %v4083, %v4721
        %v4810 = vadd.f32 %v4084, %v4726
        %v4811 = vadd.f32 %v4085, %v4729
        %v4812 = vadd.f32 %v4086, %v4734
        %v4813 = vadd.f32 %v4087, %v4737
        %v4814 = vadd.f32 %v4088, %v4742
        %v4815 = vadd.f32 %v4089, %v4745
        %v4816 = vadd.f32 %v4090, %v4750
        %v4817 = vadd.f32 %v4091, %v4753
        %v4818 = vadd.f32 %v4092, %v4758
        %v4819 = vadd.f32 %v4093, %v4761
        %v4820 = vadd.f32 %v4094, %v4766
        %v4821 = vadd.f32 %v4095, %v4769
        %v4822 = vadd.f32 %v4096, %v4774
        %v4823 = vadd.f32 %v4097, %v4777
        %v4824 = vadd.f32 %v4098, %v4782
        %v4825 = vadd.f32 %v4099, %v4785
        %v4826 = vadd.f32 %v4100, %v4790
        %v4827 = vadd.f32 %v4101, %v4793
        %v4828 = vld [vmem:[%s3743] sm:$0xe]
        %v4829 = vld [vmem:[%s3743 + $0xc] sm:$0xe]
        %v4830 = vld [vmem:[%s3743 + $0x18] sm:$0xe]
        %v4831 = vld [vmem:[%s3743 + $0x24] sm:$0xe]
        %v4832 = vld [vmem:[%s3743 + $0x30] sm:$0xe]
        %v4833 = vld [vmem:[%s3743 + $0x3c] sm:$0xe]
        %v4834 = vld [vmem:[%s3743 + $0x48] sm:$0xe]
        %v4835 = vld [vmem:[%s3743 + $0x54] sm:$0xe]
        %v4836 = vld [vmem:[%s3743 + $0x60] sm:$0xe]
        %v4837 = vld [vmem:[%s3743 + $0x6c] sm:$0xe]
        %v4838 = vld [vmem:[%s3743 + $0x78] sm:$0xe]
        %v4839 = vld [vmem:[%s3743 + $0x84] sm:$0xe]
        %v4840 = vld [vmem:[%s3743 + $0x90] sm:$0xe]
        %v4841 = vld [vmem:[%s3743 + $0x9c] sm:$0xe]
        %v4842 = vld [vmem:[%s3743 + $0xa8] sm:$0xe]
        %v4843 = vld [vmem:[%s3743 + $0xb4] sm:$0xe]
        %v4892 = vrot.slane %v4828, 5
        %v4893 = vrot.slane %v4892, 4
        %v4894 = vrot.slane %v4103, 5
        %v4895 = vsel %vm1782, %v4893, %v4894
        %v4896 = vrot.slane %v4894, 4
        %v4897 = vrot.slane %v4104, 5
        %v4898 = vsel %vm1782, %v4896, %v4897
        %v4899 = vrot.slane %v4829, 5
        %v4900 = vrot.slane %v4899, 4
        %v4901 = vrot.slane %v4106, 5
        %v4902 = vsel %vm1782, %v4900, %v4901
        %v4903 = vrot.slane %v4901, 4
        %v4904 = vrot.slane %v4107, 5
        %v4905 = vsel %vm1782, %v4903, %v4904
        %v4906 = vrot.slane %v4830, 5
        %v4907 = vrot.slane %v4906, 4
        %v4908 = vrot.slane %v4109, 5
        %v4909 = vsel %vm1782, %v4907, %v4908
        %v4910 = vrot.slane %v4908, 4
        %v4911 = vrot.slane %v4110, 5
        %v4912 = vsel %vm1782, %v4910, %v4911
        %v4913 = vrot.slane %v4831, 5
        %v4914 = vrot.slane %v4913, 4
        %v4915 = vrot.slane %v4112, 5
        %v4916 = vsel %vm1782, %v4914, %v4915
        %v4917 = vrot.slane %v4915, 4
        %v4918 = vrot.slane %v4113, 5
        %v4919 = vsel %vm1782, %v4917, %v4918
        %v4920 = vrot.slane %v4832, 5
        %v4921 = vrot.slane %v4920, 4
        %v4922 = vrot.slane %v4115, 5
        %v4923 = vsel %vm1782, %v4921, %v4922
        %v4924 = vrot.slane %v4922, 4
        %v4925 = vrot.slane %v4116, 5
        %v4926 = vsel %vm1782, %v4924, %v4925
        %v4927 = vrot.slane %v4833, 5
        %v4928 = vrot.slane %v4927, 4
        %v4929 = vrot.slane %v4118, 5
        %v4930 = vsel %vm1782, %v4928, %v4929
        %v4931 = vrot.slane %v4929, 4
        %v4932 = vrot.slane %v4119, 5
        %v4933 = vsel %vm1782, %v4931, %v4932
        %v4934 = vrot.slane %v4834, 5
        %v4935 = vrot.slane %v4934, 4
        %v4936 = vrot.slane %v4121, 5
        %v4937 = vsel %vm1782, %v4935, %v4936
        %v4938 = vrot.slane %v4936, 4
        %v4939 = vrot.slane %v4122, 5
        %v4940 = vsel %vm1782, %v4938, %v4939
        %v4941 = vrot.slane %v4835, 5
        %v4942 = vrot.slane %v4941, 4
        %v4943 = vrot.slane %v4124, 5
        %v4944 = vsel %vm1782, %v4942, %v4943
        %v4945 = vrot.slane %v4943, 4
        %v4946 = vrot.slane %v4125, 5
        %v4947 = vsel %vm1782, %v4945, %v4946
        %v4948 = vrot.slane %v4836, 5
        %v4949 = vrot.slane %v4948, 4
        %v4950 = vrot.slane %v4127, 5
        %v4951 = vsel %vm1782, %v4949, %v4950
        %v4952 = vrot.slane %v4950, 4
        %v4953 = vrot.slane %v4128, 5
        %v4954 = vsel %vm1782, %v4952, %v4953
        %v4955 = vrot.slane %v4837, 5
        %v4956 = vrot.slane %v4955, 4
        %v4957 = vrot.slane %v4130, 5
        %v4958 = vsel %vm1782, %v4956, %v4957
        %v4959 = vrot.slane %v4957, 4
        %v4960 = vrot.slane %v4131, 5
        %v4961 = vsel %vm1782, %v4959, %v4960
        %v4962 = vrot.slane %v4838, 5
        %v4963 = vrot.slane %v4962, 4
        %v4964 = vrot.slane %v4133, 5
        %v4965 = vsel %vm1782, %v4963, %v4964
        %v4966 = vrot.slane %v4964, 4
        %v4967 = vrot.slane %v4134, 5
        %v4968 = vsel %vm1782, %v4966, %v4967
        %v4969 = vrot.slane %v4839, 5
        %v4970 = vrot.slane %v4969, 4
        %v4971 = vrot.slane %v4136, 5
        %v4972 = vsel %vm1782, %v4970, %v4971
        %v4973 = vrot.slane %v4971, 4
        %v4974 = vrot.slane %v4137, 5
        %v4975 = vsel %vm1782, %v4973, %v4974
        %v4976 = vrot.slane %v4840, 5
        %v4977 = vrot.slane %v4976, 4
        %v4978 = vrot.slane %v4139, 5
        %v4979 = vsel %vm1782, %v4977, %v4978
        %v4980 = vrot.slane %v4978, 4
        %v4981 = vrot.slane %v4140, 5
        %v4982 = vsel %vm1782, %v4980, %v4981
        %v4983 = vrot.slane %v4841, 5
        %v4984 = vrot.slane %v4983, 4
        %v4985 = vrot.slane %v4142, 5
        %v4986 = vsel %vm1782, %v4984, %v4985
        %v4987 = vrot.slane %v4985, 4
        %v4988 = vrot.slane %v4143, 5
        %v4989 = vsel %vm1782, %v4987, %v4988
        %v4990 = vrot.slane %v4842, 5
        %v4991 = vrot.slane %v4990, 4
        %v4992 = vrot.slane %v4145, 5
        %v4993 = vsel %vm1782, %v4991, %v4992
        %v4994 = vrot.slane %v4992, 4
        %v4995 = vrot.slane %v4146, 5
        %v4996 = vsel %vm1782, %v4994, %v4995
        %v4997 = vrot.slane %v4843, 5
        %v4998 = vrot.slane %v4997, 4
        %v4999 = vrot.slane %v4148, 5
        %v5000 = vsel %vm1782, %v4998, %v4999
        %v5001 = vrot.slane %v4999, 4
        %v5002 = vrot.slane %v4149, 5
        %v5003 = vsel %vm1782, %v5001, %v5002
        %s5004 = scalar_lea.vmem %s1, 16
        %v5005 = vld [vmem:[%s5004] sm:$0x3]
        %v5006 = vunpack.c.l.b16 %v4895
        %v5007 = vunpack.c.l.b16 %v4898
        %v5008 = vunpack.c.l.b16 %v4902
        %v5009 = vunpack.c.l.b16 %v4905
        %v5010 = vunpack.c.l.b16 %v4909
        %v5011 = vunpack.c.l.b16 %v4912
        %v5012 = vunpack.c.l.b16 %v4916
        %v5013 = vunpack.c.l.b16 %v4919
        %v5014 = vunpack.c.l.b16 %v4923
        %v5015 = vunpack.c.l.b16 %v4926
        %v5016 = vunpack.c.l.b16 %v4930
        %v5017 = vunpack.c.l.b16 %v4933
        %v5018 = vunpack.c.l.b16 %v4937
        %v5019 = vunpack.c.l.b16 %v4940
        %v5020 = vunpack.c.l.b16 %v4944
        %v5021 = vunpack.c.l.b16 %v4947
        %v5022 = vunpack.c.l.b16 %v4951
        %v5023 = vunpack.c.l.b16 %v4954
        %v5024 = vunpack.c.l.b16 %v4958
        %v5025 = vunpack.c.l.b16 %v4961
        %v5026 = vunpack.c.l.b16 %v4965
        %v5027 = vunpack.c.l.b16 %v4968
        %v5028 = vunpack.c.l.b16 %v4972
        %v5029 = vunpack.c.l.b16 %v4975
        %v5030 = vunpack.c.l.b16 %v4979
        %v5031 = vunpack.c.l.b16 %v4982
        %v5032 = vunpack.c.l.b16 %v4986
        %v5033 = vunpack.c.l.b16 %v4989
        %v5034 = vunpack.c.l.b16 %v4993
        %v5035 = vunpack.c.l.b16 %v4996
        %v5036 = vunpack.c.l.b16 %v5000
        %v5037 = vunpack.c.l.b16 %v5003
        %v5038 = vpack.c.b16 %v5007, %v5006
        %v5039 = vpack.c.b16 %v5009, %v5008
        %v5040 = vpack.c.b16 %v5011, %v5010
        %v5041 = vpack.c.b16 %v5013, %v5012
        %v5042 = vpack.c.b16 %v5015, %v5014
        %v5043 = vpack.c.b16 %v5017, %v5016
        %v5044 = vpack.c.b16 %v5019, %v5018
        %v5045 = vpack.c.b16 %v5021, %v5020
        %v5046 = vpack.c.b16 %v5023, %v5022
        %v5047 = vpack.c.b16 %v5025, %v5024
        %v5048 = vpack.c.b16 %v5027, %v5026
        %v5049 = vpack.c.b16 %v5029, %v5028
        %v5050 = vpack.c.b16 %v5031, %v5030
        %v5051 = vpack.c.b16 %v5033, %v5032
        %v5052 = vpack.c.b16 %v5035, %v5034
        %v5053 = vpack.c.b16 %v5037, %v5036
        %v5055 = vsel %vm1223, %v5038, 0
        %v5058 = vsel %vm1223, %v5039, 0
        %v5061 = vsel %vm1223, %v5040, 0
        %v5064 = vsel %vm1223, %v5041, 0
        %v5067 = vsel %vm1223, %v5042, 0
        %v5070 = vsel %vm1223, %v5043, 0
        %v5073 = vsel %vm1223, %v5044, 0
        %v5076 = vsel %vm1223, %v5045, 0
        %v5079 = vsel %vm1223, %v5046, 0
        %v5082 = vsel %vm1223, %v5047, 0
        %v5085 = vsel %vm1223, %v5048, 0
        %v5088 = vsel %vm1223, %v5049, 0
        %v5091 = vsel %vm1223, %v5050, 0
        %v5094 = vsel %vm1223, %v5051, 0
        %v5097 = vsel %vm1223, %v5052, 0
        %v5100 = vsel %vm1223, %v5053, 0
        %v5103 = vand.u32 %v5005, %v1275
        %5105 = vmatprep.subr.bf16.mxu0 0
        %5106 = vmatpush1.bf16.msra.mxu0 %v5103
        %5107 = vmatprep.subr.bf16.mxu0 0
        %5108 = vmatpush1.bf16.msra.mxu0 0
        %5109 = vmatprep.subr.bf16.mxu0 0
        %5110 = vmatpush1.bf16.msra.mxu0 0
        %5111 = vmatprep.subr.bf16.mxu0 0
        %5112 = vmatpush1.bf16.msra.mxu0 0
        %5113 = vmatprep.subr.bf16.mxu0 0
        %5114 = vmatpush1.bf16.msra.mxu0 0
        %5115 = vmatprep.subr.bf16.mxu0 0
        %5116 = vmatpush1.bf16.msra.mxu0 0
        %5117 = vmatprep.subr.bf16.mxu0 0
        %5118 = vmatpush1.bf16.msra.mxu0 0
        %5119 = vmatprep.subr.bf16.mxu0 0
        %5120 = vmatpush1.bf16.msra.mxu0 0
        %5121 = vmatprep.subr.bf16.mxu0 0
        %5122 = vmatpush1.bf16.msra.mxu0 0
        %5123 = vmatprep.subr.bf16.mxu0 0
        %5124 = vmatpush1.bf16.msra.mxu0 0
        %5125 = vmatprep.subr.bf16.mxu0 0
        %5126 = vmatpush1.bf16.msra.mxu0 0
        %5127 = vmatprep.subr.bf16.mxu0 0
        %5128 = vmatpush1.bf16.msra.mxu0 0
        %5129 = vmatprep.subr.bf16.mxu0 0
        %5130 = vmatpush1.bf16.msra.mxu0 0
        %5131 = vmatprep.subr.bf16.mxu0 0
        %5132 = vmatpush1.bf16.msra.mxu0 0
        %5133 = vmatprep.subr.bf16.mxu0 0
        %5134 = vmatpush1.bf16.msra.mxu0 0
        %5135 = vmatprep.subr.bf16.mxu0 0
        %5136 = vmatpush1.bf16.msra.mxu0 0
        %5137 = vmatprep.mubr.bf16.mxu0 0
        %5138 = vmatmul.mubr.bf16.gmra.mrb[0].mxu0 %v5055
        %v5139 = vpop.f32.mrb[0].mxu0
        %v5140 = vadd.f32 0.0, %v5139
        %v5141 = vpop.f32.mrb[0].mxu0
        %v5142 = vpop.f32.mrb[0].mxu0
        %v5143 = vadd.f32 0.0, %v5142
        %v5144 = vpop.f32.mrb[0].mxu0
        %5145 = vmatprep.mubr.bf16.mxu0 0
        %5146 = vmatmul.mubr.bf16.gmra.mrb[0].mxu0 %v5058
        %v5147 = vpop.f32.mrb[0].mxu0
        %v5148 = vadd.f32 0.0, %v5147
        %v5149 = vpop.f32.mrb[0].mxu0
        %v5150 = vpop.f32.mrb[0].mxu0
        %v5151 = vadd.f32 0.0, %v5150
        %v5152 = vpop.f32.mrb[0].mxu0
        %5153 = vmatprep.mubr.bf16.mxu0 0
        %5154 = vmatmul.mubr.bf16.gmra.mrb[0].mxu0 %v5061
        %v5155 = vpop.f32.mrb[0].mxu0
        %v5156 = vadd.f32 0.0, %v5155
        %v5157 = vpop.f32.mrb[0].mxu0
        %v5158 = vpop.f32.mrb[0].mxu0
        %v5159 = vadd.f32 0.0, %v5158
        %v5160 = vpop.f32.mrb[0].mxu0
        %5161 = vmatprep.mubr.bf16.mxu0 0
        %5162 = vmatmul.mubr.bf16.gmra.mrb[0].mxu0 %v5064
        %v5163 = vpop.f32.mrb[0].mxu0
        %v5164 = vadd.f32 0.0, %v5163
        %v5165 = vpop.f32.mrb[0].mxu0
        %v5166 = vpop.f32.mrb[0].mxu0
        %v5167 = vadd.f32 0.0, %v5166
        %v5168 = vpop.f32.mrb[0].mxu0
        %5169 = vmatprep.mubr.bf16.mxu0 0
        %5170 = vmatmul.mubr.bf16.gmra.mrb[0].mxu0 %v5067
        %v5171 = vpop.f32.mrb[0].mxu0
        %v5172 = vadd.f32 0.0, %v5171
        %v5173 = vpop.f32.mrb[0].mxu0
        %v5174 = vpop.f32.mrb[0].mxu0
        %v5175 = vadd.f32 0.0, %v5174
        %v5176 = vpop.f32.mrb[0].mxu0
        %5177 = vmatprep.mubr.bf16.mxu0 0
        %5178 = vmatmul.mubr.bf16.gmra.mrb[0].mxu0 %v5070
        %v5179 = vpop.f32.mrb[0].mxu0
        %v5180 = vadd.f32 0.0, %v5179
        %v5181 = vpop.f32.mrb[0].mxu0
        %v5182 = vpop.f32.mrb[0].mxu0
        %v5183 = vadd.f32 0.0, %v5182
        %v5184 = vpop.f32.mrb[0].mxu0
        %5185 = vmatprep.mubr.bf16.mxu0 0
        %5186 = vmatmul.mubr.bf16.gmra.mrb[0].mxu0 %v5073
        %v5187 = vpop.f32.mrb[0].mxu0
        %v5188 = vadd.f32 0.0, %v5187
        %v5189 = vpop.f32.mrb[0].mxu0
        %v5190 = vpop.f32.mrb[0].mxu0
        %v5191 = vadd.f32 0.0, %v5190
        %v5192 = vpop.f32.mrb[0].mxu0
        %5193 = vmatprep.mubr.bf16.mxu0 0
        %5194 = vmatmul.mubr.bf16.gmra.mrb[0].mxu0 %v5076
        %v5195 = vpop.f32.mrb[0].mxu0
        %v5196 = vadd.f32 0.0, %v5195
        %v5197 = vpop.f32.mrb[0].mxu0
        %v5198 = vpop.f32.mrb[0].mxu0
        %v5199 = vadd.f32 0.0, %v5198
        %v5200 = vpop.f32.mrb[0].mxu0
        %5201 = vmatprep.mubr.bf16.mxu0 0
        %5202 = vmatmul.mubr.bf16.gmra.mrb[0].mxu0 %v5079
        %v5203 = vpop.f32.mrb[0].mxu0
        %v5204 = vadd.f32 0.0, %v5203
        %v5205 = vpop.f32.mrb[0].mxu0
        %v5206 = vpop.f32.mrb[0].mxu0
        %v5207 = vadd.f32 0.0, %v5206
        %v5208 = vpop.f32.mrb[0].mxu0
        %5209 = vmatprep.mubr.bf16.mxu0 0
        %5210 = vmatmul.mubr.bf16.gmra.mrb[0].mxu0 %v5082
        %v5211 = vpop.f32.mrb[0].mxu0
        %v5212 = vadd.f32 0.0, %v5211
        %v5213 = vpop.f32.mrb[0].mxu0
        %v5214 = vpop.f32.mrb[0].mxu0
        %v5215 = vadd.f32 0.0, %v5214
        %v5216 = vpop.f32.mrb[0].mxu0
        %5217 = vmatprep.mubr.bf16.mxu0 0
        %5218 = vmatmul.mubr.bf16.gmra.mrb[0].mxu0 %v5085
        %v5219 = vpop.f32.mrb[0].mxu0
        %v5220 = vadd.f32 0.0, %v5219
        %v5221 = vpop.f32.mrb[0].mxu0
        %v5222 = vpop.f32.mrb[0].mxu0
        %v5223 = vadd.f32 0.0, %v5222
        %v5224 = vpop.f32.mrb[0].mxu0
        %5225 = vmatprep.mubr.bf16.mxu0 0
        %5226 = vmatmul.mubr.bf16.gmra.mrb[0].mxu0 %v5088
        %v5227 = vpop.f32.mrb[0].mxu0
        %v5228 = vadd.f32 0.0, %v5227
        %v5229 = vpop.f32.mrb[0].mxu0
        %v5230 = vpop.f32.mrb[0].mxu0
        %v5231 = vadd.f32 0.0, %v5230
        %v5232 = vpop.f32.mrb[0].mxu0
        %5233 = vmatprep.mubr.bf16.mxu0 0
        %5234 = vmatmul.mubr.bf16.gmra.mrb[0].mxu0 %v5091
        %v5235 = vpop.f32.mrb[0].mxu0
        %v5236 = vadd.f32 0.0, %v5235
        %v5237 = vpop.f32.mrb[0].mxu0
        %v5238 = vpop.f32.mrb[0].mxu0
        %v5239 = vadd.f32 0.0, %v5238
        %v5240 = vpop.f32.mrb[0].mxu0
        %5241 = vmatprep.mubr.bf16.mxu0 0
        %5242 = vmatmul.mubr.bf16.gmra.mrb[0].mxu0 %v5094
        %v5243 = vpop.f32.mrb[0].mxu0
        %v5244 = vadd.f32 0.0, %v5243
        %v5245 = vpop.f32.mrb[0].mxu0
        %v5246 = vpop.f32.mrb[0].mxu0
        %v5247 = vadd.f32 0.0, %v5246
        %v5248 = vpop.f32.mrb[0].mxu0
        %5249 = vmatprep.mubr.bf16.mxu0 0
        %5250 = vmatmul.mubr.bf16.gmra.mrb[0].mxu0 %v5097
        %v5251 = vpop.f32.mrb[0].mxu0
        %v5252 = vadd.f32 0.0, %v5251
        %v5253 = vpop.f32.mrb[0].mxu0
        %v5254 = vpop.f32.mrb[0].mxu0
        %v5255 = vadd.f32 0.0, %v5254
        %v5256 = vpop.f32.mrb[0].mxu0
        %5257 = vmatprep.mubr.bf16.mxu0 0
        %5258 = vmatmul.mubr.bf16.gmra.mrb[0].mxu0 %v5100
        %v5259 = vpop.f32.mrb[0].mxu0
        %v5260 = vadd.f32 0.0, %v5259
        %v5261 = vpop.f32.mrb[0].mxu0
        %v5262 = vpop.f32.mrb[0].mxu0
        %v5263 = vadd.f32 0.0, %v5262
        %v5264 = vpop.f32.mrb[0].mxu0
        %5265 = vdwg.mxu0
        %v5266 = vadd.f32 %v4796, %v5140
        %v5267 = vadd.f32 %v4797, %v5143
        %v5268 = vadd.f32 %v4798, %v5148
        %v5269 = vadd.f32 %v4799, %v5151
        %v5270 = vadd.f32 %v4800, %v5156
        %v5271 = vadd.f32 %v4801, %v5159
        %v5272 = vadd.f32 %v4802, %v5164
        %v5273 = vadd.f32 %v4803, %v5167
        %v5274 = vadd.f32 %v4804, %v5172
        %v5275 = vadd.f32 %v4805, %v5175
        %v5276 = vadd.f32 %v4806, %v5180
        %v5277 = vadd.f32 %v4807, %v5183
        %v5278 = vadd.f32 %v4808, %v5188
        %v5279 = vadd.f32 %v4809, %v5191
        %v5280 = vadd.f32 %v4810, %v5196
        %v5281 = vadd.f32 %v4811, %v5199
        %v5282 = vadd.f32 %v4812, %v5204
        %v5283 = vadd.f32 %v4813, %v5207
        %v5284 = vadd.f32 %v4814, %v5212
        %v5285 = vadd.f32 %v4815, %v5215
        %v5286 = vadd.f32 %v4816, %v5220
        %v5287 = vadd.f32 %v4817, %v5223
        %v5288 = vadd.f32 %v4818, %v5228
        %v5289 = vadd.f32 %v4819, %v5231
        %v5290 = vadd.f32 %v4820, %v5236
        %v5291 = vadd.f32 %v4821, %v5239
        %v5292 = vadd.f32 %v4822, %v5244
        %v5293 = vadd.f32 %v4823, %v5247
        %v5294 = vadd.f32 %v4824, %v5252
        %v5295 = vadd.f32 %v4825, %v5255
        %v5296 = vadd.f32 %v4826, %v5260
        %v5297 = vadd.f32 %v4827, %v5263
        %v5298 = vld [vmem:[%s2] sm:$0x1]
        %v5300 = vlaneseq
        %v5301 = vshrl.u32 %v5300, 7
        %v5302 = vsub.s32 0, %v5301
        %v5303 = vrot.slane %v5298, %v5302
        %v5305 = vadd.f32 %v5266, %v5303
        %v5306 = vadd.f32 %v5267, %v5303
        %v5307 = vadd.f32 %v5268, %v5303
        %v5308 = vadd.f32 %v5269, %v5303
        %v5309 = vadd.f32 %v5270, %v5303
        %v5310 = vadd.f32 %v5271, %v5303
        %v5311 = vadd.f32 %v5272, %v5303
        %v5312 = vadd.f32 %v5273, %v5303
        %v5313 = vadd.f32 %v5274, %v5303
        %v5314 = vadd.f32 %v5275, %v5303
        %v5315 = vadd.f32 %v5276, %v5303
        %v5316 = vadd.f32 %v5277, %v5303
        %v5317 = vadd.f32 %v5278, %v5303
        %v5318 = vadd.f32 %v5279, %v5303
        %v5319 = vadd.f32 %v5280, %v5303
        %v5320 = vadd.f32 %v5281, %v5303
        %v5321 = vadd.f32 %v5282, %v5303
        %v5322 = vadd.f32 %v5283, %v5303
        %v5323 = vadd.f32 %v5284, %v5303
        %v5324 = vadd.f32 %v5285, %v5303
        %v5325 = vadd.f32 %v5286, %v5303
        %v5326 = vadd.f32 %v5287, %v5303
        %v5327 = vadd.f32 %v5288, %v5303
        %v5328 = vadd.f32 %v5289, %v5303
        %v5329 = vadd.f32 %v5290, %v5303
        %v5330 = vadd.f32 %v5291, %v5303
        %v5331 = vadd.f32 %v5292, %v5303
        %v5332 = vadd.f32 %v5293, %v5303
        %v5333 = vadd.f32 %v5294, %v5303
        %v5334 = vadd.f32 %v5295, %v5303
        %v5335 = vadd.f32 %v5296, %v5303
        %v5336 = vadd.f32 %v5297, %v5303
        %v5337 = vmax.f32 %v5305, 0.0
        %v5338 = vmax.f32 %v5306, 0.0
        %v5339 = vmax.f32 %v5307, 0.0
        %v5340 = vmax.f32 %v5308, 0.0
        %v5341 = vmax.f32 %v5309, 0.0
        %v5342 = vmax.f32 %v5310, 0.0
        %v5343 = vmax.f32 %v5311, 0.0
        %v5344 = vmax.f32 %v5312, 0.0
        %v5345 = vmax.f32 %v5313, 0.0
        %v5346 = vmax.f32 %v5314, 0.0
        %v5347 = vmax.f32 %v5315, 0.0
        %v5348 = vmax.f32 %v5316, 0.0
        %v5349 = vmax.f32 %v5317, 0.0
        %v5350 = vmax.f32 %v5318, 0.0
        %v5351 = vmax.f32 %v5319, 0.0
        %v5352 = vmax.f32 %v5320, 0.0
        %v5353 = vmax.f32 %v5321, 0.0
        %v5354 = vmax.f32 %v5322, 0.0
        %v5355 = vmax.f32 %v5323, 0.0
        %v5356 = vmax.f32 %v5324, 0.0
        %v5357 = vmax.f32 %v5325, 0.0
        %v5358 = vmax.f32 %v5326, 0.0
        %v5359 = vmax.f32 %v5327, 0.0
        %v5360 = vmax.f32 %v5328, 0.0
        %v5361 = vmax.f32 %v5329, 0.0
        %v5362 = vmax.f32 %v5330, 0.0
        %v5363 = vmax.f32 %v5331, 0.0
        %v5364 = vmax.f32 %v5332, 0.0
        %v5365 = vmax.f32 %v5333, 0.0
        %v5366 = vmax.f32 %v5334, 0.0
        %v5367 = vmax.f32 %v5335, 0.0
        %v5368 = vmax.f32 %v5336, 0.0
        %v5369 = vpack.c.bf16 %v5338, %v5337
        %v5370 = vpack.c.bf16 %v5340, %v5339
        %v5371 = vpack.c.bf16 %v5342, %v5341
        %v5372 = vpack.c.bf16 %v5344, %v5343
        %v5373 = vpack.c.bf16 %v5346, %v5345
        %v5374 = vpack.c.bf16 %v5348, %v5347
        %v5375 = vpack.c.bf16 %v5350, %v5349
        %v5376 = vpack.c.bf16 %v5352, %v5351
        %v5377 = vpack.c.bf16 %v5354, %v5353
        %v5378 = vpack.c.bf16 %v5356, %v5355
        %v5379 = vpack.c.bf16 %v5358, %v5357
        %v5380 = vpack.c.bf16 %v5360, %v5359
        %v5381 = vpack.c.bf16 %v5362, %v5361
        %v5382 = vpack.c.bf16 %v5364, %v5363
        %v5383 = vpack.c.bf16 %v5366, %v5365
        %v5384 = vpack.c.bf16 %v5368, %v5367
        %v5401 = vunpack.c.l.b16 %v5369
        %v5402 = vunpack.c.h.b16 %v5369
        %v5403 = vunpack.c.l.b16 %v5370
        %v5404 = vunpack.c.h.b16 %v5370
        %v5405 = vunpack.c.l.b16 %v5371
        %v5406 = vunpack.c.h.b16 %v5371
        %v5407 = vunpack.c.l.b16 %v5372
        %v5408 = vunpack.c.h.b16 %v5372
        %v5409 = vunpack.c.l.b16 %v5373
        %v5410 = vunpack.c.h.b16 %v5373
        %v5411 = vunpack.c.l.b16 %v5374
        %v5412 = vunpack.c.h.b16 %v5374
        %v5413 = vunpack.c.l.b16 %v5375
        %v5414 = vunpack.c.h.b16 %v5375
        %v5415 = vunpack.c.l.b16 %v5376
        %v5416 = vunpack.c.h.b16 %v5376
        %v5417 = vunpack.c.l.b16 %v5377
        %v5418 = vunpack.c.h.b16 %v5377
        %v5419 = vunpack.c.l.b16 %v5378
        %v5420 = vunpack.c.h.b16 %v5378
        %v5421 = vunpack.c.l.b16 %v5379
        %v5422 = vunpack.c.h.b16 %v5379
        %v5423 = vunpack.c.l.b16 %v5380
        %v5424 = vunpack.c.h.b16 %v5380
        %v5425 = vunpack.c.l.b16 %v5381
        %v5426 = vunpack.c.h.b16 %v5381
        %v5427 = vunpack.c.l.b16 %v5382
        %v5428 = vunpack.c.h.b16 %v5382
        %v5429 = vunpack.c.l.b16 %v5383
        %v5430 = vunpack.c.h.b16 %v5383
        %v5431 = vunpack.c.l.b16 %v5384
        %v5432 = vunpack.c.h.b16 %v5384
        %v5433 = vpack.c.b16 %v5401, %v5401
        %v5434 = vpack.c.b16 %v5402, %v5402
        %v5435 = vpack.c.b16 %v5403, %v5403
        %v5436 = vpack.c.b16 %v5404, %v5404
        %v5437 = vpack.c.b16 %v5405, %v5405
        %v5438 = vpack.c.b16 %v5406, %v5406
        %v5439 = vpack.c.b16 %v5407, %v5407
        %v5440 = vpack.c.b16 %v5408, %v5408
        %v5441 = vpack.c.b16 %v5409, %v5409
        %v5442 = vpack.c.b16 %v5410, %v5410
        %v5443 = vpack.c.b16 %v5411, %v5411
        %v5444 = vpack.c.b16 %v5412, %v5412
        %v5445 = vpack.c.b16 %v5413, %v5413
        %v5446 = vpack.c.b16 %v5414, %v5414
        %v5447 = vpack.c.b16 %v5415, %v5415
        %v5448 = vpack.c.b16 %v5416, %v5416
        %v5449 = vpack.c.b16 %v5417, %v5417
        %v5450 = vpack.c.b16 %v5418, %v5418
        %v5451 = vpack.c.b16 %v5419, %v5419
        %v5452 = vpack.c.b16 %v5420, %v5420
        %v5453 = vpack.c.b16 %v5421, %v5421
        %v5454 = vpack.c.b16 %v5422, %v5422
        %v5455 = vpack.c.b16 %v5423, %v5423
        %v5456 = vpack.c.b16 %v5424, %v5424
        %v5457 = vpack.c.b16 %v5425, %v5425
        %v5458 = vpack.c.b16 %v5426, %v5426
        %v5459 = vpack.c.b16 %v5427, %v5427
        %v5460 = vpack.c.b16 %v5428, %v5428
        %v5461 = vpack.c.b16 %v5429, %v5429
        %v5462 = vpack.c.b16 %v5430, %v5430
        %v5463 = vpack.c.b16 %v5431, %v5431
        %v5464 = vpack.c.b16 %v5432, %v5432
        %vm5497 = vcmask 519168
        %5498 = vst.msk [vmem:[%s194] sm:$0xf] %vm5497, %v5433
        %5499 = vst.msk [vmem:[%s194 + $0x4] sm:$0xf] %vm5497, %v5434
        %5500 = vst.msk [vmem:[%s194 + $0x8] sm:$0xf] %vm5497, %v5435
        %5501 = vst.msk [vmem:[%s194 + $0xc] sm:$0xf] %vm5497, %v5436
        %5502 = vst.msk [vmem:[%s194 + $0x10] sm:$0xf] %vm5497, %v5437
        %5503 = vst.msk [vmem:[%s194 + $0x14] sm:$0xf] %vm5497, %v5438
        %5504 = vst.msk [vmem:[%s194 + $0x18] sm:$0xf] %vm5497, %v5439
        %5505 = vst.msk [vmem:[%s194 + $0x1c] sm:$0xf] %vm5497, %v5440
        %5506 = vst.msk [vmem:[%s194 + $0x20] sm:$0xf] %vm5497, %v5441
        %5507 = vst.msk [vmem:[%s194 + $0x24] sm:$0xf] %vm5497, %v5442
        %5508 = vst.msk [vmem:[%s194 + $0x28] sm:$0xf] %vm5497, %v5443
        %5509 = vst.msk [vmem:[%s194 + $0x2c] sm:$0xf] %vm5497, %v5444
        %5510 = vst.msk [vmem:[%s194 + $0x30] sm:$0xf] %vm5497, %v5445
        %5511 = vst.msk [vmem:[%s194 + $0x34] sm:$0xf] %vm5497, %v5446
        %5512 = vst.msk [vmem:[%s194 + $0x38] sm:$0xf] %vm5497, %v5447
        %5513 = vst.msk [vmem:[%s194 + $0x3c] sm:$0xf] %vm5497, %v5448
        %5514 = vst.msk [vmem:[%s194 + $0x40] sm:$0xf] %vm5497, %v5449
        %5515 = vst.msk [vmem:[%s194 + $0x44] sm:$0xf] %vm5497, %v5450
        %5516 = vst.msk [vmem:[%s194 + $0x48] sm:$0xf] %vm5497, %v5451
        %5517 = vst.msk [vmem:[%s194 + $0x4c] sm:$0xf] %vm5497, %v5452
        %5518 = vst.msk [vmem:[%s194 + $0x50] sm:$0xf] %vm5497, %v5453
        %5519 = vst.msk [vmem:[%s194 + $0x54] sm:$0xf] %vm5497, %v5454
        %5520 = vst.msk [vmem:[%s194 + $0x58] sm:$0xf] %vm5497, %v5455
        %5521 = vst.msk [vmem:[%s194 + $0x5c] sm:$0xf] %vm5497, %v5456
        %5522 = vst.msk [vmem:[%s194 + $0x60] sm:$0xf] %vm5497, %v5457
        %5523 = vst.msk [vmem:[%s194 + $0x64] sm:$0xf] %vm5497, %v5458
        %5524 = vst.msk [vmem:[%s194 + $0x68] sm:$0xf] %vm5497, %v5459
        %5525 = vst.msk [vmem:[%s194 + $0x6c] sm:$0xf] %vm5497, %v5460
        %5526 = vst.msk [vmem:[%s194 + $0x70] sm:$0xf] %vm5497, %v5461
        %5527 = vst.msk [vmem:[%s194 + $0x74] sm:$0xf] %vm5497, %v5462
        %5528 = vst.msk [vmem:[%s194 + $0x78] sm:$0xf] %vm5497, %v5463
        %5529 = vst.msk [vmem:[%s194 + $0x7c] sm:$0xf] %vm5497, %v5464
        %v5562 = vcombine.high %v5337, %v5337
        %v5564 = vunpack.c.l.s4 1983009808
        %v5565 = vunpack.c.0.s8 %v5564
        %v5566 = vlaneseq
        %v5567 = vshrl.u32 %v5566, 7
        %v5568 = vsub.s32 %v5565, %v5567
        %v5569 = vrot.slane %v5337, %v5568
        %v5571 = vunpack.c.l.s4 1983009808
        %v5572 = vunpack.c.0.s8 %v5571
        %v5573 = vlaneseq
        %v5574 = vshrl.u32 %v5573, 7
        %v5575 = vsub.s32 %v5572, %v5574
        %v5576 = vrot.slane %v5562, %v5575
        %v5577 = vcombine.high %v5569, %v5569
        %v5578 = vcombine.high %v5576, %v5576
        %v5579 = vcombine.high %v5338, %v5338
        %v5581 = vunpack.c.l.s4 1983009808
        %v5582 = vunpack.c.0.s8 %v5581
        %v5583 = vlaneseq
        %v5584 = vshrl.u32 %v5583, 7
        %v5585 = vsub.s32 %v5582, %v5584
        %v5586 = vrot.slane %v5338, %v5585
        %v5588 = vunpack.c.l.s4 1983009808
        %v5589 = vunpack.c.0.s8 %v5588
        %v5590 = vlaneseq
        %v5591 = vshrl.u32 %v5590, 7
        %v5592 = vsub.s32 %v5589, %v5591
        %v5593 = vrot.slane %v5579, %v5592
        %v5594 = vcombine.high %v5586, %v5586
        %v5595 = vcombine.high %v5593, %v5593
        %v5596 = vcombine.high %v5339, %v5339
        %v5598 = vunpack.c.l.s4 1983009808
        %v5599 = vunpack.c.0.s8 %v5598
        %v5600 = vlaneseq
        %v5601 = vshrl.u32 %v5600, 7
        %v5602 = vsub.s32 %v5599, %v5601
        %v5603 = vrot.slane %v5339, %v5602
        %v5605 = vunpack.c.l.s4 1983009808
        %v5606 = vunpack.c.0.s8 %v5605
        %v5607 = vlaneseq
        %v5608 = vshrl.u32 %v5607, 7
        %v5609 = vsub.s32 %v5606, %v5608
        %v5610 = vrot.slane %v5596, %v5609
        %v5611 = vcombine.high %v5603, %v5603
        %v5612 = vcombine.high %v5610, %v5610
        %v5613 = vcombine.high %v5340, %v5340
        %v5615 = vunpack.c.l.s4 1983009808
        %v5616 = vunpack.c.0.s8 %v5615
        %v5617 = vlaneseq
        %v5618 = vshrl.u32 %v5617, 7
        %v5619 = vsub.s32 %v5616, %v5618
        %v5620 = vrot.slane %v5340, %v5619
        %v5622 = vunpack.c.l.s4 1983009808
        %v5623 = vunpack.c.0.s8 %v5622
        %v5624 = vlaneseq
        %v5625 = vshrl.u32 %v5624, 7
        %v5626 = vsub.s32 %v5623, %v5625
        %v5627 = vrot.slane %v5613, %v5626
        %v5628 = vcombine.high %v5620, %v5620
        %v5629 = vcombine.high %v5627, %v5627
        %v5630 = vcombine.high %v5341, %v5341
        %v5632 = vunpack.c.l.s4 1983009808
        %v5633 = vunpack.c.0.s8 %v5632
        %v5634 = vlaneseq
        %v5635 = vshrl.u32 %v5634, 7
        %v5636 = vsub.s32 %v5633, %v5635
        %v5637 = vrot.slane %v5341, %v5636
        %v5639 = vunpack.c.l.s4 1983009808
        %v5640 = vunpack.c.0.s8 %v5639
        %v5641 = vlaneseq
        %v5642 = vshrl.u32 %v5641, 7
        %v5643 = vsub.s32 %v5640, %v5642
        %v5644 = vrot.slane %v5630, %v5643
        %v5645 = vcombine.high %v5637, %v5637
        %v5646 = vcombine.high %v5644, %v5644
        %v5647 = vcombine.high %v5342, %v5342
        %v5649 = vunpack.c.l.s4 1983009808
        %v5650 = vunpack.c.0.s8 %v5649
        %v5651 = vlaneseq
        %v5652 = vshrl.u32 %v5651, 7
        %v5653 = vsub.s32 %v5650, %v5652
        %v5654 = vrot.slane %v5342, %v5653
        %v5656 = vunpack.c.l.s4 1983009808
        %v5657 = vunpack.c.0.s8 %v5656
        %v5658 = vlaneseq
        %v5659 = vshrl.u32 %v5658, 7
        %v5660 = vsub.s32 %v5657, %v5659
        %v5661 = vrot.slane %v5647, %v5660
        %v5662 = vcombine.high %v5654, %v5654
        %v5663 = vcombine.high %v5661, %v5661
        %v5664 = vcombine.high %v5343, %v5343
        %v5666 = vunpack.c.l.s4 1983009808
        %v5667 = vunpack.c.0.s8 %v5666
        %v5668 = vlaneseq
        %v5669 = vshrl.u32 %v5668, 7
        %v5670 = vsub.s32 %v5667, %v5669
        %v5671 = vrot.slane %v5343, %v5670
        %v5673 = vunpack.c.l.s4 1983009808
        %v5674 = vunpack.c.0.s8 %v5673
        %v5675 = vlaneseq
        %v5676 = vshrl.u32 %v5675, 7
        %v5677 = vsub.s32 %v5674, %v5676
        %v5678 = vrot.slane %v5664, %v5677
        %v5679 = vcombine.high %v5671, %v5671
        %v5680 = vcombine.high %v5678, %v5678
        %v5681 = vcombine.high %v5344, %v5344
        %v5683 = vunpack.c.l.s4 1983009808
        %v5684 = vunpack.c.0.s8 %v5683
        %v5685 = vlaneseq
        %v5686 = vshrl.u32 %v5685, 7
        %v5687 = vsub.s32 %v5684, %v5686
        %v5688 = vrot.slane %v5344, %v5687
        %v5690 = vunpack.c.l.s4 1983009808
        %v5691 = vunpack.c.0.s8 %v5690
        %v5692 = vlaneseq
        %v5693 = vshrl.u32 %v5692, 7
        %v5694 = vsub.s32 %v5691, %v5693
        %v5695 = vrot.slane %v5681, %v5694
        %v5696 = vcombine.high %v5688, %v5688
        %v5697 = vcombine.high %v5695, %v5695
        %v5698 = vcombine.high %v5345, %v5345
        %v5700 = vunpack.c.l.s4 1983009808
        %v5701 = vunpack.c.0.s8 %v5700
        %v5702 = vlaneseq
        %v5703 = vshrl.u32 %v5702, 7
        %v5704 = vsub.s32 %v5701, %v5703
        %v5705 = vrot.slane %v5345, %v5704
        %v5707 = vunpack.c.l.s4 1983009808
        %v5708 = vunpack.c.0.s8 %v5707
        %v5709 = vlaneseq
        %v5710 = vshrl.u32 %v5709, 7
        %v5711 = vsub.s32 %v5708, %v5710
        %v5712 = vrot.slane %v5698, %v5711
        %v5713 = vcombine.high %v5705, %v5705
        %v5714 = vcombine.high %v5712, %v5712
        %v5715 = vcombine.high %v5346, %v5346
        %v5717 = vunpack.c.l.s4 1983009808
        %v5718 = vunpack.c.0.s8 %v5717
        %v5719 = vlaneseq
        %v5720 = vshrl.u32 %v5719, 7
        %v5721 = vsub.s32 %v5718, %v5720
        %v5722 = vrot.slane %v5346, %v5721
        %v5724 = vunpack.c.l.s4 1983009808
        %v5725 = vunpack.c.0.s8 %v5724
        %v5726 = vlaneseq
        %v5727 = vshrl.u32 %v5726, 7
        %v5728 = vsub.s32 %v5725, %v5727
        %v5729 = vrot.slane %v5715, %v5728
        %v5730 = vcombine.high %v5722, %v5722
        %v5731 = vcombine.high %v5729, %v5729
        %v5732 = vcombine.high %v5347, %v5347
        %v5734 = vunpack.c.l.s4 1983009808
        %v5735 = vunpack.c.0.s8 %v5734
        %v5736 = vlaneseq
        %v5737 = vshrl.u32 %v5736, 7
        %v5738 = vsub.s32 %v5735, %v5737
        %v5739 = vrot.slane %v5347, %v5738
        %v5741 = vunpack.c.l.s4 1983009808
        %v5742 = vunpack.c.0.s8 %v5741
        %v5743 = vlaneseq
        %v5744 = vshrl.u32 %v5743, 7
        %v5745 = vsub.s32 %v5742, %v5744
        %v5746 = vrot.slane %v5732, %v5745
        %v5747 = vcombine.high %v5739, %v5739
        %v5748 = vcombine.high %v5746, %v5746
        %v5749 = vcombine.high %v5348, %v5348
        %v5751 = vunpack.c.l.s4 1983009808
        %v5752 = vunpack.c.0.s8 %v5751
        %v5753 = vlaneseq
        %v5754 = vshrl.u32 %v5753, 7
        %v5755 = vsub.s32 %v5752, %v5754
        %v5756 = vrot.slane %v5348, %v5755
        %v5758 = vunpack.c.l.s4 1983009808
        %v5759 = vunpack.c.0.s8 %v5758
        %v5760 = vlaneseq
        %v5761 = vshrl.u32 %v5760, 7
        %v5762 = vsub.s32 %v5759, %v5761
        %v5763 = vrot.slane %v5749, %v5762
        %v5764 = vcombine.high %v5756, %v5756
        %v5765 = vcombine.high %v5763, %v5763
        %v5766 = vcombine.high %v5349, %v5349
        %v5768 = vunpack.c.l.s4 1983009808
        %v5769 = vunpack.c.0.s8 %v5768
        %v5770 = vlaneseq
        %v5771 = vshrl.u32 %v5770, 7
        %v5772 = vsub.s32 %v5769, %v5771
        %v5773 = vrot.slane %v5349, %v5772
        %v5775 = vunpack.c.l.s4 1983009808
        %v5776 = vunpack.c.0.s8 %v5775
        %v5777 = vlaneseq
        %v5778 = vshrl.u32 %v5777, 7
        %v5779 = vsub.s32 %v5776, %v5778
        %v5780 = vrot.slane %v5766, %v5779
        %v5781 = vcombine.high %v5773, %v5773
        %v5782 = vcombine.high %v5780, %v5780
        %v5783 = vcombine.high %v5350, %v5350
        %v5785 = vunpack.c.l.s4 1983009808
        %v5786 = vunpack.c.0.s8 %v5785
        %v5787 = vlaneseq
        %v5788 = vshrl.u32 %v5787, 7
        %v5789 = vsub.s32 %v5786, %v5788
        %v5790 = vrot.slane %v5350, %v5789
        %v5792 = vunpack.c.l.s4 1983009808
        %v5793 = vunpack.c.0.s8 %v5792
        %v5794 = vlaneseq
        %v5795 = vshrl.u32 %v5794, 7
        %v5796 = vsub.s32 %v5793, %v5795
        %v5797 = vrot.slane %v5783, %v5796
        %v5798 = vcombine.high %v5790, %v5790
        %v5799 = vcombine.high %v5797, %v5797
        %v5800 = vcombine.high %v5351, %v5351
        %v5802 = vunpack.c.l.s4 1983009808
        %v5803 = vunpack.c.0.s8 %v5802
        %v5804 = vlaneseq
        %v5805 = vshrl.u32 %v5804, 7
        %v5806 = vsub.s32 %v5803, %v5805
        %v5807 = vrot.slane %v5351, %v5806
        %v5809 = vunpack.c.l.s4 1983009808
        %v5810 = vunpack.c.0.s8 %v5809
        %v5811 = vlaneseq
        %v5812 = vshrl.u32 %v5811, 7
        %v5813 = vsub.s32 %v5810, %v5812
        %v5814 = vrot.slane %v5800, %v5813
        %v5815 = vcombine.high %v5807, %v5807
        %v5816 = vcombine.high %v5814, %v5814
        %v5817 = vcombine.high %v5352, %v5352
        %v5819 = vunpack.c.l.s4 1983009808
        %v5820 = vunpack.c.0.s8 %v5819
        %v5821 = vlaneseq
        %v5822 = vshrl.u32 %v5821, 7
        %v5823 = vsub.s32 %v5820, %v5822
        %v5824 = vrot.slane %v5352, %v5823
        %v5826 = vunpack.c.l.s4 1983009808
        %v5827 = vunpack.c.0.s8 %v5826
        %v5828 = vlaneseq
        %v5829 = vshrl.u32 %v5828, 7
        %v5830 = vsub.s32 %v5827, %v5829
        %v5831 = vrot.slane %v5817, %v5830
        %v5832 = vcombine.high %v5824, %v5824
        %v5833 = vcombine.high %v5831, %v5831
        %v5834 = vcombine.high %v5353, %v5353
        %v5836 = vunpack.c.l.s4 1983009808
        %v5837 = vunpack.c.0.s8 %v5836
        %v5838 = vlaneseq
        %v5839 = vshrl.u32 %v5838, 7
        %v5840 = vsub.s32 %v5837, %v5839
        %v5841 = vrot.slane %v5353, %v5840
        %v5843 = vunpack.c.l.s4 1983009808
        %v5844 = vunpack.c.0.s8 %v5843
        %v5845 = vlaneseq
        %v5846 = vshrl.u32 %v5845, 7
        %v5847 = vsub.s32 %v5844, %v5846
        %v5848 = vrot.slane %v5834, %v5847
        %v5849 = vcombine.high %v5841, %v5841
        %v5850 = vcombine.high %v5848, %v5848
        %v5851 = vcombine.high %v5354, %v5354
        %v5853 = vunpack.c.l.s4 1983009808
        %v5854 = vunpack.c.0.s8 %v5853
        %v5855 = vlaneseq
        %v5856 = vshrl.u32 %v5855, 7
        %v5857 = vsub.s32 %v5854, %v5856
        %v5858 = vrot.slane %v5354, %v5857
        %v5860 = vunpack.c.l.s4 1983009808
        %v5861 = vunpack.c.0.s8 %v5860
        %v5862 = vlaneseq
        %v5863 = vshrl.u32 %v5862, 7
        %v5864 = vsub.s32 %v5861, %v5863
        %v5865 = vrot.slane %v5851, %v5864
        %v5866 = vcombine.high %v5858, %v5858
        %v5867 = vcombine.high %v5865, %v5865
        %v5868 = vcombine.high %v5355, %v5355
        %v5870 = vunpack.c.l.s4 1983009808
        %v5871 = vunpack.c.0.s8 %v5870
        %v5872 = vlaneseq
        %v5873 = vshrl.u32 %v5872, 7
        %v5874 = vsub.s32 %v5871, %v5873
        %v5875 = vrot.slane %v5355, %v5874
        %v5877 = vunpack.c.l.s4 1983009808
        %v5878 = vunpack.c.0.s8 %v5877
        %v5879 = vlaneseq
        %v5880 = vshrl.u32 %v5879, 7
        %v5881 = vsub.s32 %v5878, %v5880
        %v5882 = vrot.slane %v5868, %v5881
        %v5883 = vcombine.high %v5875, %v5875
        %v5884 = vcombine.high %v5882, %v5882
        %v5885 = vcombine.high %v5356, %v5356
        %v5887 = vunpack.c.l.s4 1983009808
        %v5888 = vunpack.c.0.s8 %v5887
        %v5889 = vlaneseq
        %v5890 = vshrl.u32 %v5889, 7
        %v5891 = vsub.s32 %v5888, %v5890
        %v5892 = vrot.slane %v5356, %v5891
        %v5894 = vunpack.c.l.s4 1983009808
        %v5895 = vunpack.c.0.s8 %v5894
        %v5896 = vlaneseq
        %v5897 = vshrl.u32 %v5896, 7
        %v5898 = vsub.s32 %v5895, %v5897
        %v5899 = vrot.slane %v5885, %v5898
        %v5900 = vcombine.high %v5892, %v5892
        %v5901 = vcombine.high %v5899, %v5899
        %v5902 = vcombine.high %v5357, %v5357
        %v5904 = vunpack.c.l.s4 1983009808
        %v5905 = vunpack.c.0.s8 %v5904
        %v5906 = vlaneseq
        %v5907 = vshrl.u32 %v5906, 7
        %v5908 = vsub.s32 %v5905, %v5907
        %v5909 = vrot.slane %v5357, %v5908
        %v5911 = vunpack.c.l.s4 1983009808
        %v5912 = vunpack.c.0.s8 %v5911
        %v5913 = vlaneseq
        %v5914 = vshrl.u32 %v5913, 7
        %v5915 = vsub.s32 %v5912, %v5914
        %v5916 = vrot.slane %v5902, %v5915
        %v5917 = vcombine.high %v5909, %v5909
        %v5918 = vcombine.high %v5916, %v5916
        %v5919 = vcombine.high %v5358, %v5358
        %v5921 = vunpack.c.l.s4 1983009808
        %v5922 = vunpack.c.0.s8 %v5921
        %v5923 = vlaneseq
        %v5924 = vshrl.u32 %v5923, 7
        %v5925 = vsub.s32 %v5922, %v5924
        %v5926 = vrot.slane %v5358, %v5925
        %v5928 = vunpack.c.l.s4 1983009808
        %v5929 = vunpack.c.0.s8 %v5928
        %v5930 = vlaneseq
        %v5931 = vshrl.u32 %v5930, 7
        %v5932 = vsub.s32 %v5929, %v5931
        %v5933 = vrot.slane %v5919, %v5932
        %v5934 = vcombine.high %v5926, %v5926
        %v5935 = vcombine.high %v5933, %v5933
        %v5936 = vcombine.high %v5359, %v5359
        %v5938 = vunpack.c.l.s4 1983009808
        %v5939 = vunpack.c.0.s8 %v5938
        %v5940 = vlaneseq
        %v5941 = vshrl.u32 %v5940, 7
        %v5942 = vsub.s32 %v5939, %v5941
        %v5943 = vrot.slane %v5359, %v5942
        %v5945 = vunpack.c.l.s4 1983009808
        %v5946 = vunpack.c.0.s8 %v5945
        %v5947 = vlaneseq
        %v5948 = vshrl.u32 %v5947, 7
        %v5949 = vsub.s32 %v5946, %v5948
        %v5950 = vrot.slane %v5936, %v5949
        %v5951 = vcombine.high %v5943, %v5943
        %v5952 = vcombine.high %v5950, %v5950
        %v5953 = vcombine.high %v5360, %v5360
        %v5955 = vunpack.c.l.s4 1983009808
        %v5956 = vunpack.c.0.s8 %v5955
        %v5957 = vlaneseq
        %v5958 = vshrl.u32 %v5957, 7
        %v5959 = vsub.s32 %v5956, %v5958
        %v5960 = vrot.slane %v5360, %v5959
        %v5962 = vunpack.c.l.s4 1983009808
        %v5963 = vunpack.c.0.s8 %v5962
        %v5964 = vlaneseq
        %v5965 = vshrl.u32 %v5964, 7
        %v5966 = vsub.s32 %v5963, %v5965
        %v5967 = vrot.slane %v5953, %v5966
        %v5968 = vcombine.high %v5960, %v5960
        %v5969 = vcombine.high %v5967, %v5967
        %v5970 = vcombine.high %v5361, %v5361
        %v5972 = vunpack.c.l.s4 1983009808
        %v5973 = vunpack.c.0.s8 %v5972
        %v5974 = vlaneseq
        %v5975 = vshrl.u32 %v5974, 7
        %v5976 = vsub.s32 %v5973, %v5975
        %v5977 = vrot.slane %v5361, %v5976
        %v5979 = vunpack.c.l.s4 1983009808
        %v5980 = vunpack.c.0.s8 %v5979
        %v5981 = vlaneseq
        %v5982 = vshrl.u32 %v5981, 7
        %v5983 = vsub.s32 %v5980, %v5982
        %v5984 = vrot.slane %v5970, %v5983
        %v5985 = vcombine.high %v5977, %v5977
        %v5986 = vcombine.high %v5984, %v5984
        %v5987 = vcombine.high %v5362, %v5362
        %v5989 = vunpack.c.l.s4 1983009808
        %v5990 = vunpack.c.0.s8 %v5989
        %v5991 = vlaneseq
        %v5992 = vshrl.u32 %v5991, 7
        %v5993 = vsub.s32 %v5990, %v5992
        %v5994 = vrot.slane %v5362, %v5993
        %v5996 = vunpack.c.l.s4 1983009808
        %v5997 = vunpack.c.0.s8 %v5996
        %v5998 = vlaneseq
        %v5999 = vshrl.u32 %v5998, 7
        %v6000 = vsub.s32 %v5997, %v5999
        %v6001 = vrot.slane %v5987, %v6000
        %v6002 = vcombine.high %v5994, %v5994
        %v6003 = vcombine.high %v6001, %v6001
        %v6004 = vcombine.high %v5363, %v5363
        %v6006 = vunpack.c.l.s4 1983009808
        %v6007 = vunpack.c.0.s8 %v6006
        %v6008 = vlaneseq
        %v6009 = vshrl.u32 %v6008, 7
        %v6010 = vsub.s32 %v6007, %v6009
        %v6011 = vrot.slane %v5363, %v6010
        %v6013 = vunpack.c.l.s4 1983009808
        %v6014 = vunpack.c.0.s8 %v6013
        %v6015 = vlaneseq
        %v6016 = vshrl.u32 %v6015, 7
        %v6017 = vsub.s32 %v6014, %v6016
        %v6018 = vrot.slane %v6004, %v6017
        %v6019 = vcombine.high %v6011, %v6011
        %v6020 = vcombine.high %v6018, %v6018
        %v6021 = vcombine.high %v5364, %v5364
        %v6023 = vunpack.c.l.s4 1983009808
        %v6024 = vunpack.c.0.s8 %v6023
        %v6025 = vlaneseq
        %v6026 = vshrl.u32 %v6025, 7
        %v6027 = vsub.s32 %v6024, %v6026
        %v6028 = vrot.slane %v5364, %v6027
        %v6030 = vunpack.c.l.s4 1983009808
        %v6031 = vunpack.c.0.s8 %v6030
        %v6032 = vlaneseq
        %v6033 = vshrl.u32 %v6032, 7
        %v6034 = vsub.s32 %v6031, %v6033
        %v6035 = vrot.slane %v6021, %v6034
        %v6036 = vcombine.high %v6028, %v6028
        %v6037 = vcombine.high %v6035, %v6035
        %v6038 = vcombine.high %v5365, %v5365
        %v6040 = vunpack.c.l.s4 1983009808
        %v6041 = vunpack.c.0.s8 %v6040
        %v6042 = vlaneseq
        %v6043 = vshrl.u32 %v6042, 7
        %v6044 = vsub.s32 %v6041, %v6043
        %v6045 = vrot.slane %v5365, %v6044
        %v6047 = vunpack.c.l.s4 1983009808
        %v6048 = vunpack.c.0.s8 %v6047
        %v6049 = vlaneseq
        %v6050 = vshrl.u32 %v6049, 7
        %v6051 = vsub.s32 %v6048, %v6050
        %v6052 = vrot.slane %v6038, %v6051
        %v6053 = vcombine.high %v6045, %v6045
        %v6054 = vcombine.high %v6052, %v6052
        %v6055 = vcombine.high %v5366, %v5366
        %v6057 = vunpack.c.l.s4 1983009808
        %v6058 = vunpack.c.0.s8 %v6057
        %v6059 = vlaneseq
        %v6060 = vshrl.u32 %v6059, 7
        %v6061 = vsub.s32 %v6058, %v6060
        %v6062 = vrot.slane %v5366, %v6061
        %v6064 = vunpack.c.l.s4 1983009808
        %v6065 = vunpack.c.0.s8 %v6064
        %v6066 = vlaneseq
        %v6067 = vshrl.u32 %v6066, 7
        %v6068 = vsub.s32 %v6065, %v6067
        %v6069 = vrot.slane %v6055, %v6068
        %v6070 = vcombine.high %v6062, %v6062
        %v6071 = vcombine.high %v6069, %v6069
        %v6072 = vcombine.high %v5367, %v5367
        %v6074 = vunpack.c.l.s4 1983009808
        %v6075 = vunpack.c.0.s8 %v6074
        %v6076 = vlaneseq
        %v6077 = vshrl.u32 %v6076, 7
        %v6078 = vsub.s32 %v6075, %v6077
        %v6079 = vrot.slane %v5367, %v6078
        %v6081 = vunpack.c.l.s4 1983009808
        %v6082 = vunpack.c.0.s8 %v6081
        %v6083 = vlaneseq
        %v6084 = vshrl.u32 %v6083, 7
        %v6085 = vsub.s32 %v6082, %v6084
        %v6086 = vrot.slane %v6072, %v6085
        %v6087 = vcombine.high %v6079, %v6079
        %v6088 = vcombine.high %v6086, %v6086
        %v6089 = vcombine.high %v5368, %v5368
        %v6091 = vunpack.c.l.s4 1983009808
        %v6092 = vunpack.c.0.s8 %v6091
        %v6093 = vlaneseq
        %v6094 = vshrl.u32 %v6093, 7
        %v6095 = vsub.s32 %v6092, %v6094
        %v6096 = vrot.slane %v5368, %v6095
        %v6098 = vunpack.c.l.s4 1983009808
        %v6099 = vunpack.c.0.s8 %v6098
        %v6100 = vlaneseq
        %v6101 = vshrl.u32 %v6100, 7
        %v6102 = vsub.s32 %v6099, %v6101
        %v6103 = vrot.slane %v6089, %v6102
        %v6104 = vcombine.high %v6096, %v6096
        %v6105 = vcombine.high %v6103, %v6103
        %vm6234 = vcmask 517120
        %v6235 = vsel %vm6234, %v5569, -inf
        %v6236 = vrot.slane %v6235, 4
        %v6237 = vmax.f32 %v6235, %v6236
        %v6238 = vrot.slane %v6237, 2
        %v6239 = vmax.f32 %v6237, %v6238
        %v6240 = vrot.slane %v6239, 1
        %v6241 = vmax.f32 %v6239, %v6240
        %v6242 = vsel %vm6234, %v5577, -inf
        %v6243 = vrot.slane %v6242, 4
        %v6244 = vmax.f32 %v6242, %v6243
        %v6245 = vrot.slane %v6244, 2
        %v6246 = vmax.f32 %v6244, %v6245
        %v6247 = vrot.slane %v6246, 1
        %v6248 = vmax.f32 %v6246, %v6247
        %v6249 = vsel %vm6234, %v5576, -inf
        %v6250 = vrot.slane %v6249, 4
        %v6251 = vmax.f32 %v6249, %v6250
        %v6252 = vrot.slane %v6251, 2
        %v6253 = vmax.f32 %v6251, %v6252
        %v6254 = vrot.slane %v6253, 1
        %v6255 = vmax.f32 %v6253, %v6254
        %v6256 = vsel %vm6234, %v5578, -inf
        %v6257 = vrot.slane %v6256, 4
        %v6258 = vmax.f32 %v6256, %v6257
        %v6259 = vrot.slane %v6258, 2
        %v6260 = vmax.f32 %v6258, %v6259
        %v6261 = vrot.slane %v6260, 1
        %v6262 = vmax.f32 %v6260, %v6261
        %v6263 = vsel %vm6234, %v5586, -inf
        %v6264 = vrot.slane %v6263, 4
        %v6265 = vmax.f32 %v6263, %v6264
        %v6266 = vrot.slane %v6265, 2
        %v6267 = vmax.f32 %v6265, %v6266
        %v6268 = vrot.slane %v6267, 1
        %v6269 = vmax.f32 %v6267, %v6268
        %v6270 = vsel %vm6234, %v5594, -inf
        %v6271 = vrot.slane %v6270, 4
        %v6272 = vmax.f32 %v6270, %v6271
        %v6273 = vrot.slane %v6272, 2
        %v6274 = vmax.f32 %v6272, %v6273
        %v6275 = vrot.slane %v6274, 1
        %v6276 = vmax.f32 %v6274, %v6275
        %v6277 = vsel %vm6234, %v5593, -inf
        %v6278 = vrot.slane %v6277, 4
        %v6279 = vmax.f32 %v6277, %v6278
        %v6280 = vrot.slane %v6279, 2
        %v6281 = vmax.f32 %v6279, %v6280
        %v6282 = vrot.slane %v6281, 1
        %v6283 = vmax.f32 %v6281, %v6282
        %v6284 = vsel %vm6234, %v5595, -inf
        %v6285 = vrot.slane %v6284, 4
        %v6286 = vmax.f32 %v6284, %v6285
        %v6287 = vrot.slane %v6286, 2
        %v6288 = vmax.f32 %v6286, %v6287
        %v6289 = vrot.slane %v6288, 1
        %v6290 = vmax.f32 %v6288, %v6289
        %v6291 = vsel %vm6234, %v5603, -inf
        %v6292 = vrot.slane %v6291, 4
        %v6293 = vmax.f32 %v6291, %v6292
        %v6294 = vrot.slane %v6293, 2
        %v6295 = vmax.f32 %v6293, %v6294
        %v6296 = vrot.slane %v6295, 1
        %v6297 = vmax.f32 %v6295, %v6296
        %v6298 = vsel %vm6234, %v5611, -inf
        %v6299 = vrot.slane %v6298, 4
        %v6300 = vmax.f32 %v6298, %v6299
        %v6301 = vrot.slane %v6300, 2
        %v6302 = vmax.f32 %v6300, %v6301
        %v6303 = vrot.slane %v6302, 1
        %v6304 = vmax.f32 %v6302, %v6303
        %v6305 = vsel %vm6234, %v5610, -inf
        %v6306 = vrot.slane %v6305, 4
        %v6307 = vmax.f32 %v6305, %v6306
        %v6308 = vrot.slane %v6307, 2
        %v6309 = vmax.f32 %v6307, %v6308
        %v6310 = vrot.slane %v6309, 1
        %v6311 = vmax.f32 %v6309, %v6310
        %v6312 = vsel %vm6234, %v5612, -inf
        %v6313 = vrot.slane %v6312, 4
        %v6314 = vmax.f32 %v6312, %v6313
        %v6315 = vrot.slane %v6314, 2
        %v6316 = vmax.f32 %v6314, %v6315
        %v6317 = vrot.slane %v6316, 1
        %v6318 = vmax.f32 %v6316, %v6317
        %v6319 = vsel %vm6234, %v5620, -inf
        %v6320 = vrot.slane %v6319, 4
        %v6321 = vmax.f32 %v6319, %v6320
        %v6322 = vrot.slane %v6321, 2
        %v6323 = vmax.f32 %v6321, %v6322
        %v6324 = vrot.slane %v6323, 1
        %v6325 = vmax.f32 %v6323, %v6324
        %v6326 = vsel %vm6234, %v5628, -inf
        %v6327 = vrot.slane %v6326, 4
        %v6328 = vmax.f32 %v6326, %v6327
        %v6329 = vrot.slane %v6328, 2
        %v6330 = vmax.f32 %v6328, %v6329
        %v6331 = vrot.slane %v6330, 1
        %v6332 = vmax.f32 %v6330, %v6331
        %v6333 = vsel %vm6234, %v5627, -inf
        %v6334 = vrot.slane %v6333, 4
        %v6335 = vmax.f32 %v6333, %v6334
        %v6336 = vrot.slane %v6335, 2
        %v6337 = vmax.f32 %v6335, %v6336
        %v6338 = vrot.slane %v6337, 1
        %v6339 = vmax.f32 %v6337, %v6338
        %v6340 = vsel %vm6234, %v5629, -inf
        %v6341 = vrot.slane %v6340, 4
        %v6342 = vmax.f32 %v6340, %v6341
        %v6343 = vrot.slane %v6342, 2
        %v6344 = vmax.f32 %v6342, %v6343
        %v6345 = vrot.slane %v6344, 1
        %v6346 = vmax.f32 %v6344, %v6345
        %v6347 = vsel %vm6234, %v5637, -inf
        %v6348 = vrot.slane %v6347, 4
        %v6349 = vmax.f32 %v6347, %v6348
        %v6350 = vrot.slane %v6349, 2
        %v6351 = vmax.f32 %v6349, %v6350
        %v6352 = vrot.slane %v6351, 1
        %v6353 = vmax.f32 %v6351, %v6352
        %v6354 = vsel %vm6234, %v5645, -inf
        %v6355 = vrot.slane %v6354, 4
        %v6356 = vmax.f32 %v6354, %v6355
        %v6357 = vrot.slane %v6356, 2
        %v6358 = vmax.f32 %v6356, %v6357
        %v6359 = vrot.slane %v6358, 1
        %v6360 = vmax.f32 %v6358, %v6359
        %v6361 = vsel %vm6234, %v5644, -inf
        %v6362 = vrot.slane %v6361, 4
        %v6363 = vmax.f32 %v6361, %v6362
        %v6364 = vrot.slane %v6363, 2
        %v6365 = vmax.f32 %v6363, %v6364
        %v6366 = vrot.slane %v6365, 1
        %v6367 = vmax.f32 %v6365, %v6366
        %v6368 = vsel %vm6234, %v5646, -inf
        %v6369 = vrot.slane %v6368, 4
        %v6370 = vmax.f32 %v6368, %v6369
        %v6371 = vrot.slane %v6370, 2
        %v6372 = vmax.f32 %v6370, %v6371
        %v6373 = vrot.slane %v6372, 1
        %v6374 = vmax.f32 %v6372, %v6373
        %v6375 = vsel %vm6234, %v5654, -inf
        %v6376 = vrot.slane %v6375, 4
        %v6377 = vmax.f32 %v6375, %v6376
        %v6378 = vrot.slane %v6377, 2
        %v6379 = vmax.f32 %v6377, %v6378
        %v6380 = vrot.slane %v6379, 1
        %v6381 = vmax.f32 %v6379, %v6380
        %v6382 = vsel %vm6234, %v5662, -inf
        %v6383 = vrot.slane %v6382, 4
        %v6384 = vmax.f32 %v6382, %v6383
        %v6385 = vrot.slane %v6384, 2
        %v6386 = vmax.f32 %v6384, %v6385
        %v6387 = vrot.slane %v6386, 1
        %v6388 = vmax.f32 %v6386, %v6387
        %v6389 = vsel %vm6234, %v5661, -inf
        %v6390 = vrot.slane %v6389, 4
        %v6391 = vmax.f32 %v6389, %v6390
        %v6392 = vrot.slane %v6391, 2
        %v6393 = vmax.f32 %v6391, %v6392
        %v6394 = vrot.slane %v6393, 1
        %v6395 = vmax.f32 %v6393, %v6394
        %v6396 = vsel %vm6234, %v5663, -inf
        %v6397 = vrot.slane %v6396, 4
        %v6398 = vmax.f32 %v6396, %v6397
        %v6399 = vrot.slane %v6398, 2
        %v6400 = vmax.f32 %v6398, %v6399
        %v6401 = vrot.slane %v6400, 1
        %v6402 = vmax.f32 %v6400, %v6401
        %v6403 = vsel %vm6234, %v5671, -inf
        %v6404 = vrot.slane %v6403, 4
        %v6405 = vmax.f32 %v6403, %v6404
        %v6406 = vrot.slane %v6405, 2
        %v6407 = vmax.f32 %v6405, %v6406
        %v6408 = vrot.slane %v6407, 1
        %v6409 = vmax.f32 %v6407, %v6408
        %v6410 = vsel %vm6234, %v5679, -inf
        %v6411 = vrot.slane %v6410, 4
        %v6412 = vmax.f32 %v6410, %v6411
        %v6413 = vrot.slane %v6412, 2
        %v6414 = vmax.f32 %v6412, %v6413
        %v6415 = vrot.slane %v6414, 1
        %v6416 = vmax.f32 %v6414, %v6415
        %v6417 = vsel %vm6234, %v5678, -inf
        %v6418 = vrot.slane %v6417, 4
        %v6419 = vmax.f32 %v6417, %v6418
        %v6420 = vrot.slane %v6419, 2
        %v6421 = vmax.f32 %v6419, %v6420
        %v6422 = vrot.slane %v6421, 1
        %v6423 = vmax.f32 %v6421, %v6422
        %v6424 = vsel %vm6234, %v5680, -inf
        %v6425 = vrot.slane %v6424, 4
        %v6426 = vmax.f32 %v6424, %v6425
        %v6427 = vrot.slane %v6426, 2
        %v6428 = vmax.f32 %v6426, %v6427
        %v6429 = vrot.slane %v6428, 1
        %v6430 = vmax.f32 %v6428, %v6429
        %v6431 = vsel %vm6234, %v5688, -inf
        %v6432 = vrot.slane %v6431, 4
        %v6433 = vmax.f32 %v6431, %v6432
        %v6434 = vrot.slane %v6433, 2
        %v6435 = vmax.f32 %v6433, %v6434
        %v6436 = vrot.slane %v6435, 1
        %v6437 = vmax.f32 %v6435, %v6436
        %v6438 = vsel %vm6234, %v5696, -inf
        %v6439 = vrot.slane %v6438, 4
        %v6440 = vmax.f32 %v6438, %v6439
        %v6441 = vrot.slane %v6440, 2
        %v6442 = vmax.f32 %v6440, %v6441
        %v6443 = vrot.slane %v6442, 1
        %v6444 = vmax.f32 %v6442, %v6443
        %v6445 = vsel %vm6234, %v5695, -inf
        %v6446 = vrot.slane %v6445, 4
        %v6447 = vmax.f32 %v6445, %v6446
        %v6448 = vrot.slane %v6447, 2
        %v6449 = vmax.f32 %v6447, %v6448
        %v6450 = vrot.slane %v6449, 1
        %v6451 = vmax.f32 %v6449, %v6450
        %v6452 = vsel %vm6234, %v5697, -inf
        %v6453 = vrot.slane %v6452, 4
        %v6454 = vmax.f32 %v6452, %v6453
        %v6455 = vrot.slane %v6454, 2
        %v6456 = vmax.f32 %v6454, %v6455
        %v6457 = vrot.slane %v6456, 1
        %v6458 = vmax.f32 %v6456, %v6457
        %v6459 = vsel %vm6234, %v5705, -inf
        %v6460 = vrot.slane %v6459, 4
        %v6461 = vmax.f32 %v6459, %v6460
        %v6462 = vrot.slane %v6461, 2
        %v6463 = vmax.f32 %v6461, %v6462
        %v6464 = vrot.slane %v6463, 1
        %v6465 = vmax.f32 %v6463, %v6464
        %v6466 = vsel %vm6234, %v5713, -inf
        %v6467 = vrot.slane %v6466, 4
        %v6468 = vmax.f32 %v6466, %v6467
        %v6469 = vrot.slane %v6468, 2
        %v6470 = vmax.f32 %v6468, %v6469
        %v6471 = vrot.slane %v6470, 1
        %v6472 = vmax.f32 %v6470, %v6471
        %v6473 = vsel %vm6234, %v5712, -inf
        %v6474 = vrot.slane %v6473, 4
        %v6475 = vmax.f32 %v6473, %v6474
        %v6476 = vrot.slane %v6475, 2
        %v6477 = vmax.f32 %v6475, %v6476
        %v6478 = vrot.slane %v6477, 1
        %v6479 = vmax.f32 %v6477, %v6478
        %v6480 = vsel %vm6234, %v5714, -inf
        %v6481 = vrot.slane %v6480, 4
        %v6482 = vmax.f32 %v6480, %v6481
        %v6483 = vrot.slane %v6482, 2
        %v6484 = vmax.f32 %v6482, %v6483
        %v6485 = vrot.slane %v6484, 1
        %v6486 = vmax.f32 %v6484, %v6485
        %v6487 = vsel %vm6234, %v5722, -inf
        %v6488 = vrot.slane %v6487, 4
        %v6489 = vmax.f32 %v6487, %v6488
        %v6490 = vrot.slane %v6489, 2
        %v6491 = vmax.f32 %v6489, %v6490
        %v6492 = vrot.slane %v6491, 1
        %v6493 = vmax.f32 %v6491, %v6492
        %v6494 = vsel %vm6234, %v5730, -inf
        %v6495 = vrot.slane %v6494, 4
        %v6496 = vmax.f32 %v6494, %v6495
        %v6497 = vrot.slane %v6496, 2
        %v6498 = vmax.f32 %v6496, %v6497
        %v6499 = vrot.slane %v6498, 1
        %v6500 = vmax.f32 %v6498, %v6499
        %v6501 = vsel %vm6234, %v5729, -inf
        %v6502 = vrot.slane %v6501, 4
        %v6503 = vmax.f32 %v6501, %v6502
        %v6504 = vrot.slane %v6503, 2
        %v6505 = vmax.f32 %v6503, %v6504
        %v6506 = vrot.slane %v6505, 1
        %v6507 = vmax.f32 %v6505, %v6506
        %v6508 = vsel %vm6234, %v5731, -inf
        %v6509 = vrot.slane %v6508, 4
        %v6510 = vmax.f32 %v6508, %v6509
        %v6511 = vrot.slane %v6510, 2
        %v6512 = vmax.f32 %v6510, %v6511
        %v6513 = vrot.slane %v6512, 1
        %v6514 = vmax.f32 %v6512, %v6513
        %v6515 = vsel %vm6234, %v5739, -inf
        %v6516 = vrot.slane %v6515, 4
        %v6517 = vmax.f32 %v6515, %v6516
        %v6518 = vrot.slane %v6517, 2
        %v6519 = vmax.f32 %v6517, %v6518
        %v6520 = vrot.slane %v6519, 1
        %v6521 = vmax.f32 %v6519, %v6520
        %v6522 = vsel %vm6234, %v5747, -inf
        %v6523 = vrot.slane %v6522, 4
        %v6524 = vmax.f32 %v6522, %v6523
        %v6525 = vrot.slane %v6524, 2
        %v6526 = vmax.f32 %v6524, %v6525
        %v6527 = vrot.slane %v6526, 1
        %v6528 = vmax.f32 %v6526, %v6527
        %v6529 = vsel %vm6234, %v5746, -inf
        %v6530 = vrot.slane %v6529, 4
        %v6531 = vmax.f32 %v6529, %v6530
        %v6532 = vrot.slane %v6531, 2
        %v6533 = vmax.f32 %v6531, %v6532
        %v6534 = vrot.slane %v6533, 1
        %v6535 = vmax.f32 %v6533, %v6534
        %v6536 = vsel %vm6234, %v5748, -inf
        %v6537 = vrot.slane %v6536, 4
        %v6538 = vmax.f32 %v6536, %v6537
        %v6539 = vrot.slane %v6538, 2
        %v6540 = vmax.f32 %v6538, %v6539
        %v6541 = vrot.slane %v6540, 1
        %v6542 = vmax.f32 %v6540, %v6541
        %v6543 = vsel %vm6234, %v5756, -inf
        %v6544 = vrot.slane %v6543, 4
        %v6545 = vmax.f32 %v6543, %v6544
        %v6546 = vrot.slane %v6545, 2
        %v6547 = vmax.f32 %v6545, %v6546
        %v6548 = vrot.slane %v6547, 1
        %v6549 = vmax.f32 %v6547, %v6548
        %v6550 = vsel %vm6234, %v5764, -inf
        %v6551 = vrot.slane %v6550, 4
        %v6552 = vmax.f32 %v6550, %v6551
        %v6553 = vrot.slane %v6552, 2
        %v6554 = vmax.f32 %v6552, %v6553
        %v6555 = vrot.slane %v6554, 1
        %v6556 = vmax.f32 %v6554, %v6555
        %v6557 = vsel %vm6234, %v5763, -inf
        %v6558 = vrot.slane %v6557, 4
        %v6559 = vmax.f32 %v6557, %v6558
        %v6560 = vrot.slane %v6559, 2
        %v6561 = vmax.f32 %v6559, %v6560
        %v6562 = vrot.slane %v6561, 1
        %v6563 = vmax.f32 %v6561, %v6562
        %v6564 = vsel %vm6234, %v5765, -inf
        %v6565 = vrot.slane %v6564, 4
        %v6566 = vmax.f32 %v6564, %v6565
        %v6567 = vrot.slane %v6566, 2
        %v6568 = vmax.f32 %v6566, %v6567
        %v6569 = vrot.slane %v6568, 1
        %v6570 = vmax.f32 %v6568, %v6569
        %v6571 = vsel %vm6234, %v5773, -inf
        %v6572 = vrot.slane %v6571, 4
        %v6573 = vmax.f32 %v6571, %v6572
        %v6574 = vrot.slane %v6573, 2
        %v6575 = vmax.f32 %v6573, %v6574
        %v6576 = vrot.slane %v6575, 1
        %v6577 = vmax.f32 %v6575, %v6576
        %v6578 = vsel %vm6234, %v5781, -inf
        %v6579 = vrot.slane %v6578, 4
        %v6580 = vmax.f32 %v6578, %v6579
        %v6581 = vrot.slane %v6580, 2
        %v6582 = vmax.f32 %v6580, %v6581
        %v6583 = vrot.slane %v6582, 1
        %v6584 = vmax.f32 %v6582, %v6583
        %v6585 = vsel %vm6234, %v5780, -inf
        %v6586 = vrot.slane %v6585, 4
        %v6587 = vmax.f32 %v6585, %v6586
        %v6588 = vrot.slane %v6587, 2
        %v6589 = vmax.f32 %v6587, %v6588
        %v6590 = vrot.slane %v6589, 1
        %v6591 = vmax.f32 %v6589, %v6590
        %v6592 = vsel %vm6234, %v5782, -inf
        %v6593 = vrot.slane %v6592, 4
        %v6594 = vmax.f32 %v6592, %v6593
        %v6595 = vrot.slane %v6594, 2
        %v6596 = vmax.f32 %v6594, %v6595
        %v6597 = vrot.slane %v6596, 1
        %v6598 = vmax.f32 %v6596, %v6597
        %v6599 = vsel %vm6234, %v5790, -inf
        %v6600 = vrot.slane %v6599, 4
        %v6601 = vmax.f32 %v6599, %v6600
        %v6602 = vrot.slane %v6601, 2
        %v6603 = vmax.f32 %v6601, %v6602
        %v6604 = vrot.slane %v6603, 1
        %v6605 = vmax.f32 %v6603, %v6604
        %v6606 = vsel %vm6234, %v5798, -inf
        %v6607 = vrot.slane %v6606, 4
        %v6608 = vmax.f32 %v6606, %v6607
        %v6609 = vrot.slane %v6608, 2
        %v6610 = vmax.f32 %v6608, %v6609
        %v6611 = vrot.slane %v6610, 1
        %v6612 = vmax.f32 %v6610, %v6611
        %v6613 = vsel %vm6234, %v5797, -inf
        %v6614 = vrot.slane %v6613, 4
        %v6615 = vmax.f32 %v6613, %v6614
        %v6616 = vrot.slane %v6615, 2
        %v6617 = vmax.f32 %v6615, %v6616
        %v6618 = vrot.slane %v6617, 1
        %v6619 = vmax.f32 %v6617, %v6618
        %v6620 = vsel %vm6234, %v5799, -inf
        %v6621 = vrot.slane %v6620, 4
        %v6622 = vmax.f32 %v6620, %v6621
        %v6623 = vrot.slane %v6622, 2
        %v6624 = vmax.f32 %v6622, %v6623
        %v6625 = vrot.slane %v6624, 1
        %v6626 = vmax.f32 %v6624, %v6625
        %v6627 = vsel %vm6234, %v5807, -inf
        %v6628 = vrot.slane %v6627, 4
        %v6629 = vmax.f32 %v6627, %v6628
        %v6630 = vrot.slane %v6629, 2
        %v6631 = vmax.f32 %v6629, %v6630
        %v6632 = vrot.slane %v6631, 1
        %v6633 = vmax.f32 %v6631, %v6632
        %v6634 = vsel %vm6234, %v5815, -inf
        %v6635 = vrot.slane %v6634, 4
        %v6636 = vmax.f32 %v6634, %v6635
        %v6637 = vrot.slane %v6636, 2
        %v6638 = vmax.f32 %v6636, %v6637
        %v6639 = vrot.slane %v6638, 1
        %v6640 = vmax.f32 %v6638, %v6639
        %v6641 = vsel %vm6234, %v5814, -inf
        %v6642 = vrot.slane %v6641, 4
        %v6643 = vmax.f32 %v6641, %v6642
        %v6644 = vrot.slane %v6643, 2
        %v6645 = vmax.f32 %v6643, %v6644
        %v6646 = vrot.slane %v6645, 1
        %v6647 = vmax.f32 %v6645, %v6646
        %v6648 = vsel %vm6234, %v5816, -inf
        %v6649 = vrot.slane %v6648, 4
        %v6650 = vmax.f32 %v6648, %v6649
        %v6651 = vrot.slane %v6650, 2
        %v6652 = vmax.f32 %v6650, %v6651
        %v6653 = vrot.slane %v6652, 1
        %v6654 = vmax.f32 %v6652, %v6653
        %v6655 = vsel %vm6234, %v5824, -inf
        %v6656 = vrot.slane %v6655, 4
        %v6657 = vmax.f32 %v6655, %v6656
        %v6658 = vrot.slane %v6657, 2
        %v6659 = vmax.f32 %v6657, %v6658
        %v6660 = vrot.slane %v6659, 1
        %v6661 = vmax.f32 %v6659, %v6660
        %v6662 = vsel %vm6234, %v5832, -inf
        %v6663 = vrot.slane %v6662, 4
        %v6664 = vmax.f32 %v6662, %v6663
        %v6665 = vrot.slane %v6664, 2
        %v6666 = vmax.f32 %v6664, %v6665
        %v6667 = vrot.slane %v6666, 1
        %v6668 = vmax.f32 %v6666, %v6667
        %v6669 = vsel %vm6234, %v5831, -inf
        %v6670 = vrot.slane %v6669, 4
        %v6671 = vmax.f32 %v6669, %v6670
        %v6672 = vrot.slane %v6671, 2
        %v6673 = vmax.f32 %v6671, %v6672
        %v6674 = vrot.slane %v6673, 1
        %v6675 = vmax.f32 %v6673, %v6674
        %v6676 = vsel %vm6234, %v5833, -inf
        %v6677 = vrot.slane %v6676, 4
        %v6678 = vmax.f32 %v6676, %v6677
        %v6679 = vrot.slane %v6678, 2
        %v6680 = vmax.f32 %v6678, %v6679
        %v6681 = vrot.slane %v6680, 1
        %v6682 = vmax.f32 %v6680, %v6681
        %v6683 = vsel %vm6234, %v5841, -inf
        %v6684 = vrot.slane %v6683, 4
        %v6685 = vmax.f32 %v6683, %v6684
        %v6686 = vrot.slane %v6685, 2
        %v6687 = vmax.f32 %v6685, %v6686
        %v6688 = vrot.slane %v6687, 1
        %v6689 = vmax.f32 %v6687, %v6688
        %v6690 = vsel %vm6234, %v5849, -inf
        %v6691 = vrot.slane %v6690, 4
        %v6692 = vmax.f32 %v6690, %v6691
        %v6693 = vrot.slane %v6692, 2
        %v6694 = vmax.f32 %v6692, %v6693
        %v6695 = vrot.slane %v6694, 1
        %v6696 = vmax.f32 %v6694, %v6695
        %v6697 = vsel %vm6234, %v5848, -inf
        %v6698 = vrot.slane %v6697, 4
        %v6699 = vmax.f32 %v6697, %v6698
        %v6700 = vrot.slane %v6699, 2
        %v6701 = vmax.f32 %v6699, %v6700
        %v6702 = vrot.slane %v6701, 1
        %v6703 = vmax.f32 %v6701, %v6702
        %v6704 = vsel %vm6234, %v5850, -inf
        %v6705 = vrot.slane %v6704, 4
        %v6706 = vmax.f32 %v6704, %v6705
        %v6707 = vrot.slane %v6706, 2
        %v6708 = vmax.f32 %v6706, %v6707
        %v6709 = vrot.slane %v6708, 1
        %v6710 = vmax.f32 %v6708, %v6709
        %v6711 = vsel %vm6234, %v5858, -inf
        %v6712 = vrot.slane %v6711, 4
        %v6713 = vmax.f32 %v6711, %v6712
        %v6714 = vrot.slane %v6713, 2
        %v6715 = vmax.f32 %v6713, %v6714
        %v6716 = vrot.slane %v6715, 1
        %v6717 = vmax.f32 %v6715, %v6716
        %v6718 = vsel %vm6234, %v5866, -inf
        %v6719 = vrot.slane %v6718, 4
        %v6720 = vmax.f32 %v6718, %v6719
        %v6721 = vrot.slane %v6720, 2
        %v6722 = vmax.f32 %v6720, %v6721
        %v6723 = vrot.slane %v6722, 1
        %v6724 = vmax.f32 %v6722, %v6723
        %v6725 = vsel %vm6234, %v5865, -inf
        %v6726 = vrot.slane %v6725, 4
        %v6727 = vmax.f32 %v6725, %v6726
        %v6728 = vrot.slane %v6727, 2
        %v6729 = vmax.f32 %v6727, %v6728
        %v6730 = vrot.slane %v6729, 1
        %v6731 = vmax.f32 %v6729, %v6730
        %v6732 = vsel %vm6234, %v5867, -inf
        %v6733 = vrot.slane %v6732, 4
        %v6734 = vmax.f32 %v6732, %v6733
        %v6735 = vrot.slane %v6734, 2
        %v6736 = vmax.f32 %v6734, %v6735
        %v6737 = vrot.slane %v6736, 1
        %v6738 = vmax.f32 %v6736, %v6737
        %v6739 = vsel %vm6234, %v5875, -inf
        %v6740 = vrot.slane %v6739, 4
        %v6741 = vmax.f32 %v6739, %v6740
        %v6742 = vrot.slane %v6741, 2
        %v6743 = vmax.f32 %v6741, %v6742
        %v6744 = vrot.slane %v6743, 1
        %v6745 = vmax.f32 %v6743, %v6744
        %v6746 = vsel %vm6234, %v5883, -inf
        %v6747 = vrot.slane %v6746, 4
        %v6748 = vmax.f32 %v6746, %v6747
        %v6749 = vrot.slane %v6748, 2
        %v6750 = vmax.f32 %v6748, %v6749
        %v6751 = vrot.slane %v6750, 1
        %v6752 = vmax.f32 %v6750, %v6751
        %v6753 = vsel %vm6234, %v5882, -inf
        %v6754 = vrot.slane %v6753, 4
        %v6755 = vmax.f32 %v6753, %v6754
        %v6756 = vrot.slane %v6755, 2
        %v6757 = vmax.f32 %v6755, %v6756
        %v6758 = vrot.slane %v6757, 1
        %v6759 = vmax.f32 %v6757, %v6758
        %v6760 = vsel %vm6234, %v5884, -inf
        %v6761 = vrot.slane %v6760, 4
        %v6762 = vmax.f32 %v6760, %v6761
        %v6763 = vrot.slane %v6762, 2
        %v6764 = vmax.f32 %v6762, %v6763
        %v6765 = vrot.slane %v6764, 1
        %v6766 = vmax.f32 %v6764, %v6765
        %v6767 = vsel %vm6234, %v5892, -inf
        %v6768 = vrot.slane %v6767, 4
        %v6769 = vmax.f32 %v6767, %v6768
        %v6770 = vrot.slane %v6769, 2
        %v6771 = vmax.f32 %v6769, %v6770
        %v6772 = vrot.slane %v6771, 1
        %v6773 = vmax.f32 %v6771, %v6772
        %v6774 = vsel %vm6234, %v5900, -inf
        %v6775 = vrot.slane %v6774, 4
        %v6776 = vmax.f32 %v6774, %v6775
        %v6777 = vrot.slane %v6776, 2
        %v6778 = vmax.f32 %v6776, %v6777
        %v6779 = vrot.slane %v6778, 1
        %v6780 = vmax.f32 %v6778, %v6779
        %v6781 = vsel %vm6234, %v5899, -inf
        %v6782 = vrot.slane %v6781, 4
        %v6783 = vmax.f32 %v6781, %v6782
        %v6784 = vrot.slane %v6783, 2
        %v6785 = vmax.f32 %v6783, %v6784
        %v6786 = vrot.slane %v6785, 1
        %v6787 = vmax.f32 %v6785, %v6786
        %v6788 = vsel %vm6234, %v5901, -inf
        %v6789 = vrot.slane %v6788, 4
        %v6790 = vmax.f32 %v6788, %v6789
        %v6791 = vrot.slane %v6790, 2
        %v6792 = vmax.f32 %v6790, %v6791
        %v6793 = vrot.slane %v6792, 1
        %v6794 = vmax.f32 %v6792, %v6793
        %v6795 = vsel %vm6234, %v5909, -inf
        %v6796 = vrot.slane %v6795, 4
        %v6797 = vmax.f32 %v6795, %v6796
        %v6798 = vrot.slane %v6797, 2
        %v6799 = vmax.f32 %v6797, %v6798
        %v6800 = vrot.slane %v6799, 1
        %v6801 = vmax.f32 %v6799, %v6800
        %v6802 = vsel %vm6234, %v5917, -inf
        %v6803 = vrot.slane %v6802, 4
        %v6804 = vmax.f32 %v6802, %v6803
        %v6805 = vrot.slane %v6804, 2
        %v6806 = vmax.f32 %v6804, %v6805
        %v6807 = vrot.slane %v6806, 1
        %v6808 = vmax.f32 %v6806, %v6807
        %v6809 = vsel %vm6234, %v5916, -inf
        %v6810 = vrot.slane %v6809, 4
        %v6811 = vmax.f32 %v6809, %v6810
        %v6812 = vrot.slane %v6811, 2
        %v6813 = vmax.f32 %v6811, %v6812
        %v6814 = vrot.slane %v6813, 1
        %v6815 = vmax.f32 %v6813, %v6814
        %v6816 = vsel %vm6234, %v5918, -inf
        %v6817 = vrot.slane %v6816, 4
        %v6818 = vmax.f32 %v6816, %v6817
        %v6819 = vrot.slane %v6818, 2
        %v6820 = vmax.f32 %v6818, %v6819
        %v6821 = vrot.slane %v6820, 1
        %v6822 = vmax.f32 %v6820, %v6821
        %v6823 = vsel %vm6234, %v5926, -inf
        %v6824 = vrot.slane %v6823, 4
        %v6825 = vmax.f32 %v6823, %v6824
        %v6826 = vrot.slane %v6825, 2
        %v6827 = vmax.f32 %v6825, %v6826
        %v6828 = vrot.slane %v6827, 1
        %v6829 = vmax.f32 %v6827, %v6828
        %v6830 = vsel %vm6234, %v5934, -inf
        %v6831 = vrot.slane %v6830, 4
        %v6832 = vmax.f32 %v6830, %v6831
        %v6833 = vrot.slane %v6832, 2
        %v6834 = vmax.f32 %v6832, %v6833
        %v6835 = vrot.slane %v6834, 1
        %v6836 = vmax.f32 %v6834, %v6835
        %v6837 = vsel %vm6234, %v5933, -inf
        %v6838 = vrot.slane %v6837, 4
        %v6839 = vmax.f32 %v6837, %v6838
        %v6840 = vrot.slane %v6839, 2
        %v6841 = vmax.f32 %v6839, %v6840
        %v6842 = vrot.slane %v6841, 1
        %v6843 = vmax.f32 %v6841, %v6842
        %v6844 = vsel %vm6234, %v5935, -inf
        %v6845 = vrot.slane %v6844, 4
        %v6846 = vmax.f32 %v6844, %v6845
        %v6847 = vrot.slane %v6846, 2
        %v6848 = vmax.f32 %v6846, %v6847
        %v6849 = vrot.slane %v6848, 1
        %v6850 = vmax.f32 %v6848, %v6849
        %v6851 = vsel %vm6234, %v5943, -inf
        %v6852 = vrot.slane %v6851, 4
        %v6853 = vmax.f32 %v6851, %v6852
        %v6854 = vrot.slane %v6853, 2
        %v6855 = vmax.f32 %v6853, %v6854
        %v6856 = vrot.slane %v6855, 1
        %v6857 = vmax.f32 %v6855, %v6856
        %v6858 = vsel %vm6234, %v5951, -inf
        %v6859 = vrot.slane %v6858, 4
        %v6860 = vmax.f32 %v6858, %v6859
        %v6861 = vrot.slane %v6860, 2
        %v6862 = vmax.f32 %v6860, %v6861
        %v6863 = vrot.slane %v6862, 1
        %v6864 = vmax.f32 %v6862, %v6863
        %v6865 = vsel %vm6234, %v5950, -inf
        %v6866 = vrot.slane %v6865, 4
        %v6867 = vmax.f32 %v6865, %v6866
        %v6868 = vrot.slane %v6867, 2
        %v6869 = vmax.f32 %v6867, %v6868
        %v6870 = vrot.slane %v6869, 1
        %v6871 = vmax.f32 %v6869, %v6870
        %v6872 = vsel %vm6234, %v5952, -inf
        %v6873 = vrot.slane %v6872, 4
        %v6874 = vmax.f32 %v6872, %v6873
        %v6875 = vrot.slane %v6874, 2
        %v6876 = vmax.f32 %v6874, %v6875
        %v6877 = vrot.slane %v6876, 1
        %v6878 = vmax.f32 %v6876, %v6877
        %v6879 = vsel %vm6234, %v5960, -inf
        %v6880 = vrot.slane %v6879, 4
        %v6881 = vmax.f32 %v6879, %v6880
        %v6882 = vrot.slane %v6881, 2
        %v6883 = vmax.f32 %v6881, %v6882
        %v6884 = vrot.slane %v6883, 1
        %v6885 = vmax.f32 %v6883, %v6884
        %v6886 = vsel %vm6234, %v5968, -inf
        %v6887 = vrot.slane %v6886, 4
        %v6888 = vmax.f32 %v6886, %v6887
        %v6889 = vrot.slane %v6888, 2
        %v6890 = vmax.f32 %v6888, %v6889
        %v6891 = vrot.slane %v6890, 1
        %v6892 = vmax.f32 %v6890, %v6891
        %v6893 = vsel %vm6234, %v5967, -inf
        %v6894 = vrot.slane %v6893, 4
        %v6895 = vmax.f32 %v6893, %v6894
        %v6896 = vrot.slane %v6895, 2
        %v6897 = vmax.f32 %v6895, %v6896
        %v6898 = vrot.slane %v6897, 1
        %v6899 = vmax.f32 %v6897, %v6898
        %v6900 = vsel %vm6234, %v5969, -inf
        %v6901 = vrot.slane %v6900, 4
        %v6902 = vmax.f32 %v6900, %v6901
        %v6903 = vrot.slane %v6902, 2
        %v6904 = vmax.f32 %v6902, %v6903
        %v6905 = vrot.slane %v6904, 1
        %v6906 = vmax.f32 %v6904, %v6905
        %v6907 = vsel %vm6234, %v5977, -inf
        %v6908 = vrot.slane %v6907, 4
        %v6909 = vmax.f32 %v6907, %v6908
        %v6910 = vrot.slane %v6909, 2
        %v6911 = vmax.f32 %v6909, %v6910
        %v6912 = vrot.slane %v6911, 1
        %v6913 = vmax.f32 %v6911, %v6912
        %v6914 = vsel %vm6234, %v5985, -inf
        %v6915 = vrot.slane %v6914, 4
        %v6916 = vmax.f32 %v6914, %v6915
        %v6917 = vrot.slane %v6916, 2
        %v6918 = vmax.f32 %v6916, %v6917
        %v6919 = vrot.slane %v6918, 1
        %v6920 = vmax.f32 %v6918, %v6919
        %v6921 = vsel %vm6234, %v5984, -inf
        %v6922 = vrot.slane %v6921, 4
        %v6923 = vmax.f32 %v6921, %v6922
        %v6924 = vrot.slane %v6923, 2
        %v6925 = vmax.f32 %v6923, %v6924
        %v6926 = vrot.slane %v6925, 1
        %v6927 = vmax.f32 %v6925, %v6926
        %v6928 = vsel %vm6234, %v5986, -inf
        %v6929 = vrot.slane %v6928, 4
        %v6930 = vmax.f32 %v6928, %v6929
        %v6931 = vrot.slane %v6930, 2
        %v6932 = vmax.f32 %v6930, %v6931
        %v6933 = vrot.slane %v6932, 1
        %v6934 = vmax.f32 %v6932, %v6933
        %v6935 = vsel %vm6234, %v5994, -inf
        %v6936 = vrot.slane %v6935, 4
        %v6937 = vmax.f32 %v6935, %v6936
        %v6938 = vrot.slane %v6937, 2
        %v6939 = vmax.f32 %v6937, %v6938
        %v6940 = vrot.slane %v6939, 1
        %v6941 = vmax.f32 %v6939, %v6940
        %v6942 = vsel %vm6234, %v6002, -inf
        %v6943 = vrot.slane %v6942, 4
        %v6944 = vmax.f32 %v6942, %v6943
        %v6945 = vrot.slane %v6944, 2
        %v6946 = vmax.f32 %v6944, %v6945
        %v6947 = vrot.slane %v6946, 1
        %v6948 = vmax.f32 %v6946, %v6947
        %v6949 = vsel %vm6234, %v6001, -inf
        %v6950 = vrot.slane %v6949, 4
        %v6951 = vmax.f32 %v6949, %v6950
        %v6952 = vrot.slane %v6951, 2
        %v6953 = vmax.f32 %v6951, %v6952
        %v6954 = vrot.slane %v6953, 1
        %v6955 = vmax.f32 %v6953, %v6954
        %v6956 = vsel %vm6234, %v6003, -inf
        %v6957 = vrot.slane %v6956, 4
        %v6958 = vmax.f32 %v6956, %v6957
        %v6959 = vrot.slane %v6958, 2
        %v6960 = vmax.f32 %v6958, %v6959
        %v6961 = vrot.slane %v6960, 1
        %v6962 = vmax.f32 %v6960, %v6961
        %v6963 = vsel %vm6234, %v6011, -inf
        %v6964 = vrot.slane %v6963, 4
        %v6965 = vmax.f32 %v6963, %v6964
        %v6966 = vrot.slane %v6965, 2
        %v6967 = vmax.f32 %v6965, %v6966
        %v6968 = vrot.slane %v6967, 1
        %v6969 = vmax.f32 %v6967, %v6968
        %v6970 = vsel %vm6234, %v6019, -inf
        %v6971 = vrot.slane %v6970, 4
        %v6972 = vmax.f32 %v6970, %v6971
        %v6973 = vrot.slane %v6972, 2
        %v6974 = vmax.f32 %v6972, %v6973
        %v6975 = vrot.slane %v6974, 1
        %v6976 = vmax.f32 %v6974, %v6975
        %v6977 = vsel %vm6234, %v6018, -inf
        %v6978 = vrot.slane %v6977, 4
        %v6979 = vmax.f32 %v6977, %v6978
        %v6980 = vrot.slane %v6979, 2
        %v6981 = vmax.f32 %v6979, %v6980
        %v6982 = vrot.slane %v6981, 1
        %v6983 = vmax.f32 %v6981, %v6982
        %v6984 = vsel %vm6234, %v6020, -inf
        %v6985 = vrot.slane %v6984, 4
        %v6986 = vmax.f32 %v6984, %v6985
        %v6987 = vrot.slane %v6986, 2
        %v6988 = vmax.f32 %v6986, %v6987
        %v6989 = vrot.slane %v6988, 1
        %v6990 = vmax.f32 %v6988, %v6989
        %v6991 = vsel %vm6234, %v6028, -inf
        %v6992 = vrot.slane %v6991, 4
        %v6993 = vmax.f32 %v6991, %v6992
        %v6994 = vrot.slane %v6993, 2
        %v6995 = vmax.f32 %v6993, %v6994
        %v6996 = vrot.slane %v6995, 1
        %v6997 = vmax.f32 %v6995, %v6996
        %v6998 = vsel %vm6234, %v6036, -inf
        %v6999 = vrot.slane %v6998, 4
        %v7000 = vmax.f32 %v6998, %v6999
        %v7001 = vrot.slane %v7000, 2
        %v7002 = vmax.f32 %v7000, %v7001
        %v7003 = vrot.slane %v7002, 1
        %v7004 = vmax.f32 %v7002, %v7003
        %v7005 = vsel %vm6234, %v6035, -inf
        %v7006 = vrot.slane %v7005, 4
        %v7007 = vmax.f32 %v7005, %v7006
        %v7008 = vrot.slane %v7007, 2
        %v7009 = vmax.f32 %v7007, %v7008
        %v7010 = vrot.slane %v7009, 1
        %v7011 = vmax.f32 %v7009, %v7010
        %v7012 = vsel %vm6234, %v6037, -inf
        %v7013 = vrot.slane %v7012, 4
        %v7014 = vmax.f32 %v7012, %v7013
        %v7015 = vrot.slane %v7014, 2
        %v7016 = vmax.f32 %v7014, %v7015
        %v7017 = vrot.slane %v7016, 1
        %v7018 = vmax.f32 %v7016, %v7017
        %v7019 = vsel %vm6234, %v6045, -inf
        %v7020 = vrot.slane %v7019, 4
        %v7021 = vmax.f32 %v7019, %v7020
        %v7022 = vrot.slane %v7021, 2
        %v7023 = vmax.f32 %v7021, %v7022
        %v7024 = vrot.slane %v7023, 1
        %v7025 = vmax.f32 %v7023, %v7024
        %v7026 = vsel %vm6234, %v6053, -inf
        %v7027 = vrot.slane %v7026, 4
        %v7028 = vmax.f32 %v7026, %v7027
        %v7029 = vrot.slane %v7028, 2
        %v7030 = vmax.f32 %v7028, %v7029
        %v7031 = vrot.slane %v7030, 1
        %v7032 = vmax.f32 %v7030, %v7031
        %v7033 = vsel %vm6234, %v6052, -inf
        %v7034 = vrot.slane %v7033, 4
        %v7035 = vmax.f32 %v7033, %v7034
        %v7036 = vrot.slane %v7035, 2
        %v7037 = vmax.f32 %v7035, %v7036
        %v7038 = vrot.slane %v7037, 1
        %v7039 = vmax.f32 %v7037, %v7038
        %v7040 = vsel %vm6234, %v6054, -inf
        %v7041 = vrot.slane %v7040, 4
        %v7042 = vmax.f32 %v7040, %v7041
        %v7043 = vrot.slane %v7042, 2
        %v7044 = vmax.f32 %v7042, %v7043
        %v7045 = vrot.slane %v7044, 1
        %v7046 = vmax.f32 %v7044, %v7045
        %v7047 = vsel %vm6234, %v6062, -inf
        %v7048 = vrot.slane %v7047, 4
        %v7049 = vmax.f32 %v7047, %v7048
        %v7050 = vrot.slane %v7049, 2
        %v7051 = vmax.f32 %v7049, %v7050
        %v7052 = vrot.slane %v7051, 1
        %v7053 = vmax.f32 %v7051, %v7052
        %v7054 = vsel %vm6234, %v6070, -inf
        %v7055 = vrot.slane %v7054, 4
        %v7056 = vmax.f32 %v7054, %v7055
        %v7057 = vrot.slane %v7056, 2
        %v7058 = vmax.f32 %v7056, %v7057
        %v7059 = vrot.slane %v7058, 1
        %v7060 = vmax.f32 %v7058, %v7059
        %v7061 = vsel %vm6234, %v6069, -inf
        %v7062 = vrot.slane %v7061, 4
        %v7063 = vmax.f32 %v7061, %v7062
        %v7064 = vrot.slane %v7063, 2
        %v7065 = vmax.f32 %v7063, %v7064
        %v7066 = vrot.slane %v7065, 1
        %v7067 = vmax.f32 %v7065, %v7066
        %v7068 = vsel %vm6234, %v6071, -inf
        %v7069 = vrot.slane %v7068, 4
        %v7070 = vmax.f32 %v7068, %v7069
        %v7071 = vrot.slane %v7070, 2
        %v7072 = vmax.f32 %v7070, %v7071
        %v7073 = vrot.slane %v7072, 1
        %v7074 = vmax.f32 %v7072, %v7073
        %v7075 = vsel %vm6234, %v6079, -inf
        %v7076 = vrot.slane %v7075, 4
        %v7077 = vmax.f32 %v7075, %v7076
        %v7078 = vrot.slane %v7077, 2
        %v7079 = vmax.f32 %v7077, %v7078
        %v7080 = vrot.slane %v7079, 1
        %v7081 = vmax.f32 %v7079, %v7080
        %v7082 = vsel %vm6234, %v6087, -inf
        %v7083 = vrot.slane %v7082, 4
        %v7084 = vmax.f32 %v7082, %v7083
        %v7085 = vrot.slane %v7084, 2
        %v7086 = vmax.f32 %v7084, %v7085
        %v7087 = vrot.slane %v7086, 1
        %v7088 = vmax.f32 %v7086, %v7087
        %v7089 = vsel %vm6234, %v6086, -inf
        %v7090 = vrot.slane %v7089, 4
        %v7091 = vmax.f32 %v7089, %v7090
        %v7092 = vrot.slane %v7091, 2
        %v7093 = vmax.f32 %v7091, %v7092
        %v7094 = vrot.slane %v7093, 1
        %v7095 = vmax.f32 %v7093, %v7094
        %v7096 = vsel %vm6234, %v6088, -inf
        %v7097 = vrot.slane %v7096, 4
        %v7098 = vmax.f32 %v7096, %v7097
        %v7099 = vrot.slane %v7098, 2
        %v7100 = vmax.f32 %v7098, %v7099
        %v7101 = vrot.slane %v7100, 1
        %v7102 = vmax.f32 %v7100, %v7101
        %v7103 = vsel %vm6234, %v6096, -inf
        %v7104 = vrot.slane %v7103, 4
        %v7105 = vmax.f32 %v7103, %v7104
        %v7106 = vrot.slane %v7105, 2
        %v7107 = vmax.f32 %v7105, %v7106
        %v7108 = vrot.slane %v7107, 1
        %v7109 = vmax.f32 %v7107, %v7108
        %v7110 = vsel %vm6234, %v6104, -inf
        %v7111 = vrot.slane %v7110, 4
        %v7112 = vmax.f32 %v7110, %v7111
        %v7113 = vrot.slane %v7112, 2
        %v7114 = vmax.f32 %v7112, %v7113
        %v7115 = vrot.slane %v7114, 1
        %v7116 = vmax.f32 %v7114, %v7115
        %v7117 = vsel %vm6234, %v6103, -inf
        %v7118 = vrot.slane %v7117, 4
        %v7119 = vmax.f32 %v7117, %v7118
        %v7120 = vrot.slane %v7119, 2
        %v7121 = vmax.f32 %v7119, %v7120
        %v7122 = vrot.slane %v7121, 1
        %v7123 = vmax.f32 %v7121, %v7122
        %v7124 = vsel %vm6234, %v6105, -inf
        %v7125 = vrot.slane %v7124, 4
        %v7126 = vmax.f32 %v7124, %v7125
        %v7127 = vrot.slane %v7126, 2
        %v7128 = vmax.f32 %v7126, %v7127
        %v7129 = vrot.slane %v7128, 1
        %v7130 = vmax.f32 %v7128, %v7129
        %vm7131 = vcmask 523264
        %v7132 = vsel %vm7131, %v6241, -inf
        %v7133 = vsel %vm7131, %v6297, -inf
        %v7134 = vmax.f32 %v7132, %v7133
        %v7135 = vsel %vm7131, %v6248, -inf
        %v7136 = vsel %vm7131, %v6304, -inf
        %v7137 = vmax.f32 %v7135, %v7136
        %v7138 = vsel %vm7131, %v6255, -inf
        %v7139 = vsel %vm7131, %v6311, -inf
        %v7140 = vmax.f32 %v7138, %v7139
        %v7141 = vsel %vm7131, %v6262, -inf
        %v7142 = vsel %vm7131, %v6318, -inf
        %v7143 = vmax.f32 %v7141, %v7142
        %v7144 = vsel %vm7131, %v6269, -inf
        %v7145 = vsel %vm7131, %v6325, -inf
        %v7146 = vmax.f32 %v7144, %v7145
        %v7147 = vsel %vm7131, %v6276, -inf
        %v7148 = vsel %vm7131, %v6332, -inf
        %v7149 = vmax.f32 %v7147, %v7148
        %v7150 = vsel %vm7131, %v6283, -inf
        %v7151 = vsel %vm7131, %v6339, -inf
        %v7152 = vmax.f32 %v7150, %v7151
        %v7153 = vsel %vm7131, %v6290, -inf
        %v7154 = vsel %vm7131, %v6346, -inf
        %v7155 = vmax.f32 %v7153, %v7154
        %v7156 = vsel %vm7131, %v6353, -inf
        %v7157 = vsel %vm7131, %v6409, -inf
        %v7158 = vmax.f32 %v7156, %v7157
        %v7159 = vsel %vm7131, %v6360, -inf
        %v7160 = vsel %vm7131, %v6416, -inf
        %v7161 = vmax.f32 %v7159, %v7160
        %v7162 = vsel %vm7131, %v6367, -inf
        %v7163 = vsel %vm7131, %v6423, -inf
        %v7164 = vmax.f32 %v7162, %v7163
        %v7165 = vsel %vm7131, %v6374, -inf
        %v7166 = vsel %vm7131, %v6430, -inf
        %v7167 = vmax.f32 %v7165, %v7166
        %v7168 = vsel %vm7131, %v6381, -inf
        %v7169 = vsel %vm7131, %v6437, -inf
        %v7170 = vmax.f32 %v7168, %v7169
        %v7171 = vsel %vm7131, %v6388, -inf
        %v7172 = vsel %vm7131, %v6444, -inf
        %v7173 = vmax.f32 %v7171, %v7172
        %v7174 = vsel %vm7131, %v6395, -inf
        %v7175 = vsel %vm7131, %v6451, -inf
        %v7176 = vmax.f32 %v7174, %v7175
        %v7177 = vsel %vm7131, %v6402, -inf
        %v7178 = vsel %vm7131, %v6458, -inf
        %v7179 = vmax.f32 %v7177, %v7178
        %v7180 = vsel %vm7131, %v6465, -inf
        %v7181 = vsel %vm7131, %v6521, -inf
        %v7182 = vmax.f32 %v7180, %v7181
        %v7183 = vsel %vm7131, %v6472, -inf
        %v7184 = vsel %vm7131, %v6528, -inf
        %v7185 = vmax.f32 %v7183, %v7184
        %v7186 = vsel %vm7131, %v6479, -inf
        %v7187 = vsel %vm7131, %v6535, -inf
        %v7188 = vmax.f32 %v7186, %v7187
        %v7189 = vsel %vm7131, %v6486, -inf
        %v7190 = vsel %vm7131, %v6542, -inf
        %v7191 = vmax.f32 %v7189, %v7190
        %v7192 = vsel %vm7131, %v6493, -inf
        %v7193 = vsel %vm7131, %v6549, -inf
        %v7194 = vmax.f32 %v7192, %v7193
        %v7195 = vsel %vm7131, %v6500, -inf
        %v7196 = vsel %vm7131, %v6556, -inf
        %v7197 = vmax.f32 %v7195, %v7196
        %v7198 = vsel %vm7131, %v6507, -inf
        %v7199 = vsel %vm7131, %v6563, -inf
        %v7200 = vmax.f32 %v7198, %v7199
        %v7201 = vsel %vm7131, %v6514, -inf
        %v7202 = vsel %vm7131, %v6570, -inf
        %v7203 = vmax.f32 %v7201, %v7202
        %v7204 = vsel %vm7131, %v6577, -inf
        %v7205 = vsel %vm7131, %v6633, -inf
        %v7206 = vmax.f32 %v7204, %v7205
        %v7207 = vsel %vm7131, %v6584, -inf
        %v7208 = vsel %vm7131, %v6640, -inf
        %v7209 = vmax.f32 %v7207, %v7208
        %v7210 = vsel %vm7131, %v6591, -inf
        %v7211 = vsel %vm7131, %v6647, -inf
        %v7212 = vmax.f32 %v7210, %v7211
        %v7213 = vsel %vm7131, %v6598, -inf
        %v7214 = vsel %vm7131, %v6654, -inf
        %v7215 = vmax.f32 %v7213, %v7214
        %v7216 = vsel %vm7131, %v6605, -inf
        %v7217 = vsel %vm7131, %v6661, -inf
        %v7218 = vmax.f32 %v7216, %v7217
        %v7219 = vsel %vm7131, %v6612, -inf
        %v7220 = vsel %vm7131, %v6668, -inf
        %v7221 = vmax.f32 %v7219, %v7220
        %v7222 = vsel %vm7131, %v6619, -inf
        %v7223 = vsel %vm7131, %v6675, -inf
        %v7224 = vmax.f32 %v7222, %v7223
        %v7225 = vsel %vm7131, %v6626, -inf
        %v7226 = vsel %vm7131, %v6682, -inf
        %v7227 = vmax.f32 %v7225, %v7226
        %v7228 = vsel %vm7131, %v6689, -inf
        %v7229 = vsel %vm7131, %v6745, -inf
        %v7230 = vmax.f32 %v7228, %v7229
        %v7231 = vsel %vm7131, %v6696, -inf
        %v7232 = vsel %vm7131, %v6752, -inf
        %v7233 = vmax.f32 %v7231, %v7232
        %v7234 = vsel %vm7131, %v6703, -inf
        %v7235 = vsel %vm7131, %v6759, -inf
        %v7236 = vmax.f32 %v7234, %v7235
        %v7237 = vsel %vm7131, %v6710, -inf
        %v7238 = vsel %vm7131, %v6766, -inf
        %v7239 = vmax.f32 %v7237, %v7238
        %v7240 = vsel %vm7131, %v6717, -inf
        %v7241 = vsel %vm7131, %v6773, -inf
        %v7242 = vmax.f32 %v7240, %v7241
        %v7243 = vsel %vm7131, %v6724, -inf
        %v7244 = vsel %vm7131, %v6780, -inf
        %v7245 = vmax.f32 %v7243, %v7244
        %v7246 = vsel %vm7131, %v6731, -inf
        %v7247 = vsel %vm7131, %v6787, -inf
        %v7248 = vmax.f32 %v7246, %v7247
        %v7249 = vsel %vm7131, %v6738, -inf
        %v7250 = vsel %vm7131, %v6794, -inf
        %v7251 = vmax.f32 %v7249, %v7250
        %v7252 = vsel %vm7131, %v6801, -inf
        %v7253 = vsel %vm7131, %v6857, -inf
        %v7254 = vmax.f32 %v7252, %v7253
        %v7255 = vsel %vm7131, %v6808, -inf
        %v7256 = vsel %vm7131, %v6864, -inf
        %v7257 = vmax.f32 %v7255, %v7256
        %v7258 = vsel %vm7131, %v6815, -inf
        %v7259 = vsel %vm7131, %v6871, -inf
        %v7260 = vmax.f32 %v7258, %v7259
        %v7261 = vsel %vm7131, %v6822, -inf
        %v7262 = vsel %vm7131, %v6878, -inf
        %v7263 = vmax.f32 %v7261, %v7262
        %v7264 = vsel %vm7131, %v6829, -inf
        %v7265 = vsel %vm7131, %v6885, -inf
        %v7266 = vmax.f32 %v7264, %v7265
        %v7267 = vsel %vm7131, %v6836, -inf
        %v7268 = vsel %vm7131, %v6892, -inf
        %v7269 = vmax.f32 %v7267, %v7268
        %v7270 = vsel %vm7131, %v6843, -inf
        %v7271 = vsel %vm7131, %v6899, -inf
        %v7272 = vmax.f32 %v7270, %v7271
        %v7273 = vsel %vm7131, %v6850, -inf
        %v7274 = vsel %vm7131, %v6906, -inf
        %v7275 = vmax.f32 %v7273, %v7274
        %v7276 = vsel %vm7131, %v6913, -inf
        %v7277 = vsel %vm7131, %v6969, -inf
        %v7278 = vmax.f32 %v7276, %v7277
        %v7279 = vsel %vm7131, %v6920, -inf
        %v7280 = vsel %vm7131, %v6976, -inf
        %v7281 = vmax.f32 %v7279, %v7280
        %v7282 = vsel %vm7131, %v6927, -inf
        %v7283 = vsel %vm7131, %v6983, -inf
        %v7284 = vmax.f32 %v7282, %v7283
        %v7285 = vsel %vm7131, %v6934, -inf
        %v7286 = vsel %vm7131, %v6990, -inf
        %v7287 = vmax.f32 %v7285, %v7286
        %v7288 = vsel %vm7131, %v6941, -inf
        %v7289 = vsel %vm7131, %v6997, -inf
        %v7290 = vmax.f32 %v7288, %v7289
        %v7291 = vsel %vm7131, %v6948, -inf
        %v7292 = vsel %vm7131, %v7004, -inf
        %v7293 = vmax.f32 %v7291, %v7292
        %v7294 = vsel %vm7131, %v6955, -inf
        %v7295 = vsel %vm7131, %v7011, -inf
        %v7296 = vmax.f32 %v7294, %v7295
        %v7297 = vsel %vm7131, %v6962, -inf
        %v7298 = vsel %vm7131, %v7018, -inf
        %v7299 = vmax.f32 %v7297, %v7298
        %v7300 = vsel %vm7131, %v7025, -inf
        %v7301 = vsel %vm7131, %v7081, -inf
        %v7302 = vmax.f32 %v7300, %v7301
        %v7303 = vsel %vm7131, %v7032, -inf
        %v7304 = vsel %vm7131, %v7088, -inf
        %v7305 = vmax.f32 %v7303, %v7304
        %v7306 = vsel %vm7131, %v7039, -inf
        %v7307 = vsel %vm7131, %v7095, -inf
        %v7308 = vmax.f32 %v7306, %v7307
        %v7309 = vsel %vm7131, %v7046, -inf
        %v7310 = vsel %vm7131, %v7102, -inf
        %v7311 = vmax.f32 %v7309, %v7310
        %v7312 = vsel %vm7131, %v7053, -inf
        %v7313 = vsel %vm7131, %v7109, -inf
        %v7314 = vmax.f32 %v7312, %v7313
        %v7315 = vsel %vm7131, %v7060, -inf
        %v7316 = vsel %vm7131, %v7116, -inf
        %v7317 = vmax.f32 %v7315, %v7316
        %v7318 = vsel %vm7131, %v7067, -inf
        %v7319 = vsel %vm7131, %v7123, -inf
        %v7320 = vmax.f32 %v7318, %v7319
        %v7321 = vsel %vm7131, %v7074, -inf
        %v7322 = vsel %vm7131, %v7130, -inf
        %v7323 = vmax.f32 %v7321, %v7322
        %v7324 = vpack.c.bf16 %v7134, %v7134
        %v7325 = vpack.c.bf16 %v7137, %v7137
        %v7326 = vpack.c.bf16 %v7140, %v7140
        %v7327 = vpack.c.bf16 %v7143, %v7143
        %v7328 = vpack.c.bf16 %v7146, %v7146
        %v7329 = vpack.c.bf16 %v7149, %v7149
        %v7330 = vpack.c.bf16 %v7152, %v7152
        %v7331 = vpack.c.bf16 %v7155, %v7155
        %v7332 = vpack.c.bf16 %v7158, %v7158
        %v7333 = vpack.c.bf16 %v7161, %v7161
        %v7334 = vpack.c.bf16 %v7164, %v7164
        %v7335 = vpack.c.bf16 %v7167, %v7167
        %v7336 = vpack.c.bf16 %v7170, %v7170
        %v7337 = vpack.c.bf16 %v7173, %v7173
        %v7338 = vpack.c.bf16 %v7176, %v7176
        %v7339 = vpack.c.bf16 %v7179, %v7179
        %v7340 = vpack.c.bf16 %v7182, %v7182
        %v7341 = vpack.c.bf16 %v7185, %v7185
        %v7342 = vpack.c.bf16 %v7188, %v7188
        %v7343 = vpack.c.bf16 %v7191, %v7191
        %v7344 = vpack.c.bf16 %v7194, %v7194
        %v7345 = vpack.c.bf16 %v7197, %v7197
        %v7346 = vpack.c.bf16 %v7200, %v7200
        %v7347 = vpack.c.bf16 %v7203, %v7203
        %v7348 = vpack.c.bf16 %v7206, %v7206
        %v7349 = vpack.c.bf16 %v7209, %v7209
        %v7350 = vpack.c.bf16 %v7212, %v7212
        %v7351 = vpack.c.bf16 %v7215, %v7215
        %v7352 = vpack.c.bf16 %v7218, %v7218
        %v7353 = vpack.c.bf16 %v7221, %v7221
        %v7354 = vpack.c.bf16 %v7224, %v7224
        %v7355 = vpack.c.bf16 %v7227, %v7227
        %v7356 = vpack.c.bf16 %v7230, %v7230
        %v7357 = vpack.c.bf16 %v7233, %v7233
        %v7358 = vpack.c.bf16 %v7236, %v7236
        %v7359 = vpack.c.bf16 %v7239, %v7239
        %v7360 = vpack.c.bf16 %v7242, %v7242
        %v7361 = vpack.c.bf16 %v7245, %v7245
        %v7362 = vpack.c.bf16 %v7248, %v7248
        %v7363 = vpack.c.bf16 %v7251, %v7251
        %v7364 = vpack.c.bf16 %v7254, %v7254
        %v7365 = vpack.c.bf16 %v7257, %v7257
        %v7366 = vpack.c.bf16 %v7260, %v7260
        %v7367 = vpack.c.bf16 %v7263, %v7263
        %v7368 = vpack.c.bf16 %v7266, %v7266
        %v7369 = vpack.c.bf16 %v7269, %v7269
        %v7370 = vpack.c.bf16 %v7272, %v7272
        %v7371 = vpack.c.bf16 %v7275, %v7275
        %v7372 = vpack.c.bf16 %v7278, %v7278
        %v7373 = vpack.c.bf16 %v7281, %v7281
        %v7374 = vpack.c.bf16 %v7284, %v7284
        %v7375 = vpack.c.bf16 %v7287, %v7287
        %v7376 = vpack.c.bf16 %v7290, %v7290
        %v7377 = vpack.c.bf16 %v7293, %v7293
        %v7378 = vpack.c.bf16 %v7296, %v7296
        %v7379 = vpack.c.bf16 %v7299, %v7299
        %v7380 = vpack.c.bf16 %v7302, %v7302
        %v7381 = vpack.c.bf16 %v7305, %v7305
        %v7382 = vpack.c.bf16 %v7308, %v7308
        %v7383 = vpack.c.bf16 %v7311, %v7311
        %v7384 = vpack.c.bf16 %v7314, %v7314
        %v7385 = vpack.c.bf16 %v7317, %v7317
        %v7386 = vpack.c.bf16 %v7320, %v7320
        %v7387 = vpack.c.bf16 %v7323, %v7323
        %v7452 = vunpack.c.l.b16 %v7324
        %v7453 = vunpack.c.l.b16 %v7325
        %v7454 = vunpack.c.l.b16 %v7326
        %v7455 = vunpack.c.l.b16 %v7327
        %v7456 = vunpack.c.l.b16 %v7328
        %v7457 = vunpack.c.l.b16 %v7329
        %v7458 = vunpack.c.l.b16 %v7330
        %v7459 = vunpack.c.l.b16 %v7331
        %v7460 = vunpack.c.l.b16 %v7332
        %v7461 = vunpack.c.l.b16 %v7333
        %v7462 = vunpack.c.l.b16 %v7334
        %v7463 = vunpack.c.l.b16 %v7335
        %v7464 = vunpack.c.l.b16 %v7336
        %v7465 = vunpack.c.l.b16 %v7337
        %v7466 = vunpack.c.l.b16 %v7338
        %v7467 = vunpack.c.l.b16 %v7339
        %v7468 = vunpack.c.l.b16 %v7340
        %v7469 = vunpack.c.l.b16 %v7341
        %v7470 = vunpack.c.l.b16 %v7342
        %v7471 = vunpack.c.l.b16 %v7343
        %v7472 = vunpack.c.l.b16 %v7344
        %v7473 = vunpack.c.l.b16 %v7345
        %v7474 = vunpack.c.l.b16 %v7346
        %v7475 = vunpack.c.l.b16 %v7347
        %v7476 = vunpack.c.l.b16 %v7348
        %v7477 = vunpack.c.l.b16 %v7349
        %v7478 = vunpack.c.l.b16 %v7350
        %v7479 = vunpack.c.l.b16 %v7351
        %v7480 = vunpack.c.l.b16 %v7352
        %v7481 = vunpack.c.l.b16 %v7353
        %v7482 = vunpack.c.l.b16 %v7354
        %v7483 = vunpack.c.l.b16 %v7355
        %v7484 = vunpack.c.l.b16 %v7356
        %v7485 = vunpack.c.l.b16 %v7357
        %v7486 = vunpack.c.l.b16 %v7358
        %v7487 = vunpack.c.l.b16 %v7359
        %v7488 = vunpack.c.l.b16 %v7360
        %v7489 = vunpack.c.l.b16 %v7361
        %v7490 = vunpack.c.l.b16 %v7362
        %v7491 = vunpack.c.l.b16 %v7363
        %v7492 = vunpack.c.l.b16 %v7364
        %v7493 = vunpack.c.l.b16 %v7365
        %v7494 = vunpack.c.l.b16 %v7366
        %v7495 = vunpack.c.l.b16 %v7367
        %v7496 = vunpack.c.l.b16 %v7368
        %v7497 = vunpack.c.l.b16 %v7369
        %v7498 = vunpack.c.l.b16 %v7370
        %v7499 = vunpack.c.l.b16 %v7371
        %v7500 = vunpack.c.l.b16 %v7372
        %v7501 = vunpack.c.l.b16 %v7373
        %v7502 = vunpack.c.l.b16 %v7374
        %v7503 = vunpack.c.l.b16 %v7375
        %v7504 = vunpack.c.l.b16 %v7376
        %v7505 = vunpack.c.l.b16 %v7377
        %v7506 = vunpack.c.l.b16 %v7378
        %v7507 = vunpack.c.l.b16 %v7379
        %v7508 = vunpack.c.l.b16 %v7380
        %v7509 = vunpack.c.l.b16 %v7381
        %v7510 = vunpack.c.l.b16 %v7382
        %v7511 = vunpack.c.l.b16 %v7383
        %v7512 = vunpack.c.l.b16 %v7384
        %v7513 = vunpack.c.l.b16 %v7385
        %v7514 = vunpack.c.l.b16 %v7386
        %v7515 = vunpack.c.l.b16 %v7387
        %v7516 = vpack.c.b16 %v7452, %v7452
        %v7517 = vpack.c.b16 %v7453, %v7453
        %v7518 = vpack.c.b16 %v7454, %v7454
        %v7519 = vpack.c.b16 %v7455, %v7455
        %v7520 = vpack.c.b16 %v7456, %v7456
        %v7521 = vpack.c.b16 %v7457, %v7457
        %v7522 = vpack.c.b16 %v7458, %v7458
        %v7523 = vpack.c.b16 %v7459, %v7459
        %v7524 = vpack.c.b16 %v7460, %v7460
        %v7525 = vpack.c.b16 %v7461, %v7461
        %v7526 = vpack.c.b16 %v7462, %v7462
        %v7527 = vpack.c.b16 %v7463, %v7463
        %v7528 = vpack.c.b16 %v7464, %v7464
        %v7529 = vpack.c.b16 %v7465, %v7465
        %v7530 = vpack.c.b16 %v7466, %v7466
        %v7531 = vpack.c.b16 %v7467, %v7467
        %v7532 = vpack.c.b16 %v7468, %v7468
        %v7533 = vpack.c.b16 %v7469, %v7469
        %v7534 = vpack.c.b16 %v7470, %v7470
        %v7535 = vpack.c.b16 %v7471, %v7471
        %v7536 = vpack.c.b16 %v7472, %v7472
        %v7537 = vpack.c.b16 %v7473, %v7473
        %v7538 = vpack.c.b16 %v7474, %v7474
        %v7539 = vpack.c.b16 %v7475, %v7475
        %v7540 = vpack.c.b16 %v7476, %v7476
        %v7541 = vpack.c.b16 %v7477, %v7477
        %v7542 = vpack.c.b16 %v7478, %v7478
        %v7543 = vpack.c.b16 %v7479, %v7479
        %v7544 = vpack.c.b16 %v7480, %v7480
        %v7545 = vpack.c.b16 %v7481, %v7481
        %v7546 = vpack.c.b16 %v7482, %v7482
        %v7547 = vpack.c.b16 %v7483, %v7483
        %v7548 = vpack.c.b16 %v7484, %v7484
        %v7549 = vpack.c.b16 %v7485, %v7485
        %v7550 = vpack.c.b16 %v7486, %v7486
        %v7551 = vpack.c.b16 %v7487, %v7487
        %v7552 = vpack.c.b16 %v7488, %v7488
        %v7553 = vpack.c.b16 %v7489, %v7489
        %v7554 = vpack.c.b16 %v7490, %v7490
        %v7555 = vpack.c.b16 %v7491, %v7491
        %v7556 = vpack.c.b16 %v7492, %v7492
        %v7557 = vpack.c.b16 %v7493, %v7493
        %v7558 = vpack.c.b16 %v7494, %v7494
        %v7559 = vpack.c.b16 %v7495, %v7495
        %v7560 = vpack.c.b16 %v7496, %v7496
        %v7561 = vpack.c.b16 %v7497, %v7497
        %v7562 = vpack.c.b16 %v7498, %v7498
        %v7563 = vpack.c.b16 %v7499, %v7499
        %v7564 = vpack.c.b16 %v7500, %v7500
        %v7565 = vpack.c.b16 %v7501, %v7501
        %v7566 = vpack.c.b16 %v7502, %v7502
        %v7567 = vpack.c.b16 %v7503, %v7503
        %v7568 = vpack.c.b16 %v7504, %v7504
        %v7569 = vpack.c.b16 %v7505, %v7505
        %v7570 = vpack.c.b16 %v7506, %v7506
        %v7571 = vpack.c.b16 %v7507, %v7507
        %v7572 = vpack.c.b16 %v7508, %v7508
        %v7573 = vpack.c.b16 %v7509, %v7509
        %v7574 = vpack.c.b16 %v7510, %v7510
        %v7575 = vpack.c.b16 %v7511, %v7511
        %v7576 = vpack.c.b16 %v7512, %v7512
        %v7577 = vpack.c.b16 %v7513, %v7513
        %v7578 = vpack.c.b16 %v7514, %v7514
        %v7579 = vpack.c.b16 %v7515, %v7515
        %v7580 = vunpack.c.l.b16 %v7516
        %v7581 = vunpack.c.l.b16 %v7517
        %v7582 = vunpack.c.l.b16 %v7518
        %v7583 = vunpack.c.l.b16 %v7519
        %v7584 = vunpack.c.l.b16 %v7520
        %v7585 = vunpack.c.l.b16 %v7521
        %v7586 = vunpack.c.l.b16 %v7522
        %v7587 = vunpack.c.l.b16 %v7523
        %v7588 = vunpack.c.l.b16 %v7524
        %v7589 = vunpack.c.l.b16 %v7525
        %v7590 = vunpack.c.l.b16 %v7526
        %v7591 = vunpack.c.l.b16 %v7527
        %v7592 = vunpack.c.l.b16 %v7528
        %v7593 = vunpack.c.l.b16 %v7529
        %v7594 = vunpack.c.l.b16 %v7530
        %v7595 = vunpack.c.l.b16 %v7531
        %v7596 = vunpack.c.l.b16 %v7532
        %v7597 = vunpack.c.l.b16 %v7533
        %v7598 = vunpack.c.l.b16 %v7534
        %v7599 = vunpack.c.l.b16 %v7535
        %v7600 = vunpack.c.l.b16 %v7536
        %v7601 = vunpack.c.l.b16 %v7537
        %v7602 = vunpack.c.l.b16 %v7538
        %v7603 = vunpack.c.l.b16 %v7539
        %v7604 = vunpack.c.l.b16 %v7540
        %v7605 = vunpack.c.l.b16 %v7541
        %v7606 = vunpack.c.l.b16 %v7542
        %v7607 = vunpack.c.l.b16 %v7543
        %v7608 = vunpack.c.l.b16 %v7544
        %v7609 = vunpack.c.l.b16 %v7545
        %v7610 = vunpack.c.l.b16 %v7546
        %v7611 = vunpack.c.l.b16 %v7547
        %v7612 = vunpack.c.l.b16 %v7548
        %v7613 = vunpack.c.l.b16 %v7549
        %v7614 = vunpack.c.l.b16 %v7550
        %v7615 = vunpack.c.l.b16 %v7551
        %v7616 = vunpack.c.l.b16 %v7552
        %v7617 = vunpack.c.l.b16 %v7553
        %v7618 = vunpack.c.l.b16 %v7554
        %v7619 = vunpack.c.l.b16 %v7555
        %v7620 = vunpack.c.l.b16 %v7556
        %v7621 = vunpack.c.l.b16 %v7557
        %v7622 = vunpack.c.l.b16 %v7558
        %v7623 = vunpack.c.l.b16 %v7559
        %v7624 = vunpack.c.l.b16 %v7560
        %v7625 = vunpack.c.l.b16 %v7561
        %v7626 = vunpack.c.l.b16 %v7562
        %v7627 = vunpack.c.l.b16 %v7563
        %v7628 = vunpack.c.l.b16 %v7564
        %v7629 = vunpack.c.l.b16 %v7565
        %v7630 = vunpack.c.l.b16 %v7566
        %v7631 = vunpack.c.l.b16 %v7567
        %v7632 = vunpack.c.l.b16 %v7568
        %v7633 = vunpack.c.l.b16 %v7569
        %v7634 = vunpack.c.l.b16 %v7570
        %v7635 = vunpack.c.l.b16 %v7571
        %v7636 = vunpack.c.l.b16 %v7572
        %v7637 = vunpack.c.l.b16 %v7573
        %v7638 = vunpack.c.l.b16 %v7574
        %v7639 = vunpack.c.l.b16 %v7575
        %v7640 = vunpack.c.l.b16 %v7576
        %v7641 = vunpack.c.l.b16 %v7577
        %v7642 = vunpack.c.l.b16 %v7578
        %v7643 = vunpack.c.l.b16 %v7579
        %vm7644 = vcmask 1041409
        %v7645 = vsel %vm7644, %v7581, %v7580
        %vm7646 = vcmask 1042434
        %v7647 = vsel %vm7646, %v7582, %v7645
        %vm7648 = vcmask 1043459
        %v7649 = vsel %vm7648, %v7583, %v7647
        %vm7650 = vcmask 1044484
        %v7651 = vsel %vm7650, %v7584, %v7649
        %vm7652 = vcmask 1045509
        %v7653 = vsel %vm7652, %v7585, %v7651
        %vm7654 = vcmask 1046534
        %v7655 = vsel %vm7654, %v7586, %v7653
        %vm7656 = vcmask 1047559
        %v7657 = vsel %vm7656, %v7587, %v7655
        %v7658 = vsel %vm7644, %v7589, %v7588
        %v7659 = vsel %vm7646, %v7590, %v7658
        %v7660 = vsel %vm7648, %v7591, %v7659
        %v7661 = vsel %vm7650, %v7592, %v7660
        %v7662 = vsel %vm7652, %v7593, %v7661
        %v7663 = vsel %vm7654, %v7594, %v7662
        %v7664 = vsel %vm7656, %v7595, %v7663
        %v7665 = vsel %vm7644, %v7597, %v7596
        %v7666 = vsel %vm7646, %v7598, %v7665
        %v7667 = vsel %vm7648, %v7599, %v7666
        %v7668 = vsel %vm7650, %v7600, %v7667
        %v7669 = vsel %vm7652, %v7601, %v7668
        %v7670 = vsel %vm7654, %v7602, %v7669
        %v7671 = vsel %vm7656, %v7603, %v7670
        %v7672 = vsel %vm7644, %v7605, %v7604
        %v7673 = vsel %vm7646, %v7606, %v7672
        %v7674 = vsel %vm7648, %v7607, %v7673
        %v7675 = vsel %vm7650, %v7608, %v7674
        %v7676 = vsel %vm7652, %v7609, %v7675
        %v7677 = vsel %vm7654, %v7610, %v7676
        %v7678 = vsel %vm7656, %v7611, %v7677
        %v7679 = vsel %vm7644, %v7613, %v7612
        %v7680 = vsel %vm7646, %v7614, %v7679
        %v7681 = vsel %vm7648, %v7615, %v7680
        %v7682 = vsel %vm7650, %v7616, %v7681
        %v7683 = vsel %vm7652, %v7617, %v7682
        %v7684 = vsel %vm7654, %v7618, %v7683
        %v7685 = vsel %vm7656, %v7619, %v7684
        %v7686 = vsel %vm7644, %v7621, %v7620
        %v7687 = vsel %vm7646, %v7622, %v7686
        %v7688 = vsel %vm7648, %v7623, %v7687
        %v7689 = vsel %vm7650, %v7624, %v7688
        %v7690 = vsel %vm7652, %v7625, %v7689
        %v7691 = vsel %vm7654, %v7626, %v7690
        %v7692 = vsel %vm7656, %v7627, %v7691
        %v7693 = vsel %vm7644, %v7629, %v7628
        %v7694 = vsel %vm7646, %v7630, %v7693
        %v7695 = vsel %vm7648, %v7631, %v7694
        %v7696 = vsel %vm7650, %v7632, %v7695
        %v7697 = vsel %vm7652, %v7633, %v7696
        %v7698 = vsel %vm7654, %v7634, %v7697
        %v7699 = vsel %vm7656, %v7635, %v7698
        %v7700 = vsel %vm7644, %v7637, %v7636
        %v7701 = vsel %vm7646, %v7638, %v7700
        %v7702 = vsel %vm7648, %v7639, %v7701
        %v7703 = vsel %vm7650, %v7640, %v7702
        %v7704 = vsel %vm7652, %v7641, %v7703
        %v7705 = vsel %vm7654, %v7642, %v7704
        %v7706 = vsel %vm7656, %v7643, %v7705
        %v7707 = vpack.c.b16 %v7657, %v7657
        %v7708 = vpack.c.b16 %v7664, %v7664
        %v7709 = vpack.c.b16 %v7671, %v7671
        %v7710 = vpack.c.b16 %v7678, %v7678
        %v7711 = vpack.c.b16 %v7685, %v7685
        %v7712 = vpack.c.b16 %v7692, %v7692
        %v7713 = vpack.c.b16 %v7699, %v7699
        %v7714 = vpack.c.b16 %v7706, %v7706
        %7723 = vst.msk [vmem:[%s201] sm:$0xf] %vm5497, %v7707
        %7724 = vst.msk [vmem:[%s201 + $0x4] sm:$0xf] %vm5497, %v7708
        %7725 = vst.msk [vmem:[%s201 + $0x8] sm:$0xf] %vm5497, %v7709
        %7726 = vst.msk [vmem:[%s201 + $0xc] sm:$0xf] %vm5497, %v7710
        %7727 = vst.msk [vmem:[%s201 + $0x10] sm:$0xf] %vm5497, %v7711
        %7728 = vst.msk [vmem:[%s201 + $0x14] sm:$0xf] %vm5497, %v7712
        %7729 = vst.msk [vmem:[%s201 + $0x18] sm:$0xf] %vm5497, %v7713
        %7730 = vst.msk [vmem:[%s201 + $0x1c] sm:$0xf] %vm5497, %v7714
        %s7731 = sand.u32 %s98, 1
        %s7732 = scalar_lea.sflag [#allocation4], %s7731
        %s7733 = sand.u32 %s98, 1
        %s7734 = smul.addr %s7733, 128
        %s7735 = scalar_lea.vmem [#allocation3], %s7734
        %s7736 = sand.u32 %s124, 1
        %s7737 = scalar_lea.sflag [#allocation6], %s7736
        %s7738 = sand.u32 %s124, 1
        %s7739 = smul.addr %s7738, 32
        %s7740 = scalar_lea.vmem [#allocation5], %s7739
        // Predicated region
        $region33: #{tpu_custom_call.1} parent=31 // pred_check
          %p7741 = pneg %p108
        $region34: #{tpu_custom_call.1} parent=31 // pred_check_branch
          %7743 = sbr.rel (%p7741) target = $region36
        $region35: #{tpu_custom_call.1} parent=31 // pred_region
          %s7745 = ssub.s32 2048, 2048
          %7746 = vsyncadd %s7732, %s7745
          %s7747 = smul.addr %s22, 32
          %s7748 = smul.addr %s7747, 64
          %s7749 = scalar_lea.hbm %s3, %s7748
          %s7750 = sshll.u32 %s7735, 4
          %s7751 = int_to_ptr.vmem [resolvable:$true] %s7750
          %7756 = dma.vmem_to_hbm [thread:$0]  %s7751, 2048, %s7749, %s7732, 64, 64, 4
        $region36: #{tpu_custom_call.1} parent=31 // pred_fallthru
          _
        // Predicated region
        $region37: #{tpu_custom_call.1} parent=31 // pred_check
          %p7757 = pneg %p134
        $region38: #{tpu_custom_call.1} parent=31 // pred_check_branch
          %7759 = sbr.rel (%p7757) target = $region40
        $region39: #{tpu_custom_call.1} parent=31 // pred_region
          %s7761 = ssub.s32 512, 512
          %7762 = vsyncadd %s7737, %s7761
          %s7763 = smul.addr %s22, 8
          %s7764 = smul.addr %s7763, 64
          %s7765 = scalar_lea.hbm %s4, %s7764
          %s7766 = sshll.u32 %s7740, 4
          %s7767 = int_to_ptr.vmem [resolvable:$true] %s7766
          %7772 = dma.vmem_to_hbm [thread:$0]  %s7767, 512, %s7765, %s7737, 64, 64, 4
        $region40: #{tpu_custom_call.1} parent=31 // pred_fallthru
          _
      $region32: #{tpu_custom_call.1} parent=5 // pred_fallthru
        _
      %p7773 = scmp.le.s32.totalorder 2, %s17
      // Predicated region
      $region41: #{tpu_custom_call.1} parent=5 // pred_check
        %p7774 = pneg %p7773
      $region42: #{tpu_custom_call.1} parent=5 // pred_check_branch
        %7776 = sbr.rel (%p7774) target = $region44
      $region43: #{tpu_custom_call.1} parent=5 // pred_region
        %s7777 = ssub.s32 %s17, 2
        // Predicated region
        $region45: #{tpu_custom_call.1} parent=43 // pred_check
          %p7778 = pneg %p114
        $region46: #{tpu_custom_call.1} parent=43 // pred_check_branch
          %7780 = sbr.rel (%p7778) target = $region48
        $region47: #{tpu_custom_call.1} parent=43 // pred_region
          %s7781 = sand.u32 %s99, 1
          %s7782 = scalar_lea.sflag [#allocation4], %s7781
          %s7783 = sand.u32 %s99, 1
          %s7784 = smul.addr %s7783, 128
          %s7785 = scalar_lea.vmem [#allocation3], %s7784
          %7786 = dma.done %s7782, 2048
        $region48: #{tpu_custom_call.1} parent=43 // pred_fallthru
          _
        // Predicated region
        $region49: #{tpu_custom_call.1} parent=43 // pred_check
          %p7787 = pneg %p140
        $region50: #{tpu_custom_call.1} parent=43 // pred_check_branch
          %7789 = sbr.rel (%p7787) target = $region52
        $region51: #{tpu_custom_call.1} parent=43 // pred_region
          %s7790 = sand.u32 %s125, 1
          %s7791 = scalar_lea.sflag [#allocation6], %s7790
          %s7792 = sand.u32 %s125, 1
          %s7793 = smul.addr %s7792, 32
          %s7794 = scalar_lea.vmem [#allocation5], %s7793
          %7795 = dma.done %s7791, 512
        $region52: #{tpu_custom_call.1} parent=43 // pred_fallthru
          _
      $region44: #{tpu_custom_call.1} parent=5 // pred_fallthru
        _
    $region6: #{tpu_custom_call.1} parent=1 // loop_footer
      %s21 = sadd.s32 1, %s17
    $region7: #{tpu_custom_call.1} parent=1 // loop_footer_branch
      %16 = sbr.rel target = $region3
    $region8: #{tpu_custom_call.1} parent=1 // loop_exit
      _
    %7796 = vsyncpa [#allocation4], 1
    %s7797 = scalar_lea.sflag [#allocation4], 1
    %7798 = vsyncpa %s7797, 1
    %7799 = vsyncpa [#allocation6], 1
    %s7800 = scalar_lea.sflag [#allocation6], 1
    %7801 = vsyncpa %s7800, 1

</llo_original>
